<compile_context>
chip_gen: v7x
topology: tpu7x:2x2x1
jax: 0.10.0
libtpu: 0.0.40
codegen_flags: <defaults>
</compile_context>

<pallas_src>
import jax
import jax.numpy as jnp
from jax import lax
from jax.experimental import pallas as pl
from jax.experimental.pallas import tpu as pltpu

CLASSES = 6
BN_EPS = 1e-5


# ---------------------------------------------------------------------------
# Fused kernel
# ---------------------------------------------------------------------------
def _make_kernel(geoms, batch, s_final):
    """geoms: per-layer static geometry for conv layers 2..4 (flat layout)."""
    g2, g3, g4 = geoms

    def kernel(p_ref, w1_ref, b1_ref,
               w2_ref, b2_ref, w3_ref, b3_ref, w4_ref, b4_ref,
               fc1w_ref, fc1b_ref, fc2w_ref, fc2b_ref,
               o_ref,
               act2_ref, conv2_ref, pool2_ref,
               act3_ref, conv3_ref, pool3_ref,
               act4_ref, conv4_ref, pool4_ref,
               act5_ref):
        f32 = jnp.float32

        # ---- layer 1: conv(k=2) + ReLU + MaxPool on pre-built im2col patches ----
        # p_ref: (4, N2, K1pad), one patch matrix per 2x2 pool-window offset.
        w1 = w1_ref[...]                                        # (K1pad, C1out)
        m = jnp.dot(p_ref[0], w1, preferred_element_type=f32)
        for d in range(1, 4):
            m = jnp.maximum(m, jnp.dot(p_ref[d], w1, preferred_element_type=f32))
        a2 = jnp.maximum(m + b1_ref[...], 0.0)                  # (N2, C1out)
        act2_ref[pl.ds(0, g2["N"]), :] = a2                     # dense flat layer-2 input

        # Zero the few padding rows of each flat activation buffer.  They are read
        # only by the out-of-range conv taps whose results are never consumed,
        # but keep them finite/deterministic.
        act2_ref[pl.ds(g2["N"], g2["PAD"]), :] = jnp.zeros((g2["PAD"], g2["Cin"]), f32)
        act3_ref[pl.ds(g3["N"], g3["PAD"]), :] = jnp.zeros((g3["PAD"], g3["Cin"]), f32)
        act4_ref[pl.ds(g4["N"], g4["PAD"]), :] = jnp.zeros((g4["PAD"], g4["Cin"]), f32)

        def conv_relu_pool(g, act_ref, w_ref, b_ref, conv_ref, pool_ref, nxt_ref):
            H, W, N, M = g["H"], g["W"], g["N"], g["M"]
            Hp, Wp = g["Hp"], g["Wp"]
            taps = (0, 1, W, W + 1)                 # flat shift of the 4 conv taps
            # conv(k=2, VALID) at every flat position: 4 shifted matmuls
            acc = jnp.dot(act_ref[pl.ds(taps[0], N), :], w_ref[0],
                          preferred_element_type=f32)
            for t in range(1, 4):
                acc = acc + jnp.dot(act_ref[pl.ds(taps[t], N), :], w_ref[t],
                                    preferred_element_type=f32)
            conv_ref[...] = jnp.maximum(acc + b_ref[...], 0.0)  # bias + ReLU (once)
            # 2x2 max-pool, still in flat coordinates
            pooled = jnp.maximum(
                jnp.maximum(conv_ref[pl.ds(0, M), :], conv_ref[pl.ds(1, M), :]),
                jnp.maximum(conv_ref[pl.ds(W, M), :], conv_ref[pl.ds(W + 1, M), :]))
            pool_ref[...] = pooled
            # compact the strided pool outputs into the next layer's dense layout
            for b in range(batch):
                for pi in range(Hp):
                    src = b * H * W + 2 * pi * W
                    dst = b * Hp * Wp + pi * Wp
                    row_sl = pl.ds(src, Wp, 2) if Wp > 1 else pl.ds(src, 1)
                    nxt_ref[pl.ds(dst, Wp), :] = pool_ref[row_sl, :]

        conv_relu_pool(g2, act2_ref, w2_ref, b2_ref, conv2_ref, pool2_ref, act3_ref)
        conv_relu_pool(g3, act3_ref, w3_ref, b3_ref, conv3_ref, pool3_ref, act4_ref)
        conv_relu_pool(g4, act4_ref, w4_ref, b4_ref, conv4_ref, pool4_ref, act5_ref)

        # ---- AdaptiveAvgPool2d(1) + fc1 (BN folded) + fc2 ----
        if s_final == 1:
            feat = act5_ref[...]                                # (B, 128)
        else:
            feats = []
            for b in range(batch):
                blk = act5_ref[pl.ds(b * s_final, s_final), :]
                feats.append(jnp.mean(blk, axis=0, keepdims=True))
            feat = feats[0] if batch == 1 else jnp.concatenate(feats, axis=0)
        h = jnp.dot(feat, fc1w_ref[...], preferred_element_type=f32) + fc1b_ref[...]
        o_ref[...] = jnp.dot(h, fc2w_ref[...], preferred_element_type=f32) + fc2b_ref[...]

    return kernel


# ---------------------------------------------------------------------------
# Wrapper: layout prep for the input / weights (tiny, XLA) + one pallas_call
# ---------------------------------------------------------------------------
def _conv_w_taps(w_oikk):
    # (Cout, Cin, 2, 2) -> (4, Cin, Cout), tap order (ky, kx)
    cout, cin = w_oikk.shape[0], w_oikk.shape[1]
    return jnp.transpose(w_oikk, (2, 3, 1, 0)).reshape(4, cin, cout)


def spt_cnn_forward(x_nchw, params):
    x = jnp.transpose(x_nchw, (0, 2, 3, 1)).astype(jnp.float32)   # NCHW -> NHWC
    B, H0, W0, C0 = x.shape
    convs = params["convs"]
    chans = [(w.shape[1], w.shape[0]) for (w, _) in convs]

    # ---- layer-1 im2col (on the tiny HBM input only; later layers stay in VMEM) ----
    Hp1, Wp1 = (H0 - 1) // 2, (W0 - 1) // 2
    N2 = B * Hp1 * Wp1
    pats = []
    for py in range(2):
        for px in range(2):
            parts = []
            for ky in range(2):
                for kx in range(2):
                    parts.append(x[:, py + ky: py + ky + 2 * Hp1: 2,
                                   px + kx: px + kx + 2 * Wp1: 2, :])
            pats.append(jnp.concatenate(parts, axis=-1).reshape(N2, 4 * C0))
    patches = jnp.stack(pats, axis=0)                             # (4, N2, 4*C0)
    k1 = 4 * C0
    k1p = ((k1 + 7) // 8) * 8
    if k1p != k1:
        patches = jnp.pad(patches, ((0, 0), (0, 0), (0, k1p - k1)))

    w1, b1 = convs[0]
    c1out = w1.shape[0]
    w1_2d = jnp.transpose(w1, (2, 3, 1, 0)).reshape(k1, c1out)    # (ky,kx,cin) x cout
    if k1p != k1:
        w1_2d = jnp.pad(w1_2d, ((0, k1p - k1), (0, 0)))
    b1_2d = b1.reshape(1, c1out)

    # ---- static geometry for in-kernel conv layers 2..4 ----
    geoms = []
    H, W = Hp1, Wp1
    for (cin, cout) in chans[1:]:
        Hp, Wp = (H - 1) // 2, (W - 1) // 2
        geoms.append(dict(H=H, W=W, Cin=cin, Cout=cout, Hp=Hp, Wp=Wp,
                          N=B * H * W, M=B * H * W - W - 1, PAD=W + 1))
        H, W = Hp, Wp
    s_final = H * W
    g2, g3, g4 = geoms

    # ---- fold BatchNorm1d (eval: running stats) into fc1 ----
    scale = params["bn_gamma"] * lax.rsqrt(params["bn_var"] + BN_EPS)
    shift = params["bn_beta"] - params["bn_mean"] * scale
    fc1w = params["fc1_w"].T * scale[None, :]                     # (128, 64)
    fc1b = (params["fc1_b"] * scale + shift).reshape(1, -1)
    fc2w = params["fc2_w"].T                                      # (64, CLASSES)
    fc2b = params["fc2_b"].reshape(1, -1)
    n_classes = fc2w.shape[1]

    scratch = [
        pltpu.VMEM((g2["N"] + g2["PAD"], g2["Cin"]), jnp.float32),   # act2
        pltpu.VMEM((g2["N"], g2["Cout"]), jnp.float32),              # conv2
        pltpu.VMEM((g2["M"], g2["Cout"]), jnp.float32),              # pool2
        pltpu.VMEM((g3["N"] + g3["PAD"], g3["Cin"]), jnp.float32),   # act3
        pltpu.VMEM((g3["N"], g3["Cout"]), jnp.float32),              # conv3
        pltpu.VMEM((g3["M"], g3["Cout"]), jnp.float32),              # pool3
        pltpu.VMEM((g4["N"] + g4["PAD"], g4["Cin"]), jnp.float32),   # act4
        pltpu.VMEM((g4["N"], g4["Cout"]), jnp.float32),              # conv4
        pltpu.VMEM((g4["M"], g4["Cout"]), jnp.float32),              # pool4
        pltpu.VMEM((B * s_final, g4["Cout"]), jnp.float32),          # act5 / features
    ]

    # advisory cost estimate for XLA scheduling around the single custom call
    flops = 2 * 4 * N2 * k1p * c1out
    for g in geoms:
        flops += 2 * 4 * g["N"] * g["Cin"] * g["Cout"]
    flops += 2 * B * (g4["Cout"] * fc1w.shape[1] + fc1w.shape[1] * n_classes)
    bytes_acc = 4 * (patches.size + w1_2d.size + b1_2d.size
                     + fc1w.size + fc1b.size + fc2w.size + fc2b.size
                     + B * n_classes)
    for (w, b) in convs[1:]:
        bytes_acc += 4 * (w.size + b.size)

    kernel = _make_kernel(geoms, B, s_final)
    return pl.pallas_call(
        kernel,
        out_shape=jax.ShapeDtypeStruct((B, n_classes), jnp.float32),
        scratch_shapes=scratch,
        cost_estimate=pl.CostEstimate(flops=int(flops), transcendentals=0,
                                      bytes_accessed=int(bytes_acc)),
    )(patches, w1_2d, b1_2d,
      _conv_w_taps(convs[1][0]), convs[1][1].reshape(1, -1),
      _conv_w_taps(convs[2][0]), convs[2][1].reshape(1, -1),
      _conv_w_taps(convs[3][0]), convs[3][1].reshape(1, -1),
      fc1w, fc1b, fc2w, fc2b)


# ---------------------------------------------------------------------------
# Deterministic parameter init + pure-JAX reference
# ---------------------------------------------------------------------------
def init_params(key):
    keys = jax.random.split(key, 12)
    convs = []
    chans = [(1, 16), (16, 32), (32, 64), (64, 128)]
    for i, (ci, co) in enumerate(chans):
        w = 0.1 * jax.random.normal(keys[2 * i], (co, ci, 2, 2), jnp.float32)
        b = 0.01 * jax.random.normal(keys[2 * i + 1], (co,), jnp.float32)
        convs.append((w, b))
    return {
        "convs": convs,
        "fc1_w": 0.05 * jax.random.normal(keys[8], (64, 128), jnp.float32),
        "fc1_b": 0.01 * jax.random.normal(keys[9], (64,), jnp.float32),
        "bn_gamma": jnp.ones((64,), jnp.float32),
        "bn_beta": jnp.zeros((64,), jnp.float32),
        "bn_mean": jnp.zeros((64,), jnp.float32),
        "bn_var": jnp.ones((64,), jnp.float32),
        "fc2_w": 0.05 * jax.random.normal(keys[10], (CLASSES, 64), jnp.float32),
        "fc2_b": 0.01 * jax.random.normal(keys[11], (CLASSES,), jnp.float32),
    }


def reference_forward(x_nchw, params):
    x = jnp.transpose(x_nchw, (0, 2, 3, 1))
    for (w, b) in params["convs"]:
        w_hwio = jnp.transpose(w, (2, 3, 1, 0))
        y = lax.conv_general_dilated(
            x, w_hwio, window_strides=(1, 1), padding="VALID",
            dimension_numbers=("NHWC", "HWIO", "NHWC")) + b
        y = jnp.maximum(y, 0.0)
        B, H, W, C = y.shape
        Hp, Wp = H // 2, W // 2
        x = y[:, : 2 * Hp, : 2 * Wp, :].reshape(B, Hp, 2, Wp, 2, C).max(axis=(2, 4))
    feat = x.mean(axis=(1, 2))
    scale = params["bn_gamma"] / jnp.sqrt(params["bn_var"] + BN_EPS)
    shift = params["bn_beta"] - params["bn_mean"] * scale
    h = feat @ params["fc1_w"].T + params["fc1_b"]
    h = h * scale + shift
    return h @ params["fc2_w"].T + params["fc2_b"]


if __name__ == "__main__":
    key = jax.random.PRNGKey(0)
    pkey, xkey = jax.random.split(key)
    params = init_params(pkey)

    # NCHW, 1 input channel, 33x33 spatial (survives four conv(k=2)+pool(2)
    # stages: 33 -> 16 -> 7 -> 3 -> 1), batch=2.
    x = jax.random.normal(xkey, (2, 1, 33, 33), jnp.float32)

    out = jax.jit(spt_cnn_forward)(x, params)
    out = jax.block_until_ready(out)

    ref = reference_forward(x, params)
    assert out.shape == (2, CLASSES)
    assert bool(jnp.allclose(out, ref, atol=2e-4, rtol=2e-4)), "mismatch vs reference"

    print("KERNEL_OK")
</pallas_src>

<mosaic_0001>
module attributes {stable_mosaic.version = 11 : i64} {
  func.func @kernel(%arg0: memref<4x512x8xf32, #tpu.memory_space<vmem>>, %arg1: memref<8x16xf32, #tpu.memory_space<vmem>>, %arg2: memref<1x16xf32, #tpu.memory_space<vmem>>, %arg3: memref<4x16x32xf32, #tpu.memory_space<vmem>>, %arg4: memref<1x32xf32, #tpu.memory_space<vmem>>, %arg5: memref<4x32x64xf32, #tpu.memory_space<vmem>>, %arg6: memref<1x64xf32, #tpu.memory_space<vmem>>, %arg7: memref<4x64x128xf32, #tpu.memory_space<vmem>>, %arg8: memref<1x128xf32, #tpu.memory_space<vmem>>, %arg9: memref<128x64xf32, #tpu.memory_space<vmem>>, %arg10: memref<1x64xf32, #tpu.memory_space<vmem>>, %arg11: memref<64x6xf32, #tpu.memory_space<vmem>>, %arg12: memref<1x6xf32, #tpu.memory_space<vmem>>, %arg13: memref<2x6xf32, #tpu.memory_space<vmem>>, %arg14: memref<529x16xf32, #tpu.memory_space<vmem>>, %arg15: memref<512x32xf32, #tpu.memory_space<vmem>>, %arg16: memref<495x32xf32, #tpu.memory_space<vmem>>, %arg17: memref<106x32xf32, #tpu.memory_space<vmem>>, %arg18: memref<98x64xf32, #tpu.memory_space<vmem>>, %arg19: memref<90x64xf32, #tpu.memory_space<vmem>>, %arg20: memref<22x64xf32, #tpu.memory_space<vmem>>, %arg21: memref<18x128xf32, #tpu.memory_space<vmem>>, %arg22: memref<14x128xf32, #tpu.memory_space<vmem>>, %arg23: memref<2x128xf32, #tpu.memory_space<vmem>>) attributes {dimension_semantics = [], scalar_prefetch = 0 : i64, scratch_operands = 10 : i64, tpu.core_type = #tpu.core_type<tc>} {
    %c0 = arith.constant 0 : index
    %c0_0 = arith.constant 0 : index
    %0 = vector.load %arg1[%c0, %c0_0] : memref<8x16xf32, #tpu.memory_space<vmem>>, vector<8x16xf32>
    %c0_1 = arith.constant 0 : index
    %c0_2 = arith.constant 0 : index
    %c0_3 = arith.constant 0 : index
    %1 = vector.load %arg0[%c0_1, %c0_2, %c0_3] : memref<4x512x8xf32, #tpu.memory_space<vmem>>, vector<1x512x8xf32>
    %2 = vector.shape_cast %1 : vector<1x512x8xf32> to vector<512x8xf32>
    %cst = arith.constant dense<0.000000e+00> : vector<512x16xf32>
    %3 = tpu.matmul %2, %0, %cst {dimension_numbers = #tpu.dot_dimension_numbers<[1], [0], [0], [1], [0, 0, 1, 1], [], []>} : vector<512x8xf32>, vector<8x16xf32>, vector<512x16xf32> -> vector<512x16xf32>
    %c1 = arith.constant 1 : index
    %c0_4 = arith.constant 0 : index
    %c0_5 = arith.constant 0 : index
    %4 = vector.load %arg0[%c1, %c0_4, %c0_5] : memref<4x512x8xf32, #tpu.memory_space<vmem>>, vector<1x512x8xf32>
    %5 = vector.shape_cast %4 : vector<1x512x8xf32> to vector<512x8xf32>
    %cst_6 = arith.constant dense<0.000000e+00> : vector<512x16xf32>
    %6 = tpu.matmul %5, %0, %cst_6 {dimension_numbers = #tpu.dot_dimension_numbers<[1], [0], [0], [1], [0, 0, 1, 1], [], []>} : vector<512x8xf32>, vector<8x16xf32>, vector<512x16xf32> -> vector<512x16xf32>
    %7 = arith.maximumf %3, %6 : vector<512x16xf32>
    %c2 = arith.constant 2 : index
    %c0_7 = arith.constant 0 : index
    %c0_8 = arith.constant 0 : index
    %8 = vector.load %arg0[%c2, %c0_7, %c0_8] : memref<4x512x8xf32, #tpu.memory_space<vmem>>, vector<1x512x8xf32>
    %9 = vector.shape_cast %8 : vector<1x512x8xf32> to vector<512x8xf32>
    %cst_9 = arith.constant dense<0.000000e+00> : vector<512x16xf32>
    %10 = tpu.matmul %9, %0, %cst_9 {dimension_numbers = #tpu.dot_dimension_numbers<[1], [0], [0], [1], [0, 0, 1, 1], [], []>} : vector<512x8xf32>, vector<8x16xf32>, vector<512x16xf32> -> vector<512x16xf32>
    %11 = arith.maximumf %7, %10 : vector<512x16xf32>
    %c3 = arith.constant 3 : index
    %c0_10 = arith.constant 0 : index
    %c0_11 = arith.constant 0 : index
    %12 = vector.load %arg0[%c3, %c0_10, %c0_11] : memref<4x512x8xf32, #tpu.memory_space<vmem>>, vector<1x512x8xf32>
    %13 = vector.shape_cast %12 : vector<1x512x8xf32> to vector<512x8xf32>
    %cst_12 = arith.constant dense<0.000000e+00> : vector<512x16xf32>
    %14 = tpu.matmul %13, %0, %cst_12 {dimension_numbers = #tpu.dot_dimension_numbers<[1], [0], [0], [1], [0, 0, 1, 1], [], []>} : vector<512x8xf32>, vector<8x16xf32>, vector<512x16xf32> -> vector<512x16xf32>
    %15 = arith.maximumf %11, %14 : vector<512x16xf32>
    %c0_13 = arith.constant 0 : index
    %c0_14 = arith.constant 0 : index
    %16 = vector.load %arg2[%c0_13, %c0_14] : memref<1x16xf32, #tpu.memory_space<vmem>>, vector<1x16xf32>
    %17 = vector.broadcast %16 : vector<1x16xf32> to vector<512x16xf32>
    %18 = arith.addf %15, %17 : vector<512x16xf32>
    %cst_15 = arith.constant 0.000000e+00 : f32
    %19 = vector.broadcast %cst_15 : f32 to vector<512x16xf32>
    %20 = arith.maximumf %18, %19 : vector<512x16xf32>
    %c0_16 = arith.constant 0 : index
    %c0_17 = arith.constant 0 : index
    %21 = vector.load %arg14[%c0_16, %c0_17] : memref<529x16xf32, #tpu.memory_space<vmem>>, vector<512x16xf32>
    tpu.vector_store %arg14[%c0_16, %c0_17], %20 {strides = array<i32>} : memref<529x16xf32, #tpu.memory_space<vmem>>, vector<512x16xf32>,
    %cst_18 = arith.constant 0.000000e+00 : f32
    %22 = vector.broadcast %cst_18 : f32 to vector<17x16xf32>
    %c512 = arith.constant 512 : index
    %c0_19 = arith.constant 0 : index
    %23 = vector.load %arg14[%c512, %c0_19] : memref<529x16xf32, #tpu.memory_space<vmem>>, vector<17x16xf32>
    tpu.vector_store %arg14[%c512, %c0_19], %22 {strides = array<i32>} : memref<529x16xf32, #tpu.memory_space<vmem>>, vector<17x16xf32>,
    %cst_20 = arith.constant 0.000000e+00 : f32
    %24 = vector.broadcast %cst_20 : f32 to vector<8x32xf32>
    %c98 = arith.constant 98 : index
    %c0_21 = arith.constant 0 : index
    %25 = vector.load %arg17[%c98, %c0_21] : memref<106x32xf32, #tpu.memory_space<vmem>>, vector<8x32xf32>
    tpu.vector_store %arg17[%c98, %c0_21], %24 {strides = array<i32>} : memref<106x32xf32, #tpu.memory_space<vmem>>, vector<8x32xf32>,
    %cst_22 = arith.constant 0.000000e+00 : f32
    %26 = vector.broadcast %cst_22 : f32 to vector<4x64xf32>
    %c18 = arith.constant 18 : index
    %c0_23 = arith.constant 0 : index
    %27 = vector.load %arg20[%c18, %c0_23] : memref<22x64xf32, #tpu.memory_space<vmem>>, vector<4x64xf32>
    tpu.vector_store %arg20[%c18, %c0_23], %26 {strides = array<i32>} : memref<22x64xf32, #tpu.memory_space<vmem>>, vector<4x64xf32>,
    %c0_24 = arith.constant 0 : index
    %c0_25 = arith.constant 0 : index
    %28 = vector.load %arg14[%c0_24, %c0_25] : memref<529x16xf32, #tpu.memory_space<vmem>>, vector<512x16xf32>
    %c0_26 = arith.constant 0 : index
    %c0_27 = arith.constant 0 : index
    %c0_28 = arith.constant 0 : index
    %29 = vector.load %arg3[%c0_26, %c0_27, %c0_28] : memref<4x16x32xf32, #tpu.memory_space<vmem>>, vector<1x16x32xf32>
    %30 = vector.shape_cast %29 : vector<1x16x32xf32> to vector<16x32xf32>
    %cst_29 = arith.constant dense<0.000000e+00> : vector<512x32xf32>
    %31 = tpu.matmul %28, %30, %cst_29 {dimension_numbers = #tpu.dot_dimension_numbers<[1], [0], [0], [1], [0, 0, 1, 1], [], []>} : vector<512x16xf32>, vector<16x32xf32>, vector<512x32xf32> -> vector<512x32xf32>
    %c1_30 = arith.constant 1 : index
    %c0_31 = arith.constant 0 : index
    %32 = vector.load %arg14[%c1_30, %c0_31] : memref<529x16xf32, #tpu.memory_space<vmem>>, vector<512x16xf32>
    %c1_32 = arith.constant 1 : index
    %c0_33 = arith.constant 0 : index
    %c0_34 = arith.constant 0 : index
    %33 = vector.load %arg3[%c1_32, %c0_33, %c0_34] : memref<4x16x32xf32, #tpu.memory_space<vmem>>, vector<1x16x32xf32>
    %34 = vector.shape_cast %33 : vector<1x16x32xf32> to vector<16x32xf32>
    %cst_35 = arith.constant dense<0.000000e+00> : vector<512x32xf32>
    %35 = tpu.matmul %32, %34, %cst_35 {dimension_numbers = #tpu.dot_dimension_numbers<[1], [0], [0], [1], [0, 0, 1, 1], [], []>} : vector<512x16xf32>, vector<16x32xf32>, vector<512x32xf32> -> vector<512x32xf32>
    %36 = arith.addf %31, %35 : vector<512x32xf32>
    %c16 = arith.constant 16 : index
    %c0_36 = arith.constant 0 : index
    %37 = vector.load %arg14[%c16, %c0_36] : memref<529x16xf32, #tpu.memory_space<vmem>>, vector<512x16xf32>
    %c2_37 = arith.constant 2 : index
    %c0_38 = arith.constant 0 : index
    %c0_39 = arith.constant 0 : index
    %38 = vector.load %arg3[%c2_37, %c0_38, %c0_39] : memref<4x16x32xf32, #tpu.memory_space<vmem>>, vector<1x16x32xf32>
    %39 = vector.shape_cast %38 : vector<1x16x32xf32> to vector<16x32xf32>
    %cst_40 = arith.constant dense<0.000000e+00> : vector<512x32xf32>
    %40 = tpu.matmul %37, %39, %cst_40 {dimension_numbers = #tpu.dot_dimension_numbers<[1], [0], [0], [1], [0, 0, 1, 1], [], []>} : vector<512x16xf32>, vector<16x32xf32>, vector<512x32xf32> -> vector<512x32xf32>
    %41 = arith.addf %36, %40 : vector<512x32xf32>
    %c17 = arith.constant 17 : index
    %c0_41 = arith.constant 0 : index
    %42 = vector.load %arg14[%c17, %c0_41] : memref<529x16xf32, #tpu.memory_space<vmem>>, vector<512x16xf32>
    %c3_42 = arith.constant 3 : index
    %c0_43 = arith.constant 0 : index
    %c0_44 = arith.constant 0 : index
    %43 = vector.load %arg3[%c3_42, %c0_43, %c0_44] : memref<4x16x32xf32, #tpu.memory_space<vmem>>, vector<1x16x32xf32>
    %44 = vector.shape_cast %43 : vector<1x16x32xf32> to vector<16x32xf32>
    %cst_45 = arith.constant dense<0.000000e+00> : vector<512x32xf32>
    %45 = tpu.matmul %42, %44, %cst_45 {dimension_numbers = #tpu.dot_dimension_numbers<[1], [0], [0], [1], [0, 0, 1, 1], [], []>} : vector<512x16xf32>, vector<16x32xf32>, vector<512x32xf32> -> vector<512x32xf32>
    %46 = arith.addf %41, %45 : vector<512x32xf32>
    %c0_46 = arith.constant 0 : index
    %c0_47 = arith.constant 0 : index
    %47 = vector.load %arg4[%c0_46, %c0_47] : memref<1x32xf32, #tpu.memory_space<vmem>>, vector<1x32xf32>
    %48 = vector.broadcast %47 : vector<1x32xf32> to vector<512x32xf32>
    %49 = arith.addf %46, %48 : vector<512x32xf32>
    %cst_48 = arith.constant 0.000000e+00 : f32
    %50 = vector.broadcast %cst_48 : f32 to vector<512x32xf32>
    %51 = arith.maximumf %49, %50 : vector<512x32xf32>
    %c0_49 = arith.constant 0 : index
    %c0_50 = arith.constant 0 : index
    %52 = vector.load %arg15[%c0_49, %c0_50] : memref<512x32xf32, #tpu.memory_space<vmem>>, vector<512x32xf32>
    tpu.vector_store %arg15[%c0_49, %c0_50], %51 {strides = array<i32>} : memref<512x32xf32, #tpu.memory_space<vmem>>, vector<512x32xf32>,
    %c0_51 = arith.constant 0 : index
    %c0_52 = arith.constant 0 : index
    %53 = vector.load %arg15[%c0_51, %c0_52] : memref<512x32xf32, #tpu.memory_space<vmem>>, vector<495x32xf32>
    %c1_53 = arith.constant 1 : index
    %c0_54 = arith.constant 0 : index
    %54 = vector.load %arg15[%c1_53, %c0_54] : memref<512x32xf32, #tpu.memory_space<vmem>>, vector<495x32xf32>
    %55 = arith.maximumf %53, %54 : vector<495x32xf32>
    %c16_55 = arith.constant 16 : index
    %c0_56 = arith.constant 0 : index
    %56 = vector.load %arg15[%c16_55, %c0_56] : memref<512x32xf32, #tpu.memory_space<vmem>>, vector<495x32xf32>
    %c17_57 = arith.constant 17 : index
    %c0_58 = arith.constant 0 : index
    %57 = vector.load %arg15[%c17_57, %c0_58] : memref<512x32xf32, #tpu.memory_space<vmem>>, vector<495x32xf32>
    %58 = arith.maximumf %56, %57 : vector<495x32xf32>
    %59 = arith.maximumf %55, %58 : vector<495x32xf32>
    %c0_59 = arith.constant 0 : index
    %c0_60 = arith.constant 0 : index
    %60 = vector.load %arg16[%c0_59, %c0_60] : memref<495x32xf32, #tpu.memory_space<vmem>>, vector<495x32xf32>
    tpu.vector_store %arg16[%c0_59, %c0_60], %59 {strides = array<i32>} : memref<495x32xf32, #tpu.memory_space<vmem>>, vector<495x32xf32>,
    %c0_61 = arith.constant 0 : index
    %c0_62 = arith.constant 0 : index
    %61 = tpu.strided_load %arg16[%c0_61, %c0_62] {strides = array<i32: 2, 1>} : memref<495x32xf32, #tpu.memory_space<vmem>>, vector<7x32xf32>
    %c0_63 = arith.constant 0 : index
    %c0_64 = arith.constant 0 : index
    %62 = vector.load %arg17[%c0_63, %c0_64] : memref<106x32xf32, #tpu.memory_space<vmem>>, vector<7x32xf32>
    tpu.vector_store %arg17[%c0_63, %c0_64], %61 {strides = array<i32>} : memref<106x32xf32, #tpu.memory_space<vmem>>, vector<7x32xf32>,
    %c32 = arith.constant 32 : index
    %c0_65 = arith.constant 0 : index
    %63 = tpu.strided_load %arg16[%c32, %c0_65] {strides = array<i32: 2, 1>} : memref<495x32xf32, #tpu.memory_space<vmem>>, vector<7x32xf32>
    %c7 = arith.constant 7 : index
    %c0_66 = arith.constant 0 : index
    %64 = vector.load %arg17[%c7, %c0_66] : memref<106x32xf32, #tpu.memory_space<vmem>>, vector<7x32xf32>
    tpu.vector_store %arg17[%c7, %c0_66], %63 {strides = array<i32>} : memref<106x32xf32, #tpu.memory_space<vmem>>, vector<7x32xf32>,
    %c64 = arith.constant 64 : index
    %c0_67 = arith.constant 0 : index
    %65 = tpu.strided_load %arg16[%c64, %c0_67] {strides = array<i32: 2, 1>} : memref<495x32xf32, #tpu.memory_space<vmem>>, vector<7x32xf32>
    %c14 = arith.constant 14 : index
    %c0_68 = arith.constant 0 : index
    %66 = vector.load %arg17[%c14, %c0_68] : memref<106x32xf32, #tpu.memory_space<vmem>>, vector<7x32xf32>
    tpu.vector_store %arg17[%c14, %c0_68], %65 {strides = array<i32>} : memref<106x32xf32, #tpu.memory_space<vmem>>, vector<7x32xf32>,
    %c96 = arith.constant 96 : index
    %c0_69 = arith.constant 0 : index
    %67 = tpu.strided_load %arg16[%c96, %c0_69] {strides = array<i32: 2, 1>} : memref<495x32xf32, #tpu.memory_space<vmem>>, vector<7x32xf32>
    %c21 = arith.constant 21 : index
    %c0_70 = arith.constant 0 : index
    %68 = vector.load %arg17[%c21, %c0_70] : memref<106x32xf32, #tpu.memory_space<vmem>>, vector<7x32xf32>
    tpu.vector_store %arg17[%c21, %c0_70], %67 {strides = array<i32>} : memref<106x32xf32, #tpu.memory_space<vmem>>, vector<7x32xf32>,
    %c128 = arith.constant 128 : index
    %c0_71 = arith.constant 0 : index
    %69 = tpu.strided_load %arg16[%c128, %c0_71] {strides = array<i32: 2, 1>} : memref<495x32xf32, #tpu.memory_space<vmem>>, vector<7x32xf32>
    %c28 = arith.constant 28 : index
    %c0_72 = arith.constant 0 : index
    %70 = vector.load %arg17[%c28, %c0_72] : memref<106x32xf32, #tpu.memory_space<vmem>>, vector<7x32xf32>
    tpu.vector_store %arg17[%c28, %c0_72], %69 {strides = array<i32>} : memref<106x32xf32, #tpu.memory_space<vmem>>, vector<7x32xf32>,
    %c160 = arith.constant 160 : index
    %c0_73 = arith.constant 0 : index
    %71 = tpu.strided_load %arg16[%c160, %c0_73] {strides = array<i32: 2, 1>} : memref<495x32xf32, #tpu.memory_space<vmem>>, vector<7x32xf32>
    %c35 = arith.constant 35 : index
    %c0_74 = arith.constant 0 : index
    %72 = vector.load %arg17[%c35, %c0_74] : memref<106x32xf32, #tpu.memory_space<vmem>>, vector<7x32xf32>
    tpu.vector_store %arg17[%c35, %c0_74], %71 {strides = array<i32>} : memref<106x32xf32, #tpu.memory_space<vmem>>, vector<7x32xf32>,
    %c192 = arith.constant 192 : index
    %c0_75 = arith.constant 0 : index
    %73 = tpu.strided_load %arg16[%c192, %c0_75] {strides = array<i32: 2, 1>} : memref<495x32xf32, #tpu.memory_space<vmem>>, vector<7x32xf32>
    %c42 = arith.constant 42 : index
    %c0_76 = arith.constant 0 : index
    %74 = vector.load %arg17[%c42, %c0_76] : memref<106x32xf32, #tpu.memory_space<vmem>>, vector<7x32xf32>
    tpu.vector_store %arg17[%c42, %c0_76], %73 {strides = array<i32>} : memref<106x32xf32, #tpu.memory_space<vmem>>, vector<7x32xf32>,
    %c256 = arith.constant 256 : index
    %c0_77 = arith.constant 0 : index
    %75 = tpu.strided_load %arg16[%c256, %c0_77] {strides = array<i32: 2, 1>} : memref<495x32xf32, #tpu.memory_space<vmem>>, vector<7x32xf32>
    %c49 = arith.constant 49 : index
    %c0_78 = arith.constant 0 : index
    %76 = vector.load %arg17[%c49, %c0_78] : memref<106x32xf32, #tpu.memory_space<vmem>>, vector<7x32xf32>
    tpu.vector_store %arg17[%c49, %c0_78], %75 {strides = array<i32>} : memref<106x32xf32, #tpu.memory_space<vmem>>, vector<7x32xf32>,
    %c288 = arith.constant 288 : index
    %c0_79 = arith.constant 0 : index
    %77 = tpu.strided_load %arg16[%c288, %c0_79] {strides = array<i32: 2, 1>} : memref<495x32xf32, #tpu.memory_space<vmem>>, vector<7x32xf32>
    %c56 = arith.constant 56 : index
    %c0_80 = arith.constant 0 : index
    %78 = vector.load %arg17[%c56, %c0_80] : memref<106x32xf32, #tpu.memory_space<vmem>>, vector<7x32xf32>
    tpu.vector_store %arg17[%c56, %c0_80], %77 {strides = array<i32>} : memref<106x32xf32, #tpu.memory_space<vmem>>, vector<7x32xf32>,
    %c320 = arith.constant 320 : index
    %c0_81 = arith.constant 0 : index
    %79 = tpu.strided_load %arg16[%c320, %c0_81] {strides = array<i32: 2, 1>} : memref<495x32xf32, #tpu.memory_space<vmem>>, vector<7x32xf32>
    %c63 = arith.constant 63 : index
    %c0_82 = arith.constant 0 : index
    %80 = vector.load %arg17[%c63, %c0_82] : memref<106x32xf32, #tpu.memory_space<vmem>>, vector<7x32xf32>
    tpu.vector_store %arg17[%c63, %c0_82], %79 {strides = array<i32>} : memref<106x32xf32, #tpu.memory_space<vmem>>, vector<7x32xf32>,
    %c352 = arith.constant 352 : index
    %c0_83 = arith.constant 0 : index
    %81 = tpu.strided_load %arg16[%c352, %c0_83] {strides = array<i32: 2, 1>} : memref<495x32xf32, #tpu.memory_space<vmem>>, vector<7x32xf32>
    %c70 = arith.constant 70 : index
    %c0_84 = arith.constant 0 : index
    %82 = vector.load %arg17[%c70, %c0_84] : memref<106x32xf32, #tpu.memory_space<vmem>>, vector<7x32xf32>
    tpu.vector_store %arg17[%c70, %c0_84], %81 {strides = array<i32>} : memref<106x32xf32, #tpu.memory_space<vmem>>, vector<7x32xf32>,
    %c384 = arith.constant 384 : index
    %c0_85 = arith.constant 0 : index
    %83 = tpu.strided_load %arg16[%c384, %c0_85] {strides = array<i32: 2, 1>} : memref<495x32xf32, #tpu.memory_space<vmem>>, vector<7x32xf32>
    %c77 = arith.constant 77 : index
    %c0_86 = arith.constant 0 : index
    %84 = vector.load %arg17[%c77, %c0_86] : memref<106x32xf32, #tpu.memory_space<vmem>>, vector<7x32xf32>
    tpu.vector_store %arg17[%c77, %c0_86], %83 {strides = array<i32>} : memref<106x32xf32, #tpu.memory_space<vmem>>, vector<7x32xf32>,
    %c416 = arith.constant 416 : index
    %c0_87 = arith.constant 0 : index
    %85 = tpu.strided_load %arg16[%c416, %c0_87] {strides = array<i32: 2, 1>} : memref<495x32xf32, #tpu.memory_space<vmem>>, vector<7x32xf32>
    %c84 = arith.constant 84 : index
    %c0_88 = arith.constant 0 : index
    %86 = vector.load %arg17[%c84, %c0_88] : memref<106x32xf32, #tpu.memory_space<vmem>>, vector<7x32xf32>
    tpu.vector_store %arg17[%c84, %c0_88], %85 {strides = array<i32>} : memref<106x32xf32, #tpu.memory_space<vmem>>, vector<7x32xf32>,
    %c448 = arith.constant 448 : index
    %c0_89 = arith.constant 0 : index
    %87 = tpu.strided_load %arg16[%c448, %c0_89] {strides = array<i32: 2, 1>} : memref<495x32xf32, #tpu.memory_space<vmem>>, vector<7x32xf32>
    %c91 = arith.constant 91 : index
    %c0_90 = arith.constant 0 : index
    %88 = vector.load %arg17[%c91, %c0_90] : memref<106x32xf32, #tpu.memory_space<vmem>>, vector<7x32xf32>
    tpu.vector_store %arg17[%c91, %c0_90], %87 {strides = array<i32>} : memref<106x32xf32, #tpu.memory_space<vmem>>, vector<7x32xf32>,
    %c0_91 = arith.constant 0 : index
    %c0_92 = arith.constant 0 : index
    %89 = vector.load %arg17[%c0_91, %c0_92] : memref<106x32xf32, #tpu.memory_space<vmem>>, vector<98x32xf32>
    %c0_93 = arith.constant 0 : index
    %c0_94 = arith.constant 0 : index
    %c0_95 = arith.constant 0 : index
    %90 = vector.load %arg5[%c0_93, %c0_94, %c0_95] : memref<4x32x64xf32, #tpu.memory_space<vmem>>, vector<1x32x64xf32>
    %91 = vector.shape_cast %90 : vector<1x32x64xf32> to vector<32x64xf32>
    %cst_96 = arith.constant dense<0.000000e+00> : vector<98x64xf32>
    %92 = tpu.matmul %89, %91, %cst_96 {dimension_numbers = #tpu.dot_dimension_numbers<[1], [0], [0], [1], [0, 0, 1, 1], [], []>} : vector<98x32xf32>, vector<32x64xf32>, vector<98x64xf32> -> vector<98x64xf32>
    %c1_97 = arith.constant 1 : index
    %c0_98 = arith.constant 0 : index
    %93 = vector.load %arg17[%c1_97, %c0_98] : memref<106x32xf32, #tpu.memory_space<vmem>>, vector<98x32xf32>
    %c1_99 = arith.constant 1 : index
    %c0_100 = arith.constant 0 : index
    %c0_101 = arith.constant 0 : index
    %94 = vector.load %arg5[%c1_99, %c0_100, %c0_101] : memref<4x32x64xf32, #tpu.memory_space<vmem>>, vector<1x32x64xf32>
    %95 = vector.shape_cast %94 : vector<1x32x64xf32> to vector<32x64xf32>
    %cst_102 = arith.constant dense<0.000000e+00> : vector<98x64xf32>
    %96 = tpu.matmul %93, %95, %cst_102 {dimension_numbers = #tpu.dot_dimension_numbers<[1], [0], [0], [1], [0, 0, 1, 1], [], []>} : vector<98x32xf32>, vector<32x64xf32>, vector<98x64xf32> -> vector<98x64xf32>
    %97 = arith.addf %92, %96 : vector<98x64xf32>
    %c7_103 = arith.constant 7 : index
    %c0_104 = arith.constant 0 : index
    %98 = vector.load %arg17[%c7_103, %c0_104] : memref<106x32xf32, #tpu.memory_space<vmem>>, vector<98x32xf32>
    %c2_105 = arith.constant 2 : index
    %c0_106 = arith.constant 0 : index
    %c0_107 = arith.constant 0 : index
    %99 = vector.load %arg5[%c2_105, %c0_106, %c0_107] : memref<4x32x64xf32, #tpu.memory_space<vmem>>, vector<1x32x64xf32>
    %100 = vector.shape_cast %99 : vector<1x32x64xf32> to vector<32x64xf32>
    %cst_108 = arith.constant dense<0.000000e+00> : vector<98x64xf32>
    %101 = tpu.matmul %98, %100, %cst_108 {dimension_numbers = #tpu.dot_dimension_numbers<[1], [0], [0], [1], [0, 0, 1, 1], [], []>} : vector<98x32xf32>, vector<32x64xf32>, vector<98x64xf32> -> vector<98x64xf32>
    %102 = arith.addf %97, %101 : vector<98x64xf32>
    %c8 = arith.constant 8 : index
    %c0_109 = arith.constant 0 : index
    %103 = vector.load %arg17[%c8, %c0_109] : memref<106x32xf32, #tpu.memory_space<vmem>>, vector<98x32xf32>
    %c3_110 = arith.constant 3 : index
    %c0_111 = arith.constant 0 : index
    %c0_112 = arith.constant 0 : index
    %104 = vector.load %arg5[%c3_110, %c0_111, %c0_112] : memref<4x32x64xf32, #tpu.memory_space<vmem>>, vector<1x32x64xf32>
    %105 = vector.shape_cast %104 : vector<1x32x64xf32> to vector<32x64xf32>
    %cst_113 = arith.constant dense<0.000000e+00> : vector<98x64xf32>
    %106 = tpu.matmul %103, %105, %cst_113 {dimension_numbers = #tpu.dot_dimension_numbers<[1], [0], [0], [1], [0, 0, 1, 1], [], []>} : vector<98x32xf32>, vector<32x64xf32>, vector<98x64xf32> -> vector<98x64xf32>
    %107 = arith.addf %102, %106 : vector<98x64xf32>
    %c0_114 = arith.constant 0 : index
    %c0_115 = arith.constant 0 : index
    %108 = vector.load %arg6[%c0_114, %c0_115] : memref<1x64xf32, #tpu.memory_space<vmem>>, vector<1x64xf32>
    %109 = vector.broadcast %108 : vector<1x64xf32> to vector<98x64xf32>
    %110 = arith.addf %107, %109 : vector<98x64xf32>
    %cst_116 = arith.constant 0.000000e+00 : f32
    %111 = vector.broadcast %cst_116 : f32 to vector<98x64xf32>
    %112 = arith.maximumf %110, %111 : vector<98x64xf32>
    %c0_117 = arith.constant 0 : index
    %c0_118 = arith.constant 0 : index
    %113 = vector.load %arg18[%c0_117, %c0_118] : memref<98x64xf32, #tpu.memory_space<vmem>>, vector<98x64xf32>
    tpu.vector_store %arg18[%c0_117, %c0_118], %112 {strides = array<i32>} : memref<98x64xf32, #tpu.memory_space<vmem>>, vector<98x64xf32>,
    %c0_119 = arith.constant 0 : index
    %c0_120 = arith.constant 0 : index
    %114 = vector.load %arg18[%c0_119, %c0_120] : memref<98x64xf32, #tpu.memory_space<vmem>>, vector<90x64xf32>
    %c1_121 = arith.constant 1 : index
    %c0_122 = arith.constant 0 : index
    %115 = vector.load %arg18[%c1_121, %c0_122] : memref<98x64xf32, #tpu.memory_space<vmem>>, vector<90x64xf32>
    %116 = arith.maximumf %114, %115 : vector<90x64xf32>
    %c7_123 = arith.constant 7 : index
    %c0_124 = arith.constant 0 : index
    %117 = vector.load %arg18[%c7_123, %c0_124] : memref<98x64xf32, #tpu.memory_space<vmem>>, vector<90x64xf32>
    %c8_125 = arith.constant 8 : index
    %c0_126 = arith.constant 0 : index
    %118 = vector.load %arg18[%c8_125, %c0_126] : memref<98x64xf32, #tpu.memory_space<vmem>>, vector<90x64xf32>
    %119 = arith.maximumf %117, %118 : vector<90x64xf32>
    %120 = arith.maximumf %116, %119 : vector<90x64xf32>
    %c0_127 = arith.constant 0 : index
    %c0_128 = arith.constant 0 : index
    %121 = vector.load %arg19[%c0_127, %c0_128] : memref<90x64xf32, #tpu.memory_space<vmem>>, vector<90x64xf32>
    tpu.vector_store %arg19[%c0_127, %c0_128], %120 {strides = array<i32>} : memref<90x64xf32, #tpu.memory_space<vmem>>, vector<90x64xf32>,
    %c0_129 = arith.constant 0 : index
    %c0_130 = arith.constant 0 : index
    %122 = tpu.strided_load %arg19[%c0_129, %c0_130] {strides = array<i32: 2, 1>} : memref<90x64xf32, #tpu.memory_space<vmem>>, vector<3x64xf32>
    %c0_131 = arith.constant 0 : index
    %c0_132 = arith.constant 0 : index
    %123 = vector.load %arg20[%c0_131, %c0_132] : memref<22x64xf32, #tpu.memory_space<vmem>>, vector<3x64xf32>
    tpu.vector_store %arg20[%c0_131, %c0_132], %122 {strides = array<i32>} : memref<22x64xf32, #tpu.memory_space<vmem>>, vector<3x64xf32>,
    %c14_133 = arith.constant 14 : index
    %c0_134 = arith.constant 0 : index
    %124 = tpu.strided_load %arg19[%c14_133, %c0_134] {strides = array<i32: 2, 1>} : memref<90x64xf32, #tpu.memory_space<vmem>>, vector<3x64xf32>
    %c3_135 = arith.constant 3 : index
    %c0_136 = arith.constant 0 : index
    %125 = vector.load %arg20[%c3_135, %c0_136] : memref<22x64xf32, #tpu.memory_space<vmem>>, vector<3x64xf32>
    tpu.vector_store %arg20[%c3_135, %c0_136], %124 {strides = array<i32>} : memref<22x64xf32, #tpu.memory_space<vmem>>, vector<3x64xf32>,
    %c28_137 = arith.constant 28 : index
    %c0_138 = arith.constant 0 : index
    %126 = tpu.strided_load %arg19[%c28_137, %c0_138] {strides = array<i32: 2, 1>} : memref<90x64xf32, #tpu.memory_space<vmem>>, vector<3x64xf32>
    %c6 = arith.constant 6 : index
    %c0_139 = arith.constant 0 : index
    %127 = vector.load %arg20[%c6, %c0_139] : memref<22x64xf32, #tpu.memory_space<vmem>>, vector<3x64xf32>
    tpu.vector_store %arg20[%c6, %c0_139], %126 {strides = array<i32>} : memref<22x64xf32, #tpu.memory_space<vmem>>, vector<3x64xf32>,
    %c49_140 = arith.constant 49 : index
    %c0_141 = arith.constant 0 : index
    %128 = tpu.strided_load %arg19[%c49_140, %c0_141] {strides = array<i32: 2, 1>} : memref<90x64xf32, #tpu.memory_space<vmem>>, vector<3x64xf32>
    %c9 = arith.constant 9 : index
    %c0_142 = arith.constant 0 : index
    %129 = vector.load %arg20[%c9, %c0_142] : memref<22x64xf32, #tpu.memory_space<vmem>>, vector<3x64xf32>
    tpu.vector_store %arg20[%c9, %c0_142], %128 {strides = array<i32>} : memref<22x64xf32, #tpu.memory_space<vmem>>, vector<3x64xf32>,
    %c63_143 = arith.constant 63 : index
    %c0_144 = arith.constant 0 : index
    %130 = tpu.strided_load %arg19[%c63_143, %c0_144] {strides = array<i32: 2, 1>} : memref<90x64xf32, #tpu.memory_space<vmem>>, vector<3x64xf32>
    %c12 = arith.constant 12 : index
    %c0_145 = arith.constant 0 : index
    %131 = vector.load %arg20[%c12, %c0_145] : memref<22x64xf32, #tpu.memory_space<vmem>>, vector<3x64xf32>
    tpu.vector_store %arg20[%c12, %c0_145], %130 {strides = array<i32>} : memref<22x64xf32, #tpu.memory_space<vmem>>, vector<3x64xf32>,
    %c77_146 = arith.constant 77 : index
    %c0_147 = arith.constant 0 : index
    %132 = tpu.strided_load %arg19[%c77_146, %c0_147] {strides = array<i32: 2, 1>} : memref<90x64xf32, #tpu.memory_space<vmem>>, vector<3x64xf32>
    %c15 = arith.constant 15 : index
    %c0_148 = arith.constant 0 : index
    %133 = vector.load %arg20[%c15, %c0_148] : memref<22x64xf32, #tpu.memory_space<vmem>>, vector<3x64xf32>
    tpu.vector_store %arg20[%c15, %c0_148], %132 {strides = array<i32>} : memref<22x64xf32, #tpu.memory_space<vmem>>, vector<3x64xf32>,
    %c0_149 = arith.constant 0 : index
    %c0_150 = arith.constant 0 : index
    %134 = vector.load %arg20[%c0_149, %c0_150] : memref<22x64xf32, #tpu.memory_space<vmem>>, vector<18x64xf32>
    %c0_151 = arith.constant 0 : index
    %c0_152 = arith.constant 0 : index
    %c0_153 = arith.constant 0 : index
    %135 = vector.load %arg7[%c0_151, %c0_152, %c0_153] : memref<4x64x128xf32, #tpu.memory_space<vmem>>, vector<1x64x128xf32>
    %136 = vector.shape_cast %135 : vector<1x64x128xf32> to vector<64x128xf32>
    %cst_154 = arith.constant dense<0.000000e+00> : vector<18x128xf32>
    %137 = tpu.matmul %134, %136, %cst_154 {dimension_numbers = #tpu.dot_dimension_numbers<[1], [0], [0], [1], [0, 0, 1, 1], [], []>} : vector<18x64xf32>, vector<64x128xf32>, vector<18x128xf32> -> vector<18x128xf32>
    %c1_155 = arith.constant 1 : index
    %c0_156 = arith.constant 0 : index
    %138 = vector.load %arg20[%c1_155, %c0_156] : memref<22x64xf32, #tpu.memory_space<vmem>>, vector<18x64xf32>
    %c1_157 = arith.constant 1 : index
    %c0_158 = arith.constant 0 : index
    %c0_159 = arith.constant 0 : index
    %139 = vector.load %arg7[%c1_157, %c0_158, %c0_159] : memref<4x64x128xf32, #tpu.memory_space<vmem>>, vector<1x64x128xf32>
    %140 = vector.shape_cast %139 : vector<1x64x128xf32> to vector<64x128xf32>
    %cst_160 = arith.constant dense<0.000000e+00> : vector<18x128xf32>
    %141 = tpu.matmul %138, %140, %cst_160 {dimension_numbers = #tpu.dot_dimension_numbers<[1], [0], [0], [1], [0, 0, 1, 1], [], []>} : vector<18x64xf32>, vector<64x128xf32>, vector<18x128xf32> -> vector<18x128xf32>
    %142 = arith.addf %137, %141 : vector<18x128xf32>
    %c3_161 = arith.constant 3 : index
    %c0_162 = arith.constant 0 : index
    %143 = vector.load %arg20[%c3_161, %c0_162] : memref<22x64xf32, #tpu.memory_space<vmem>>, vector<18x64xf32>
    %c2_163 = arith.constant 2 : index
    %c0_164 = arith.constant 0 : index
    %c0_165 = arith.constant 0 : index
    %144 = vector.load %arg7[%c2_163, %c0_164, %c0_165] : memref<4x64x128xf32, #tpu.memory_space<vmem>>, vector<1x64x128xf32>
    %145 = vector.shape_cast %144 : vector<1x64x128xf32> to vector<64x128xf32>
    %cst_166 = arith.constant dense<0.000000e+00> : vector<18x128xf32>
    %146 = tpu.matmul %143, %145, %cst_166 {dimension_numbers = #tpu.dot_dimension_numbers<[1], [0], [0], [1], [0, 0, 1, 1], [], []>} : vector<18x64xf32>, vector<64x128xf32>, vector<18x128xf32> -> vector<18x128xf32>
    %147 = arith.addf %142, %146 : vector<18x128xf32>
    %c4 = arith.constant 4 : index
    %c0_167 = arith.constant 0 : index
    %148 = vector.load %arg20[%c4, %c0_167] : memref<22x64xf32, #tpu.memory_space<vmem>>, vector<18x64xf32>
    %c3_168 = arith.constant 3 : index
    %c0_169 = arith.constant 0 : index
    %c0_170 = arith.constant 0 : index
    %149 = vector.load %arg7[%c3_168, %c0_169, %c0_170] : memref<4x64x128xf32, #tpu.memory_space<vmem>>, vector<1x64x128xf32>
    %150 = vector.shape_cast %149 : vector<1x64x128xf32> to vector<64x128xf32>
    %cst_171 = arith.constant dense<0.000000e+00> : vector<18x128xf32>
    %151 = tpu.matmul %148, %150, %cst_171 {dimension_numbers = #tpu.dot_dimension_numbers<[1], [0], [0], [1], [0, 0, 1, 1], [], []>} : vector<18x64xf32>, vector<64x128xf32>, vector<18x128xf32> -> vector<18x128xf32>
    %152 = arith.addf %147, %151 : vector<18x128xf32>
    %c0_172 = arith.constant 0 : index
    %c0_173 = arith.constant 0 : index
    %153 = vector.load %arg8[%c0_172, %c0_173] : memref<1x128xf32, #tpu.memory_space<vmem>>, vector<1x128xf32>
    %154 = vector.broadcast %153 : vector<1x128xf32> to vector<18x128xf32>
    %155 = arith.addf %152, %154 : vector<18x128xf32>
    %cst_174 = arith.constant 0.000000e+00 : f32
    %156 = vector.broadcast %cst_174 : f32 to vector<18x128xf32>
    %157 = arith.maximumf %155, %156 : vector<18x128xf32>
    %c0_175 = arith.constant 0 : index
    %c0_176 = arith.constant 0 : index
    %158 = vector.load %arg21[%c0_175, %c0_176] : memref<18x128xf32, #tpu.memory_space<vmem>>, vector<18x128xf32>
    tpu.vector_store %arg21[%c0_175, %c0_176], %157 {strides = array<i32>} : memref<18x128xf32, #tpu.memory_space<vmem>>, vector<18x128xf32>,
    %c0_177 = arith.constant 0 : index
    %c0_178 = arith.constant 0 : index
    %159 = vector.load %arg21[%c0_177, %c0_178] : memref<18x128xf32, #tpu.memory_space<vmem>>, vector<14x128xf32>
    %c1_179 = arith.constant 1 : index
    %c0_180 = arith.constant 0 : index
    %160 = vector.load %arg21[%c1_179, %c0_180] : memref<18x128xf32, #tpu.memory_space<vmem>>, vector<14x128xf32>
    %161 = arith.maximumf %159, %160 : vector<14x128xf32>
    %c3_181 = arith.constant 3 : index
    %c0_182 = arith.constant 0 : index
    %162 = vector.load %arg21[%c3_181, %c0_182] : memref<18x128xf32, #tpu.memory_space<vmem>>, vector<14x128xf32>
    %c4_183 = arith.constant 4 : index
    %c0_184 = arith.constant 0 : index
    %163 = vector.load %arg21[%c4_183, %c0_184] : memref<18x128xf32, #tpu.memory_space<vmem>>, vector<14x128xf32>
    %164 = arith.maximumf %162, %163 : vector<14x128xf32>
    %165 = arith.maximumf %161, %164 : vector<14x128xf32>
    %c0_185 = arith.constant 0 : index
    %c0_186 = arith.constant 0 : index
    %166 = vector.load %arg22[%c0_185, %c0_186] : memref<14x128xf32, #tpu.memory_space<vmem>>, vector<14x128xf32>
    tpu.vector_store %arg22[%c0_185, %c0_186], %165 {strides = array<i32>} : memref<14x128xf32, #tpu.memory_space<vmem>>, vector<14x128xf32>,
    %c0_187 = arith.constant 0 : index
    %c0_188 = arith.constant 0 : index
    %167 = vector.load %arg22[%c0_187, %c0_188] : memref<14x128xf32, #tpu.memory_space<vmem>>, vector<1x128xf32>
    %c0_189 = arith.constant 0 : index
    %c0_190 = arith.constant 0 : index
    %168 = vector.load %arg23[%c0_189, %c0_190] : memref<2x128xf32, #tpu.memory_space<vmem>>, vector<1x128xf32>
    tpu.vector_store %arg23[%c0_189, %c0_190], %167 {strides = array<i32>} : memref<2x128xf32, #tpu.memory_space<vmem>>, vector<1x128xf32>,
    %c9_191 = arith.constant 9 : index
    %c0_192 = arith.constant 0 : index
    %169 = vector.load %arg22[%c9_191, %c0_192] : memref<14x128xf32, #tpu.memory_space<vmem>>, vector<1x128xf32>
    %c1_193 = arith.constant 1 : index
    %c0_194 = arith.constant 0 : index
    %170 = vector.load %arg23[%c1_193, %c0_194] : memref<2x128xf32, #tpu.memory_space<vmem>>, vector<1x128xf32>
    tpu.vector_store %arg23[%c1_193, %c0_194], %169 {strides = array<i32>} : memref<2x128xf32, #tpu.memory_space<vmem>>, vector<1x128xf32>,
    %c0_195 = arith.constant 0 : index
    %c0_196 = arith.constant 0 : index
    %171 = vector.load %arg23[%c0_195, %c0_196] : memref<2x128xf32, #tpu.memory_space<vmem>>, vector<2x128xf32>
    %c0_197 = arith.constant 0 : index
    %c0_198 = arith.constant 0 : index
    %172 = vector.load %arg9[%c0_197, %c0_198] : memref<128x64xf32, #tpu.memory_space<vmem>>, vector<128x64xf32>
    %cst_199 = arith.constant dense<0.000000e+00> : vector<2x64xf32>
    %173 = tpu.matmul %171, %172, %cst_199 {dimension_numbers = #tpu.dot_dimension_numbers<[1], [0], [0], [1], [0, 0, 1, 1], [], []>} : vector<2x128xf32>, vector<128x64xf32>, vector<2x64xf32> -> vector<2x64xf32>
    %c0_200 = arith.constant 0 : index
    %c0_201 = arith.constant 0 : index
    %174 = vector.load %arg10[%c0_200, %c0_201] : memref<1x64xf32, #tpu.memory_space<vmem>>, vector<1x64xf32>
    %175 = vector.broadcast %174 : vector<1x64xf32> to vector<2x64xf32>
    %176 = arith.addf %173, %175 : vector<2x64xf32>
    %c0_202 = arith.constant 0 : index
    %c0_203 = arith.constant 0 : index
    %177 = vector.load %arg11[%c0_202, %c0_203] : memref<64x6xf32, #tpu.memory_space<vmem>>, vector<64x6xf32>
    %cst_204 = arith.constant dense<0.000000e+00> : vector<2x6xf32>
    %178 = tpu.matmul %176, %177, %cst_204 {dimension_numbers = #tpu.dot_dimension_numbers<[1], [0], [0], [1], [0, 0, 1, 1], [], []>} : vector<2x64xf32>, vector<64x6xf32>, vector<2x6xf32> -> vector<2x6xf32>
    %c0_205 = arith.constant 0 : index
    %c0_206 = arith.constant 0 : index
    %179 = vector.load %arg12[%c0_205, %c0_206] : memref<1x6xf32, #tpu.memory_space<vmem>>, vector<1x6xf32>
    %180 = vector.broadcast %179 : vector<1x6xf32> to vector<2x6xf32>
    %181 = arith.addf %178, %180 : vector<2x6xf32>
    %c0_207 = arith.constant 0 : index
    %c0_208 = arith.constant 0 : index
    %182 = vector.load %arg13[%c0_207, %c0_208] : memref<2x6xf32, #tpu.memory_space<vmem>>, vector<2x6xf32>
    tpu.vector_store %arg13[%c0_207, %c0_208], %181 {strides = array<i32>} : memref<2x6xf32, #tpu.memory_space<vmem>>, vector<2x6xf32>,
    return
  }
}

</mosaic_0001>

<llo_original>
// kernel: spt_cnn_forward.1
$region0: #{spt_cnn_forward.1}
  #allocation0 [shape = 'u32[]', space=smem, size = 0x4, offset = 0x4, fixed_abs, tag = 'smem constant byte address 0x4 - core index']
  #allocation1 [shape = 'u32[144,128]{1,0:T(1,128)}', space=vmem, size = 0x12000, scoped, tag = 'internal scratch']
  #allocation2 [shape = 'f32[529,16]{1,0:T(8,128)}', space=vmem, size = 0x43000, scoped, tag = 'scratch operand']
  #allocation3 [shape = 'f32[512,32]{1,0:T(8,128)}', space=vmem, size = 0x40000, scoped, tag = 'scratch operand']
  #allocation4 [shape = 'f32[495,32]{1,0:T(8,128)}', space=vmem, size = 0x3e000, scoped, tag = 'scratch operand']
  #allocation5 [shape = 'f32[106,32]{1,0:T(8,128)}', space=vmem, size = 0xe000, scoped, tag = 'scratch operand']
  #allocation6 [shape = 'f32[98,64]{1,0:T(8,128)}', space=vmem, size = 0xd000, scoped, tag = 'scratch operand']
  #allocation7 [shape = 'f32[90,64]{1,0:T(8,128)}', space=vmem, size = 0xc000, scoped, tag = 'scratch operand']
  #allocation8 [shape = 'f32[22,64]{1,0:T(8,128)}', space=vmem, size = 0x3000, scoped, tag = 'scratch operand']
  #allocation9 [shape = 'f32[18,128]{1,0:T(8,128)}', space=vmem, size = 0x3000, scoped, tag = 'scratch operand']
  #allocation10 [shape = 'f32[14,128]{1,0:T(8,128)}', space=vmem, size = 0x2000, scoped, tag = 'scratch operand']
  #allocation11 [shape = 'f32[2,128]{1,0:T(2,128)}', space=vmem, size = 0x400, scoped, tag = 'scratch operand']
  %s0 = inlined_call_operand.vmem [shape: f32[4,512,8], index: 0, kind: input, shape index: {}]
  %s1 = inlined_call_operand.vmem [shape: f32[8,16], index: 1, kind: input, shape index: {}]
  %s2 = inlined_call_operand.vmem [shape: f32[1,16], index: 2, kind: input, shape index: {}]
  %s3 = inlined_call_operand.vmem [shape: f32[4,16,32], index: 3, kind: input, shape index: {}]
  %s4 = inlined_call_operand.vmem [shape: f32[1,32], index: 4, kind: input, shape index: {}]
  %s5 = inlined_call_operand.vmem [shape: f32[4,32,64], index: 5, kind: input, shape index: {}]
  %s6 = inlined_call_operand.vmem [shape: f32[1,64], index: 6, kind: input, shape index: {}]
  %s7 = inlined_call_operand.vmem [shape: f32[4,64,128], index: 7, kind: input, shape index: {}]
  %s8 = inlined_call_operand.vmem [shape: f32[1,128], index: 8, kind: input, shape index: {}]
  %s9 = inlined_call_operand.vmem [shape: f32[128,64], index: 9, kind: input, shape index: {}]
  %s10 = inlined_call_operand.vmem [shape: f32[1,64], index: 10, kind: input, shape index: {}]
  %s11 = inlined_call_operand.vmem [shape: f32[64,6], index: 11, kind: input, shape index: {}]
  %s12 = inlined_call_operand.vmem [shape: f32[1,6], index: 12, kind: input, shape index: {}]
  %s13 = inlined_call_operand.hbm [shape: f32[2,6], index: 13, kind: output, shape index: {}]
  %s14 = sld [smem:[#allocation0]]
  $region62: #{spt_cnn_forward.1} parent=0
    _
  %s16 = ssub.s32 1, %s14
  %s17 = scalar_select 0, %s16, %s14
  $region1: #{spt_cnn_forward.1} parent=0
    #allocation12 [shape = 'u8[1024]{0}', space=vmem, size = 0x400, scoped, tag = 'output window, operand 0, single buffered']
    #allocation13 [shape = 's32[1]{0}', space=sflag, size = 0x4, scoped, tag = 'scoped memory for spt_cnn_forward.1']
    %18 = vsyncpa [#allocation13], 0
    // Predicated region
    $region2: #{spt_cnn_forward.1} parent=1 // pred_check
      _
    $region3: #{spt_cnn_forward.1} parent=1 // pred_check_branch
      %20 = sbr.rel (0) target = $region5
    $region4: #{spt_cnn_forward.1} parent=1 // pred_region
      _
    $region5: #{spt_cnn_forward.1} parent=1 // pred_fallthru
      _
    // Predicated region
    $region6: #{spt_cnn_forward.1} parent=1 // pred_check
      _
    $region7: #{spt_cnn_forward.1} parent=1 // pred_check_branch
      %22 = sbr.rel (0) target = $region9
    $region8: #{spt_cnn_forward.1} parent=1 // pred_region
      _
    $region9: #{spt_cnn_forward.1} parent=1 // pred_fallthru
      _
    // Predicated region
    $region10: #{spt_cnn_forward.1} parent=1 // pred_check
      _
    $region11: #{spt_cnn_forward.1} parent=1 // pred_check_branch
      %24 = sbr.rel (0) target = $region13
    $region12: #{spt_cnn_forward.1} parent=1 // pred_region
      _
    $region13: #{spt_cnn_forward.1} parent=1 // pred_fallthru
      _
    // Predicated region
    $region14: #{spt_cnn_forward.1} parent=1 // pred_check
      _
    $region15: #{spt_cnn_forward.1} parent=1 // pred_check_branch
      %26 = sbr.rel (0) target = $region17
    $region16: #{spt_cnn_forward.1} parent=1 // pred_region
      _
    $region17: #{spt_cnn_forward.1} parent=1 // pred_fallthru
      _
    // Predicated region
    $region18: #{spt_cnn_forward.1} parent=1 // pred_check
      _
    $region19: #{spt_cnn_forward.1} parent=1 // pred_check_branch
      %28 = sbr.rel (0) target = $region21
    $region20: #{spt_cnn_forward.1} parent=1 // pred_region
      _
    $region21: #{spt_cnn_forward.1} parent=1 // pred_fallthru
      _
    // Predicated region
    $region22: #{spt_cnn_forward.1} parent=1 // pred_check
      _
    $region23: #{spt_cnn_forward.1} parent=1 // pred_check_branch
      %30 = sbr.rel (0) target = $region25
    $region24: #{spt_cnn_forward.1} parent=1 // pred_region
      _
    $region25: #{spt_cnn_forward.1} parent=1 // pred_fallthru
      _
    // Predicated region
    $region26: #{spt_cnn_forward.1} parent=1 // pred_check
      _
    $region27: #{spt_cnn_forward.1} parent=1 // pred_check_branch
      %32 = sbr.rel (0) target = $region29
    $region28: #{spt_cnn_forward.1} parent=1 // pred_region
      _
    $region29: #{spt_cnn_forward.1} parent=1 // pred_fallthru
      _
    // Predicated region
    $region30: #{spt_cnn_forward.1} parent=1 // pred_check
      _
    $region31: #{spt_cnn_forward.1} parent=1 // pred_check_branch
      %34 = sbr.rel (0) target = $region33
    $region32: #{spt_cnn_forward.1} parent=1 // pred_region
      _
    $region33: #{spt_cnn_forward.1} parent=1 // pred_fallthru
      _
    // Predicated region
    $region34: #{spt_cnn_forward.1} parent=1 // pred_check
      _
    $region35: #{spt_cnn_forward.1} parent=1 // pred_check_branch
      %36 = sbr.rel (0) target = $region37
    $region36: #{spt_cnn_forward.1} parent=1 // pred_region
      _
    $region37: #{spt_cnn_forward.1} parent=1 // pred_fallthru
      _
    // Predicated region
    $region38: #{spt_cnn_forward.1} parent=1 // pred_check
      _
    $region39: #{spt_cnn_forward.1} parent=1 // pred_check_branch
      %38 = sbr.rel (0) target = $region41
    $region40: #{spt_cnn_forward.1} parent=1 // pred_region
      _
    $region41: #{spt_cnn_forward.1} parent=1 // pred_fallthru
      _
    // Predicated region
    $region42: #{spt_cnn_forward.1} parent=1 // pred_check
      _
    $region43: #{spt_cnn_forward.1} parent=1 // pred_check_branch
      %40 = sbr.rel (0) target = $region45
    $region44: #{spt_cnn_forward.1} parent=1 // pred_region
      _
    $region45: #{spt_cnn_forward.1} parent=1 // pred_fallthru
      _
    // Predicated region
    $region46: #{spt_cnn_forward.1} parent=1 // pred_check
      _
    $region47: #{spt_cnn_forward.1} parent=1 // pred_check_branch
      %42 = sbr.rel (0) target = $region49
    $region48: #{spt_cnn_forward.1} parent=1 // pred_region
      _
    $region49: #{spt_cnn_forward.1} parent=1 // pred_fallthru
      _
    // Predicated region
    $region50: #{spt_cnn_forward.1} parent=1 // pred_check
      _
    $region51: #{spt_cnn_forward.1} parent=1 // pred_check_branch
      %44 = sbr.rel (0) target = $region53
    $region52: #{spt_cnn_forward.1} parent=1 // pred_region
      _
    $region53: #{spt_cnn_forward.1} parent=1 // pred_fallthru
      _
    %v45 = vld [vmem:[%s1] sm:$0xff]
    %v46 = vld [vmem:[%s0] sm:$0xff]
    %v47 = vld [vmem:[%s0 + $0x8] sm:$0xff]
    %v48 = vld [vmem:[%s0 + $0x10] sm:$0xff]
    %v49 = vld [vmem:[%s0 + $0x18] sm:$0xff]
    %v50 = vld [vmem:[%s0 + $0x20] sm:$0xff]
    %v51 = vld [vmem:[%s0 + $0x28] sm:$0xff]
    %v52 = vld [vmem:[%s0 + $0x30] sm:$0xff]
    %v53 = vld [vmem:[%s0 + $0x38] sm:$0xff]
    %v54 = vld [vmem:[%s0 + $0x40] sm:$0xff]
    %v55 = vld [vmem:[%s0 + $0x48] sm:$0xff]
    %v56 = vld [vmem:[%s0 + $0x50] sm:$0xff]
    %v57 = vld [vmem:[%s0 + $0x58] sm:$0xff]
    %v58 = vld [vmem:[%s0 + $0x60] sm:$0xff]
    %v59 = vld [vmem:[%s0 + $0x68] sm:$0xff]
    %v60 = vld [vmem:[%s0 + $0x70] sm:$0xff]
    %v61 = vld [vmem:[%s0 + $0x78] sm:$0xff]
    %v62 = vld [vmem:[%s0 + $0x80] sm:$0xff]
    %v63 = vld [vmem:[%s0 + $0x88] sm:$0xff]
    %v64 = vld [vmem:[%s0 + $0x90] sm:$0xff]
    %v65 = vld [vmem:[%s0 + $0x98] sm:$0xff]
    %v66 = vld [vmem:[%s0 + $0xa0] sm:$0xff]
    %v67 = vld [vmem:[%s0 + $0xa8] sm:$0xff]
    %v68 = vld [vmem:[%s0 + $0xb0] sm:$0xff]
    %v69 = vld [vmem:[%s0 + $0xb8] sm:$0xff]
    %v70 = vld [vmem:[%s0 + $0xc0] sm:$0xff]
    %v71 = vld [vmem:[%s0 + $0xc8] sm:$0xff]
    %v72 = vld [vmem:[%s0 + $0xd0] sm:$0xff]
    %v73 = vld [vmem:[%s0 + $0xd8] sm:$0xff]
    %v74 = vld [vmem:[%s0 + $0xe0] sm:$0xff]
    %v75 = vld [vmem:[%s0 + $0xe8] sm:$0xff]
    %v76 = vld [vmem:[%s0 + $0xf0] sm:$0xff]
    %v77 = vld [vmem:[%s0 + $0xf8] sm:$0xff]
    %v78 = vld [vmem:[%s0 + $0x100] sm:$0xff]
    %v79 = vld [vmem:[%s0 + $0x108] sm:$0xff]
    %v80 = vld [vmem:[%s0 + $0x110] sm:$0xff]
    %v81 = vld [vmem:[%s0 + $0x118] sm:$0xff]
    %v82 = vld [vmem:[%s0 + $0x120] sm:$0xff]
    %v83 = vld [vmem:[%s0 + $0x128] sm:$0xff]
    %v84 = vld [vmem:[%s0 + $0x130] sm:$0xff]
    %v85 = vld [vmem:[%s0 + $0x138] sm:$0xff]
    %v86 = vld [vmem:[%s0 + $0x140] sm:$0xff]
    %v87 = vld [vmem:[%s0 + $0x148] sm:$0xff]
    %v88 = vld [vmem:[%s0 + $0x150] sm:$0xff]
    %v89 = vld [vmem:[%s0 + $0x158] sm:$0xff]
    %v90 = vld [vmem:[%s0 + $0x160] sm:$0xff]
    %v91 = vld [vmem:[%s0 + $0x168] sm:$0xff]
    %v92 = vld [vmem:[%s0 + $0x170] sm:$0xff]
    %v93 = vld [vmem:[%s0 + $0x178] sm:$0xff]
    %v94 = vld [vmem:[%s0 + $0x180] sm:$0xff]
    %v95 = vld [vmem:[%s0 + $0x188] sm:$0xff]
    %v96 = vld [vmem:[%s0 + $0x190] sm:$0xff]
    %v97 = vld [vmem:[%s0 + $0x198] sm:$0xff]
    %v98 = vld [vmem:[%s0 + $0x1a0] sm:$0xff]
    %v99 = vld [vmem:[%s0 + $0x1a8] sm:$0xff]
    %v100 = vld [vmem:[%s0 + $0x1b0] sm:$0xff]
    %v101 = vld [vmem:[%s0 + $0x1b8] sm:$0xff]
    %v102 = vld [vmem:[%s0 + $0x1c0] sm:$0xff]
    %v103 = vld [vmem:[%s0 + $0x1c8] sm:$0xff]
    %v104 = vld [vmem:[%s0 + $0x1d0] sm:$0xff]
    %v105 = vld [vmem:[%s0 + $0x1d8] sm:$0xff]
    %v106 = vld [vmem:[%s0 + $0x1e0] sm:$0xff]
    %v107 = vld [vmem:[%s0 + $0x1e8] sm:$0xff]
    %v108 = vld [vmem:[%s0 + $0x1f0] sm:$0xff]
    %v109 = vld [vmem:[%s0 + $0x1f8] sm:$0xff]
    %vm110 = vcmask 64512
    %v112 = vsel %vm110, %v46, 0
    %v115 = vsel %vm110, %v47, 0
    %v118 = vsel %vm110, %v48, 0
    %v121 = vsel %vm110, %v49, 0
    %v124 = vsel %vm110, %v50, 0
    %v127 = vsel %vm110, %v51, 0
    %v130 = vsel %vm110, %v52, 0
    %v133 = vsel %vm110, %v53, 0
    %v136 = vsel %vm110, %v54, 0
    %v139 = vsel %vm110, %v55, 0
    %v142 = vsel %vm110, %v56, 0
    %v145 = vsel %vm110, %v57, 0
    %v148 = vsel %vm110, %v58, 0
    %v151 = vsel %vm110, %v59, 0
    %v154 = vsel %vm110, %v60, 0
    %v157 = vsel %vm110, %v61, 0
    %v160 = vsel %vm110, %v62, 0
    %v163 = vsel %vm110, %v63, 0
    %v166 = vsel %vm110, %v64, 0
    %v169 = vsel %vm110, %v65, 0
    %v172 = vsel %vm110, %v66, 0
    %v175 = vsel %vm110, %v67, 0
    %v178 = vsel %vm110, %v68, 0
    %v181 = vsel %vm110, %v69, 0
    %v184 = vsel %vm110, %v70, 0
    %v187 = vsel %vm110, %v71, 0
    %v190 = vsel %vm110, %v72, 0
    %v193 = vsel %vm110, %v73, 0
    %v196 = vsel %vm110, %v74, 0
    %v199 = vsel %vm110, %v75, 0
    %v202 = vsel %vm110, %v76, 0
    %v205 = vsel %vm110, %v77, 0
    %v208 = vsel %vm110, %v78, 0
    %v211 = vsel %vm110, %v79, 0
    %v214 = vsel %vm110, %v80, 0
    %v217 = vsel %vm110, %v81, 0
    %v220 = vsel %vm110, %v82, 0
    %v223 = vsel %vm110, %v83, 0
    %v226 = vsel %vm110, %v84, 0
    %v229 = vsel %vm110, %v85, 0
    %v232 = vsel %vm110, %v86, 0
    %v235 = vsel %vm110, %v87, 0
    %v238 = vsel %vm110, %v88, 0
    %v241 = vsel %vm110, %v89, 0
    %v244 = vsel %vm110, %v90, 0
    %v247 = vsel %vm110, %v91, 0
    %v250 = vsel %vm110, %v92, 0
    %v253 = vsel %vm110, %v93, 0
    %v256 = vsel %vm110, %v94, 0
    %v259 = vsel %vm110, %v95, 0
    %v262 = vsel %vm110, %v96, 0
    %v265 = vsel %vm110, %v97, 0
    %v268 = vsel %vm110, %v98, 0
    %v271 = vsel %vm110, %v99, 0
    %v274 = vsel %vm110, %v100, 0
    %v277 = vsel %vm110, %v101, 0
    %v280 = vsel %vm110, %v102, 0
    %v283 = vsel %vm110, %v103, 0
    %v286 = vsel %vm110, %v104, 0
    %v289 = vsel %vm110, %v105, 0
    %v292 = vsel %vm110, %v106, 0
    %v295 = vsel %vm110, %v107, 0
    %v298 = vsel %vm110, %v108, 0
    %v301 = vsel %vm110, %v109, 0
    %303 = vmatprep.subr.mxu0 0.0
    %304 = vmatpush1.msra.mxu0 %v45
    %305 = vmatprep.subr.mxu0 0.0
    %306 = vmatpush1.msra.mxu0 0.0
    %307 = vmatprep.subr.mxu0 0.0
    %308 = vmatpush1.msra.mxu0 0.0
    %309 = vmatprep.subr.mxu0 0.0
    %310 = vmatpush1.msra.mxu0 0.0
    %311 = vmatprep.subr.mxu0 0.0
    %312 = vmatpush1.msra.mxu0 0.0
    %313 = vmatprep.subr.mxu0 0.0
    %314 = vmatpush1.msra.mxu0 0.0
    %315 = vmatprep.subr.mxu0 0.0
    %316 = vmatpush1.msra.mxu0 0.0
    %317 = vmatprep.subr.mxu0 0.0
    %318 = vmatpush1.msra.mxu0 0.0
    %319 = vmatprep.subr.mxu0 0.0
    %320 = vmatpush1.msra.mxu0 0.0
    %321 = vmatprep.subr.mxu0 0.0
    %322 = vmatpush1.msra.mxu0 0.0
    %323 = vmatprep.subr.mxu0 0.0
    %324 = vmatpush1.msra.mxu0 0.0
    %325 = vmatprep.subr.mxu0 0.0
    %326 = vmatpush1.msra.mxu0 0.0
    %327 = vmatprep.subr.mxu0 0.0
    %328 = vmatpush1.msra.mxu0 0.0
    %329 = vmatprep.subr.mxu0 0.0
    %330 = vmatpush1.msra.mxu0 0.0
    %331 = vmatprep.subr.mxu0 0.0
    %332 = vmatpush1.msra.mxu0 0.0
    %333 = vmatprep.subr.mxu0 0.0
    %334 = vmatpush1.msra.mxu0 0.0
    %335 = vmatprep.subr.mxu0 0.0
    %336 = vmatpush1.msra.mxu0 0.0
    %337 = vmatprep.subr.mxu0 0.0
    %338 = vmatpush1.msra.mxu0 0.0
    %339 = vmatprep.subr.mxu0 0.0
    %340 = vmatpush1.msra.mxu0 0.0
    %341 = vmatprep.subr.mxu0 0.0
    %342 = vmatpush1.msra.mxu0 0.0
    %343 = vmatprep.subr.mxu0 0.0
    %344 = vmatpush1.msra.mxu0 0.0
    %345 = vmatprep.subr.mxu0 0.0
    %346 = vmatpush1.msra.mxu0 0.0
    %347 = vmatprep.subr.mxu0 0.0
    %348 = vmatpush1.msra.mxu0 0.0
    %349 = vmatprep.subr.mxu0 0.0
    %350 = vmatpush1.msra.mxu0 0.0
    %351 = vmatprep.subr.mxu0 0.0
    %352 = vmatpush1.msra.mxu0 0.0
    %353 = vmatprep.subr.mxu0 0.0
    %354 = vmatpush1.msra.mxu0 0.0
    %355 = vmatprep.subr.mxu0 0.0
    %356 = vmatpush1.msra.mxu0 0.0
    %357 = vmatprep.subr.mxu0 0.0
    %358 = vmatpush1.msra.mxu0 0.0
    %359 = vmatprep.subr.mxu0 0.0
    %360 = vmatpush1.msra.mxu0 0.0
    %361 = vmatprep.subr.mxu0 0.0
    %362 = vmatpush1.msra.mxu0 0.0
    %363 = vmatprep.subr.mxu0 0.0
    %364 = vmatpush1.msra.mxu0 0.0
    %365 = vmatprep.subr.mxu0 0.0
    %366 = vmatpush1.msra.mxu0 0.0
    %367 = vmatprep.mubr.f32.mxu0 0.0
    %368 = vmatmul.mubr.f32.gmra.mrb[0].mxu0 %v112
    %v369 = vpop.f32.mrb[0].mxu0
    %v370 = vadd.f32 0.0, %v369
    %v371 = vpop.f32.mrb[0].mxu0
    %372 = vmatprep.mubr.f32.mxu0 0.0
    %373 = vmatmul.mubr.f32.gmra.mrb[0].mxu0 %v115
    %v374 = vpop.f32.mrb[0].mxu0
    %v375 = vadd.f32 0.0, %v374
    %v376 = vpop.f32.mrb[0].mxu0
    %377 = vmatprep.mubr.f32.mxu0 0.0
    %378 = vmatmul.mubr.f32.gmra.mrb[0].mxu0 %v118
    %v379 = vpop.f32.mrb[0].mxu0
    %v380 = vadd.f32 0.0, %v379
    %v381 = vpop.f32.mrb[0].mxu0
    %382 = vmatprep.mubr.f32.mxu0 0.0
    %383 = vmatmul.mubr.f32.gmra.mrb[0].mxu0 %v121
    %v384 = vpop.f32.mrb[0].mxu0
    %v385 = vadd.f32 0.0, %v384
    %v386 = vpop.f32.mrb[0].mxu0
    %387 = vmatprep.mubr.f32.mxu0 0.0
    %388 = vmatmul.mubr.f32.gmra.mrb[0].mxu0 %v124
    %v389 = vpop.f32.mrb[0].mxu0
    %v390 = vadd.f32 0.0, %v389
    %v391 = vpop.f32.mrb[0].mxu0
    %392 = vmatprep.mubr.f32.mxu0 0.0
    %393 = vmatmul.mubr.f32.gmra.mrb[0].mxu0 %v127
    %v394 = vpop.f32.mrb[0].mxu0
    %v395 = vadd.f32 0.0, %v394
    %v396 = vpop.f32.mrb[0].mxu0
    %397 = vmatprep.mubr.f32.mxu0 0.0
    %398 = vmatmul.mubr.f32.gmra.mrb[0].mxu0 %v130
    %v399 = vpop.f32.mrb[0].mxu0
    %v400 = vadd.f32 0.0, %v399
    %v401 = vpop.f32.mrb[0].mxu0
    %402 = vmatprep.mubr.f32.mxu0 0.0
    %403 = vmatmul.mubr.f32.gmra.mrb[0].mxu0 %v133
    %v404 = vpop.f32.mrb[0].mxu0
    %v405 = vadd.f32 0.0, %v404
    %v406 = vpop.f32.mrb[0].mxu0
    %407 = vmatprep.mubr.f32.mxu0 0.0
    %408 = vmatmul.mubr.f32.gmra.mrb[0].mxu0 %v136
    %v409 = vpop.f32.mrb[0].mxu0
    %v410 = vadd.f32 0.0, %v409
    %v411 = vpop.f32.mrb[0].mxu0
    %412 = vmatprep.mubr.f32.mxu0 0.0
    %413 = vmatmul.mubr.f32.gmra.mrb[0].mxu0 %v139
    %v414 = vpop.f32.mrb[0].mxu0
    %v415 = vadd.f32 0.0, %v414
    %v416 = vpop.f32.mrb[0].mxu0
    %417 = vmatprep.mubr.f32.mxu0 0.0
    %418 = vmatmul.mubr.f32.gmra.mrb[0].mxu0 %v142
    %v419 = vpop.f32.mrb[0].mxu0
    %v420 = vadd.f32 0.0, %v419
    %v421 = vpop.f32.mrb[0].mxu0
    %422 = vmatprep.mubr.f32.mxu0 0.0
    %423 = vmatmul.mubr.f32.gmra.mrb[0].mxu0 %v145
    %v424 = vpop.f32.mrb[0].mxu0
    %v425 = vadd.f32 0.0, %v424
    %v426 = vpop.f32.mrb[0].mxu0
    %427 = vmatprep.mubr.f32.mxu0 0.0
    %428 = vmatmul.mubr.f32.gmra.mrb[0].mxu0 %v148
    %v429 = vpop.f32.mrb[0].mxu0
    %v430 = vadd.f32 0.0, %v429
    %v431 = vpop.f32.mrb[0].mxu0
    %432 = vmatprep.mubr.f32.mxu0 0.0
    %433 = vmatmul.mubr.f32.gmra.mrb[0].mxu0 %v151
    %v434 = vpop.f32.mrb[0].mxu0
    %v435 = vadd.f32 0.0, %v434
    %v436 = vpop.f32.mrb[0].mxu0
    %437 = vmatprep.mubr.f32.mxu0 0.0
    %438 = vmatmul.mubr.f32.gmra.mrb[0].mxu0 %v154
    %v439 = vpop.f32.mrb[0].mxu0
    %v440 = vadd.f32 0.0, %v439
    %v441 = vpop.f32.mrb[0].mxu0
    %442 = vmatprep.mubr.f32.mxu0 0.0
    %443 = vmatmul.mubr.f32.gmra.mrb[0].mxu0 %v157
    %v444 = vpop.f32.mrb[0].mxu0
    %v445 = vadd.f32 0.0, %v444
    %v446 = vpop.f32.mrb[0].mxu0
    %447 = vmatprep.mubr.f32.mxu0 0.0
    %448 = vmatmul.mubr.f32.gmra.mrb[0].mxu0 %v160
    %v449 = vpop.f32.mrb[0].mxu0
    %v450 = vadd.f32 0.0, %v449
    %v451 = vpop.f32.mrb[0].mxu0
    %452 = vmatprep.mubr.f32.mxu0 0.0
    %453 = vmatmul.mubr.f32.gmra.mrb[0].mxu0 %v163
    %v454 = vpop.f32.mrb[0].mxu0
    %v455 = vadd.f32 0.0, %v454
    %v456 = vpop.f32.mrb[0].mxu0
    %457 = vmatprep.mubr.f32.mxu0 0.0
    %458 = vmatmul.mubr.f32.gmra.mrb[0].mxu0 %v166
    %v459 = vpop.f32.mrb[0].mxu0
    %v460 = vadd.f32 0.0, %v459
    %v461 = vpop.f32.mrb[0].mxu0
    %462 = vmatprep.mubr.f32.mxu0 0.0
    %463 = vmatmul.mubr.f32.gmra.mrb[0].mxu0 %v169
    %v464 = vpop.f32.mrb[0].mxu0
    %v465 = vadd.f32 0.0, %v464
    %v466 = vpop.f32.mrb[0].mxu0
    %467 = vmatprep.mubr.f32.mxu0 0.0
    %468 = vmatmul.mubr.f32.gmra.mrb[0].mxu0 %v172
    %v469 = vpop.f32.mrb[0].mxu0
    %v470 = vadd.f32 0.0, %v469
    %v471 = vpop.f32.mrb[0].mxu0
    %472 = vmatprep.mubr.f32.mxu0 0.0
    %473 = vmatmul.mubr.f32.gmra.mrb[0].mxu0 %v175
    %v474 = vpop.f32.mrb[0].mxu0
    %v475 = vadd.f32 0.0, %v474
    %v476 = vpop.f32.mrb[0].mxu0
    %477 = vmatprep.mubr.f32.mxu0 0.0
    %478 = vmatmul.mubr.f32.gmra.mrb[0].mxu0 %v178
    %v479 = vpop.f32.mrb[0].mxu0
    %v480 = vadd.f32 0.0, %v479
    %v481 = vpop.f32.mrb[0].mxu0
    %482 = vmatprep.mubr.f32.mxu0 0.0
    %483 = vmatmul.mubr.f32.gmra.mrb[0].mxu0 %v181
    %v484 = vpop.f32.mrb[0].mxu0
    %v485 = vadd.f32 0.0, %v484
    %v486 = vpop.f32.mrb[0].mxu0
    %487 = vmatprep.mubr.f32.mxu0 0.0
    %488 = vmatmul.mubr.f32.gmra.mrb[0].mxu0 %v184
    %v489 = vpop.f32.mrb[0].mxu0
    %v490 = vadd.f32 0.0, %v489
    %v491 = vpop.f32.mrb[0].mxu0
    %492 = vmatprep.mubr.f32.mxu0 0.0
    %493 = vmatmul.mubr.f32.gmra.mrb[0].mxu0 %v187
    %v494 = vpop.f32.mrb[0].mxu0
    %v495 = vadd.f32 0.0, %v494
    %v496 = vpop.f32.mrb[0].mxu0
    %497 = vmatprep.mubr.f32.mxu0 0.0
    %498 = vmatmul.mubr.f32.gmra.mrb[0].mxu0 %v190
    %v499 = vpop.f32.mrb[0].mxu0
    %v500 = vadd.f32 0.0, %v499
    %v501 = vpop.f32.mrb[0].mxu0
    %502 = vmatprep.mubr.f32.mxu0 0.0
    %503 = vmatmul.mubr.f32.gmra.mrb[0].mxu0 %v193
    %v504 = vpop.f32.mrb[0].mxu0
    %v505 = vadd.f32 0.0, %v504
    %v506 = vpop.f32.mrb[0].mxu0
    %507 = vmatprep.mubr.f32.mxu0 0.0
    %508 = vmatmul.mubr.f32.gmra.mrb[0].mxu0 %v196
    %v509 = vpop.f32.mrb[0].mxu0
    %v510 = vadd.f32 0.0, %v509
    %v511 = vpop.f32.mrb[0].mxu0
    %512 = vmatprep.mubr.f32.mxu0 0.0
    %513 = vmatmul.mubr.f32.gmra.mrb[0].mxu0 %v199
    %v514 = vpop.f32.mrb[0].mxu0
    %v515 = vadd.f32 0.0, %v514
    %v516 = vpop.f32.mrb[0].mxu0
    %517 = vmatprep.mubr.f32.mxu0 0.0
    %518 = vmatmul.mubr.f32.gmra.mrb[0].mxu0 %v202
    %v519 = vpop.f32.mrb[0].mxu0
    %v520 = vadd.f32 0.0, %v519
    %v521 = vpop.f32.mrb[0].mxu0
    %522 = vmatprep.mubr.f32.mxu0 0.0
    %523 = vmatmul.mubr.f32.gmra.mrb[0].mxu0 %v205
    %v524 = vpop.f32.mrb[0].mxu0
    %v525 = vadd.f32 0.0, %v524
    %v526 = vpop.f32.mrb[0].mxu0
    %527 = vmatprep.mubr.f32.mxu0 0.0
    %528 = vmatmul.mubr.f32.gmra.mrb[0].mxu0 %v208
    %v529 = vpop.f32.mrb[0].mxu0
    %v530 = vadd.f32 0.0, %v529
    %v531 = vpop.f32.mrb[0].mxu0
    %532 = vmatprep.mubr.f32.mxu0 0.0
    %533 = vmatmul.mubr.f32.gmra.mrb[0].mxu0 %v211
    %v534 = vpop.f32.mrb[0].mxu0
    %v535 = vadd.f32 0.0, %v534
    %v536 = vpop.f32.mrb[0].mxu0
    %537 = vmatprep.mubr.f32.mxu0 0.0
    %538 = vmatmul.mubr.f32.gmra.mrb[0].mxu0 %v214
    %v539 = vpop.f32.mrb[0].mxu0
    %v540 = vadd.f32 0.0, %v539
    %v541 = vpop.f32.mrb[0].mxu0
    %542 = vmatprep.mubr.f32.mxu0 0.0
    %543 = vmatmul.mubr.f32.gmra.mrb[0].mxu0 %v217
    %v544 = vpop.f32.mrb[0].mxu0
    %v545 = vadd.f32 0.0, %v544
    %v546 = vpop.f32.mrb[0].mxu0
    %547 = vmatprep.mubr.f32.mxu0 0.0
    %548 = vmatmul.mubr.f32.gmra.mrb[0].mxu0 %v220
    %v549 = vpop.f32.mrb[0].mxu0
    %v550 = vadd.f32 0.0, %v549
    %v551 = vpop.f32.mrb[0].mxu0
    %552 = vmatprep.mubr.f32.mxu0 0.0
    %553 = vmatmul.mubr.f32.gmra.mrb[0].mxu0 %v223
    %v554 = vpop.f32.mrb[0].mxu0
    %v555 = vadd.f32 0.0, %v554
    %v556 = vpop.f32.mrb[0].mxu0
    %557 = vmatprep.mubr.f32.mxu0 0.0
    %558 = vmatmul.mubr.f32.gmra.mrb[0].mxu0 %v226
    %v559 = vpop.f32.mrb[0].mxu0
    %v560 = vadd.f32 0.0, %v559
    %v561 = vpop.f32.mrb[0].mxu0
    %562 = vmatprep.mubr.f32.mxu0 0.0
    %563 = vmatmul.mubr.f32.gmra.mrb[0].mxu0 %v229
    %v564 = vpop.f32.mrb[0].mxu0
    %v565 = vadd.f32 0.0, %v564
    %v566 = vpop.f32.mrb[0].mxu0
    %567 = vmatprep.mubr.f32.mxu0 0.0
    %568 = vmatmul.mubr.f32.gmra.mrb[0].mxu0 %v232
    %v569 = vpop.f32.mrb[0].mxu0
    %v570 = vadd.f32 0.0, %v569
    %v571 = vpop.f32.mrb[0].mxu0
    %572 = vmatprep.mubr.f32.mxu0 0.0
    %573 = vmatmul.mubr.f32.gmra.mrb[0].mxu0 %v235
    %v574 = vpop.f32.mrb[0].mxu0
    %v575 = vadd.f32 0.0, %v574
    %v576 = vpop.f32.mrb[0].mxu0
    %577 = vmatprep.mubr.f32.mxu0 0.0
    %578 = vmatmul.mubr.f32.gmra.mrb[0].mxu0 %v238
    %v579 = vpop.f32.mrb[0].mxu0
    %v580 = vadd.f32 0.0, %v579
    %v581 = vpop.f32.mrb[0].mxu0
    %582 = vmatprep.mubr.f32.mxu0 0.0
    %583 = vmatmul.mubr.f32.gmra.mrb[0].mxu0 %v241
    %v584 = vpop.f32.mrb[0].mxu0
    %v585 = vadd.f32 0.0, %v584
    %v586 = vpop.f32.mrb[0].mxu0
    %587 = vmatprep.mubr.f32.mxu0 0.0
    %588 = vmatmul.mubr.f32.gmra.mrb[0].mxu0 %v244
    %v589 = vpop.f32.mrb[0].mxu0
    %v590 = vadd.f32 0.0, %v589
    %v591 = vpop.f32.mrb[0].mxu0
    %592 = vmatprep.mubr.f32.mxu0 0.0
    %593 = vmatmul.mubr.f32.gmra.mrb[0].mxu0 %v247
    %v594 = vpop.f32.mrb[0].mxu0
    %v595 = vadd.f32 0.0, %v594
    %v596 = vpop.f32.mrb[0].mxu0
    %597 = vmatprep.mubr.f32.mxu0 0.0
    %598 = vmatmul.mubr.f32.gmra.mrb[0].mxu0 %v250
    %v599 = vpop.f32.mrb[0].mxu0
    %v600 = vadd.f32 0.0, %v599
    %v601 = vpop.f32.mrb[0].mxu0
    %602 = vmatprep.mubr.f32.mxu0 0.0
    %603 = vmatmul.mubr.f32.gmra.mrb[0].mxu0 %v253
    %v604 = vpop.f32.mrb[0].mxu0
    %v605 = vadd.f32 0.0, %v604
    %v606 = vpop.f32.mrb[0].mxu0
    %607 = vmatprep.mubr.f32.mxu0 0.0
    %608 = vmatmul.mubr.f32.gmra.mrb[0].mxu0 %v256
    %v609 = vpop.f32.mrb[0].mxu0
    %v610 = vadd.f32 0.0, %v609
    %v611 = vpop.f32.mrb[0].mxu0
    %612 = vmatprep.mubr.f32.mxu0 0.0
    %613 = vmatmul.mubr.f32.gmra.mrb[0].mxu0 %v259
    %v614 = vpop.f32.mrb[0].mxu0
    %v615 = vadd.f32 0.0, %v614
    %v616 = vpop.f32.mrb[0].mxu0
    %617 = vmatprep.mubr.f32.mxu0 0.0
    %618 = vmatmul.mubr.f32.gmra.mrb[0].mxu0 %v262
    %v619 = vpop.f32.mrb[0].mxu0
    %v620 = vadd.f32 0.0, %v619
    %v621 = vpop.f32.mrb[0].mxu0
    %622 = vmatprep.mubr.f32.mxu0 0.0
    %623 = vmatmul.mubr.f32.gmra.mrb[0].mxu0 %v265
    %v624 = vpop.f32.mrb[0].mxu0
    %v625 = vadd.f32 0.0, %v624
    %v626 = vpop.f32.mrb[0].mxu0
    %627 = vmatprep.mubr.f32.mxu0 0.0
    %628 = vmatmul.mubr.f32.gmra.mrb[0].mxu0 %v268
    %v629 = vpop.f32.mrb[0].mxu0
    %v630 = vadd.f32 0.0, %v629
    %v631 = vpop.f32.mrb[0].mxu0
    %632 = vmatprep.mubr.f32.mxu0 0.0
    %633 = vmatmul.mubr.f32.gmra.mrb[0].mxu0 %v271
    %v634 = vpop.f32.mrb[0].mxu0
    %v635 = vadd.f32 0.0, %v634
    %v636 = vpop.f32.mrb[0].mxu0
    %637 = vmatprep.mubr.f32.mxu0 0.0
    %638 = vmatmul.mubr.f32.gmra.mrb[0].mxu0 %v274
    %v639 = vpop.f32.mrb[0].mxu0
    %v640 = vadd.f32 0.0, %v639
    %v641 = vpop.f32.mrb[0].mxu0
    %642 = vmatprep.mubr.f32.mxu0 0.0
    %643 = vmatmul.mubr.f32.gmra.mrb[0].mxu0 %v277
    %v644 = vpop.f32.mrb[0].mxu0
    %v645 = vadd.f32 0.0, %v644
    %v646 = vpop.f32.mrb[0].mxu0
    %647 = vmatprep.mubr.f32.mxu0 0.0
    %648 = vmatmul.mubr.f32.gmra.mrb[0].mxu0 %v280
    %v649 = vpop.f32.mrb[0].mxu0
    %v650 = vadd.f32 0.0, %v649
    %v651 = vpop.f32.mrb[0].mxu0
    %652 = vmatprep.mubr.f32.mxu0 0.0
    %653 = vmatmul.mubr.f32.gmra.mrb[0].mxu0 %v283
    %v654 = vpop.f32.mrb[0].mxu0
    %v655 = vadd.f32 0.0, %v654
    %v656 = vpop.f32.mrb[0].mxu0
    %657 = vmatprep.mubr.f32.mxu0 0.0
    %658 = vmatmul.mubr.f32.gmra.mrb[0].mxu0 %v286
    %v659 = vpop.f32.mrb[0].mxu0
    %v660 = vadd.f32 0.0, %v659
    %v661 = vpop.f32.mrb[0].mxu0
    %662 = vmatprep.mubr.f32.mxu0 0.0
    %663 = vmatmul.mubr.f32.gmra.mrb[0].mxu0 %v289
    %v664 = vpop.f32.mrb[0].mxu0
    %v665 = vadd.f32 0.0, %v664
    %v666 = vpop.f32.mrb[0].mxu0
    %667 = vmatprep.mubr.f32.mxu0 0.0
    %668 = vmatmul.mubr.f32.gmra.mrb[0].mxu0 %v292
    %v669 = vpop.f32.mrb[0].mxu0
    %v670 = vadd.f32 0.0, %v669
    %v671 = vpop.f32.mrb[0].mxu0
    %672 = vmatprep.mubr.f32.mxu0 0.0
    %673 = vmatmul.mubr.f32.gmra.mrb[0].mxu0 %v295
    %v674 = vpop.f32.mrb[0].mxu0
    %v675 = vadd.f32 0.0, %v674
    %v676 = vpop.f32.mrb[0].mxu0
    %677 = vmatprep.mubr.f32.mxu0 0.0
    %678 = vmatmul.mubr.f32.gmra.mrb[0].mxu0 %v298
    %v679 = vpop.f32.mrb[0].mxu0
    %v680 = vadd.f32 0.0, %v679
    %v681 = vpop.f32.mrb[0].mxu0
    %682 = vmatprep.mubr.f32.mxu0 0.0
    %683 = vmatmul.mubr.f32.gmra.mrb[0].mxu0 %v301
    %v684 = vpop.f32.mrb[0].mxu0
    %v685 = vadd.f32 0.0, %v684
    %v686 = vpop.f32.mrb[0].mxu0
    %687 = vdwg.mxu0
    %s688 = scalar_lea.vmem %s0, 512
    %v689 = vld [vmem:[%s688] sm:$0xff]
    %v690 = vld [vmem:[%s688 + $0x8] sm:$0xff]
    %v691 = vld [vmem:[%s688 + $0x10] sm:$0xff]
    %v692 = vld [vmem:[%s688 + $0x18] sm:$0xff]
    %v693 = vld [vmem:[%s688 + $0x20] sm:$0xff]
    %v694 = vld [vmem:[%s688 + $0x28] sm:$0xff]
    %v695 = vld [vmem:[%s688 + $0x30] sm:$0xff]
    %v696 = vld [vmem:[%s688 + $0x38] sm:$0xff]
    %v697 = vld [vmem:[%s688 + $0x40] sm:$0xff]
    %v698 = vld [vmem:[%s688 + $0x48] sm:$0xff]
    %v699 = vld [vmem:[%s688 + $0x50] sm:$0xff]
    %v700 = vld [vmem:[%s688 + $0x58] sm:$0xff]
    %v701 = vld [vmem:[%s688 + $0x60] sm:$0xff]
    %v702 = vld [vmem:[%s688 + $0x68] sm:$0xff]
    %v703 = vld [vmem:[%s688 + $0x70] sm:$0xff]
    %v704 = vld [vmem:[%s688 + $0x78] sm:$0xff]
    %v705 = vld [vmem:[%s688 + $0x80] sm:$0xff]
    %v706 = vld [vmem:[%s688 + $0x88] sm:$0xff]
    %v707 = vld [vmem:[%s688 + $0x90] sm:$0xff]
    %v708 = vld [vmem:[%s688 + $0x98] sm:$0xff]
    %v709 = vld [vmem:[%s688 + $0xa0] sm:$0xff]
    %v710 = vld [vmem:[%s688 + $0xa8] sm:$0xff]
    %v711 = vld [vmem:[%s688 + $0xb0] sm:$0xff]
    %v712 = vld [vmem:[%s688 + $0xb8] sm:$0xff]
    %v713 = vld [vmem:[%s688 + $0xc0] sm:$0xff]
    %v714 = vld [vmem:[%s688 + $0xc8] sm:$0xff]
    %v715 = vld [vmem:[%s688 + $0xd0] sm:$0xff]
    %v716 = vld [vmem:[%s688 + $0xd8] sm:$0xff]
    %v717 = vld [vmem:[%s688 + $0xe0] sm:$0xff]
    %v718 = vld [vmem:[%s688 + $0xe8] sm:$0xff]
    %v719 = vld [vmem:[%s688 + $0xf0] sm:$0xff]
    %v720 = vld [vmem:[%s688 + $0xf8] sm:$0xff]
    %v721 = vld [vmem:[%s688 + $0x100] sm:$0xff]
    %v722 = vld [vmem:[%s688 + $0x108] sm:$0xff]
    %v723 = vld [vmem:[%s688 + $0x110] sm:$0xff]
    %v724 = vld [vmem:[%s688 + $0x118] sm:$0xff]
    %v725 = vld [vmem:[%s688 + $0x120] sm:$0xff]
    %v726 = vld [vmem:[%s688 + $0x128] sm:$0xff]
    %v727 = vld [vmem:[%s688 + $0x130] sm:$0xff]
    %v728 = vld [vmem:[%s688 + $0x138] sm:$0xff]
    %v729 = vld [vmem:[%s688 + $0x140] sm:$0xff]
    %v730 = vld [vmem:[%s688 + $0x148] sm:$0xff]
    %v731 = vld [vmem:[%s688 + $0x150] sm:$0xff]
    %v732 = vld [vmem:[%s688 + $0x158] sm:$0xff]
    %v733 = vld [vmem:[%s688 + $0x160] sm:$0xff]
    %v734 = vld [vmem:[%s688 + $0x168] sm:$0xff]
    %v735 = vld [vmem:[%s688 + $0x170] sm:$0xff]
    %v736 = vld [vmem:[%s688 + $0x178] sm:$0xff]
    %v737 = vld [vmem:[%s688 + $0x180] sm:$0xff]
    %v738 = vld [vmem:[%s688 + $0x188] sm:$0xff]
    %v739 = vld [vmem:[%s688 + $0x190] sm:$0xff]
    %v740 = vld [vmem:[%s688 + $0x198] sm:$0xff]
    %v741 = vld [vmem:[%s688 + $0x1a0] sm:$0xff]
    %v742 = vld [vmem:[%s688 + $0x1a8] sm:$0xff]
    %v743 = vld [vmem:[%s688 + $0x1b0] sm:$0xff]
    %v744 = vld [vmem:[%s688 + $0x1b8] sm:$0xff]
    %v745 = vld [vmem:[%s688 + $0x1c0] sm:$0xff]
    %v746 = vld [vmem:[%s688 + $0x1c8] sm:$0xff]
    %v747 = vld [vmem:[%s688 + $0x1d0] sm:$0xff]
    %v748 = vld [vmem:[%s688 + $0x1d8] sm:$0xff]
    %v749 = vld [vmem:[%s688 + $0x1e0] sm:$0xff]
    %v750 = vld [vmem:[%s688 + $0x1e8] sm:$0xff]
    %v751 = vld [vmem:[%s688 + $0x1f0] sm:$0xff]
    %v752 = vld [vmem:[%s688 + $0x1f8] sm:$0xff]
    %v754 = vsel %vm110, %v689, 0
    %v757 = vsel %vm110, %v690, 0
    %v760 = vsel %vm110, %v691, 0
    %v763 = vsel %vm110, %v692, 0
    %v766 = vsel %vm110, %v693, 0
    %v769 = vsel %vm110, %v694, 0
    %v772 = vsel %vm110, %v695, 0
    %v775 = vsel %vm110, %v696, 0
    %v778 = vsel %vm110, %v697, 0
    %v781 = vsel %vm110, %v698, 0
    %v784 = vsel %vm110, %v699, 0
    %v787 = vsel %vm110, %v700, 0
    %v790 = vsel %vm110, %v701, 0
    %v793 = vsel %vm110, %v702, 0
    %v796 = vsel %vm110, %v703, 0
    %v799 = vsel %vm110, %v704, 0
    %v802 = vsel %vm110, %v705, 0
    %v805 = vsel %vm110, %v706, 0
    %v808 = vsel %vm110, %v707, 0
    %v811 = vsel %vm110, %v708, 0
    %v814 = vsel %vm110, %v709, 0
    %v817 = vsel %vm110, %v710, 0
    %v820 = vsel %vm110, %v711, 0
    %v823 = vsel %vm110, %v712, 0
    %v826 = vsel %vm110, %v713, 0
    %v829 = vsel %vm110, %v714, 0
    %v832 = vsel %vm110, %v715, 0
    %v835 = vsel %vm110, %v716, 0
    %v838 = vsel %vm110, %v717, 0
    %v841 = vsel %vm110, %v718, 0
    %v844 = vsel %vm110, %v719, 0
    %v847 = vsel %vm110, %v720, 0
    %v850 = vsel %vm110, %v721, 0
    %v853 = vsel %vm110, %v722, 0
    %v856 = vsel %vm110, %v723, 0
    %v859 = vsel %vm110, %v724, 0
    %v862 = vsel %vm110, %v725, 0
    %v865 = vsel %vm110, %v726, 0
    %v868 = vsel %vm110, %v727, 0
    %v871 = vsel %vm110, %v728, 0
    %v874 = vsel %vm110, %v729, 0
    %v877 = vsel %vm110, %v730, 0
    %v880 = vsel %vm110, %v731, 0
    %v883 = vsel %vm110, %v732, 0
    %v886 = vsel %vm110, %v733, 0
    %v889 = vsel %vm110, %v734, 0
    %v892 = vsel %vm110, %v735, 0
    %v895 = vsel %vm110, %v736, 0
    %v898 = vsel %vm110, %v737, 0
    %v901 = vsel %vm110, %v738, 0
    %v904 = vsel %vm110, %v739, 0
    %v907 = vsel %vm110, %v740, 0
    %v910 = vsel %vm110, %v741, 0
    %v913 = vsel %vm110, %v742, 0
    %v916 = vsel %vm110, %v743, 0
    %v919 = vsel %vm110, %v744, 0
    %v922 = vsel %vm110, %v745, 0
    %v925 = vsel %vm110, %v746, 0
    %v928 = vsel %vm110, %v747, 0
    %v931 = vsel %vm110, %v748, 0
    %v934 = vsel %vm110, %v749, 0
    %v937 = vsel %vm110, %v750, 0
    %v940 = vsel %vm110, %v751, 0
    %v943 = vsel %vm110, %v752, 0
    %945 = vmatprep.subr.mxu0 0.0
    %946 = vmatpush1.msra.mxu0 %v45
    %947 = vmatprep.subr.mxu0 0.0
    %948 = vmatpush1.msra.mxu0 0.0
    %949 = vmatprep.subr.mxu0 0.0
    %950 = vmatpush1.msra.mxu0 0.0
    %951 = vmatprep.subr.mxu0 0.0
    %952 = vmatpush1.msra.mxu0 0.0
    %953 = vmatprep.subr.mxu0 0.0
    %954 = vmatpush1.msra.mxu0 0.0
    %955 = vmatprep.subr.mxu0 0.0
    %956 = vmatpush1.msra.mxu0 0.0
    %957 = vmatprep.subr.mxu0 0.0
    %958 = vmatpush1.msra.mxu0 0.0
    %959 = vmatprep.subr.mxu0 0.0
    %960 = vmatpush1.msra.mxu0 0.0
    %961 = vmatprep.subr.mxu0 0.0
    %962 = vmatpush1.msra.mxu0 0.0
    %963 = vmatprep.subr.mxu0 0.0
    %964 = vmatpush1.msra.mxu0 0.0
    %965 = vmatprep.subr.mxu0 0.0
    %966 = vmatpush1.msra.mxu0 0.0
    %967 = vmatprep.subr.mxu0 0.0
    %968 = vmatpush1.msra.mxu0 0.0
    %969 = vmatprep.subr.mxu0 0.0
    %970 = vmatpush1.msra.mxu0 0.0
    %971 = vmatprep.subr.mxu0 0.0
    %972 = vmatpush1.msra.mxu0 0.0
    %973 = vmatprep.subr.mxu0 0.0
    %974 = vmatpush1.msra.mxu0 0.0
    %975 = vmatprep.subr.mxu0 0.0
    %976 = vmatpush1.msra.mxu0 0.0
    %977 = vmatprep.subr.mxu0 0.0
    %978 = vmatpush1.msra.mxu0 0.0
    %979 = vmatprep.subr.mxu0 0.0
    %980 = vmatpush1.msra.mxu0 0.0
    %981 = vmatprep.subr.mxu0 0.0
    %982 = vmatpush1.msra.mxu0 0.0
    %983 = vmatprep.subr.mxu0 0.0
    %984 = vmatpush1.msra.mxu0 0.0
    %985 = vmatprep.subr.mxu0 0.0
    %986 = vmatpush1.msra.mxu0 0.0
    %987 = vmatprep.subr.mxu0 0.0
    %988 = vmatpush1.msra.mxu0 0.0
    %989 = vmatprep.subr.mxu0 0.0
    %990 = vmatpush1.msra.mxu0 0.0
    %991 = vmatprep.subr.mxu0 0.0
    %992 = vmatpush1.msra.mxu0 0.0
    %993 = vmatprep.subr.mxu0 0.0
    %994 = vmatpush1.msra.mxu0 0.0
    %995 = vmatprep.subr.mxu0 0.0
    %996 = vmatpush1.msra.mxu0 0.0
    %997 = vmatprep.subr.mxu0 0.0
    %998 = vmatpush1.msra.mxu0 0.0
    %999 = vmatprep.subr.mxu0 0.0
    %1000 = vmatpush1.msra.mxu0 0.0
    %1001 = vmatprep.subr.mxu0 0.0
    %1002 = vmatpush1.msra.mxu0 0.0
    %1003 = vmatprep.subr.mxu0 0.0
    %1004 = vmatpush1.msra.mxu0 0.0
    %1005 = vmatprep.subr.mxu0 0.0
    %1006 = vmatpush1.msra.mxu0 0.0
    %1007 = vmatprep.subr.mxu0 0.0
    %1008 = vmatpush1.msra.mxu0 0.0
    %1009 = vmatprep.mubr.f32.mxu0 0.0
    %1010 = vmatmul.mubr.f32.gmra.mrb[0].mxu0 %v754
    %v1011 = vpop.f32.mrb[0].mxu0
    %v1012 = vadd.f32 0.0, %v1011
    %v1013 = vpop.f32.mrb[0].mxu0
    %1014 = vmatprep.mubr.f32.mxu0 0.0
    %1015 = vmatmul.mubr.f32.gmra.mrb[0].mxu0 %v757
    %v1016 = vpop.f32.mrb[0].mxu0
    %v1017 = vadd.f32 0.0, %v1016
    %v1018 = vpop.f32.mrb[0].mxu0
    %1019 = vmatprep.mubr.f32.mxu0 0.0
    %1020 = vmatmul.mubr.f32.gmra.mrb[0].mxu0 %v760
    %v1021 = vpop.f32.mrb[0].mxu0
    %v1022 = vadd.f32 0.0, %v1021
    %v1023 = vpop.f32.mrb[0].mxu0
    %1024 = vmatprep.mubr.f32.mxu0 0.0
    %1025 = vmatmul.mubr.f32.gmra.mrb[0].mxu0 %v763
    %v1026 = vpop.f32.mrb[0].mxu0
    %v1027 = vadd.f32 0.0, %v1026
    %v1028 = vpop.f32.mrb[0].mxu0
    %1029 = vmatprep.mubr.f32.mxu0 0.0
    %1030 = vmatmul.mubr.f32.gmra.mrb[0].mxu0 %v766
    %v1031 = vpop.f32.mrb[0].mxu0
    %v1032 = vadd.f32 0.0, %v1031
    %v1033 = vpop.f32.mrb[0].mxu0
    %1034 = vmatprep.mubr.f32.mxu0 0.0
    %1035 = vmatmul.mubr.f32.gmra.mrb[0].mxu0 %v769
    %v1036 = vpop.f32.mrb[0].mxu0
    %v1037 = vadd.f32 0.0, %v1036
    %v1038 = vpop.f32.mrb[0].mxu0
    %1039 = vmatprep.mubr.f32.mxu0 0.0
    %1040 = vmatmul.mubr.f32.gmra.mrb[0].mxu0 %v772
    %v1041 = vpop.f32.mrb[0].mxu0
    %v1042 = vadd.f32 0.0, %v1041
    %v1043 = vpop.f32.mrb[0].mxu0
    %1044 = vmatprep.mubr.f32.mxu0 0.0
    %1045 = vmatmul.mubr.f32.gmra.mrb[0].mxu0 %v775
    %v1046 = vpop.f32.mrb[0].mxu0
    %v1047 = vadd.f32 0.0, %v1046
    %v1048 = vpop.f32.mrb[0].mxu0
    %1049 = vmatprep.mubr.f32.mxu0 0.0
    %1050 = vmatmul.mubr.f32.gmra.mrb[0].mxu0 %v778
    %v1051 = vpop.f32.mrb[0].mxu0
    %v1052 = vadd.f32 0.0, %v1051
    %v1053 = vpop.f32.mrb[0].mxu0
    %1054 = vmatprep.mubr.f32.mxu0 0.0
    %1055 = vmatmul.mubr.f32.gmra.mrb[0].mxu0 %v781
    %v1056 = vpop.f32.mrb[0].mxu0
    %v1057 = vadd.f32 0.0, %v1056
    %v1058 = vpop.f32.mrb[0].mxu0
    %1059 = vmatprep.mubr.f32.mxu0 0.0
    %1060 = vmatmul.mubr.f32.gmra.mrb[0].mxu0 %v784
    %v1061 = vpop.f32.mrb[0].mxu0
    %v1062 = vadd.f32 0.0, %v1061
    %v1063 = vpop.f32.mrb[0].mxu0
    %1064 = vmatprep.mubr.f32.mxu0 0.0
    %1065 = vmatmul.mubr.f32.gmra.mrb[0].mxu0 %v787
    %v1066 = vpop.f32.mrb[0].mxu0
    %v1067 = vadd.f32 0.0, %v1066
    %v1068 = vpop.f32.mrb[0].mxu0
    %1069 = vmatprep.mubr.f32.mxu0 0.0
    %1070 = vmatmul.mubr.f32.gmra.mrb[0].mxu0 %v790
    %v1071 = vpop.f32.mrb[0].mxu0
    %v1072 = vadd.f32 0.0, %v1071
    %v1073 = vpop.f32.mrb[0].mxu0
    %1074 = vmatprep.mubr.f32.mxu0 0.0
    %1075 = vmatmul.mubr.f32.gmra.mrb[0].mxu0 %v793
    %v1076 = vpop.f32.mrb[0].mxu0
    %v1077 = vadd.f32 0.0, %v1076
    %v1078 = vpop.f32.mrb[0].mxu0
    %1079 = vmatprep.mubr.f32.mxu0 0.0
    %1080 = vmatmul.mubr.f32.gmra.mrb[0].mxu0 %v796
    %v1081 = vpop.f32.mrb[0].mxu0
    %v1082 = vadd.f32 0.0, %v1081
    %v1083 = vpop.f32.mrb[0].mxu0
    %1084 = vmatprep.mubr.f32.mxu0 0.0
    %1085 = vmatmul.mubr.f32.gmra.mrb[0].mxu0 %v799
    %v1086 = vpop.f32.mrb[0].mxu0
    %v1087 = vadd.f32 0.0, %v1086
    %v1088 = vpop.f32.mrb[0].mxu0
    %1089 = vmatprep.mubr.f32.mxu0 0.0
    %1090 = vmatmul.mubr.f32.gmra.mrb[0].mxu0 %v802
    %v1091 = vpop.f32.mrb[0].mxu0
    %v1092 = vadd.f32 0.0, %v1091
    %v1093 = vpop.f32.mrb[0].mxu0
    %1094 = vmatprep.mubr.f32.mxu0 0.0
    %1095 = vmatmul.mubr.f32.gmra.mrb[0].mxu0 %v805
    %v1096 = vpop.f32.mrb[0].mxu0
    %v1097 = vadd.f32 0.0, %v1096
    %v1098 = vpop.f32.mrb[0].mxu0
    %1099 = vmatprep.mubr.f32.mxu0 0.0
    %1100 = vmatmul.mubr.f32.gmra.mrb[0].mxu0 %v808
    %v1101 = vpop.f32.mrb[0].mxu0
    %v1102 = vadd.f32 0.0, %v1101
    %v1103 = vpop.f32.mrb[0].mxu0
    %1104 = vmatprep.mubr.f32.mxu0 0.0
    %1105 = vmatmul.mubr.f32.gmra.mrb[0].mxu0 %v811
    %v1106 = vpop.f32.mrb[0].mxu0
    %v1107 = vadd.f32 0.0, %v1106
    %v1108 = vpop.f32.mrb[0].mxu0
    %1109 = vmatprep.mubr.f32.mxu0 0.0
    %1110 = vmatmul.mubr.f32.gmra.mrb[0].mxu0 %v814
    %v1111 = vpop.f32.mrb[0].mxu0
    %v1112 = vadd.f32 0.0, %v1111
    %v1113 = vpop.f32.mrb[0].mxu0
    %1114 = vmatprep.mubr.f32.mxu0 0.0
    %1115 = vmatmul.mubr.f32.gmra.mrb[0].mxu0 %v817
    %v1116 = vpop.f32.mrb[0].mxu0
    %v1117 = vadd.f32 0.0, %v1116
    %v1118 = vpop.f32.mrb[0].mxu0
    %1119 = vmatprep.mubr.f32.mxu0 0.0
    %1120 = vmatmul.mubr.f32.gmra.mrb[0].mxu0 %v820
    %v1121 = vpop.f32.mrb[0].mxu0
    %v1122 = vadd.f32 0.0, %v1121
    %v1123 = vpop.f32.mrb[0].mxu0
    %1124 = vmatprep.mubr.f32.mxu0 0.0
    %1125 = vmatmul.mubr.f32.gmra.mrb[0].mxu0 %v823
    %v1126 = vpop.f32.mrb[0].mxu0
    %v1127 = vadd.f32 0.0, %v1126
    %v1128 = vpop.f32.mrb[0].mxu0
    %1129 = vmatprep.mubr.f32.mxu0 0.0
    %1130 = vmatmul.mubr.f32.gmra.mrb[0].mxu0 %v826
    %v1131 = vpop.f32.mrb[0].mxu0
    %v1132 = vadd.f32 0.0, %v1131
    %v1133 = vpop.f32.mrb[0].mxu0
    %1134 = vmatprep.mubr.f32.mxu0 0.0
    %1135 = vmatmul.mubr.f32.gmra.mrb[0].mxu0 %v829
    %v1136 = vpop.f32.mrb[0].mxu0
    %v1137 = vadd.f32 0.0, %v1136
    %v1138 = vpop.f32.mrb[0].mxu0
    %1139 = vmatprep.mubr.f32.mxu0 0.0
    %1140 = vmatmul.mubr.f32.gmra.mrb[0].mxu0 %v832
    %v1141 = vpop.f32.mrb[0].mxu0
    %v1142 = vadd.f32 0.0, %v1141
    %v1143 = vpop.f32.mrb[0].mxu0
    %1144 = vmatprep.mubr.f32.mxu0 0.0
    %1145 = vmatmul.mubr.f32.gmra.mrb[0].mxu0 %v835
    %v1146 = vpop.f32.mrb[0].mxu0
    %v1147 = vadd.f32 0.0, %v1146
    %v1148 = vpop.f32.mrb[0].mxu0
    %1149 = vmatprep.mubr.f32.mxu0 0.0
    %1150 = vmatmul.mubr.f32.gmra.mrb[0].mxu0 %v838
    %v1151 = vpop.f32.mrb[0].mxu0
    %v1152 = vadd.f32 0.0, %v1151
    %v1153 = vpop.f32.mrb[0].mxu0
    %1154 = vmatprep.mubr.f32.mxu0 0.0
    %1155 = vmatmul.mubr.f32.gmra.mrb[0].mxu0 %v841
    %v1156 = vpop.f32.mrb[0].mxu0
    %v1157 = vadd.f32 0.0, %v1156
    %v1158 = vpop.f32.mrb[0].mxu0
    %1159 = vmatprep.mubr.f32.mxu0 0.0
    %1160 = vmatmul.mubr.f32.gmra.mrb[0].mxu0 %v844
    %v1161 = vpop.f32.mrb[0].mxu0
    %v1162 = vadd.f32 0.0, %v1161
    %v1163 = vpop.f32.mrb[0].mxu0
    %1164 = vmatprep.mubr.f32.mxu0 0.0
    %1165 = vmatmul.mubr.f32.gmra.mrb[0].mxu0 %v847
    %v1166 = vpop.f32.mrb[0].mxu0
    %v1167 = vadd.f32 0.0, %v1166
    %v1168 = vpop.f32.mrb[0].mxu0
    %1169 = vmatprep.mubr.f32.mxu0 0.0
    %1170 = vmatmul.mubr.f32.gmra.mrb[0].mxu0 %v850
    %v1171 = vpop.f32.mrb[0].mxu0
    %v1172 = vadd.f32 0.0, %v1171
    %v1173 = vpop.f32.mrb[0].mxu0
    %1174 = vmatprep.mubr.f32.mxu0 0.0
    %1175 = vmatmul.mubr.f32.gmra.mrb[0].mxu0 %v853
    %v1176 = vpop.f32.mrb[0].mxu0
    %v1177 = vadd.f32 0.0, %v1176
    %v1178 = vpop.f32.mrb[0].mxu0
    %1179 = vmatprep.mubr.f32.mxu0 0.0
    %1180 = vmatmul.mubr.f32.gmra.mrb[0].mxu0 %v856
    %v1181 = vpop.f32.mrb[0].mxu0
    %v1182 = vadd.f32 0.0, %v1181
    %v1183 = vpop.f32.mrb[0].mxu0
    %1184 = vmatprep.mubr.f32.mxu0 0.0
    %1185 = vmatmul.mubr.f32.gmra.mrb[0].mxu0 %v859
    %v1186 = vpop.f32.mrb[0].mxu0
    %v1187 = vadd.f32 0.0, %v1186
    %v1188 = vpop.f32.mrb[0].mxu0
    %1189 = vmatprep.mubr.f32.mxu0 0.0
    %1190 = vmatmul.mubr.f32.gmra.mrb[0].mxu0 %v862
    %v1191 = vpop.f32.mrb[0].mxu0
    %v1192 = vadd.f32 0.0, %v1191
    %v1193 = vpop.f32.mrb[0].mxu0
    %1194 = vmatprep.mubr.f32.mxu0 0.0
    %1195 = vmatmul.mubr.f32.gmra.mrb[0].mxu0 %v865
    %v1196 = vpop.f32.mrb[0].mxu0
    %v1197 = vadd.f32 0.0, %v1196
    %v1198 = vpop.f32.mrb[0].mxu0
    %1199 = vmatprep.mubr.f32.mxu0 0.0
    %1200 = vmatmul.mubr.f32.gmra.mrb[0].mxu0 %v868
    %v1201 = vpop.f32.mrb[0].mxu0
    %v1202 = vadd.f32 0.0, %v1201
    %v1203 = vpop.f32.mrb[0].mxu0
    %1204 = vmatprep.mubr.f32.mxu0 0.0
    %1205 = vmatmul.mubr.f32.gmra.mrb[0].mxu0 %v871
    %v1206 = vpop.f32.mrb[0].mxu0
    %v1207 = vadd.f32 0.0, %v1206
    %v1208 = vpop.f32.mrb[0].mxu0
    %1209 = vmatprep.mubr.f32.mxu0 0.0
    %1210 = vmatmul.mubr.f32.gmra.mrb[0].mxu0 %v874
    %v1211 = vpop.f32.mrb[0].mxu0
    %v1212 = vadd.f32 0.0, %v1211
    %v1213 = vpop.f32.mrb[0].mxu0
    %1214 = vmatprep.mubr.f32.mxu0 0.0
    %1215 = vmatmul.mubr.f32.gmra.mrb[0].mxu0 %v877
    %v1216 = vpop.f32.mrb[0].mxu0
    %v1217 = vadd.f32 0.0, %v1216
    %v1218 = vpop.f32.mrb[0].mxu0
    %1219 = vmatprep.mubr.f32.mxu0 0.0
    %1220 = vmatmul.mubr.f32.gmra.mrb[0].mxu0 %v880
    %v1221 = vpop.f32.mrb[0].mxu0
    %v1222 = vadd.f32 0.0, %v1221
    %v1223 = vpop.f32.mrb[0].mxu0
    %1224 = vmatprep.mubr.f32.mxu0 0.0
    %1225 = vmatmul.mubr.f32.gmra.mrb[0].mxu0 %v883
    %v1226 = vpop.f32.mrb[0].mxu0
    %v1227 = vadd.f32 0.0, %v1226
    %v1228 = vpop.f32.mrb[0].mxu0
    %1229 = vmatprep.mubr.f32.mxu0 0.0
    %1230 = vmatmul.mubr.f32.gmra.mrb[0].mxu0 %v886
    %v1231 = vpop.f32.mrb[0].mxu0
    %v1232 = vadd.f32 0.0, %v1231
    %v1233 = vpop.f32.mrb[0].mxu0
    %1234 = vmatprep.mubr.f32.mxu0 0.0
    %1235 = vmatmul.mubr.f32.gmra.mrb[0].mxu0 %v889
    %v1236 = vpop.f32.mrb[0].mxu0
    %v1237 = vadd.f32 0.0, %v1236
    %v1238 = vpop.f32.mrb[0].mxu0
    %1239 = vmatprep.mubr.f32.mxu0 0.0
    %1240 = vmatmul.mubr.f32.gmra.mrb[0].mxu0 %v892
    %v1241 = vpop.f32.mrb[0].mxu0
    %v1242 = vadd.f32 0.0, %v1241
    %v1243 = vpop.f32.mrb[0].mxu0
    %1244 = vmatprep.mubr.f32.mxu0 0.0
    %1245 = vmatmul.mubr.f32.gmra.mrb[0].mxu0 %v895
    %v1246 = vpop.f32.mrb[0].mxu0
    %v1247 = vadd.f32 0.0, %v1246
    %v1248 = vpop.f32.mrb[0].mxu0
    %1249 = vmatprep.mubr.f32.mxu0 0.0
    %1250 = vmatmul.mubr.f32.gmra.mrb[0].mxu0 %v898
    %v1251 = vpop.f32.mrb[0].mxu0
    %v1252 = vadd.f32 0.0, %v1251
    %v1253 = vpop.f32.mrb[0].mxu0
    %1254 = vmatprep.mubr.f32.mxu0 0.0
    %1255 = vmatmul.mubr.f32.gmra.mrb[0].mxu0 %v901
    %v1256 = vpop.f32.mrb[0].mxu0
    %v1257 = vadd.f32 0.0, %v1256
    %v1258 = vpop.f32.mrb[0].mxu0
    %1259 = vmatprep.mubr.f32.mxu0 0.0
    %1260 = vmatmul.mubr.f32.gmra.mrb[0].mxu0 %v904
    %v1261 = vpop.f32.mrb[0].mxu0
    %v1262 = vadd.f32 0.0, %v1261
    %v1263 = vpop.f32.mrb[0].mxu0
    %1264 = vmatprep.mubr.f32.mxu0 0.0
    %1265 = vmatmul.mubr.f32.gmra.mrb[0].mxu0 %v907
    %v1266 = vpop.f32.mrb[0].mxu0
    %v1267 = vadd.f32 0.0, %v1266
    %v1268 = vpop.f32.mrb[0].mxu0
    %1269 = vmatprep.mubr.f32.mxu0 0.0
    %1270 = vmatmul.mubr.f32.gmra.mrb[0].mxu0 %v910
    %v1271 = vpop.f32.mrb[0].mxu0
    %v1272 = vadd.f32 0.0, %v1271
    %v1273 = vpop.f32.mrb[0].mxu0
    %1274 = vmatprep.mubr.f32.mxu0 0.0
    %1275 = vmatmul.mubr.f32.gmra.mrb[0].mxu0 %v913
    %v1276 = vpop.f32.mrb[0].mxu0
    %v1277 = vadd.f32 0.0, %v1276
    %v1278 = vpop.f32.mrb[0].mxu0
    %1279 = vmatprep.mubr.f32.mxu0 0.0
    %1280 = vmatmul.mubr.f32.gmra.mrb[0].mxu0 %v916
    %v1281 = vpop.f32.mrb[0].mxu0
    %v1282 = vadd.f32 0.0, %v1281
    %v1283 = vpop.f32.mrb[0].mxu0
    %1284 = vmatprep.mubr.f32.mxu0 0.0
    %1285 = vmatmul.mubr.f32.gmra.mrb[0].mxu0 %v919
    %v1286 = vpop.f32.mrb[0].mxu0
    %v1287 = vadd.f32 0.0, %v1286
    %v1288 = vpop.f32.mrb[0].mxu0
    %1289 = vmatprep.mubr.f32.mxu0 0.0
    %1290 = vmatmul.mubr.f32.gmra.mrb[0].mxu0 %v922
    %v1291 = vpop.f32.mrb[0].mxu0
    %v1292 = vadd.f32 0.0, %v1291
    %v1293 = vpop.f32.mrb[0].mxu0
    %1294 = vmatprep.mubr.f32.mxu0 0.0
    %1295 = vmatmul.mubr.f32.gmra.mrb[0].mxu0 %v925
    %v1296 = vpop.f32.mrb[0].mxu0
    %v1297 = vadd.f32 0.0, %v1296
    %v1298 = vpop.f32.mrb[0].mxu0
    %1299 = vmatprep.mubr.f32.mxu0 0.0
    %1300 = vmatmul.mubr.f32.gmra.mrb[0].mxu0 %v928
    %v1301 = vpop.f32.mrb[0].mxu0
    %v1302 = vadd.f32 0.0, %v1301
    %v1303 = vpop.f32.mrb[0].mxu0
    %1304 = vmatprep.mubr.f32.mxu0 0.0
    %1305 = vmatmul.mubr.f32.gmra.mrb[0].mxu0 %v931
    %v1306 = vpop.f32.mrb[0].mxu0
    %v1307 = vadd.f32 0.0, %v1306
    %v1308 = vpop.f32.mrb[0].mxu0
    %1309 = vmatprep.mubr.f32.mxu0 0.0
    %1310 = vmatmul.mubr.f32.gmra.mrb[0].mxu0 %v934
    %v1311 = vpop.f32.mrb[0].mxu0
    %v1312 = vadd.f32 0.0, %v1311
    %v1313 = vpop.f32.mrb[0].mxu0
    %1314 = vmatprep.mubr.f32.mxu0 0.0
    %1315 = vmatmul.mubr.f32.gmra.mrb[0].mxu0 %v937
    %v1316 = vpop.f32.mrb[0].mxu0
    %v1317 = vadd.f32 0.0, %v1316
    %v1318 = vpop.f32.mrb[0].mxu0
    %1319 = vmatprep.mubr.f32.mxu0 0.0
    %1320 = vmatmul.mubr.f32.gmra.mrb[0].mxu0 %v940
    %v1321 = vpop.f32.mrb[0].mxu0
    %v1322 = vadd.f32 0.0, %v1321
    %v1323 = vpop.f32.mrb[0].mxu0
    %1324 = vmatprep.mubr.f32.mxu0 0.0
    %1325 = vmatmul.mubr.f32.gmra.mrb[0].mxu0 %v943
    %v1326 = vpop.f32.mrb[0].mxu0
    %v1327 = vadd.f32 0.0, %v1326
    %v1328 = vpop.f32.mrb[0].mxu0
    %1329 = vdwg.mxu0
    %v1330 = vmax.f32 %v370, %v1012
    %v1331 = vmax.f32 %v375, %v1017
    %v1332 = vmax.f32 %v380, %v1022
    %v1333 = vmax.f32 %v385, %v1027
    %v1334 = vmax.f32 %v390, %v1032
    %v1335 = vmax.f32 %v395, %v1037
    %v1336 = vmax.f32 %v400, %v1042
    %v1337 = vmax.f32 %v405, %v1047
    %v1338 = vmax.f32 %v410, %v1052
    %v1339 = vmax.f32 %v415, %v1057
    %v1340 = vmax.f32 %v420, %v1062
    %v1341 = vmax.f32 %v425, %v1067
    %v1342 = vmax.f32 %v430, %v1072
    %v1343 = vmax.f32 %v435, %v1077
    %v1344 = vmax.f32 %v440, %v1082
    %v1345 = vmax.f32 %v445, %v1087
    %v1346 = vmax.f32 %v450, %v1092
    %v1347 = vmax.f32 %v455, %v1097
    %v1348 = vmax.f32 %v460, %v1102
    %v1349 = vmax.f32 %v465, %v1107
    %v1350 = vmax.f32 %v470, %v1112
    %v1351 = vmax.f32 %v475, %v1117
    %v1352 = vmax.f32 %v480, %v1122
    %v1353 = vmax.f32 %v485, %v1127
    %v1354 = vmax.f32 %v490, %v1132
    %v1355 = vmax.f32 %v495, %v1137
    %v1356 = vmax.f32 %v500, %v1142
    %v1357 = vmax.f32 %v505, %v1147
    %v1358 = vmax.f32 %v510, %v1152
    %v1359 = vmax.f32 %v515, %v1157
    %v1360 = vmax.f32 %v520, %v1162
    %v1361 = vmax.f32 %v525, %v1167
    %v1362 = vmax.f32 %v530, %v1172
    %v1363 = vmax.f32 %v535, %v1177
    %v1364 = vmax.f32 %v540, %v1182
    %v1365 = vmax.f32 %v545, %v1187
    %v1366 = vmax.f32 %v550, %v1192
    %v1367 = vmax.f32 %v555, %v1197
    %v1368 = vmax.f32 %v560, %v1202
    %v1369 = vmax.f32 %v565, %v1207
    %v1370 = vmax.f32 %v570, %v1212
    %v1371 = vmax.f32 %v575, %v1217
    %v1372 = vmax.f32 %v580, %v1222
    %v1373 = vmax.f32 %v585, %v1227
    %v1374 = vmax.f32 %v590, %v1232
    %v1375 = vmax.f32 %v595, %v1237
    %v1376 = vmax.f32 %v600, %v1242
    %v1377 = vmax.f32 %v605, %v1247
    %v1378 = vmax.f32 %v610, %v1252
    %v1379 = vmax.f32 %v615, %v1257
    %v1380 = vmax.f32 %v620, %v1262
    %v1381 = vmax.f32 %v625, %v1267
    %v1382 = vmax.f32 %v630, %v1272
    %v1383 = vmax.f32 %v635, %v1277
    %v1384 = vmax.f32 %v640, %v1282
    %v1385 = vmax.f32 %v645, %v1287
    %v1386 = vmax.f32 %v650, %v1292
    %v1387 = vmax.f32 %v655, %v1297
    %v1388 = vmax.f32 %v660, %v1302
    %v1389 = vmax.f32 %v665, %v1307
    %v1390 = vmax.f32 %v670, %v1312
    %v1391 = vmax.f32 %v675, %v1317
    %v1392 = vmax.f32 %v680, %v1322
    %v1393 = vmax.f32 %v685, %v1327
    %s1394 = scalar_lea.vmem %s0, 1024
    %v1395 = vld [vmem:[%s1394] sm:$0xff]
    %v1396 = vld [vmem:[%s1394 + $0x8] sm:$0xff]
    %v1397 = vld [vmem:[%s1394 + $0x10] sm:$0xff]
    %v1398 = vld [vmem:[%s1394 + $0x18] sm:$0xff]
    %v1399 = vld [vmem:[%s1394 + $0x20] sm:$0xff]
    %v1400 = vld [vmem:[%s1394 + $0x28] sm:$0xff]
    %v1401 = vld [vmem:[%s1394 + $0x30] sm:$0xff]
    %v1402 = vld [vmem:[%s1394 + $0x38] sm:$0xff]
    %v1403 = vld [vmem:[%s1394 + $0x40] sm:$0xff]
    %v1404 = vld [vmem:[%s1394 + $0x48] sm:$0xff]
    %v1405 = vld [vmem:[%s1394 + $0x50] sm:$0xff]
    %v1406 = vld [vmem:[%s1394 + $0x58] sm:$0xff]
    %v1407 = vld [vmem:[%s1394 + $0x60] sm:$0xff]
    %v1408 = vld [vmem:[%s1394 + $0x68] sm:$0xff]
    %v1409 = vld [vmem:[%s1394 + $0x70] sm:$0xff]
    %v1410 = vld [vmem:[%s1394 + $0x78] sm:$0xff]
    %v1411 = vld [vmem:[%s1394 + $0x80] sm:$0xff]
    %v1412 = vld [vmem:[%s1394 + $0x88] sm:$0xff]
    %v1413 = vld [vmem:[%s1394 + $0x90] sm:$0xff]
    %v1414 = vld [vmem:[%s1394 + $0x98] sm:$0xff]
    %v1415 = vld [vmem:[%s1394 + $0xa0] sm:$0xff]
    %v1416 = vld [vmem:[%s1394 + $0xa8] sm:$0xff]
    %v1417 = vld [vmem:[%s1394 + $0xb0] sm:$0xff]
    %v1418 = vld [vmem:[%s1394 + $0xb8] sm:$0xff]
    %v1419 = vld [vmem:[%s1394 + $0xc0] sm:$0xff]
    %v1420 = vld [vmem:[%s1394 + $0xc8] sm:$0xff]
    %v1421 = vld [vmem:[%s1394 + $0xd0] sm:$0xff]
    %v1422 = vld [vmem:[%s1394 + $0xd8] sm:$0xff]
    %v1423 = vld [vmem:[%s1394 + $0xe0] sm:$0xff]
    %v1424 = vld [vmem:[%s1394 + $0xe8] sm:$0xff]
    %v1425 = vld [vmem:[%s1394 + $0xf0] sm:$0xff]
    %v1426 = vld [vmem:[%s1394 + $0xf8] sm:$0xff]
    %v1427 = vld [vmem:[%s1394 + $0x100] sm:$0xff]
    %v1428 = vld [vmem:[%s1394 + $0x108] sm:$0xff]
    %v1429 = vld [vmem:[%s1394 + $0x110] sm:$0xff]
    %v1430 = vld [vmem:[%s1394 + $0x118] sm:$0xff]
    %v1431 = vld [vmem:[%s1394 + $0x120] sm:$0xff]
    %v1432 = vld [vmem:[%s1394 + $0x128] sm:$0xff]
    %v1433 = vld [vmem:[%s1394 + $0x130] sm:$0xff]
    %v1434 = vld [vmem:[%s1394 + $0x138] sm:$0xff]
    %v1435 = vld [vmem:[%s1394 + $0x140] sm:$0xff]
    %v1436 = vld [vmem:[%s1394 + $0x148] sm:$0xff]
    %v1437 = vld [vmem:[%s1394 + $0x150] sm:$0xff]
    %v1438 = vld [vmem:[%s1394 + $0x158] sm:$0xff]
    %v1439 = vld [vmem:[%s1394 + $0x160] sm:$0xff]
    %v1440 = vld [vmem:[%s1394 + $0x168] sm:$0xff]
    %v1441 = vld [vmem:[%s1394 + $0x170] sm:$0xff]
    %v1442 = vld [vmem:[%s1394 + $0x178] sm:$0xff]
    %v1443 = vld [vmem:[%s1394 + $0x180] sm:$0xff]
    %v1444 = vld [vmem:[%s1394 + $0x188] sm:$0xff]
    %v1445 = vld [vmem:[%s1394 + $0x190] sm:$0xff]
    %v1446 = vld [vmem:[%s1394 + $0x198] sm:$0xff]
    %v1447 = vld [vmem:[%s1394 + $0x1a0] sm:$0xff]
    %v1448 = vld [vmem:[%s1394 + $0x1a8] sm:$0xff]
    %v1449 = vld [vmem:[%s1394 + $0x1b0] sm:$0xff]
    %v1450 = vld [vmem:[%s1394 + $0x1b8] sm:$0xff]
    %v1451 = vld [vmem:[%s1394 + $0x1c0] sm:$0xff]
    %v1452 = vld [vmem:[%s1394 + $0x1c8] sm:$0xff]
    %v1453 = vld [vmem:[%s1394 + $0x1d0] sm:$0xff]
    %v1454 = vld [vmem:[%s1394 + $0x1d8] sm:$0xff]
    %v1455 = vld [vmem:[%s1394 + $0x1e0] sm:$0xff]
    %v1456 = vld [vmem:[%s1394 + $0x1e8] sm:$0xff]
    %v1457 = vld [vmem:[%s1394 + $0x1f0] sm:$0xff]
    %v1458 = vld [vmem:[%s1394 + $0x1f8] sm:$0xff]
    %v1460 = vsel %vm110, %v1395, 0
    %v1463 = vsel %vm110, %v1396, 0
    %v1466 = vsel %vm110, %v1397, 0
    %v1469 = vsel %vm110, %v1398, 0
    %v1472 = vsel %vm110, %v1399, 0
    %v1475 = vsel %vm110, %v1400, 0
    %v1478 = vsel %vm110, %v1401, 0
    %v1481 = vsel %vm110, %v1402, 0
    %v1484 = vsel %vm110, %v1403, 0
    %v1487 = vsel %vm110, %v1404, 0
    %v1490 = vsel %vm110, %v1405, 0
    %v1493 = vsel %vm110, %v1406, 0
    %v1496 = vsel %vm110, %v1407, 0
    %v1499 = vsel %vm110, %v1408, 0
    %v1502 = vsel %vm110, %v1409, 0
    %v1505 = vsel %vm110, %v1410, 0
    %v1508 = vsel %vm110, %v1411, 0
    %v1511 = vsel %vm110, %v1412, 0
    %v1514 = vsel %vm110, %v1413, 0
    %v1517 = vsel %vm110, %v1414, 0
    %v1520 = vsel %vm110, %v1415, 0
    %v1523 = vsel %vm110, %v1416, 0
    %v1526 = vsel %vm110, %v1417, 0
    %v1529 = vsel %vm110, %v1418, 0
    %v1532 = vsel %vm110, %v1419, 0
    %v1535 = vsel %vm110, %v1420, 0
    %v1538 = vsel %vm110, %v1421, 0
    %v1541 = vsel %vm110, %v1422, 0
    %v1544 = vsel %vm110, %v1423, 0
    %v1547 = vsel %vm110, %v1424, 0
    %v1550 = vsel %vm110, %v1425, 0
    %v1553 = vsel %vm110, %v1426, 0
    %v1556 = vsel %vm110, %v1427, 0
    %v1559 = vsel %vm110, %v1428, 0
    %v1562 = vsel %vm110, %v1429, 0
    %v1565 = vsel %vm110, %v1430, 0
    %v1568 = vsel %vm110, %v1431, 0
    %v1571 = vsel %vm110, %v1432, 0
    %v1574 = vsel %vm110, %v1433, 0
    %v1577 = vsel %vm110, %v1434, 0
    %v1580 = vsel %vm110, %v1435, 0
    %v1583 = vsel %vm110, %v1436, 0
    %v1586 = vsel %vm110, %v1437, 0
    %v1589 = vsel %vm110, %v1438, 0
    %v1592 = vsel %vm110, %v1439, 0
    %v1595 = vsel %vm110, %v1440, 0
    %v1598 = vsel %vm110, %v1441, 0
    %v1601 = vsel %vm110, %v1442, 0
    %v1604 = vsel %vm110, %v1443, 0
    %v1607 = vsel %vm110, %v1444, 0
    %v1610 = vsel %vm110, %v1445, 0
    %v1613 = vsel %vm110, %v1446, 0
    %v1616 = vsel %vm110, %v1447, 0
    %v1619 = vsel %vm110, %v1448, 0
    %v1622 = vsel %vm110, %v1449, 0
    %v1625 = vsel %vm110, %v1450, 0
    %v1628 = vsel %vm110, %v1451, 0
    %v1631 = vsel %vm110, %v1452, 0
    %v1634 = vsel %vm110, %v1453, 0
    %v1637 = vsel %vm110, %v1454, 0
    %v1640 = vsel %vm110, %v1455, 0
    %v1643 = vsel %vm110, %v1456, 0
    %v1646 = vsel %vm110, %v1457, 0
    %v1649 = vsel %vm110, %v1458, 0
    %1651 = vmatprep.subr.mxu0 0.0
    %1652 = vmatpush1.msra.mxu0 %v45
    %1653 = vmatprep.subr.mxu0 0.0
    %1654 = vmatpush1.msra.mxu0 0.0
    %1655 = vmatprep.subr.mxu0 0.0
    %1656 = vmatpush1.msra.mxu0 0.0
    %1657 = vmatprep.subr.mxu0 0.0
    %1658 = vmatpush1.msra.mxu0 0.0
    %1659 = vmatprep.subr.mxu0 0.0
    %1660 = vmatpush1.msra.mxu0 0.0
    %1661 = vmatprep.subr.mxu0 0.0
    %1662 = vmatpush1.msra.mxu0 0.0
    %1663 = vmatprep.subr.mxu0 0.0
    %1664 = vmatpush1.msra.mxu0 0.0
    %1665 = vmatprep.subr.mxu0 0.0
    %1666 = vmatpush1.msra.mxu0 0.0
    %1667 = vmatprep.subr.mxu0 0.0
    %1668 = vmatpush1.msra.mxu0 0.0
    %1669 = vmatprep.subr.mxu0 0.0
    %1670 = vmatpush1.msra.mxu0 0.0
    %1671 = vmatprep.subr.mxu0 0.0
    %1672 = vmatpush1.msra.mxu0 0.0
    %1673 = vmatprep.subr.mxu0 0.0
    %1674 = vmatpush1.msra.mxu0 0.0
    %1675 = vmatprep.subr.mxu0 0.0
    %1676 = vmatpush1.msra.mxu0 0.0
    %1677 = vmatprep.subr.mxu0 0.0
    %1678 = vmatpush1.msra.mxu0 0.0
    %1679 = vmatprep.subr.mxu0 0.0
    %1680 = vmatpush1.msra.mxu0 0.0
    %1681 = vmatprep.subr.mxu0 0.0
    %1682 = vmatpush1.msra.mxu0 0.0
    %1683 = vmatprep.subr.mxu0 0.0
    %1684 = vmatpush1.msra.mxu0 0.0
    %1685 = vmatprep.subr.mxu0 0.0
    %1686 = vmatpush1.msra.mxu0 0.0
    %1687 = vmatprep.subr.mxu0 0.0
    %1688 = vmatpush1.msra.mxu0 0.0
    %1689 = vmatprep.subr.mxu0 0.0
    %1690 = vmatpush1.msra.mxu0 0.0
    %1691 = vmatprep.subr.mxu0 0.0
    %1692 = vmatpush1.msra.mxu0 0.0
    %1693 = vmatprep.subr.mxu0 0.0
    %1694 = vmatpush1.msra.mxu0 0.0
    %1695 = vmatprep.subr.mxu0 0.0
    %1696 = vmatpush1.msra.mxu0 0.0
    %1697 = vmatprep.subr.mxu0 0.0
    %1698 = vmatpush1.msra.mxu0 0.0
    %1699 = vmatprep.subr.mxu0 0.0
    %1700 = vmatpush1.msra.mxu0 0.0
    %1701 = vmatprep.subr.mxu0 0.0
    %1702 = vmatpush1.msra.mxu0 0.0
    %1703 = vmatprep.subr.mxu0 0.0
    %1704 = vmatpush1.msra.mxu0 0.0
    %1705 = vmatprep.subr.mxu0 0.0
    %1706 = vmatpush1.msra.mxu0 0.0
    %1707 = vmatprep.subr.mxu0 0.0
    %1708 = vmatpush1.msra.mxu0 0.0
    %1709 = vmatprep.subr.mxu0 0.0
    %1710 = vmatpush1.msra.mxu0 0.0
    %1711 = vmatprep.subr.mxu0 0.0
    %1712 = vmatpush1.msra.mxu0 0.0
    %1713 = vmatprep.subr.mxu0 0.0
    %1714 = vmatpush1.msra.mxu0 0.0
    %1715 = vmatprep.mubr.f32.mxu0 0.0
    %1716 = vmatmul.mubr.f32.gmra.mrb[0].mxu0 %v1460
    %v1717 = vpop.f32.mrb[0].mxu0
    %v1718 = vadd.f32 0.0, %v1717
    %v1719 = vpop.f32.mrb[0].mxu0
    %1720 = vmatprep.mubr.f32.mxu0 0.0
    %1721 = vmatmul.mubr.f32.gmra.mrb[0].mxu0 %v1463
    %v1722 = vpop.f32.mrb[0].mxu0
    %v1723 = vadd.f32 0.0, %v1722
    %v1724 = vpop.f32.mrb[0].mxu0
    %1725 = vmatprep.mubr.f32.mxu0 0.0
    %1726 = vmatmul.mubr.f32.gmra.mrb[0].mxu0 %v1466
    %v1727 = vpop.f32.mrb[0].mxu0
    %v1728 = vadd.f32 0.0, %v1727
    %v1729 = vpop.f32.mrb[0].mxu0
    %1730 = vmatprep.mubr.f32.mxu0 0.0
    %1731 = vmatmul.mubr.f32.gmra.mrb[0].mxu0 %v1469
    %v1732 = vpop.f32.mrb[0].mxu0
    %v1733 = vadd.f32 0.0, %v1732
    %v1734 = vpop.f32.mrb[0].mxu0
    %1735 = vmatprep.mubr.f32.mxu0 0.0
    %1736 = vmatmul.mubr.f32.gmra.mrb[0].mxu0 %v1472
    %v1737 = vpop.f32.mrb[0].mxu0
    %v1738 = vadd.f32 0.0, %v1737
    %v1739 = vpop.f32.mrb[0].mxu0
    %1740 = vmatprep.mubr.f32.mxu0 0.0
    %1741 = vmatmul.mubr.f32.gmra.mrb[0].mxu0 %v1475
    %v1742 = vpop.f32.mrb[0].mxu0
    %v1743 = vadd.f32 0.0, %v1742
    %v1744 = vpop.f32.mrb[0].mxu0
    %1745 = vmatprep.mubr.f32.mxu0 0.0
    %1746 = vmatmul.mubr.f32.gmra.mrb[0].mxu0 %v1478
    %v1747 = vpop.f32.mrb[0].mxu0
    %v1748 = vadd.f32 0.0, %v1747
    %v1749 = vpop.f32.mrb[0].mxu0
    %1750 = vmatprep.mubr.f32.mxu0 0.0
    %1751 = vmatmul.mubr.f32.gmra.mrb[0].mxu0 %v1481
    %v1752 = vpop.f32.mrb[0].mxu0
    %v1753 = vadd.f32 0.0, %v1752
    %v1754 = vpop.f32.mrb[0].mxu0
    %1755 = vmatprep.mubr.f32.mxu0 0.0
    %1756 = vmatmul.mubr.f32.gmra.mrb[0].mxu0 %v1484
    %v1757 = vpop.f32.mrb[0].mxu0
    %v1758 = vadd.f32 0.0, %v1757
    %v1759 = vpop.f32.mrb[0].mxu0
    %1760 = vmatprep.mubr.f32.mxu0 0.0
    %1761 = vmatmul.mubr.f32.gmra.mrb[0].mxu0 %v1487
    %v1762 = vpop.f32.mrb[0].mxu0
    %v1763 = vadd.f32 0.0, %v1762
    %v1764 = vpop.f32.mrb[0].mxu0
    %1765 = vmatprep.mubr.f32.mxu0 0.0
    %1766 = vmatmul.mubr.f32.gmra.mrb[0].mxu0 %v1490
    %v1767 = vpop.f32.mrb[0].mxu0
    %v1768 = vadd.f32 0.0, %v1767
    %v1769 = vpop.f32.mrb[0].mxu0
    %1770 = vmatprep.mubr.f32.mxu0 0.0
    %1771 = vmatmul.mubr.f32.gmra.mrb[0].mxu0 %v1493
    %v1772 = vpop.f32.mrb[0].mxu0
    %v1773 = vadd.f32 0.0, %v1772
    %v1774 = vpop.f32.mrb[0].mxu0
    %1775 = vmatprep.mubr.f32.mxu0 0.0
    %1776 = vmatmul.mubr.f32.gmra.mrb[0].mxu0 %v1496
    %v1777 = vpop.f32.mrb[0].mxu0
    %v1778 = vadd.f32 0.0, %v1777
    %v1779 = vpop.f32.mrb[0].mxu0
    %1780 = vmatprep.mubr.f32.mxu0 0.0
    %1781 = vmatmul.mubr.f32.gmra.mrb[0].mxu0 %v1499
    %v1782 = vpop.f32.mrb[0].mxu0
    %v1783 = vadd.f32 0.0, %v1782
    %v1784 = vpop.f32.mrb[0].mxu0
    %1785 = vmatprep.mubr.f32.mxu0 0.0
    %1786 = vmatmul.mubr.f32.gmra.mrb[0].mxu0 %v1502
    %v1787 = vpop.f32.mrb[0].mxu0
    %v1788 = vadd.f32 0.0, %v1787
    %v1789 = vpop.f32.mrb[0].mxu0
    %1790 = vmatprep.mubr.f32.mxu0 0.0
    %1791 = vmatmul.mubr.f32.gmra.mrb[0].mxu0 %v1505
    %v1792 = vpop.f32.mrb[0].mxu0
    %v1793 = vadd.f32 0.0, %v1792
    %v1794 = vpop.f32.mrb[0].mxu0
    %1795 = vmatprep.mubr.f32.mxu0 0.0
    %1796 = vmatmul.mubr.f32.gmra.mrb[0].mxu0 %v1508
    %v1797 = vpop.f32.mrb[0].mxu0
    %v1798 = vadd.f32 0.0, %v1797
    %v1799 = vpop.f32.mrb[0].mxu0
    %1800 = vmatprep.mubr.f32.mxu0 0.0
    %1801 = vmatmul.mubr.f32.gmra.mrb[0].mxu0 %v1511
    %v1802 = vpop.f32.mrb[0].mxu0
    %v1803 = vadd.f32 0.0, %v1802
    %v1804 = vpop.f32.mrb[0].mxu0
    %1805 = vmatprep.mubr.f32.mxu0 0.0
    %1806 = vmatmul.mubr.f32.gmra.mrb[0].mxu0 %v1514
    %v1807 = vpop.f32.mrb[0].mxu0
    %v1808 = vadd.f32 0.0, %v1807
    %v1809 = vpop.f32.mrb[0].mxu0
    %1810 = vmatprep.mubr.f32.mxu0 0.0
    %1811 = vmatmul.mubr.f32.gmra.mrb[0].mxu0 %v1517
    %v1812 = vpop.f32.mrb[0].mxu0
    %v1813 = vadd.f32 0.0, %v1812
    %v1814 = vpop.f32.mrb[0].mxu0
    %1815 = vmatprep.mubr.f32.mxu0 0.0
    %1816 = vmatmul.mubr.f32.gmra.mrb[0].mxu0 %v1520
    %v1817 = vpop.f32.mrb[0].mxu0
    %v1818 = vadd.f32 0.0, %v1817
    %v1819 = vpop.f32.mrb[0].mxu0
    %1820 = vmatprep.mubr.f32.mxu0 0.0
    %1821 = vmatmul.mubr.f32.gmra.mrb[0].mxu0 %v1523
    %v1822 = vpop.f32.mrb[0].mxu0
    %v1823 = vadd.f32 0.0, %v1822
    %v1824 = vpop.f32.mrb[0].mxu0
    %1825 = vmatprep.mubr.f32.mxu0 0.0
    %1826 = vmatmul.mubr.f32.gmra.mrb[0].mxu0 %v1526
    %v1827 = vpop.f32.mrb[0].mxu0
    %v1828 = vadd.f32 0.0, %v1827
    %v1829 = vpop.f32.mrb[0].mxu0
    %1830 = vmatprep.mubr.f32.mxu0 0.0
    %1831 = vmatmul.mubr.f32.gmra.mrb[0].mxu0 %v1529
    %v1832 = vpop.f32.mrb[0].mxu0
    %v1833 = vadd.f32 0.0, %v1832
    %v1834 = vpop.f32.mrb[0].mxu0
    %1835 = vmatprep.mubr.f32.mxu0 0.0
    %1836 = vmatmul.mubr.f32.gmra.mrb[0].mxu0 %v1532
    %v1837 = vpop.f32.mrb[0].mxu0
    %v1838 = vadd.f32 0.0, %v1837
    %v1839 = vpop.f32.mrb[0].mxu0
    %1840 = vmatprep.mubr.f32.mxu0 0.0
    %1841 = vmatmul.mubr.f32.gmra.mrb[0].mxu0 %v1535
    %v1842 = vpop.f32.mrb[0].mxu0
    %v1843 = vadd.f32 0.0, %v1842
    %v1844 = vpop.f32.mrb[0].mxu0
    %1845 = vmatprep.mubr.f32.mxu0 0.0
    %1846 = vmatmul.mubr.f32.gmra.mrb[0].mxu0 %v1538
    %v1847 = vpop.f32.mrb[0].mxu0
    %v1848 = vadd.f32 0.0, %v1847
    %v1849 = vpop.f32.mrb[0].mxu0
    %1850 = vmatprep.mubr.f32.mxu0 0.0
    %1851 = vmatmul.mubr.f32.gmra.mrb[0].mxu0 %v1541
    %v1852 = vpop.f32.mrb[0].mxu0
    %v1853 = vadd.f32 0.0, %v1852
    %v1854 = vpop.f32.mrb[0].mxu0
    %1855 = vmatprep.mubr.f32.mxu0 0.0
    %1856 = vmatmul.mubr.f32.gmra.mrb[0].mxu0 %v1544
    %v1857 = vpop.f32.mrb[0].mxu0
    %v1858 = vadd.f32 0.0, %v1857
    %v1859 = vpop.f32.mrb[0].mxu0
    %1860 = vmatprep.mubr.f32.mxu0 0.0
    %1861 = vmatmul.mubr.f32.gmra.mrb[0].mxu0 %v1547
    %v1862 = vpop.f32.mrb[0].mxu0
    %v1863 = vadd.f32 0.0, %v1862
    %v1864 = vpop.f32.mrb[0].mxu0
    %1865 = vmatprep.mubr.f32.mxu0 0.0
    %1866 = vmatmul.mubr.f32.gmra.mrb[0].mxu0 %v1550
    %v1867 = vpop.f32.mrb[0].mxu0
    %v1868 = vadd.f32 0.0, %v1867
    %v1869 = vpop.f32.mrb[0].mxu0
    %1870 = vmatprep.mubr.f32.mxu0 0.0
    %1871 = vmatmul.mubr.f32.gmra.mrb[0].mxu0 %v1553
    %v1872 = vpop.f32.mrb[0].mxu0
    %v1873 = vadd.f32 0.0, %v1872
    %v1874 = vpop.f32.mrb[0].mxu0
    %1875 = vmatprep.mubr.f32.mxu0 0.0
    %1876 = vmatmul.mubr.f32.gmra.mrb[0].mxu0 %v1556
    %v1877 = vpop.f32.mrb[0].mxu0
    %v1878 = vadd.f32 0.0, %v1877
    %v1879 = vpop.f32.mrb[0].mxu0
    %1880 = vmatprep.mubr.f32.mxu0 0.0
    %1881 = vmatmul.mubr.f32.gmra.mrb[0].mxu0 %v1559
    %v1882 = vpop.f32.mrb[0].mxu0
    %v1883 = vadd.f32 0.0, %v1882
    %v1884 = vpop.f32.mrb[0].mxu0
    %1885 = vmatprep.mubr.f32.mxu0 0.0
    %1886 = vmatmul.mubr.f32.gmra.mrb[0].mxu0 %v1562
    %v1887 = vpop.f32.mrb[0].mxu0
    %v1888 = vadd.f32 0.0, %v1887
    %v1889 = vpop.f32.mrb[0].mxu0
    %1890 = vmatprep.mubr.f32.mxu0 0.0
    %1891 = vmatmul.mubr.f32.gmra.mrb[0].mxu0 %v1565
    %v1892 = vpop.f32.mrb[0].mxu0
    %v1893 = vadd.f32 0.0, %v1892
    %v1894 = vpop.f32.mrb[0].mxu0
    %1895 = vmatprep.mubr.f32.mxu0 0.0
    %1896 = vmatmul.mubr.f32.gmra.mrb[0].mxu0 %v1568
    %v1897 = vpop.f32.mrb[0].mxu0
    %v1898 = vadd.f32 0.0, %v1897
    %v1899 = vpop.f32.mrb[0].mxu0
    %1900 = vmatprep.mubr.f32.mxu0 0.0
    %1901 = vmatmul.mubr.f32.gmra.mrb[0].mxu0 %v1571
    %v1902 = vpop.f32.mrb[0].mxu0
    %v1903 = vadd.f32 0.0, %v1902
    %v1904 = vpop.f32.mrb[0].mxu0
    %1905 = vmatprep.mubr.f32.mxu0 0.0
    %1906 = vmatmul.mubr.f32.gmra.mrb[0].mxu0 %v1574
    %v1907 = vpop.f32.mrb[0].mxu0
    %v1908 = vadd.f32 0.0, %v1907
    %v1909 = vpop.f32.mrb[0].mxu0
    %1910 = vmatprep.mubr.f32.mxu0 0.0
    %1911 = vmatmul.mubr.f32.gmra.mrb[0].mxu0 %v1577
    %v1912 = vpop.f32.mrb[0].mxu0
    %v1913 = vadd.f32 0.0, %v1912
    %v1914 = vpop.f32.mrb[0].mxu0
    %1915 = vmatprep.mubr.f32.mxu0 0.0
    %1916 = vmatmul.mubr.f32.gmra.mrb[0].mxu0 %v1580
    %v1917 = vpop.f32.mrb[0].mxu0
    %v1918 = vadd.f32 0.0, %v1917
    %v1919 = vpop.f32.mrb[0].mxu0
    %1920 = vmatprep.mubr.f32.mxu0 0.0
    %1921 = vmatmul.mubr.f32.gmra.mrb[0].mxu0 %v1583
    %v1922 = vpop.f32.mrb[0].mxu0
    %v1923 = vadd.f32 0.0, %v1922
    %v1924 = vpop.f32.mrb[0].mxu0
    %1925 = vmatprep.mubr.f32.mxu0 0.0
    %1926 = vmatmul.mubr.f32.gmra.mrb[0].mxu0 %v1586
    %v1927 = vpop.f32.mrb[0].mxu0
    %v1928 = vadd.f32 0.0, %v1927
    %v1929 = vpop.f32.mrb[0].mxu0
    %1930 = vmatprep.mubr.f32.mxu0 0.0
    %1931 = vmatmul.mubr.f32.gmra.mrb[0].mxu0 %v1589
    %v1932 = vpop.f32.mrb[0].mxu0
    %v1933 = vadd.f32 0.0, %v1932
    %v1934 = vpop.f32.mrb[0].mxu0
    %1935 = vmatprep.mubr.f32.mxu0 0.0
    %1936 = vmatmul.mubr.f32.gmra.mrb[0].mxu0 %v1592
    %v1937 = vpop.f32.mrb[0].mxu0
    %v1938 = vadd.f32 0.0, %v1937
    %v1939 = vpop.f32.mrb[0].mxu0
    %1940 = vmatprep.mubr.f32.mxu0 0.0
    %1941 = vmatmul.mubr.f32.gmra.mrb[0].mxu0 %v1595
    %v1942 = vpop.f32.mrb[0].mxu0
    %v1943 = vadd.f32 0.0, %v1942
    %v1944 = vpop.f32.mrb[0].mxu0
    %1945 = vmatprep.mubr.f32.mxu0 0.0
    %1946 = vmatmul.mubr.f32.gmra.mrb[0].mxu0 %v1598
    %v1947 = vpop.f32.mrb[0].mxu0
    %v1948 = vadd.f32 0.0, %v1947
    %v1949 = vpop.f32.mrb[0].mxu0
    %1950 = vmatprep.mubr.f32.mxu0 0.0
    %1951 = vmatmul.mubr.f32.gmra.mrb[0].mxu0 %v1601
    %v1952 = vpop.f32.mrb[0].mxu0
    %v1953 = vadd.f32 0.0, %v1952
    %v1954 = vpop.f32.mrb[0].mxu0
    %1955 = vmatprep.mubr.f32.mxu0 0.0
    %1956 = vmatmul.mubr.f32.gmra.mrb[0].mxu0 %v1604
    %v1957 = vpop.f32.mrb[0].mxu0
    %v1958 = vadd.f32 0.0, %v1957
    %v1959 = vpop.f32.mrb[0].mxu0
    %1960 = vmatprep.mubr.f32.mxu0 0.0
    %1961 = vmatmul.mubr.f32.gmra.mrb[0].mxu0 %v1607
    %v1962 = vpop.f32.mrb[0].mxu0
    %v1963 = vadd.f32 0.0, %v1962
    %v1964 = vpop.f32.mrb[0].mxu0
    %1965 = vmatprep.mubr.f32.mxu0 0.0
    %1966 = vmatmul.mubr.f32.gmra.mrb[0].mxu0 %v1610
    %v1967 = vpop.f32.mrb[0].mxu0
    %v1968 = vadd.f32 0.0, %v1967
    %v1969 = vpop.f32.mrb[0].mxu0
    %1970 = vmatprep.mubr.f32.mxu0 0.0
    %1971 = vmatmul.mubr.f32.gmra.mrb[0].mxu0 %v1613
    %v1972 = vpop.f32.mrb[0].mxu0
    %v1973 = vadd.f32 0.0, %v1972
    %v1974 = vpop.f32.mrb[0].mxu0
    %1975 = vmatprep.mubr.f32.mxu0 0.0
    %1976 = vmatmul.mubr.f32.gmra.mrb[0].mxu0 %v1616
    %v1977 = vpop.f32.mrb[0].mxu0
    %v1978 = vadd.f32 0.0, %v1977
    %v1979 = vpop.f32.mrb[0].mxu0
    %1980 = vmatprep.mubr.f32.mxu0 0.0
    %1981 = vmatmul.mubr.f32.gmra.mrb[0].mxu0 %v1619
    %v1982 = vpop.f32.mrb[0].mxu0
    %v1983 = vadd.f32 0.0, %v1982
    %v1984 = vpop.f32.mrb[0].mxu0
    %1985 = vmatprep.mubr.f32.mxu0 0.0
    %1986 = vmatmul.mubr.f32.gmra.mrb[0].mxu0 %v1622
    %v1987 = vpop.f32.mrb[0].mxu0
    %v1988 = vadd.f32 0.0, %v1987
    %v1989 = vpop.f32.mrb[0].mxu0
    %1990 = vmatprep.mubr.f32.mxu0 0.0
    %1991 = vmatmul.mubr.f32.gmra.mrb[0].mxu0 %v1625
    %v1992 = vpop.f32.mrb[0].mxu0
    %v1993 = vadd.f32 0.0, %v1992
    %v1994 = vpop.f32.mrb[0].mxu0
    %1995 = vmatprep.mubr.f32.mxu0 0.0
    %1996 = vmatmul.mubr.f32.gmra.mrb[0].mxu0 %v1628
    %v1997 = vpop.f32.mrb[0].mxu0
    %v1998 = vadd.f32 0.0, %v1997
    %v1999 = vpop.f32.mrb[0].mxu0
    %2000 = vmatprep.mubr.f32.mxu0 0.0
    %2001 = vmatmul.mubr.f32.gmra.mrb[0].mxu0 %v1631
    %v2002 = vpop.f32.mrb[0].mxu0
    %v2003 = vadd.f32 0.0, %v2002
    %v2004 = vpop.f32.mrb[0].mxu0
    %2005 = vmatprep.mubr.f32.mxu0 0.0
    %2006 = vmatmul.mubr.f32.gmra.mrb[0].mxu0 %v1634
    %v2007 = vpop.f32.mrb[0].mxu0
    %v2008 = vadd.f32 0.0, %v2007
    %v2009 = vpop.f32.mrb[0].mxu0
    %2010 = vmatprep.mubr.f32.mxu0 0.0
    %2011 = vmatmul.mubr.f32.gmra.mrb[0].mxu0 %v1637
    %v2012 = vpop.f32.mrb[0].mxu0
    %v2013 = vadd.f32 0.0, %v2012
    %v2014 = vpop.f32.mrb[0].mxu0
    %2015 = vmatprep.mubr.f32.mxu0 0.0
    %2016 = vmatmul.mubr.f32.gmra.mrb[0].mxu0 %v1640
    %v2017 = vpop.f32.mrb[0].mxu0
    %v2018 = vadd.f32 0.0, %v2017
    %v2019 = vpop.f32.mrb[0].mxu0
    %2020 = vmatprep.mubr.f32.mxu0 0.0
    %2021 = vmatmul.mubr.f32.gmra.mrb[0].mxu0 %v1643
    %v2022 = vpop.f32.mrb[0].mxu0
    %v2023 = vadd.f32 0.0, %v2022
    %v2024 = vpop.f32.mrb[0].mxu0
    %2025 = vmatprep.mubr.f32.mxu0 0.0
    %2026 = vmatmul.mubr.f32.gmra.mrb[0].mxu0 %v1646
    %v2027 = vpop.f32.mrb[0].mxu0
    %v2028 = vadd.f32 0.0, %v2027
    %v2029 = vpop.f32.mrb[0].mxu0
    %2030 = vmatprep.mubr.f32.mxu0 0.0
    %2031 = vmatmul.mubr.f32.gmra.mrb[0].mxu0 %v1649
    %v2032 = vpop.f32.mrb[0].mxu0
    %v2033 = vadd.f32 0.0, %v2032
    %v2034 = vpop.f32.mrb[0].mxu0
    %2035 = vdwg.mxu0
    %v2036 = vmax.f32 %v1330, %v1718
    %v2037 = vmax.f32 %v1331, %v1723
    %v2038 = vmax.f32 %v1332, %v1728
    %v2039 = vmax.f32 %v1333, %v1733
    %v2040 = vmax.f32 %v1334, %v1738
    %v2041 = vmax.f32 %v1335, %v1743
    %v2042 = vmax.f32 %v1336, %v1748
    %v2043 = vmax.f32 %v1337, %v1753
    %v2044 = vmax.f32 %v1338, %v1758
    %v2045 = vmax.f32 %v1339, %v1763
    %v2046 = vmax.f32 %v1340, %v1768
    %v2047 = vmax.f32 %v1341, %v1773
    %v2048 = vmax.f32 %v1342, %v1778
    %v2049 = vmax.f32 %v1343, %v1783
    %v2050 = vmax.f32 %v1344, %v1788
    %v2051 = vmax.f32 %v1345, %v1793
    %v2052 = vmax.f32 %v1346, %v1798
    %v2053 = vmax.f32 %v1347, %v1803
    %v2054 = vmax.f32 %v1348, %v1808
    %v2055 = vmax.f32 %v1349, %v1813
    %v2056 = vmax.f32 %v1350, %v1818
    %v2057 = vmax.f32 %v1351, %v1823
    %v2058 = vmax.f32 %v1352, %v1828
    %v2059 = vmax.f32 %v1353, %v1833
    %v2060 = vmax.f32 %v1354, %v1838
    %v2061 = vmax.f32 %v1355, %v1843
    %v2062 = vmax.f32 %v1356, %v1848
    %v2063 = vmax.f32 %v1357, %v1853
    %v2064 = vmax.f32 %v1358, %v1858
    %v2065 = vmax.f32 %v1359, %v1863
    %v2066 = vmax.f32 %v1360, %v1868
    %v2067 = vmax.f32 %v1361, %v1873
    %v2068 = vmax.f32 %v1362, %v1878
    %v2069 = vmax.f32 %v1363, %v1883
    %v2070 = vmax.f32 %v1364, %v1888
    %v2071 = vmax.f32 %v1365, %v1893
    %v2072 = vmax.f32 %v1366, %v1898
    %v2073 = vmax.f32 %v1367, %v1903
    %v2074 = vmax.f32 %v1368, %v1908
    %v2075 = vmax.f32 %v1369, %v1913
    %v2076 = vmax.f32 %v1370, %v1918
    %v2077 = vmax.f32 %v1371, %v1923
    %v2078 = vmax.f32 %v1372, %v1928
    %v2079 = vmax.f32 %v1373, %v1933
    %v2080 = vmax.f32 %v1374, %v1938
    %v2081 = vmax.f32 %v1375, %v1943
    %v2082 = vmax.f32 %v1376, %v1948
    %v2083 = vmax.f32 %v1377, %v1953
    %v2084 = vmax.f32 %v1378, %v1958
    %v2085 = vmax.f32 %v1379, %v1963
    %v2086 = vmax.f32 %v1380, %v1968
    %v2087 = vmax.f32 %v1381, %v1973
    %v2088 = vmax.f32 %v1382, %v1978
    %v2089 = vmax.f32 %v1383, %v1983
    %v2090 = vmax.f32 %v1384, %v1988
    %v2091 = vmax.f32 %v1385, %v1993
    %v2092 = vmax.f32 %v1386, %v1998
    %v2093 = vmax.f32 %v1387, %v2003
    %v2094 = vmax.f32 %v1388, %v2008
    %v2095 = vmax.f32 %v1389, %v2013
    %v2096 = vmax.f32 %v1390, %v2018
    %v2097 = vmax.f32 %v1391, %v2023
    %v2098 = vmax.f32 %v1392, %v2028
    %v2099 = vmax.f32 %v1393, %v2033
    %s2100 = scalar_lea.vmem %s0, 1536
    %v2101 = vld [vmem:[%s2100] sm:$0xff]
    %v2102 = vld [vmem:[%s2100 + $0x8] sm:$0xff]
    %v2103 = vld [vmem:[%s2100 + $0x10] sm:$0xff]
    %v2104 = vld [vmem:[%s2100 + $0x18] sm:$0xff]
    %v2105 = vld [vmem:[%s2100 + $0x20] sm:$0xff]
    %v2106 = vld [vmem:[%s2100 + $0x28] sm:$0xff]
    %v2107 = vld [vmem:[%s2100 + $0x30] sm:$0xff]
    %v2108 = vld [vmem:[%s2100 + $0x38] sm:$0xff]
    %v2109 = vld [vmem:[%s2100 + $0x40] sm:$0xff]
    %v2110 = vld [vmem:[%s2100 + $0x48] sm:$0xff]
    %v2111 = vld [vmem:[%s2100 + $0x50] sm:$0xff]
    %v2112 = vld [vmem:[%s2100 + $0x58] sm:$0xff]
    %v2113 = vld [vmem:[%s2100 + $0x60] sm:$0xff]
    %v2114 = vld [vmem:[%s2100 + $0x68] sm:$0xff]
    %v2115 = vld [vmem:[%s2100 + $0x70] sm:$0xff]
    %v2116 = vld [vmem:[%s2100 + $0x78] sm:$0xff]
    %v2117 = vld [vmem:[%s2100 + $0x80] sm:$0xff]
    %v2118 = vld [vmem:[%s2100 + $0x88] sm:$0xff]
    %v2119 = vld [vmem:[%s2100 + $0x90] sm:$0xff]
    %v2120 = vld [vmem:[%s2100 + $0x98] sm:$0xff]
    %v2121 = vld [vmem:[%s2100 + $0xa0] sm:$0xff]
    %v2122 = vld [vmem:[%s2100 + $0xa8] sm:$0xff]
    %v2123 = vld [vmem:[%s2100 + $0xb0] sm:$0xff]
    %v2124 = vld [vmem:[%s2100 + $0xb8] sm:$0xff]
    %v2125 = vld [vmem:[%s2100 + $0xc0] sm:$0xff]
    %v2126 = vld [vmem:[%s2100 + $0xc8] sm:$0xff]
    %v2127 = vld [vmem:[%s2100 + $0xd0] sm:$0xff]
    %v2128 = vld [vmem:[%s2100 + $0xd8] sm:$0xff]
    %v2129 = vld [vmem:[%s2100 + $0xe0] sm:$0xff]
    %v2130 = vld [vmem:[%s2100 + $0xe8] sm:$0xff]
    %v2131 = vld [vmem:[%s2100 + $0xf0] sm:$0xff]
    %v2132 = vld [vmem:[%s2100 + $0xf8] sm:$0xff]
    %v2133 = vld [vmem:[%s2100 + $0x100] sm:$0xff]
    %v2134 = vld [vmem:[%s2100 + $0x108] sm:$0xff]
    %v2135 = vld [vmem:[%s2100 + $0x110] sm:$0xff]
    %v2136 = vld [vmem:[%s2100 + $0x118] sm:$0xff]
    %v2137 = vld [vmem:[%s2100 + $0x120] sm:$0xff]
    %v2138 = vld [vmem:[%s2100 + $0x128] sm:$0xff]
    %v2139 = vld [vmem:[%s2100 + $0x130] sm:$0xff]
    %v2140 = vld [vmem:[%s2100 + $0x138] sm:$0xff]
    %v2141 = vld [vmem:[%s2100 + $0x140] sm:$0xff]
    %v2142 = vld [vmem:[%s2100 + $0x148] sm:$0xff]
    %v2143 = vld [vmem:[%s2100 + $0x150] sm:$0xff]
    %v2144 = vld [vmem:[%s2100 + $0x158] sm:$0xff]
    %v2145 = vld [vmem:[%s2100 + $0x160] sm:$0xff]
    %v2146 = vld [vmem:[%s2100 + $0x168] sm:$0xff]
    %v2147 = vld [vmem:[%s2100 + $0x170] sm:$0xff]
    %v2148 = vld [vmem:[%s2100 + $0x178] sm:$0xff]
    %v2149 = vld [vmem:[%s2100 + $0x180] sm:$0xff]
    %v2150 = vld [vmem:[%s2100 + $0x188] sm:$0xff]
    %v2151 = vld [vmem:[%s2100 + $0x190] sm:$0xff]
    %v2152 = vld [vmem:[%s2100 + $0x198] sm:$0xff]
    %v2153 = vld [vmem:[%s2100 + $0x1a0] sm:$0xff]
    %v2154 = vld [vmem:[%s2100 + $0x1a8] sm:$0xff]
    %v2155 = vld [vmem:[%s2100 + $0x1b0] sm:$0xff]
    %v2156 = vld [vmem:[%s2100 + $0x1b8] sm:$0xff]
    %v2157 = vld [vmem:[%s2100 + $0x1c0] sm:$0xff]
    %v2158 = vld [vmem:[%s2100 + $0x1c8] sm:$0xff]
    %v2159 = vld [vmem:[%s2100 + $0x1d0] sm:$0xff]
    %v2160 = vld [vmem:[%s2100 + $0x1d8] sm:$0xff]
    %v2161 = vld [vmem:[%s2100 + $0x1e0] sm:$0xff]
    %v2162 = vld [vmem:[%s2100 + $0x1e8] sm:$0xff]
    %v2163 = vld [vmem:[%s2100 + $0x1f0] sm:$0xff]
    %v2164 = vld [vmem:[%s2100 + $0x1f8] sm:$0xff]
    %v2166 = vsel %vm110, %v2101, 0
    %v2169 = vsel %vm110, %v2102, 0
    %v2172 = vsel %vm110, %v2103, 0
    %v2175 = vsel %vm110, %v2104, 0
    %v2178 = vsel %vm110, %v2105, 0
    %v2181 = vsel %vm110, %v2106, 0
    %v2184 = vsel %vm110, %v2107, 0
    %v2187 = vsel %vm110, %v2108, 0
    %v2190 = vsel %vm110, %v2109, 0
    %v2193 = vsel %vm110, %v2110, 0
    %v2196 = vsel %vm110, %v2111, 0
    %v2199 = vsel %vm110, %v2112, 0
    %v2202 = vsel %vm110, %v2113, 0
    %v2205 = vsel %vm110, %v2114, 0
    %v2208 = vsel %vm110, %v2115, 0
    %v2211 = vsel %vm110, %v2116, 0
    %v2214 = vsel %vm110, %v2117, 0
    %v2217 = vsel %vm110, %v2118, 0
    %v2220 = vsel %vm110, %v2119, 0
    %v2223 = vsel %vm110, %v2120, 0
    %v2226 = vsel %vm110, %v2121, 0
    %v2229 = vsel %vm110, %v2122, 0
    %v2232 = vsel %vm110, %v2123, 0
    %v2235 = vsel %vm110, %v2124, 0
    %v2238 = vsel %vm110, %v2125, 0
    %v2241 = vsel %vm110, %v2126, 0
    %v2244 = vsel %vm110, %v2127, 0
    %v2247 = vsel %vm110, %v2128, 0
    %v2250 = vsel %vm110, %v2129, 0
    %v2253 = vsel %vm110, %v2130, 0
    %v2256 = vsel %vm110, %v2131, 0
    %v2259 = vsel %vm110, %v2132, 0
    %v2262 = vsel %vm110, %v2133, 0
    %v2265 = vsel %vm110, %v2134, 0
    %v2268 = vsel %vm110, %v2135, 0
    %v2271 = vsel %vm110, %v2136, 0
    %v2274 = vsel %vm110, %v2137, 0
    %v2277 = vsel %vm110, %v2138, 0
    %v2280 = vsel %vm110, %v2139, 0
    %v2283 = vsel %vm110, %v2140, 0
    %v2286 = vsel %vm110, %v2141, 0
    %v2289 = vsel %vm110, %v2142, 0
    %v2292 = vsel %vm110, %v2143, 0
    %v2295 = vsel %vm110, %v2144, 0
    %v2298 = vsel %vm110, %v2145, 0
    %v2301 = vsel %vm110, %v2146, 0
    %v2304 = vsel %vm110, %v2147, 0
    %v2307 = vsel %vm110, %v2148, 0
    %v2310 = vsel %vm110, %v2149, 0
    %v2313 = vsel %vm110, %v2150, 0
    %v2316 = vsel %vm110, %v2151, 0
    %v2319 = vsel %vm110, %v2152, 0
    %v2322 = vsel %vm110, %v2153, 0
    %v2325 = vsel %vm110, %v2154, 0
    %v2328 = vsel %vm110, %v2155, 0
    %v2331 = vsel %vm110, %v2156, 0
    %v2334 = vsel %vm110, %v2157, 0
    %v2337 = vsel %vm110, %v2158, 0
    %v2340 = vsel %vm110, %v2159, 0
    %v2343 = vsel %vm110, %v2160, 0
    %v2346 = vsel %vm110, %v2161, 0
    %v2349 = vsel %vm110, %v2162, 0
    %v2352 = vsel %vm110, %v2163, 0
    %v2355 = vsel %vm110, %v2164, 0
    %2357 = vmatprep.subr.mxu0 0.0
    %2358 = vmatpush1.msra.mxu0 %v45
    %2359 = vmatprep.subr.mxu0 0.0
    %2360 = vmatpush1.msra.mxu0 0.0
    %2361 = vmatprep.subr.mxu0 0.0
    %2362 = vmatpush1.msra.mxu0 0.0
    %2363 = vmatprep.subr.mxu0 0.0
    %2364 = vmatpush1.msra.mxu0 0.0
    %2365 = vmatprep.subr.mxu0 0.0
    %2366 = vmatpush1.msra.mxu0 0.0
    %2367 = vmatprep.subr.mxu0 0.0
    %2368 = vmatpush1.msra.mxu0 0.0
    %2369 = vmatprep.subr.mxu0 0.0
    %2370 = vmatpush1.msra.mxu0 0.0
    %2371 = vmatprep.subr.mxu0 0.0
    %2372 = vmatpush1.msra.mxu0 0.0
    %2373 = vmatprep.subr.mxu0 0.0
    %2374 = vmatpush1.msra.mxu0 0.0
    %2375 = vmatprep.subr.mxu0 0.0
    %2376 = vmatpush1.msra.mxu0 0.0
    %2377 = vmatprep.subr.mxu0 0.0
    %2378 = vmatpush1.msra.mxu0 0.0
    %2379 = vmatprep.subr.mxu0 0.0
    %2380 = vmatpush1.msra.mxu0 0.0
    %2381 = vmatprep.subr.mxu0 0.0
    %2382 = vmatpush1.msra.mxu0 0.0
    %2383 = vmatprep.subr.mxu0 0.0
    %2384 = vmatpush1.msra.mxu0 0.0
    %2385 = vmatprep.subr.mxu0 0.0
    %2386 = vmatpush1.msra.mxu0 0.0
    %2387 = vmatprep.subr.mxu0 0.0
    %2388 = vmatpush1.msra.mxu0 0.0
    %2389 = vmatprep.subr.mxu0 0.0
    %2390 = vmatpush1.msra.mxu0 0.0
    %2391 = vmatprep.subr.mxu0 0.0
    %2392 = vmatpush1.msra.mxu0 0.0
    %2393 = vmatprep.subr.mxu0 0.0
    %2394 = vmatpush1.msra.mxu0 0.0
    %2395 = vmatprep.subr.mxu0 0.0
    %2396 = vmatpush1.msra.mxu0 0.0
    %2397 = vmatprep.subr.mxu0 0.0
    %2398 = vmatpush1.msra.mxu0 0.0
    %2399 = vmatprep.subr.mxu0 0.0
    %2400 = vmatpush1.msra.mxu0 0.0
    %2401 = vmatprep.subr.mxu0 0.0
    %2402 = vmatpush1.msra.mxu0 0.0
    %2403 = vmatprep.subr.mxu0 0.0
    %2404 = vmatpush1.msra.mxu0 0.0
    %2405 = vmatprep.subr.mxu0 0.0
    %2406 = vmatpush1.msra.mxu0 0.0
    %2407 = vmatprep.subr.mxu0 0.0
    %2408 = vmatpush1.msra.mxu0 0.0
    %2409 = vmatprep.subr.mxu0 0.0
    %2410 = vmatpush1.msra.mxu0 0.0
    %2411 = vmatprep.subr.mxu0 0.0
    %2412 = vmatpush1.msra.mxu0 0.0
    %2413 = vmatprep.subr.mxu0 0.0
    %2414 = vmatpush1.msra.mxu0 0.0
    %2415 = vmatprep.subr.mxu0 0.0
    %2416 = vmatpush1.msra.mxu0 0.0
    %2417 = vmatprep.subr.mxu0 0.0
    %2418 = vmatpush1.msra.mxu0 0.0
    %2419 = vmatprep.subr.mxu0 0.0
    %2420 = vmatpush1.msra.mxu0 0.0
    %2421 = vmatprep.mubr.f32.mxu0 0.0
    %2422 = vmatmul.mubr.f32.gmra.mrb[0].mxu0 %v2166
    %v2423 = vpop.f32.mrb[0].mxu0
    %v2424 = vadd.f32 0.0, %v2423
    %v2425 = vpop.f32.mrb[0].mxu0
    %2426 = vmatprep.mubr.f32.mxu0 0.0
    %2427 = vmatmul.mubr.f32.gmra.mrb[0].mxu0 %v2169
    %v2428 = vpop.f32.mrb[0].mxu0
    %v2429 = vadd.f32 0.0, %v2428
    %v2430 = vpop.f32.mrb[0].mxu0
    %2431 = vmatprep.mubr.f32.mxu0 0.0
    %2432 = vmatmul.mubr.f32.gmra.mrb[0].mxu0 %v2172
    %v2433 = vpop.f32.mrb[0].mxu0
    %v2434 = vadd.f32 0.0, %v2433
    %v2435 = vpop.f32.mrb[0].mxu0
    %2436 = vmatprep.mubr.f32.mxu0 0.0
    %2437 = vmatmul.mubr.f32.gmra.mrb[0].mxu0 %v2175
    %v2438 = vpop.f32.mrb[0].mxu0
    %v2439 = vadd.f32 0.0, %v2438
    %v2440 = vpop.f32.mrb[0].mxu0
    %2441 = vmatprep.mubr.f32.mxu0 0.0
    %2442 = vmatmul.mubr.f32.gmra.mrb[0].mxu0 %v2178
    %v2443 = vpop.f32.mrb[0].mxu0
    %v2444 = vadd.f32 0.0, %v2443
    %v2445 = vpop.f32.mrb[0].mxu0
    %2446 = vmatprep.mubr.f32.mxu0 0.0
    %2447 = vmatmul.mubr.f32.gmra.mrb[0].mxu0 %v2181
    %v2448 = vpop.f32.mrb[0].mxu0
    %v2449 = vadd.f32 0.0, %v2448
    %v2450 = vpop.f32.mrb[0].mxu0
    %2451 = vmatprep.mubr.f32.mxu0 0.0
    %2452 = vmatmul.mubr.f32.gmra.mrb[0].mxu0 %v2184
    %v2453 = vpop.f32.mrb[0].mxu0
    %v2454 = vadd.f32 0.0, %v2453
    %v2455 = vpop.f32.mrb[0].mxu0
    %2456 = vmatprep.mubr.f32.mxu0 0.0
    %2457 = vmatmul.mubr.f32.gmra.mrb[0].mxu0 %v2187
    %v2458 = vpop.f32.mrb[0].mxu0
    %v2459 = vadd.f32 0.0, %v2458
    %v2460 = vpop.f32.mrb[0].mxu0
    %2461 = vmatprep.mubr.f32.mxu0 0.0
    %2462 = vmatmul.mubr.f32.gmra.mrb[0].mxu0 %v2190
    %v2463 = vpop.f32.mrb[0].mxu0
    %v2464 = vadd.f32 0.0, %v2463
    %v2465 = vpop.f32.mrb[0].mxu0
    %2466 = vmatprep.mubr.f32.mxu0 0.0
    %2467 = vmatmul.mubr.f32.gmra.mrb[0].mxu0 %v2193
    %v2468 = vpop.f32.mrb[0].mxu0
    %v2469 = vadd.f32 0.0, %v2468
    %v2470 = vpop.f32.mrb[0].mxu0
    %2471 = vmatprep.mubr.f32.mxu0 0.0
    %2472 = vmatmul.mubr.f32.gmra.mrb[0].mxu0 %v2196
    %v2473 = vpop.f32.mrb[0].mxu0
    %v2474 = vadd.f32 0.0, %v2473
    %v2475 = vpop.f32.mrb[0].mxu0
    %2476 = vmatprep.mubr.f32.mxu0 0.0
    %2477 = vmatmul.mubr.f32.gmra.mrb[0].mxu0 %v2199
    %v2478 = vpop.f32.mrb[0].mxu0
    %v2479 = vadd.f32 0.0, %v2478
    %v2480 = vpop.f32.mrb[0].mxu0
    %2481 = vmatprep.mubr.f32.mxu0 0.0
    %2482 = vmatmul.mubr.f32.gmra.mrb[0].mxu0 %v2202
    %v2483 = vpop.f32.mrb[0].mxu0
    %v2484 = vadd.f32 0.0, %v2483
    %v2485 = vpop.f32.mrb[0].mxu0
    %2486 = vmatprep.mubr.f32.mxu0 0.0
    %2487 = vmatmul.mubr.f32.gmra.mrb[0].mxu0 %v2205
    %v2488 = vpop.f32.mrb[0].mxu0
    %v2489 = vadd.f32 0.0, %v2488
    %v2490 = vpop.f32.mrb[0].mxu0
    %2491 = vmatprep.mubr.f32.mxu0 0.0
    %2492 = vmatmul.mubr.f32.gmra.mrb[0].mxu0 %v2208
    %v2493 = vpop.f32.mrb[0].mxu0
    %v2494 = vadd.f32 0.0, %v2493
    %v2495 = vpop.f32.mrb[0].mxu0
    %2496 = vmatprep.mubr.f32.mxu0 0.0
    %2497 = vmatmul.mubr.f32.gmra.mrb[0].mxu0 %v2211
    %v2498 = vpop.f32.mrb[0].mxu0
    %v2499 = vadd.f32 0.0, %v2498
    %v2500 = vpop.f32.mrb[0].mxu0
    %2501 = vmatprep.mubr.f32.mxu0 0.0
    %2502 = vmatmul.mubr.f32.gmra.mrb[0].mxu0 %v2214
    %v2503 = vpop.f32.mrb[0].mxu0
    %v2504 = vadd.f32 0.0, %v2503
    %v2505 = vpop.f32.mrb[0].mxu0
    %2506 = vmatprep.mubr.f32.mxu0 0.0
    %2507 = vmatmul.mubr.f32.gmra.mrb[0].mxu0 %v2217
    %v2508 = vpop.f32.mrb[0].mxu0
    %v2509 = vadd.f32 0.0, %v2508
    %v2510 = vpop.f32.mrb[0].mxu0
    %2511 = vmatprep.mubr.f32.mxu0 0.0
    %2512 = vmatmul.mubr.f32.gmra.mrb[0].mxu0 %v2220
    %v2513 = vpop.f32.mrb[0].mxu0
    %v2514 = vadd.f32 0.0, %v2513
    %v2515 = vpop.f32.mrb[0].mxu0
    %2516 = vmatprep.mubr.f32.mxu0 0.0
    %2517 = vmatmul.mubr.f32.gmra.mrb[0].mxu0 %v2223
    %v2518 = vpop.f32.mrb[0].mxu0
    %v2519 = vadd.f32 0.0, %v2518
    %v2520 = vpop.f32.mrb[0].mxu0
    %2521 = vmatprep.mubr.f32.mxu0 0.0
    %2522 = vmatmul.mubr.f32.gmra.mrb[0].mxu0 %v2226
    %v2523 = vpop.f32.mrb[0].mxu0
    %v2524 = vadd.f32 0.0, %v2523
    %v2525 = vpop.f32.mrb[0].mxu0
    %2526 = vmatprep.mubr.f32.mxu0 0.0
    %2527 = vmatmul.mubr.f32.gmra.mrb[0].mxu0 %v2229
    %v2528 = vpop.f32.mrb[0].mxu0
    %v2529 = vadd.f32 0.0, %v2528
    %v2530 = vpop.f32.mrb[0].mxu0
    %2531 = vmatprep.mubr.f32.mxu0 0.0
    %2532 = vmatmul.mubr.f32.gmra.mrb[0].mxu0 %v2232
    %v2533 = vpop.f32.mrb[0].mxu0
    %v2534 = vadd.f32 0.0, %v2533
    %v2535 = vpop.f32.mrb[0].mxu0
    %2536 = vmatprep.mubr.f32.mxu0 0.0
    %2537 = vmatmul.mubr.f32.gmra.mrb[0].mxu0 %v2235
    %v2538 = vpop.f32.mrb[0].mxu0
    %v2539 = vadd.f32 0.0, %v2538
    %v2540 = vpop.f32.mrb[0].mxu0
    %2541 = vmatprep.mubr.f32.mxu0 0.0
    %2542 = vmatmul.mubr.f32.gmra.mrb[0].mxu0 %v2238
    %v2543 = vpop.f32.mrb[0].mxu0
    %v2544 = vadd.f32 0.0, %v2543
    %v2545 = vpop.f32.mrb[0].mxu0
    %2546 = vmatprep.mubr.f32.mxu0 0.0
    %2547 = vmatmul.mubr.f32.gmra.mrb[0].mxu0 %v2241
    %v2548 = vpop.f32.mrb[0].mxu0
    %v2549 = vadd.f32 0.0, %v2548
    %v2550 = vpop.f32.mrb[0].mxu0
    %2551 = vmatprep.mubr.f32.mxu0 0.0
    %2552 = vmatmul.mubr.f32.gmra.mrb[0].mxu0 %v2244
    %v2553 = vpop.f32.mrb[0].mxu0
    %v2554 = vadd.f32 0.0, %v2553
    %v2555 = vpop.f32.mrb[0].mxu0
    %2556 = vmatprep.mubr.f32.mxu0 0.0
    %2557 = vmatmul.mubr.f32.gmra.mrb[0].mxu0 %v2247
    %v2558 = vpop.f32.mrb[0].mxu0
    %v2559 = vadd.f32 0.0, %v2558
    %v2560 = vpop.f32.mrb[0].mxu0
    %2561 = vmatprep.mubr.f32.mxu0 0.0
    %2562 = vmatmul.mubr.f32.gmra.mrb[0].mxu0 %v2250
    %v2563 = vpop.f32.mrb[0].mxu0
    %v2564 = vadd.f32 0.0, %v2563
    %v2565 = vpop.f32.mrb[0].mxu0
    %2566 = vmatprep.mubr.f32.mxu0 0.0
    %2567 = vmatmul.mubr.f32.gmra.mrb[0].mxu0 %v2253
    %v2568 = vpop.f32.mrb[0].mxu0
    %v2569 = vadd.f32 0.0, %v2568
    %v2570 = vpop.f32.mrb[0].mxu0
    %2571 = vmatprep.mubr.f32.mxu0 0.0
    %2572 = vmatmul.mubr.f32.gmra.mrb[0].mxu0 %v2256
    %v2573 = vpop.f32.mrb[0].mxu0
    %v2574 = vadd.f32 0.0, %v2573
    %v2575 = vpop.f32.mrb[0].mxu0
    %2576 = vmatprep.mubr.f32.mxu0 0.0
    %2577 = vmatmul.mubr.f32.gmra.mrb[0].mxu0 %v2259
    %v2578 = vpop.f32.mrb[0].mxu0
    %v2579 = vadd.f32 0.0, %v2578
    %v2580 = vpop.f32.mrb[0].mxu0
    %2581 = vmatprep.mubr.f32.mxu0 0.0
    %2582 = vmatmul.mubr.f32.gmra.mrb[0].mxu0 %v2262
    %v2583 = vpop.f32.mrb[0].mxu0
    %v2584 = vadd.f32 0.0, %v2583
    %v2585 = vpop.f32.mrb[0].mxu0
    %2586 = vmatprep.mubr.f32.mxu0 0.0
    %2587 = vmatmul.mubr.f32.gmra.mrb[0].mxu0 %v2265
    %v2588 = vpop.f32.mrb[0].mxu0
    %v2589 = vadd.f32 0.0, %v2588
    %v2590 = vpop.f32.mrb[0].mxu0
    %2591 = vmatprep.mubr.f32.mxu0 0.0
    %2592 = vmatmul.mubr.f32.gmra.mrb[0].mxu0 %v2268
    %v2593 = vpop.f32.mrb[0].mxu0
    %v2594 = vadd.f32 0.0, %v2593
    %v2595 = vpop.f32.mrb[0].mxu0
    %2596 = vmatprep.mubr.f32.mxu0 0.0
    %2597 = vmatmul.mubr.f32.gmra.mrb[0].mxu0 %v2271
    %v2598 = vpop.f32.mrb[0].mxu0
    %v2599 = vadd.f32 0.0, %v2598
    %v2600 = vpop.f32.mrb[0].mxu0
    %2601 = vmatprep.mubr.f32.mxu0 0.0
    %2602 = vmatmul.mubr.f32.gmra.mrb[0].mxu0 %v2274
    %v2603 = vpop.f32.mrb[0].mxu0
    %v2604 = vadd.f32 0.0, %v2603
    %v2605 = vpop.f32.mrb[0].mxu0
    %2606 = vmatprep.mubr.f32.mxu0 0.0
    %2607 = vmatmul.mubr.f32.gmra.mrb[0].mxu0 %v2277
    %v2608 = vpop.f32.mrb[0].mxu0
    %v2609 = vadd.f32 0.0, %v2608
    %v2610 = vpop.f32.mrb[0].mxu0
    %2611 = vmatprep.mubr.f32.mxu0 0.0
    %2612 = vmatmul.mubr.f32.gmra.mrb[0].mxu0 %v2280
    %v2613 = vpop.f32.mrb[0].mxu0
    %v2614 = vadd.f32 0.0, %v2613
    %v2615 = vpop.f32.mrb[0].mxu0
    %2616 = vmatprep.mubr.f32.mxu0 0.0
    %2617 = vmatmul.mubr.f32.gmra.mrb[0].mxu0 %v2283
    %v2618 = vpop.f32.mrb[0].mxu0
    %v2619 = vadd.f32 0.0, %v2618
    %v2620 = vpop.f32.mrb[0].mxu0
    %2621 = vmatprep.mubr.f32.mxu0 0.0
    %2622 = vmatmul.mubr.f32.gmra.mrb[0].mxu0 %v2286
    %v2623 = vpop.f32.mrb[0].mxu0
    %v2624 = vadd.f32 0.0, %v2623
    %v2625 = vpop.f32.mrb[0].mxu0
    %2626 = vmatprep.mubr.f32.mxu0 0.0
    %2627 = vmatmul.mubr.f32.gmra.mrb[0].mxu0 %v2289
    %v2628 = vpop.f32.mrb[0].mxu0
    %v2629 = vadd.f32 0.0, %v2628
    %v2630 = vpop.f32.mrb[0].mxu0
    %2631 = vmatprep.mubr.f32.mxu0 0.0
    %2632 = vmatmul.mubr.f32.gmra.mrb[0].mxu0 %v2292
    %v2633 = vpop.f32.mrb[0].mxu0
    %v2634 = vadd.f32 0.0, %v2633
    %v2635 = vpop.f32.mrb[0].mxu0
    %2636 = vmatprep.mubr.f32.mxu0 0.0
    %2637 = vmatmul.mubr.f32.gmra.mrb[0].mxu0 %v2295
    %v2638 = vpop.f32.mrb[0].mxu0
    %v2639 = vadd.f32 0.0, %v2638
    %v2640 = vpop.f32.mrb[0].mxu0
    %2641 = vmatprep.mubr.f32.mxu0 0.0
    %2642 = vmatmul.mubr.f32.gmra.mrb[0].mxu0 %v2298
    %v2643 = vpop.f32.mrb[0].mxu0
    %v2644 = vadd.f32 0.0, %v2643
    %v2645 = vpop.f32.mrb[0].mxu0
    %2646 = vmatprep.mubr.f32.mxu0 0.0
    %2647 = vmatmul.mubr.f32.gmra.mrb[0].mxu0 %v2301
    %v2648 = vpop.f32.mrb[0].mxu0
    %v2649 = vadd.f32 0.0, %v2648
    %v2650 = vpop.f32.mrb[0].mxu0
    %2651 = vmatprep.mubr.f32.mxu0 0.0
    %2652 = vmatmul.mubr.f32.gmra.mrb[0].mxu0 %v2304
    %v2653 = vpop.f32.mrb[0].mxu0
    %v2654 = vadd.f32 0.0, %v2653
    %v2655 = vpop.f32.mrb[0].mxu0
    %2656 = vmatprep.mubr.f32.mxu0 0.0
    %2657 = vmatmul.mubr.f32.gmra.mrb[0].mxu0 %v2307
    %v2658 = vpop.f32.mrb[0].mxu0
    %v2659 = vadd.f32 0.0, %v2658
    %v2660 = vpop.f32.mrb[0].mxu0
    %2661 = vmatprep.mubr.f32.mxu0 0.0
    %2662 = vmatmul.mubr.f32.gmra.mrb[0].mxu0 %v2310
    %v2663 = vpop.f32.mrb[0].mxu0
    %v2664 = vadd.f32 0.0, %v2663
    %v2665 = vpop.f32.mrb[0].mxu0
    %2666 = vmatprep.mubr.f32.mxu0 0.0
    %2667 = vmatmul.mubr.f32.gmra.mrb[0].mxu0 %v2313
    %v2668 = vpop.f32.mrb[0].mxu0
    %v2669 = vadd.f32 0.0, %v2668
    %v2670 = vpop.f32.mrb[0].mxu0
    %2671 = vmatprep.mubr.f32.mxu0 0.0
    %2672 = vmatmul.mubr.f32.gmra.mrb[0].mxu0 %v2316
    %v2673 = vpop.f32.mrb[0].mxu0
    %v2674 = vadd.f32 0.0, %v2673
    %v2675 = vpop.f32.mrb[0].mxu0
    %2676 = vmatprep.mubr.f32.mxu0 0.0
    %2677 = vmatmul.mubr.f32.gmra.mrb[0].mxu0 %v2319
    %v2678 = vpop.f32.mrb[0].mxu0
    %v2679 = vadd.f32 0.0, %v2678
    %v2680 = vpop.f32.mrb[0].mxu0
    %2681 = vmatprep.mubr.f32.mxu0 0.0
    %2682 = vmatmul.mubr.f32.gmra.mrb[0].mxu0 %v2322
    %v2683 = vpop.f32.mrb[0].mxu0
    %v2684 = vadd.f32 0.0, %v2683
    %v2685 = vpop.f32.mrb[0].mxu0
    %2686 = vmatprep.mubr.f32.mxu0 0.0
    %2687 = vmatmul.mubr.f32.gmra.mrb[0].mxu0 %v2325
    %v2688 = vpop.f32.mrb[0].mxu0
    %v2689 = vadd.f32 0.0, %v2688
    %v2690 = vpop.f32.mrb[0].mxu0
    %2691 = vmatprep.mubr.f32.mxu0 0.0
    %2692 = vmatmul.mubr.f32.gmra.mrb[0].mxu0 %v2328
    %v2693 = vpop.f32.mrb[0].mxu0
    %v2694 = vadd.f32 0.0, %v2693
    %v2695 = vpop.f32.mrb[0].mxu0
    %2696 = vmatprep.mubr.f32.mxu0 0.0
    %2697 = vmatmul.mubr.f32.gmra.mrb[0].mxu0 %v2331
    %v2698 = vpop.f32.mrb[0].mxu0
    %v2699 = vadd.f32 0.0, %v2698
    %v2700 = vpop.f32.mrb[0].mxu0
    %2701 = vmatprep.mubr.f32.mxu0 0.0
    %2702 = vmatmul.mubr.f32.gmra.mrb[0].mxu0 %v2334
    %v2703 = vpop.f32.mrb[0].mxu0
    %v2704 = vadd.f32 0.0, %v2703
    %v2705 = vpop.f32.mrb[0].mxu0
    %2706 = vmatprep.mubr.f32.mxu0 0.0
    %2707 = vmatmul.mubr.f32.gmra.mrb[0].mxu0 %v2337
    %v2708 = vpop.f32.mrb[0].mxu0
    %v2709 = vadd.f32 0.0, %v2708
    %v2710 = vpop.f32.mrb[0].mxu0
    %2711 = vmatprep.mubr.f32.mxu0 0.0
    %2712 = vmatmul.mubr.f32.gmra.mrb[0].mxu0 %v2340
    %v2713 = vpop.f32.mrb[0].mxu0
    %v2714 = vadd.f32 0.0, %v2713
    %v2715 = vpop.f32.mrb[0].mxu0
    %2716 = vmatprep.mubr.f32.mxu0 0.0
    %2717 = vmatmul.mubr.f32.gmra.mrb[0].mxu0 %v2343
    %v2718 = vpop.f32.mrb[0].mxu0
    %v2719 = vadd.f32 0.0, %v2718
    %v2720 = vpop.f32.mrb[0].mxu0
    %2721 = vmatprep.mubr.f32.mxu0 0.0
    %2722 = vmatmul.mubr.f32.gmra.mrb[0].mxu0 %v2346
    %v2723 = vpop.f32.mrb[0].mxu0
    %v2724 = vadd.f32 0.0, %v2723
    %v2725 = vpop.f32.mrb[0].mxu0
    %2726 = vmatprep.mubr.f32.mxu0 0.0
    %2727 = vmatmul.mubr.f32.gmra.mrb[0].mxu0 %v2349
    %v2728 = vpop.f32.mrb[0].mxu0
    %v2729 = vadd.f32 0.0, %v2728
    %v2730 = vpop.f32.mrb[0].mxu0
    %2731 = vmatprep.mubr.f32.mxu0 0.0
    %2732 = vmatmul.mubr.f32.gmra.mrb[0].mxu0 %v2352
    %v2733 = vpop.f32.mrb[0].mxu0
    %v2734 = vadd.f32 0.0, %v2733
    %v2735 = vpop.f32.mrb[0].mxu0
    %2736 = vmatprep.mubr.f32.mxu0 0.0
    %2737 = vmatmul.mubr.f32.gmra.mrb[0].mxu0 %v2355
    %v2738 = vpop.f32.mrb[0].mxu0
    %v2739 = vadd.f32 0.0, %v2738
    %v2740 = vpop.f32.mrb[0].mxu0
    %2741 = vdwg.mxu0
    %v2742 = vmax.f32 %v2036, %v2424
    %v2743 = vmax.f32 %v2037, %v2429
    %v2744 = vmax.f32 %v2038, %v2434
    %v2745 = vmax.f32 %v2039, %v2439
    %v2746 = vmax.f32 %v2040, %v2444
    %v2747 = vmax.f32 %v2041, %v2449
    %v2748 = vmax.f32 %v2042, %v2454
    %v2749 = vmax.f32 %v2043, %v2459
    %v2750 = vmax.f32 %v2044, %v2464
    %v2751 = vmax.f32 %v2045, %v2469
    %v2752 = vmax.f32 %v2046, %v2474
    %v2753 = vmax.f32 %v2047, %v2479
    %v2754 = vmax.f32 %v2048, %v2484
    %v2755 = vmax.f32 %v2049, %v2489
    %v2756 = vmax.f32 %v2050, %v2494
    %v2757 = vmax.f32 %v2051, %v2499
    %v2758 = vmax.f32 %v2052, %v2504
    %v2759 = vmax.f32 %v2053, %v2509
    %v2760 = vmax.f32 %v2054, %v2514
    %v2761 = vmax.f32 %v2055, %v2519
    %v2762 = vmax.f32 %v2056, %v2524
    %v2763 = vmax.f32 %v2057, %v2529
    %v2764 = vmax.f32 %v2058, %v2534
    %v2765 = vmax.f32 %v2059, %v2539
    %v2766 = vmax.f32 %v2060, %v2544
    %v2767 = vmax.f32 %v2061, %v2549
    %v2768 = vmax.f32 %v2062, %v2554
    %v2769 = vmax.f32 %v2063, %v2559
    %v2770 = vmax.f32 %v2064, %v2564
    %v2771 = vmax.f32 %v2065, %v2569
    %v2772 = vmax.f32 %v2066, %v2574
    %v2773 = vmax.f32 %v2067, %v2579
    %v2774 = vmax.f32 %v2068, %v2584
    %v2775 = vmax.f32 %v2069, %v2589
    %v2776 = vmax.f32 %v2070, %v2594
    %v2777 = vmax.f32 %v2071, %v2599
    %v2778 = vmax.f32 %v2072, %v2604
    %v2779 = vmax.f32 %v2073, %v2609
    %v2780 = vmax.f32 %v2074, %v2614
    %v2781 = vmax.f32 %v2075, %v2619
    %v2782 = vmax.f32 %v2076, %v2624
    %v2783 = vmax.f32 %v2077, %v2629
    %v2784 = vmax.f32 %v2078, %v2634
    %v2785 = vmax.f32 %v2079, %v2639
    %v2786 = vmax.f32 %v2080, %v2644
    %v2787 = vmax.f32 %v2081, %v2649
    %v2788 = vmax.f32 %v2082, %v2654
    %v2789 = vmax.f32 %v2083, %v2659
    %v2790 = vmax.f32 %v2084, %v2664
    %v2791 = vmax.f32 %v2085, %v2669
    %v2792 = vmax.f32 %v2086, %v2674
    %v2793 = vmax.f32 %v2087, %v2679
    %v2794 = vmax.f32 %v2088, %v2684
    %v2795 = vmax.f32 %v2089, %v2689
    %v2796 = vmax.f32 %v2090, %v2694
    %v2797 = vmax.f32 %v2091, %v2699
    %v2798 = vmax.f32 %v2092, %v2704
    %v2799 = vmax.f32 %v2093, %v2709
    %v2800 = vmax.f32 %v2094, %v2714
    %v2801 = vmax.f32 %v2095, %v2719
    %v2802 = vmax.f32 %v2096, %v2724
    %v2803 = vmax.f32 %v2097, %v2729
    %v2804 = vmax.f32 %v2098, %v2734
    %v2805 = vmax.f32 %v2099, %v2739
    %v2806 = vld [vmem:[%s2] sm:$0x1]
    %v2808 = vlaneseq
    %v2809 = vshrl.u32 %v2808, 7
    %v2810 = vsub.s32 0, %v2809
    %v2811 = vrot.slane %v2806, %v2810
    %v2813 = vadd.f32 %v2742, %v2811
    %v2814 = vadd.f32 %v2743, %v2811
    %v2815 = vadd.f32 %v2744, %v2811
    %v2816 = vadd.f32 %v2745, %v2811
    %v2817 = vadd.f32 %v2746, %v2811
    %v2818 = vadd.f32 %v2747, %v2811
    %v2819 = vadd.f32 %v2748, %v2811
    %v2820 = vadd.f32 %v2749, %v2811
    %v2821 = vadd.f32 %v2750, %v2811
    %v2822 = vadd.f32 %v2751, %v2811
    %v2823 = vadd.f32 %v2752, %v2811
    %v2824 = vadd.f32 %v2753, %v2811
    %v2825 = vadd.f32 %v2754, %v2811
    %v2826 = vadd.f32 %v2755, %v2811
    %v2827 = vadd.f32 %v2756, %v2811
    %v2828 = vadd.f32 %v2757, %v2811
    %v2829 = vadd.f32 %v2758, %v2811
    %v2830 = vadd.f32 %v2759, %v2811
    %v2831 = vadd.f32 %v2760, %v2811
    %v2832 = vadd.f32 %v2761, %v2811
    %v2833 = vadd.f32 %v2762, %v2811
    %v2834 = vadd.f32 %v2763, %v2811
    %v2835 = vadd.f32 %v2764, %v2811
    %v2836 = vadd.f32 %v2765, %v2811
    %v2837 = vadd.f32 %v2766, %v2811
    %v2838 = vadd.f32 %v2767, %v2811
    %v2839 = vadd.f32 %v2768, %v2811
    %v2840 = vadd.f32 %v2769, %v2811
    %v2841 = vadd.f32 %v2770, %v2811
    %v2842 = vadd.f32 %v2771, %v2811
    %v2843 = vadd.f32 %v2772, %v2811
    %v2844 = vadd.f32 %v2773, %v2811
    %v2845 = vadd.f32 %v2774, %v2811
    %v2846 = vadd.f32 %v2775, %v2811
    %v2847 = vadd.f32 %v2776, %v2811
    %v2848 = vadd.f32 %v2777, %v2811
    %v2849 = vadd.f32 %v2778, %v2811
    %v2850 = vadd.f32 %v2779, %v2811
    %v2851 = vadd.f32 %v2780, %v2811
    %v2852 = vadd.f32 %v2781, %v2811
    %v2853 = vadd.f32 %v2782, %v2811
    %v2854 = vadd.f32 %v2783, %v2811
    %v2855 = vadd.f32 %v2784, %v2811
    %v2856 = vadd.f32 %v2785, %v2811
    %v2857 = vadd.f32 %v2786, %v2811
    %v2858 = vadd.f32 %v2787, %v2811
    %v2859 = vadd.f32 %v2788, %v2811
    %v2860 = vadd.f32 %v2789, %v2811
    %v2861 = vadd.f32 %v2790, %v2811
    %v2862 = vadd.f32 %v2791, %v2811
    %v2863 = vadd.f32 %v2792, %v2811
    %v2864 = vadd.f32 %v2793, %v2811
    %v2865 = vadd.f32 %v2794, %v2811
    %v2866 = vadd.f32 %v2795, %v2811
    %v2867 = vadd.f32 %v2796, %v2811
    %v2868 = vadd.f32 %v2797, %v2811
    %v2869 = vadd.f32 %v2798, %v2811
    %v2870 = vadd.f32 %v2799, %v2811
    %v2871 = vadd.f32 %v2800, %v2811
    %v2872 = vadd.f32 %v2801, %v2811
    %v2873 = vadd.f32 %v2802, %v2811
    %v2874 = vadd.f32 %v2803, %v2811
    %v2875 = vadd.f32 %v2804, %v2811
    %v2876 = vadd.f32 %v2805, %v2811
    %v2877 = vmax.f32 %v2813, 0.0
    %v2878 = vmax.f32 %v2814, 0.0
    %v2879 = vmax.f32 %v2815, 0.0
    %v2880 = vmax.f32 %v2816, 0.0
    %v2881 = vmax.f32 %v2817, 0.0
    %v2882 = vmax.f32 %v2818, 0.0
    %v2883 = vmax.f32 %v2819, 0.0
    %v2884 = vmax.f32 %v2820, 0.0
    %v2885 = vmax.f32 %v2821, 0.0
    %v2886 = vmax.f32 %v2822, 0.0
    %v2887 = vmax.f32 %v2823, 0.0
    %v2888 = vmax.f32 %v2824, 0.0
    %v2889 = vmax.f32 %v2825, 0.0
    %v2890 = vmax.f32 %v2826, 0.0
    %v2891 = vmax.f32 %v2827, 0.0
    %v2892 = vmax.f32 %v2828, 0.0
    %v2893 = vmax.f32 %v2829, 0.0
    %v2894 = vmax.f32 %v2830, 0.0
    %v2895 = vmax.f32 %v2831, 0.0
    %v2896 = vmax.f32 %v2832, 0.0
    %v2897 = vmax.f32 %v2833, 0.0
    %v2898 = vmax.f32 %v2834, 0.0
    %v2899 = vmax.f32 %v2835, 0.0
    %v2900 = vmax.f32 %v2836, 0.0
    %v2901 = vmax.f32 %v2837, 0.0
    %v2902 = vmax.f32 %v2838, 0.0
    %v2903 = vmax.f32 %v2839, 0.0
    %v2904 = vmax.f32 %v2840, 0.0
    %v2905 = vmax.f32 %v2841, 0.0
    %v2906 = vmax.f32 %v2842, 0.0
    %v2907 = vmax.f32 %v2843, 0.0
    %v2908 = vmax.f32 %v2844, 0.0
    %v2909 = vmax.f32 %v2845, 0.0
    %v2910 = vmax.f32 %v2846, 0.0
    %v2911 = vmax.f32 %v2847, 0.0
    %v2912 = vmax.f32 %v2848, 0.0
    %v2913 = vmax.f32 %v2849, 0.0
    %v2914 = vmax.f32 %v2850, 0.0
    %v2915 = vmax.f32 %v2851, 0.0
    %v2916 = vmax.f32 %v2852, 0.0
    %v2917 = vmax.f32 %v2853, 0.0
    %v2918 = vmax.f32 %v2854, 0.0
    %v2919 = vmax.f32 %v2855, 0.0
    %v2920 = vmax.f32 %v2856, 0.0
    %v2921 = vmax.f32 %v2857, 0.0
    %v2922 = vmax.f32 %v2858, 0.0
    %v2923 = vmax.f32 %v2859, 0.0
    %v2924 = vmax.f32 %v2860, 0.0
    %v2925 = vmax.f32 %v2861, 0.0
    %v2926 = vmax.f32 %v2862, 0.0
    %v2927 = vmax.f32 %v2863, 0.0
    %v2928 = vmax.f32 %v2864, 0.0
    %v2929 = vmax.f32 %v2865, 0.0
    %v2930 = vmax.f32 %v2866, 0.0
    %v2931 = vmax.f32 %v2867, 0.0
    %v2932 = vmax.f32 %v2868, 0.0
    %v2933 = vmax.f32 %v2869, 0.0
    %v2934 = vmax.f32 %v2870, 0.0
    %v2935 = vmax.f32 %v2871, 0.0
    %v2936 = vmax.f32 %v2872, 0.0
    %v2937 = vmax.f32 %v2873, 0.0
    %v2938 = vmax.f32 %v2874, 0.0
    %v2939 = vmax.f32 %v2875, 0.0
    %v2940 = vmax.f32 %v2876, 0.0
    %vm2941 = vcmask 130048
    %2942 = vst.msk [vmem:[#allocation2] sm:$0xff] %vm2941, %v2877
    %2943 = vst.msk [vmem:[#allocation2 + $0x8] sm:$0xff] %vm2941, %v2878
    %2944 = vst.msk [vmem:[#allocation2 + $0x10] sm:$0xff] %vm2941, %v2879
    %2945 = vst.msk [vmem:[#allocation2 + $0x18] sm:$0xff] %vm2941, %v2880
    %2946 = vst.msk [vmem:[#allocation2 + $0x20] sm:$0xff] %vm2941, %v2881
    %2947 = vst.msk [vmem:[#allocation2 + $0x28] sm:$0xff] %vm2941, %v2882
    %2948 = vst.msk [vmem:[#allocation2 + $0x30] sm:$0xff] %vm2941, %v2883
    %2949 = vst.msk [vmem:[#allocation2 + $0x38] sm:$0xff] %vm2941, %v2884
    %2950 = vst.msk [vmem:[#allocation2 + $0x40] sm:$0xff] %vm2941, %v2885
    %2951 = vst.msk [vmem:[#allocation2 + $0x48] sm:$0xff] %vm2941, %v2886
    %2952 = vst.msk [vmem:[#allocation2 + $0x50] sm:$0xff] %vm2941, %v2887
    %2953 = vst.msk [vmem:[#allocation2 + $0x58] sm:$0xff] %vm2941, %v2888
    %2954 = vst.msk [vmem:[#allocation2 + $0x60] sm:$0xff] %vm2941, %v2889
    %2955 = vst.msk [vmem:[#allocation2 + $0x68] sm:$0xff] %vm2941, %v2890
    %2956 = vst.msk [vmem:[#allocation2 + $0x70] sm:$0xff] %vm2941, %v2891
    %2957 = vst.msk [vmem:[#allocation2 + $0x78] sm:$0xff] %vm2941, %v2892
    %2958 = vst.msk [vmem:[#allocation2 + $0x80] sm:$0xff] %vm2941, %v2893
    %2959 = vst.msk [vmem:[#allocation2 + $0x88] sm:$0xff] %vm2941, %v2894
    %2960 = vst.msk [vmem:[#allocation2 + $0x90] sm:$0xff] %vm2941, %v2895
    %2961 = vst.msk [vmem:[#allocation2 + $0x98] sm:$0xff] %vm2941, %v2896
    %2962 = vst.msk [vmem:[#allocation2 + $0xa0] sm:$0xff] %vm2941, %v2897
    %2963 = vst.msk [vmem:[#allocation2 + $0xa8] sm:$0xff] %vm2941, %v2898
    %2964 = vst.msk [vmem:[#allocation2 + $0xb0] sm:$0xff] %vm2941, %v2899
    %2965 = vst.msk [vmem:[#allocation2 + $0xb8] sm:$0xff] %vm2941, %v2900
    %2966 = vst.msk [vmem:[#allocation2 + $0xc0] sm:$0xff] %vm2941, %v2901
    %2967 = vst.msk [vmem:[#allocation2 + $0xc8] sm:$0xff] %vm2941, %v2902
    %2968 = vst.msk [vmem:[#allocation2 + $0xd0] sm:$0xff] %vm2941, %v2903
    %2969 = vst.msk [vmem:[#allocation2 + $0xd8] sm:$0xff] %vm2941, %v2904
    %2970 = vst.msk [vmem:[#allocation2 + $0xe0] sm:$0xff] %vm2941, %v2905
    %2971 = vst.msk [vmem:[#allocation2 + $0xe8] sm:$0xff] %vm2941, %v2906
    %2972 = vst.msk [vmem:[#allocation2 + $0xf0] sm:$0xff] %vm2941, %v2907
    %2973 = vst.msk [vmem:[#allocation2 + $0xf8] sm:$0xff] %vm2941, %v2908
    %2974 = vst.msk [vmem:[#allocation2 + $0x100] sm:$0xff] %vm2941, %v2909
    %2975 = vst.msk [vmem:[#allocation2 + $0x108] sm:$0xff] %vm2941, %v2910
    %2976 = vst.msk [vmem:[#allocation2 + $0x110] sm:$0xff] %vm2941, %v2911
    %2977 = vst.msk [vmem:[#allocation2 + $0x118] sm:$0xff] %vm2941, %v2912
    %2978 = vst.msk [vmem:[#allocation2 + $0x120] sm:$0xff] %vm2941, %v2913
    %2979 = vst.msk [vmem:[#allocation2 + $0x128] sm:$0xff] %vm2941, %v2914
    %2980 = vst.msk [vmem:[#allocation2 + $0x130] sm:$0xff] %vm2941, %v2915
    %2981 = vst.msk [vmem:[#allocation2 + $0x138] sm:$0xff] %vm2941, %v2916
    %2982 = vst.msk [vmem:[#allocation2 + $0x140] sm:$0xff] %vm2941, %v2917
    %2983 = vst.msk [vmem:[#allocation2 + $0x148] sm:$0xff] %vm2941, %v2918
    %2984 = vst.msk [vmem:[#allocation2 + $0x150] sm:$0xff] %vm2941, %v2919
    %2985 = vst.msk [vmem:[#allocation2 + $0x158] sm:$0xff] %vm2941, %v2920
    %2986 = vst.msk [vmem:[#allocation2 + $0x160] sm:$0xff] %vm2941, %v2921
    %2987 = vst.msk [vmem:[#allocation2 + $0x168] sm:$0xff] %vm2941, %v2922
    %2988 = vst.msk [vmem:[#allocation2 + $0x170] sm:$0xff] %vm2941, %v2923
    %2989 = vst.msk [vmem:[#allocation2 + $0x178] sm:$0xff] %vm2941, %v2924
    %2990 = vst.msk [vmem:[#allocation2 + $0x180] sm:$0xff] %vm2941, %v2925
    %2991 = vst.msk [vmem:[#allocation2 + $0x188] sm:$0xff] %vm2941, %v2926
    %2992 = vst.msk [vmem:[#allocation2 + $0x190] sm:$0xff] %vm2941, %v2927
    %2993 = vst.msk [vmem:[#allocation2 + $0x198] sm:$0xff] %vm2941, %v2928
    %2994 = vst.msk [vmem:[#allocation2 + $0x1a0] sm:$0xff] %vm2941, %v2929
    %2995 = vst.msk [vmem:[#allocation2 + $0x1a8] sm:$0xff] %vm2941, %v2930
    %2996 = vst.msk [vmem:[#allocation2 + $0x1b0] sm:$0xff] %vm2941, %v2931
    %2997 = vst.msk [vmem:[#allocation2 + $0x1b8] sm:$0xff] %vm2941, %v2932
    %2998 = vst.msk [vmem:[#allocation2 + $0x1c0] sm:$0xff] %vm2941, %v2933
    %2999 = vst.msk [vmem:[#allocation2 + $0x1c8] sm:$0xff] %vm2941, %v2934
    %3000 = vst.msk [vmem:[#allocation2 + $0x1d0] sm:$0xff] %vm2941, %v2935
    %3001 = vst.msk [vmem:[#allocation2 + $0x1d8] sm:$0xff] %vm2941, %v2936
    %3002 = vst.msk [vmem:[#allocation2 + $0x1e0] sm:$0xff] %vm2941, %v2937
    %3003 = vst.msk [vmem:[#allocation2 + $0x1e8] sm:$0xff] %vm2941, %v2938
    %3004 = vst.msk [vmem:[#allocation2 + $0x1f0] sm:$0xff] %vm2941, %v2939
    %3005 = vst.msk [vmem:[#allocation2 + $0x1f8] sm:$0xff] %vm2941, %v2940
    %3006 = vst.msk [vmem:[#allocation2 + $0x200] sm:$0xff] %vm2941, 0.0
    %3007 = vst.msk [vmem:[#allocation2 + $0x208] sm:$0xff] %vm2941, 0.0
    %vm3008 = vcmask 122880
    %3009 = vst.msk [vmem:[#allocation2 + $0x210] sm:$0x1] %vm3008, 0.0
    %vm3010 = vcmask 261120
    %3011 = vst.msk [vmem:[#allocation5 + $0x62] sm:$0xff] %vm3010, 0.0
    %vm3012 = vcmask 519168
    %3013 = vst.msk [vmem:[#allocation8 + $0x12] sm:$0xf] %vm3012, 0.0
    %v3014 = vld [vmem:[#allocation2] sm:$0xff]
    %v3015 = vld [vmem:[#allocation2 + $0x8] sm:$0xff]
    %v3016 = vld [vmem:[#allocation2 + $0x10] sm:$0xff]
    %v3017 = vld [vmem:[#allocation2 + $0x18] sm:$0xff]
    %v3018 = vld [vmem:[#allocation2 + $0x20] sm:$0xff]
    %v3019 = vld [vmem:[#allocation2 + $0x28] sm:$0xff]
    %v3020 = vld [vmem:[#allocation2 + $0x30] sm:$0xff]
    %v3021 = vld [vmem:[#allocation2 + $0x38] sm:$0xff]
    %v3022 = vld [vmem:[#allocation2 + $0x40] sm:$0xff]
    %v3023 = vld [vmem:[#allocation2 + $0x48] sm:$0xff]
    %v3024 = vld [vmem:[#allocation2 + $0x50] sm:$0xff]
    %v3025 = vld [vmem:[#allocation2 + $0x58] sm:$0xff]
    %v3026 = vld [vmem:[#allocation2 + $0x60] sm:$0xff]
    %v3027 = vld [vmem:[#allocation2 + $0x68] sm:$0xff]
    %v3028 = vld [vmem:[#allocation2 + $0x70] sm:$0xff]
    %v3029 = vld [vmem:[#allocation2 + $0x78] sm:$0xff]
    %v3030 = vld [vmem:[#allocation2 + $0x80] sm:$0xff]
    %v3031 = vld [vmem:[#allocation2 + $0x88] sm:$0xff]
    %v3032 = vld [vmem:[#allocation2 + $0x90] sm:$0xff]
    %v3033 = vld [vmem:[#allocation2 + $0x98] sm:$0xff]
    %v3034 = vld [vmem:[#allocation2 + $0xa0] sm:$0xff]
    %v3035 = vld [vmem:[#allocation2 + $0xa8] sm:$0xff]
    %v3036 = vld [vmem:[#allocation2 + $0xb0] sm:$0xff]
    %v3037 = vld [vmem:[#allocation2 + $0xb8] sm:$0xff]
    %v3038 = vld [vmem:[#allocation2 + $0xc0] sm:$0xff]
    %v3039 = vld [vmem:[#allocation2 + $0xc8] sm:$0xff]
    %v3040 = vld [vmem:[#allocation2 + $0xd0] sm:$0xff]
    %v3041 = vld [vmem:[#allocation2 + $0xd8] sm:$0xff]
    %v3042 = vld [vmem:[#allocation2 + $0xe0] sm:$0xff]
    %v3043 = vld [vmem:[#allocation2 + $0xe8] sm:$0xff]
    %v3044 = vld [vmem:[#allocation2 + $0xf0] sm:$0xff]
    %v3045 = vld [vmem:[#allocation2 + $0xf8] sm:$0xff]
    %v3046 = vld [vmem:[#allocation2 + $0x100] sm:$0xff]
    %v3047 = vld [vmem:[#allocation2 + $0x108] sm:$0xff]
    %v3048 = vld [vmem:[#allocation2 + $0x110] sm:$0xff]
    %v3049 = vld [vmem:[#allocation2 + $0x118] sm:$0xff]
    %v3050 = vld [vmem:[#allocation2 + $0x120] sm:$0xff]
    %v3051 = vld [vmem:[#allocation2 + $0x128] sm:$0xff]
    %v3052 = vld [vmem:[#allocation2 + $0x130] sm:$0xff]
    %v3053 = vld [vmem:[#allocation2 + $0x138] sm:$0xff]
    %v3054 = vld [vmem:[#allocation2 + $0x140] sm:$0xff]
    %v3055 = vld [vmem:[#allocation2 + $0x148] sm:$0xff]
    %v3056 = vld [vmem:[#allocation2 + $0x150] sm:$0xff]
    %v3057 = vld [vmem:[#allocation2 + $0x158] sm:$0xff]
    %v3058 = vld [vmem:[#allocation2 + $0x160] sm:$0xff]
    %v3059 = vld [vmem:[#allocation2 + $0x168] sm:$0xff]
    %v3060 = vld [vmem:[#allocation2 + $0x170] sm:$0xff]
    %v3061 = vld [vmem:[#allocation2 + $0x178] sm:$0xff]
    %v3062 = vld [vmem:[#allocation2 + $0x180] sm:$0xff]
    %v3063 = vld [vmem:[#allocation2 + $0x188] sm:$0xff]
    %v3064 = vld [vmem:[#allocation2 + $0x190] sm:$0xff]
    %v3065 = vld [vmem:[#allocation2 + $0x198] sm:$0xff]
    %v3066 = vld [vmem:[#allocation2 + $0x1a0] sm:$0xff]
    %v3067 = vld [vmem:[#allocation2 + $0x1a8] sm:$0xff]
    %v3068 = vld [vmem:[#allocation2 + $0x1b0] sm:$0xff]
    %v3069 = vld [vmem:[#allocation2 + $0x1b8] sm:$0xff]
    %v3070 = vld [vmem:[#allocation2 + $0x1c0] sm:$0xff]
    %v3071 = vld [vmem:[#allocation2 + $0x1c8] sm:$0xff]
    %v3072 = vld [vmem:[#allocation2 + $0x1d0] sm:$0xff]
    %v3073 = vld [vmem:[#allocation2 + $0x1d8] sm:$0xff]
    %v3074 = vld [vmem:[#allocation2 + $0x1e0] sm:$0xff]
    %v3075 = vld [vmem:[#allocation2 + $0x1e8] sm:$0xff]
    %v3076 = vld [vmem:[#allocation2 + $0x1f0] sm:$0xff]
    %v3077 = vld [vmem:[#allocation2 + $0x1f8] sm:$0xff]
    %v3078 = vld [vmem:[%s3] sm:$0xff]
    %v3079 = vld [vmem:[%s3 + $0x8] sm:$0xff]
    %v3080 = vld [vmem:[#allocation2 + $0x1] sm:$0xff]
    %v3081 = vld [vmem:[#allocation2 + $0x9] sm:$0xff]
    %v3082 = vld [vmem:[#allocation2 + $0x11] sm:$0xff]
    %v3083 = vld [vmem:[#allocation2 + $0x19] sm:$0xff]
    %v3084 = vld [vmem:[#allocation2 + $0x21] sm:$0xff]
    %v3085 = vld [vmem:[#allocation2 + $0x29] sm:$0xff]
    %v3086 = vld [vmem:[#allocation2 + $0x31] sm:$0xff]
    %v3087 = vld [vmem:[#allocation2 + $0x39] sm:$0xff]
    %v3088 = vld [vmem:[#allocation2 + $0x41] sm:$0xff]
    %v3089 = vld [vmem:[#allocation2 + $0x49] sm:$0xff]
    %v3090 = vld [vmem:[#allocation2 + $0x51] sm:$0xff]
    %v3091 = vld [vmem:[#allocation2 + $0x59] sm:$0xff]
    %v3092 = vld [vmem:[#allocation2 + $0x61] sm:$0xff]
    %v3093 = vld [vmem:[#allocation2 + $0x69] sm:$0xff]
    %v3094 = vld [vmem:[#allocation2 + $0x71] sm:$0xff]
    %v3095 = vld [vmem:[#allocation2 + $0x79] sm:$0xff]
    %v3096 = vld [vmem:[#allocation2 + $0x81] sm:$0xff]
    %v3097 = vld [vmem:[#allocation2 + $0x89] sm:$0xff]
    %v3098 = vld [vmem:[#allocation2 + $0x91] sm:$0xff]
    %v3099 = vld [vmem:[#allocation2 + $0x99] sm:$0xff]
    %v3100 = vld [vmem:[#allocation2 + $0xa1] sm:$0xff]
    %v3101 = vld [vmem:[#allocation2 + $0xa9] sm:$0xff]
    %v3102 = vld [vmem:[#allocation2 + $0xb1] sm:$0xff]
    %v3103 = vld [vmem:[#allocation2 + $0xb9] sm:$0xff]
    %v3104 = vld [vmem:[#allocation2 + $0xc1] sm:$0xff]
    %v3105 = vld [vmem:[#allocation2 + $0xc9] sm:$0xff]
    %v3106 = vld [vmem:[#allocation2 + $0xd1] sm:$0xff]
    %v3107 = vld [vmem:[#allocation2 + $0xd9] sm:$0xff]
    %v3108 = vld [vmem:[#allocation2 + $0xe1] sm:$0xff]
    %v3109 = vld [vmem:[#allocation2 + $0xe9] sm:$0xff]
    %v3110 = vld [vmem:[#allocation2 + $0xf1] sm:$0xff]
    %v3111 = vld [vmem:[#allocation2 + $0xf9] sm:$0xff]
    %v3112 = vld [vmem:[#allocation2 + $0x101] sm:$0xff]
    %v3113 = vld [vmem:[#allocation2 + $0x109] sm:$0xff]
    %v3114 = vld [vmem:[#allocation2 + $0x111] sm:$0xff]
    %v3115 = vld [vmem:[#allocation2 + $0x119] sm:$0xff]
    %v3116 = vld [vmem:[#allocation2 + $0x121] sm:$0xff]
    %v3117 = vld [vmem:[#allocation2 + $0x129] sm:$0xff]
    %v3118 = vld [vmem:[#allocation2 + $0x131] sm:$0xff]
    %v3119 = vld [vmem:[#allocation2 + $0x139] sm:$0xff]
    %v3120 = vld [vmem:[#allocation2 + $0x141] sm:$0xff]
    %v3121 = vld [vmem:[#allocation2 + $0x149] sm:$0xff]
    %v3122 = vld [vmem:[#allocation2 + $0x151] sm:$0xff]
    %v3123 = vld [vmem:[#allocation2 + $0x159] sm:$0xff]
    %v3124 = vld [vmem:[#allocation2 + $0x161] sm:$0xff]
    %v3125 = vld [vmem:[#allocation2 + $0x169] sm:$0xff]
    %v3126 = vld [vmem:[#allocation2 + $0x171] sm:$0xff]
    %v3127 = vld [vmem:[#allocation2 + $0x179] sm:$0xff]
    %v3128 = vld [vmem:[#allocation2 + $0x181] sm:$0xff]
    %v3129 = vld [vmem:[#allocation2 + $0x189] sm:$0xff]
    %v3130 = vld [vmem:[#allocation2 + $0x191] sm:$0xff]
    %v3131 = vld [vmem:[#allocation2 + $0x199] sm:$0xff]
    %v3132 = vld [vmem:[#allocation2 + $0x1a1] sm:$0xff]
    %v3133 = vld [vmem:[#allocation2 + $0x1a9] sm:$0xff]
    %v3134 = vld [vmem:[#allocation2 + $0x1b1] sm:$0xff]
    %v3135 = vld [vmem:[#allocation2 + $0x1b9] sm:$0xff]
    %v3136 = vld [vmem:[#allocation2 + $0x1c1] sm:$0xff]
    %v3137 = vld [vmem:[#allocation2 + $0x1c9] sm:$0xff]
    %v3138 = vld [vmem:[#allocation2 + $0x1d1] sm:$0xff]
    %v3139 = vld [vmem:[#allocation2 + $0x1d9] sm:$0xff]
    %v3140 = vld [vmem:[#allocation2 + $0x1e1] sm:$0xff]
    %v3141 = vld [vmem:[#allocation2 + $0x1e9] sm:$0xff]
    %v3142 = vld [vmem:[#allocation2 + $0x1f1] sm:$0xff]
    %v3143 = vld [vmem:[#allocation2 + $0x1f9] sm:$0xff]
    %s3144 = scalar_lea.vmem %s3, 16
    %v3145 = vld [vmem:[%s3144] sm:$0xff]
    %v3146 = vld [vmem:[%s3144 + $0x8] sm:$0xff]
    %v3148 = vsel %vm2941, %v3080, 0
    %v3151 = vsel %vm2941, %v3081, 0
    %v3154 = vsel %vm2941, %v3082, 0
    %v3157 = vsel %vm2941, %v3083, 0
    %v3160 = vsel %vm2941, %v3084, 0
    %v3163 = vsel %vm2941, %v3085, 0
    %v3166 = vsel %vm2941, %v3086, 0
    %v3169 = vsel %vm2941, %v3087, 0
    %v3172 = vsel %vm2941, %v3088, 0
    %v3175 = vsel %vm2941, %v3089, 0
    %v3178 = vsel %vm2941, %v3090, 0
    %v3181 = vsel %vm2941, %v3091, 0
    %v3184 = vsel %vm2941, %v3092, 0
    %v3187 = vsel %vm2941, %v3093, 0
    %v3190 = vsel %vm2941, %v3094, 0
    %v3193 = vsel %vm2941, %v3095, 0
    %v3196 = vsel %vm2941, %v3096, 0
    %v3199 = vsel %vm2941, %v3097, 0
    %v3202 = vsel %vm2941, %v3098, 0
    %v3205 = vsel %vm2941, %v3099, 0
    %v3208 = vsel %vm2941, %v3100, 0
    %v3211 = vsel %vm2941, %v3101, 0
    %v3214 = vsel %vm2941, %v3102, 0
    %v3217 = vsel %vm2941, %v3103, 0
    %v3220 = vsel %vm2941, %v3104, 0
    %v3223 = vsel %vm2941, %v3105, 0
    %v3226 = vsel %vm2941, %v3106, 0
    %v3229 = vsel %vm2941, %v3107, 0
    %v3232 = vsel %vm2941, %v3108, 0
    %v3235 = vsel %vm2941, %v3109, 0
    %v3238 = vsel %vm2941, %v3110, 0
    %v3241 = vsel %vm2941, %v3111, 0
    %v3244 = vsel %vm2941, %v3112, 0
    %v3247 = vsel %vm2941, %v3113, 0
    %v3250 = vsel %vm2941, %v3114, 0
    %v3253 = vsel %vm2941, %v3115, 0
    %v3256 = vsel %vm2941, %v3116, 0
    %v3259 = vsel %vm2941, %v3117, 0
    %v3262 = vsel %vm2941, %v3118, 0
    %v3265 = vsel %vm2941, %v3119, 0
    %v3268 = vsel %vm2941, %v3120, 0
    %v3271 = vsel %vm2941, %v3121, 0
    %v3274 = vsel %vm2941, %v3122, 0
    %v3277 = vsel %vm2941, %v3123, 0
    %v3280 = vsel %vm2941, %v3124, 0
    %v3283 = vsel %vm2941, %v3125, 0
    %v3286 = vsel %vm2941, %v3126, 0
    %v3289 = vsel %vm2941, %v3127, 0
    %v3292 = vsel %vm2941, %v3128, 0
    %v3295 = vsel %vm2941, %v3129, 0
    %v3298 = vsel %vm2941, %v3130, 0
    %v3301 = vsel %vm2941, %v3131, 0
    %v3304 = vsel %vm2941, %v3132, 0
    %v3307 = vsel %vm2941, %v3133, 0
    %v3310 = vsel %vm2941, %v3134, 0
    %v3313 = vsel %vm2941, %v3135, 0
    %v3316 = vsel %vm2941, %v3136, 0
    %v3319 = vsel %vm2941, %v3137, 0
    %v3322 = vsel %vm2941, %v3138, 0
    %v3325 = vsel %vm2941, %v3139, 0
    %v3328 = vsel %vm2941, %v3140, 0
    %v3331 = vsel %vm2941, %v3141, 0
    %v3334 = vsel %vm2941, %v3142, 0
    %v3337 = vsel %vm2941, %v3143, 0
    %3339 = vmatprep.subr.mxu0 0.0
    %3340 = vmatpush1.msra.mxu0 %v3145
    %3341 = vmatprep.subr.mxu0 0.0
    %3342 = vmatpush1.msra.mxu0 %v3146
    %3343 = vmatprep.subr.mxu0 0.0
    %3344 = vmatpush1.msra.mxu0 0.0
    %3345 = vmatprep.subr.mxu0 0.0
    %3346 = vmatpush1.msra.mxu0 0.0
    %3347 = vmatprep.subr.mxu0 0.0
    %3348 = vmatpush1.msra.mxu0 0.0
    %3349 = vmatprep.subr.mxu0 0.0
    %3350 = vmatpush1.msra.mxu0 0.0
    %3351 = vmatprep.subr.mxu0 0.0
    %3352 = vmatpush1.msra.mxu0 0.0
    %3353 = vmatprep.subr.mxu0 0.0
    %3354 = vmatpush1.msra.mxu0 0.0
    %3355 = vmatprep.subr.mxu0 0.0
    %3356 = vmatpush1.msra.mxu0 0.0
    %3357 = vmatprep.subr.mxu0 0.0
    %3358 = vmatpush1.msra.mxu0 0.0
    %3359 = vmatprep.subr.mxu0 0.0
    %3360 = vmatpush1.msra.mxu0 0.0
    %3361 = vmatprep.subr.mxu0 0.0
    %3362 = vmatpush1.msra.mxu0 0.0
    %3363 = vmatprep.subr.mxu0 0.0
    %3364 = vmatpush1.msra.mxu0 0.0
    %3365 = vmatprep.subr.mxu0 0.0
    %3366 = vmatpush1.msra.mxu0 0.0
    %3367 = vmatprep.subr.mxu0 0.0
    %3368 = vmatpush1.msra.mxu0 0.0
    %3369 = vmatprep.subr.mxu0 0.0
    %3370 = vmatpush1.msra.mxu0 0.0
    %3371 = vmatprep.subr.mxu0 0.0
    %3372 = vmatpush1.msra.mxu0 0.0
    %3373 = vmatprep.subr.mxu0 0.0
    %3374 = vmatpush1.msra.mxu0 0.0
    %3375 = vmatprep.subr.mxu0 0.0
    %3376 = vmatpush1.msra.mxu0 0.0
    %3377 = vmatprep.subr.mxu0 0.0
    %3378 = vmatpush1.msra.mxu0 0.0
    %3379 = vmatprep.subr.mxu0 0.0
    %3380 = vmatpush1.msra.mxu0 0.0
    %3381 = vmatprep.subr.mxu0 0.0
    %3382 = vmatpush1.msra.mxu0 0.0
    %3383 = vmatprep.subr.mxu0 0.0
    %3384 = vmatpush1.msra.mxu0 0.0
    %3385 = vmatprep.subr.mxu0 0.0
    %3386 = vmatpush1.msra.mxu0 0.0
    %3387 = vmatprep.subr.mxu0 0.0
    %3388 = vmatpush1.msra.mxu0 0.0
    %3389 = vmatprep.subr.mxu0 0.0
    %3390 = vmatpush1.msra.mxu0 0.0
    %3391 = vmatprep.subr.mxu0 0.0
    %3392 = vmatpush1.msra.mxu0 0.0
    %3393 = vmatprep.subr.mxu0 0.0
    %3394 = vmatpush1.msra.mxu0 0.0
    %3395 = vmatprep.subr.mxu0 0.0
    %3396 = vmatpush1.msra.mxu0 0.0
    %3397 = vmatprep.subr.mxu0 0.0
    %3398 = vmatpush1.msra.mxu0 0.0
    %3399 = vmatprep.subr.mxu0 0.0
    %3400 = vmatpush1.msra.mxu0 0.0
    %3401 = vmatprep.subr.mxu0 0.0
    %3402 = vmatpush1.msra.mxu0 0.0
    %3403 = vmatprep.mubr.f32.mxu0 0.0
    %3404 = vmatmul.mubr.f32.gmra.mrb[0].mxu0 %v3148
    %v3405 = vpop.f32.mrb[0].mxu0
    %v3406 = vadd.f32 0.0, %v3405
    %v3407 = vpop.f32.mrb[0].mxu0
    %3408 = vmatprep.mubr.f32.mxu0 0.0
    %3409 = vmatmul.mubr.f32.gmra.mrb[0].mxu0 %v3151
    %v3410 = vpop.f32.mrb[0].mxu0
    %v3411 = vadd.f32 0.0, %v3410
    %v3412 = vpop.f32.mrb[0].mxu0
    %3413 = vmatprep.mubr.f32.mxu0 0.0
    %3414 = vmatmul.mubr.f32.gmra.mrb[0].mxu0 %v3154
    %v3415 = vpop.f32.mrb[0].mxu0
    %v3416 = vadd.f32 0.0, %v3415
    %v3417 = vpop.f32.mrb[0].mxu0
    %3418 = vmatprep.mubr.f32.mxu0 0.0
    %3419 = vmatmul.mubr.f32.gmra.mrb[0].mxu0 %v3157
    %v3420 = vpop.f32.mrb[0].mxu0
    %v3421 = vadd.f32 0.0, %v3420
    %v3422 = vpop.f32.mrb[0].mxu0
    %3423 = vmatprep.mubr.f32.mxu0 0.0
    %3424 = vmatmul.mubr.f32.gmra.mrb[0].mxu0 %v3160
    %v3425 = vpop.f32.mrb[0].mxu0
    %v3426 = vadd.f32 0.0, %v3425
    %v3427 = vpop.f32.mrb[0].mxu0
    %3428 = vmatprep.mubr.f32.mxu0 0.0
    %3429 = vmatmul.mubr.f32.gmra.mrb[0].mxu0 %v3163
    %v3430 = vpop.f32.mrb[0].mxu0
    %v3431 = vadd.f32 0.0, %v3430
    %v3432 = vpop.f32.mrb[0].mxu0
    %3433 = vmatprep.mubr.f32.mxu0 0.0
    %3434 = vmatmul.mubr.f32.gmra.mrb[0].mxu0 %v3166
    %v3435 = vpop.f32.mrb[0].mxu0
    %v3436 = vadd.f32 0.0, %v3435
    %v3437 = vpop.f32.mrb[0].mxu0
    %3438 = vmatprep.mubr.f32.mxu0 0.0
    %3439 = vmatmul.mubr.f32.gmra.mrb[0].mxu0 %v3169
    %v3440 = vpop.f32.mrb[0].mxu0
    %v3441 = vadd.f32 0.0, %v3440
    %v3442 = vpop.f32.mrb[0].mxu0
    %3443 = vmatprep.mubr.f32.mxu0 0.0
    %3444 = vmatmul.mubr.f32.gmra.mrb[0].mxu0 %v3172
    %v3445 = vpop.f32.mrb[0].mxu0
    %v3446 = vadd.f32 0.0, %v3445
    %v3447 = vpop.f32.mrb[0].mxu0
    %3448 = vmatprep.mubr.f32.mxu0 0.0
    %3449 = vmatmul.mubr.f32.gmra.mrb[0].mxu0 %v3175
    %v3450 = vpop.f32.mrb[0].mxu0
    %v3451 = vadd.f32 0.0, %v3450
    %v3452 = vpop.f32.mrb[0].mxu0
    %3453 = vmatprep.mubr.f32.mxu0 0.0
    %3454 = vmatmul.mubr.f32.gmra.mrb[0].mxu0 %v3178
    %v3455 = vpop.f32.mrb[0].mxu0
    %v3456 = vadd.f32 0.0, %v3455
    %v3457 = vpop.f32.mrb[0].mxu0
    %3458 = vmatprep.mubr.f32.mxu0 0.0
    %3459 = vmatmul.mubr.f32.gmra.mrb[0].mxu0 %v3181
    %v3460 = vpop.f32.mrb[0].mxu0
    %v3461 = vadd.f32 0.0, %v3460
    %v3462 = vpop.f32.mrb[0].mxu0
    %3463 = vmatprep.mubr.f32.mxu0 0.0
    %3464 = vmatmul.mubr.f32.gmra.mrb[0].mxu0 %v3184
    %v3465 = vpop.f32.mrb[0].mxu0
    %v3466 = vadd.f32 0.0, %v3465
    %v3467 = vpop.f32.mrb[0].mxu0
    %3468 = vmatprep.mubr.f32.mxu0 0.0
    %3469 = vmatmul.mubr.f32.gmra.mrb[0].mxu0 %v3187
    %v3470 = vpop.f32.mrb[0].mxu0
    %v3471 = vadd.f32 0.0, %v3470
    %v3472 = vpop.f32.mrb[0].mxu0
    %3473 = vmatprep.mubr.f32.mxu0 0.0
    %3474 = vmatmul.mubr.f32.gmra.mrb[0].mxu0 %v3190
    %v3475 = vpop.f32.mrb[0].mxu0
    %v3476 = vadd.f32 0.0, %v3475
    %v3477 = vpop.f32.mrb[0].mxu0
    %3478 = vmatprep.mubr.f32.mxu0 0.0
    %3479 = vmatmul.mubr.f32.gmra.mrb[0].mxu0 %v3193
    %v3480 = vpop.f32.mrb[0].mxu0
    %v3481 = vadd.f32 0.0, %v3480
    %v3482 = vpop.f32.mrb[0].mxu0
    %3483 = vmatprep.mubr.f32.mxu0 0.0
    %3484 = vmatmul.mubr.f32.gmra.mrb[0].mxu0 %v3196
    %v3485 = vpop.f32.mrb[0].mxu0
    %v3486 = vadd.f32 0.0, %v3485
    %v3487 = vpop.f32.mrb[0].mxu0
    %3488 = vmatprep.mubr.f32.mxu0 0.0
    %3489 = vmatmul.mubr.f32.gmra.mrb[0].mxu0 %v3199
    %v3490 = vpop.f32.mrb[0].mxu0
    %v3491 = vadd.f32 0.0, %v3490
    %v3492 = vpop.f32.mrb[0].mxu0
    %3493 = vmatprep.mubr.f32.mxu0 0.0
    %3494 = vmatmul.mubr.f32.gmra.mrb[0].mxu0 %v3202
    %v3495 = vpop.f32.mrb[0].mxu0
    %v3496 = vadd.f32 0.0, %v3495
    %v3497 = vpop.f32.mrb[0].mxu0
    %3498 = vmatprep.mubr.f32.mxu0 0.0
    %3499 = vmatmul.mubr.f32.gmra.mrb[0].mxu0 %v3205
    %v3500 = vpop.f32.mrb[0].mxu0
    %v3501 = vadd.f32 0.0, %v3500
    %v3502 = vpop.f32.mrb[0].mxu0
    %3503 = vmatprep.mubr.f32.mxu0 0.0
    %3504 = vmatmul.mubr.f32.gmra.mrb[0].mxu0 %v3208
    %v3505 = vpop.f32.mrb[0].mxu0
    %v3506 = vadd.f32 0.0, %v3505
    %v3507 = vpop.f32.mrb[0].mxu0
    %3508 = vmatprep.mubr.f32.mxu0 0.0
    %3509 = vmatmul.mubr.f32.gmra.mrb[0].mxu0 %v3211
    %v3510 = vpop.f32.mrb[0].mxu0
    %v3511 = vadd.f32 0.0, %v3510
    %v3512 = vpop.f32.mrb[0].mxu0
    %3513 = vmatprep.mubr.f32.mxu0 0.0
    %3514 = vmatmul.mubr.f32.gmra.mrb[0].mxu0 %v3214
    %v3515 = vpop.f32.mrb[0].mxu0
    %v3516 = vadd.f32 0.0, %v3515
    %v3517 = vpop.f32.mrb[0].mxu0
    %3518 = vmatprep.mubr.f32.mxu0 0.0
    %3519 = vmatmul.mubr.f32.gmra.mrb[0].mxu0 %v3217
    %v3520 = vpop.f32.mrb[0].mxu0
    %v3521 = vadd.f32 0.0, %v3520
    %v3522 = vpop.f32.mrb[0].mxu0
    %3523 = vmatprep.mubr.f32.mxu0 0.0
    %3524 = vmatmul.mubr.f32.gmra.mrb[0].mxu0 %v3220
    %v3525 = vpop.f32.mrb[0].mxu0
    %v3526 = vadd.f32 0.0, %v3525
    %v3527 = vpop.f32.mrb[0].mxu0
    %3528 = vmatprep.mubr.f32.mxu0 0.0
    %3529 = vmatmul.mubr.f32.gmra.mrb[0].mxu0 %v3223
    %v3530 = vpop.f32.mrb[0].mxu0
    %v3531 = vadd.f32 0.0, %v3530
    %v3532 = vpop.f32.mrb[0].mxu0
    %3533 = vmatprep.mubr.f32.mxu0 0.0
    %3534 = vmatmul.mubr.f32.gmra.mrb[0].mxu0 %v3226
    %v3535 = vpop.f32.mrb[0].mxu0
    %v3536 = vadd.f32 0.0, %v3535
    %v3537 = vpop.f32.mrb[0].mxu0
    %3538 = vmatprep.mubr.f32.mxu0 0.0
    %3539 = vmatmul.mubr.f32.gmra.mrb[0].mxu0 %v3229
    %v3540 = vpop.f32.mrb[0].mxu0
    %v3541 = vadd.f32 0.0, %v3540
    %v3542 = vpop.f32.mrb[0].mxu0
    %3543 = vmatprep.mubr.f32.mxu0 0.0
    %3544 = vmatmul.mubr.f32.gmra.mrb[0].mxu0 %v3232
    %v3545 = vpop.f32.mrb[0].mxu0
    %v3546 = vadd.f32 0.0, %v3545
    %v3547 = vpop.f32.mrb[0].mxu0
    %3548 = vmatprep.mubr.f32.mxu0 0.0
    %3549 = vmatmul.mubr.f32.gmra.mrb[0].mxu0 %v3235
    %v3550 = vpop.f32.mrb[0].mxu0
    %v3551 = vadd.f32 0.0, %v3550
    %v3552 = vpop.f32.mrb[0].mxu0
    %3553 = vmatprep.mubr.f32.mxu0 0.0
    %3554 = vmatmul.mubr.f32.gmra.mrb[0].mxu0 %v3238
    %v3555 = vpop.f32.mrb[0].mxu0
    %v3556 = vadd.f32 0.0, %v3555
    %v3557 = vpop.f32.mrb[0].mxu0
    %3558 = vmatprep.mubr.f32.mxu0 0.0
    %3559 = vmatmul.mubr.f32.gmra.mrb[0].mxu0 %v3241
    %v3560 = vpop.f32.mrb[0].mxu0
    %v3561 = vadd.f32 0.0, %v3560
    %v3562 = vpop.f32.mrb[0].mxu0
    %3563 = vmatprep.mubr.f32.mxu0 0.0
    %3564 = vmatmul.mubr.f32.gmra.mrb[0].mxu0 %v3244
    %v3565 = vpop.f32.mrb[0].mxu0
    %v3566 = vadd.f32 0.0, %v3565
    %v3567 = vpop.f32.mrb[0].mxu0
    %3568 = vmatprep.mubr.f32.mxu0 0.0
    %3569 = vmatmul.mubr.f32.gmra.mrb[0].mxu0 %v3247
    %v3570 = vpop.f32.mrb[0].mxu0
    %v3571 = vadd.f32 0.0, %v3570
    %v3572 = vpop.f32.mrb[0].mxu0
    %3573 = vmatprep.mubr.f32.mxu0 0.0
    %3574 = vmatmul.mubr.f32.gmra.mrb[0].mxu0 %v3250
    %v3575 = vpop.f32.mrb[0].mxu0
    %v3576 = vadd.f32 0.0, %v3575
    %v3577 = vpop.f32.mrb[0].mxu0
    %3578 = vmatprep.mubr.f32.mxu0 0.0
    %3579 = vmatmul.mubr.f32.gmra.mrb[0].mxu0 %v3253
    %v3580 = vpop.f32.mrb[0].mxu0
    %v3581 = vadd.f32 0.0, %v3580
    %v3582 = vpop.f32.mrb[0].mxu0
    %3583 = vmatprep.mubr.f32.mxu0 0.0
    %3584 = vmatmul.mubr.f32.gmra.mrb[0].mxu0 %v3256
    %v3585 = vpop.f32.mrb[0].mxu0
    %v3586 = vadd.f32 0.0, %v3585
    %v3587 = vpop.f32.mrb[0].mxu0
    %3588 = vmatprep.mubr.f32.mxu0 0.0
    %3589 = vmatmul.mubr.f32.gmra.mrb[0].mxu0 %v3259
    %v3590 = vpop.f32.mrb[0].mxu0
    %v3591 = vadd.f32 0.0, %v3590
    %v3592 = vpop.f32.mrb[0].mxu0
    %3593 = vmatprep.mubr.f32.mxu0 0.0
    %3594 = vmatmul.mubr.f32.gmra.mrb[0].mxu0 %v3262
    %v3595 = vpop.f32.mrb[0].mxu0
    %v3596 = vadd.f32 0.0, %v3595
    %v3597 = vpop.f32.mrb[0].mxu0
    %3598 = vmatprep.mubr.f32.mxu0 0.0
    %3599 = vmatmul.mubr.f32.gmra.mrb[0].mxu0 %v3265
    %v3600 = vpop.f32.mrb[0].mxu0
    %v3601 = vadd.f32 0.0, %v3600
    %v3602 = vpop.f32.mrb[0].mxu0
    %3603 = vmatprep.mubr.f32.mxu0 0.0
    %3604 = vmatmul.mubr.f32.gmra.mrb[0].mxu0 %v3268
    %v3605 = vpop.f32.mrb[0].mxu0
    %v3606 = vadd.f32 0.0, %v3605
    %v3607 = vpop.f32.mrb[0].mxu0
    %3608 = vmatprep.mubr.f32.mxu0 0.0
    %3609 = vmatmul.mubr.f32.gmra.mrb[0].mxu0 %v3271
    %v3610 = vpop.f32.mrb[0].mxu0
    %v3611 = vadd.f32 0.0, %v3610
    %v3612 = vpop.f32.mrb[0].mxu0
    %3613 = vmatprep.mubr.f32.mxu0 0.0
    %3614 = vmatmul.mubr.f32.gmra.mrb[0].mxu0 %v3274
    %v3615 = vpop.f32.mrb[0].mxu0
    %v3616 = vadd.f32 0.0, %v3615
    %v3617 = vpop.f32.mrb[0].mxu0
    %3618 = vmatprep.mubr.f32.mxu0 0.0
    %3619 = vmatmul.mubr.f32.gmra.mrb[0].mxu0 %v3277
    %v3620 = vpop.f32.mrb[0].mxu0
    %v3621 = vadd.f32 0.0, %v3620
    %v3622 = vpop.f32.mrb[0].mxu0
    %3623 = vmatprep.mubr.f32.mxu0 0.0
    %3624 = vmatmul.mubr.f32.gmra.mrb[0].mxu0 %v3280
    %v3625 = vpop.f32.mrb[0].mxu0
    %v3626 = vadd.f32 0.0, %v3625
    %v3627 = vpop.f32.mrb[0].mxu0
    %3628 = vmatprep.mubr.f32.mxu0 0.0
    %3629 = vmatmul.mubr.f32.gmra.mrb[0].mxu0 %v3283
    %v3630 = vpop.f32.mrb[0].mxu0
    %v3631 = vadd.f32 0.0, %v3630
    %v3632 = vpop.f32.mrb[0].mxu0
    %3633 = vmatprep.mubr.f32.mxu0 0.0
    %3634 = vmatmul.mubr.f32.gmra.mrb[0].mxu0 %v3286
    %v3635 = vpop.f32.mrb[0].mxu0
    %v3636 = vadd.f32 0.0, %v3635
    %v3637 = vpop.f32.mrb[0].mxu0
    %3638 = vmatprep.mubr.f32.mxu0 0.0
    %3639 = vmatmul.mubr.f32.gmra.mrb[0].mxu0 %v3289
    %v3640 = vpop.f32.mrb[0].mxu0
    %v3641 = vadd.f32 0.0, %v3640
    %v3642 = vpop.f32.mrb[0].mxu0
    %3643 = vmatprep.mubr.f32.mxu0 0.0
    %3644 = vmatmul.mubr.f32.gmra.mrb[0].mxu0 %v3292
    %v3645 = vpop.f32.mrb[0].mxu0
    %v3646 = vadd.f32 0.0, %v3645
    %v3647 = vpop.f32.mrb[0].mxu0
    %3648 = vmatprep.mubr.f32.mxu0 0.0
    %3649 = vmatmul.mubr.f32.gmra.mrb[0].mxu0 %v3295
    %v3650 = vpop.f32.mrb[0].mxu0
    %v3651 = vadd.f32 0.0, %v3650
    %v3652 = vpop.f32.mrb[0].mxu0
    %3653 = vmatprep.mubr.f32.mxu0 0.0
    %3654 = vmatmul.mubr.f32.gmra.mrb[0].mxu0 %v3298
    %v3655 = vpop.f32.mrb[0].mxu0
    %v3656 = vadd.f32 0.0, %v3655
    %v3657 = vpop.f32.mrb[0].mxu0
    %3658 = vmatprep.mubr.f32.mxu0 0.0
    %3659 = vmatmul.mubr.f32.gmra.mrb[0].mxu0 %v3301
    %v3660 = vpop.f32.mrb[0].mxu0
    %v3661 = vadd.f32 0.0, %v3660
    %v3662 = vpop.f32.mrb[0].mxu0
    %3663 = vmatprep.mubr.f32.mxu0 0.0
    %3664 = vmatmul.mubr.f32.gmra.mrb[0].mxu0 %v3304
    %v3665 = vpop.f32.mrb[0].mxu0
    %v3666 = vadd.f32 0.0, %v3665
    %v3667 = vpop.f32.mrb[0].mxu0
    %3668 = vmatprep.mubr.f32.mxu0 0.0
    %3669 = vmatmul.mubr.f32.gmra.mrb[0].mxu0 %v3307
    %v3670 = vpop.f32.mrb[0].mxu0
    %v3671 = vadd.f32 0.0, %v3670
    %v3672 = vpop.f32.mrb[0].mxu0
    %3673 = vmatprep.mubr.f32.mxu0 0.0
    %3674 = vmatmul.mubr.f32.gmra.mrb[0].mxu0 %v3310
    %v3675 = vpop.f32.mrb[0].mxu0
    %v3676 = vadd.f32 0.0, %v3675
    %v3677 = vpop.f32.mrb[0].mxu0
    %3678 = vmatprep.mubr.f32.mxu0 0.0
    %3679 = vmatmul.mubr.f32.gmra.mrb[0].mxu0 %v3313
    %v3680 = vpop.f32.mrb[0].mxu0
    %v3681 = vadd.f32 0.0, %v3680
    %v3682 = vpop.f32.mrb[0].mxu0
    %3683 = vmatprep.mubr.f32.mxu0 0.0
    %3684 = vmatmul.mubr.f32.gmra.mrb[0].mxu0 %v3316
    %v3685 = vpop.f32.mrb[0].mxu0
    %v3686 = vadd.f32 0.0, %v3685
    %v3687 = vpop.f32.mrb[0].mxu0
    %3688 = vmatprep.mubr.f32.mxu0 0.0
    %3689 = vmatmul.mubr.f32.gmra.mrb[0].mxu0 %v3319
    %v3690 = vpop.f32.mrb[0].mxu0
    %v3691 = vadd.f32 0.0, %v3690
    %v3692 = vpop.f32.mrb[0].mxu0
    %3693 = vmatprep.mubr.f32.mxu0 0.0
    %3694 = vmatmul.mubr.f32.gmra.mrb[0].mxu0 %v3322
    %v3695 = vpop.f32.mrb[0].mxu0
    %v3696 = vadd.f32 0.0, %v3695
    %v3697 = vpop.f32.mrb[0].mxu0
    %3698 = vmatprep.mubr.f32.mxu0 0.0
    %3699 = vmatmul.mubr.f32.gmra.mrb[0].mxu0 %v3325
    %v3700 = vpop.f32.mrb[0].mxu0
    %v3701 = vadd.f32 0.0, %v3700
    %v3702 = vpop.f32.mrb[0].mxu0
    %3703 = vmatprep.mubr.f32.mxu0 0.0
    %3704 = vmatmul.mubr.f32.gmra.mrb[0].mxu0 %v3328
    %v3705 = vpop.f32.mrb[0].mxu0
    %v3706 = vadd.f32 0.0, %v3705
    %v3707 = vpop.f32.mrb[0].mxu0
    %3708 = vmatprep.mubr.f32.mxu0 0.0
    %3709 = vmatmul.mubr.f32.gmra.mrb[0].mxu0 %v3331
    %v3710 = vpop.f32.mrb[0].mxu0
    %v3711 = vadd.f32 0.0, %v3710
    %v3712 = vpop.f32.mrb[0].mxu0
    %3713 = vmatprep.mubr.f32.mxu0 0.0
    %3714 = vmatmul.mubr.f32.gmra.mrb[0].mxu0 %v3334
    %v3715 = vpop.f32.mrb[0].mxu0
    %v3716 = vadd.f32 0.0, %v3715
    %v3717 = vpop.f32.mrb[0].mxu0
    %3718 = vmatprep.mubr.f32.mxu0 0.0
    %3719 = vmatmul.mubr.f32.gmra.mrb[0].mxu0 %v3337
    %v3720 = vpop.f32.mrb[0].mxu0
    %v3721 = vadd.f32 0.0, %v3720
    %v3722 = vpop.f32.mrb[0].mxu0
    %3723 = vdwg.mxu0
    %v3725 = vsel %vm2941, %v3014, 0
    %v3728 = vsel %vm2941, %v3015, 0
    %v3731 = vsel %vm2941, %v3016, 0
    %v3734 = vsel %vm2941, %v3017, 0
    %v3737 = vsel %vm2941, %v3018, 0
    %v3740 = vsel %vm2941, %v3019, 0
    %v3743 = vsel %vm2941, %v3020, 0
    %v3746 = vsel %vm2941, %v3021, 0
    %v3749 = vsel %vm2941, %v3022, 0
    %v3752 = vsel %vm2941, %v3023, 0
    %v3755 = vsel %vm2941, %v3024, 0
    %v3758 = vsel %vm2941, %v3025, 0
    %v3761 = vsel %vm2941, %v3026, 0
    %v3764 = vsel %vm2941, %v3027, 0
    %v3767 = vsel %vm2941, %v3028, 0
    %v3770 = vsel %vm2941, %v3029, 0
    %v3773 = vsel %vm2941, %v3030, 0
    %v3776 = vsel %vm2941, %v3031, 0
    %v3779 = vsel %vm2941, %v3032, 0
    %v3782 = vsel %vm2941, %v3033, 0
    %v3785 = vsel %vm2941, %v3034, 0
    %v3788 = vsel %vm2941, %v3035, 0
    %v3791 = vsel %vm2941, %v3036, 0
    %v3794 = vsel %vm2941, %v3037, 0
    %v3797 = vsel %vm2941, %v3038, 0
    %v3800 = vsel %vm2941, %v3039, 0
    %v3803 = vsel %vm2941, %v3040, 0
    %v3806 = vsel %vm2941, %v3041, 0
    %v3809 = vsel %vm2941, %v3042, 0
    %v3812 = vsel %vm2941, %v3043, 0
    %v3815 = vsel %vm2941, %v3044, 0
    %v3818 = vsel %vm2941, %v3045, 0
    %v3821 = vsel %vm2941, %v3046, 0
    %v3824 = vsel %vm2941, %v3047, 0
    %v3827 = vsel %vm2941, %v3048, 0
    %v3830 = vsel %vm2941, %v3049, 0
    %v3833 = vsel %vm2941, %v3050, 0
    %v3836 = vsel %vm2941, %v3051, 0
    %v3839 = vsel %vm2941, %v3052, 0
    %v3842 = vsel %vm2941, %v3053, 0
    %v3845 = vsel %vm2941, %v3054, 0
    %v3848 = vsel %vm2941, %v3055, 0
    %v3851 = vsel %vm2941, %v3056, 0
    %v3854 = vsel %vm2941, %v3057, 0
    %v3857 = vsel %vm2941, %v3058, 0
    %v3860 = vsel %vm2941, %v3059, 0
    %v3863 = vsel %vm2941, %v3060, 0
    %v3866 = vsel %vm2941, %v3061, 0
    %v3869 = vsel %vm2941, %v3062, 0
    %v3872 = vsel %vm2941, %v3063, 0
    %v3875 = vsel %vm2941, %v3064, 0
    %v3878 = vsel %vm2941, %v3065, 0
    %v3881 = vsel %vm2941, %v3066, 0
    %v3884 = vsel %vm2941, %v3067, 0
    %v3887 = vsel %vm2941, %v3068, 0
    %v3890 = vsel %vm2941, %v3069, 0
    %v3893 = vsel %vm2941, %v3070, 0
    %v3896 = vsel %vm2941, %v3071, 0
    %v3899 = vsel %vm2941, %v3072, 0
    %v3902 = vsel %vm2941, %v3073, 0
    %v3905 = vsel %vm2941, %v3074, 0
    %v3908 = vsel %vm2941, %v3075, 0
    %v3911 = vsel %vm2941, %v3076, 0
    %v3914 = vsel %vm2941, %v3077, 0
    %3916 = vmatprep.subr.mxu0 0.0
    %3917 = vmatpush1.msra.mxu0 %v3078
    %3918 = vmatprep.subr.mxu0 0.0
    %3919 = vmatpush1.msra.mxu0 %v3079
    %3920 = vmatprep.subr.mxu0 0.0
    %3921 = vmatpush1.msra.mxu0 0.0
    %3922 = vmatprep.subr.mxu0 0.0
    %3923 = vmatpush1.msra.mxu0 0.0
    %3924 = vmatprep.subr.mxu0 0.0
    %3925 = vmatpush1.msra.mxu0 0.0
    %3926 = vmatprep.subr.mxu0 0.0
    %3927 = vmatpush1.msra.mxu0 0.0
    %3928 = vmatprep.subr.mxu0 0.0
    %3929 = vmatpush1.msra.mxu0 0.0
    %3930 = vmatprep.subr.mxu0 0.0
    %3931 = vmatpush1.msra.mxu0 0.0
    %3932 = vmatprep.subr.mxu0 0.0
    %3933 = vmatpush1.msra.mxu0 0.0
    %3934 = vmatprep.subr.mxu0 0.0
    %3935 = vmatpush1.msra.mxu0 0.0
    %3936 = vmatprep.subr.mxu0 0.0
    %3937 = vmatpush1.msra.mxu0 0.0
    %3938 = vmatprep.subr.mxu0 0.0
    %3939 = vmatpush1.msra.mxu0 0.0
    %3940 = vmatprep.subr.mxu0 0.0
    %3941 = vmatpush1.msra.mxu0 0.0
    %3942 = vmatprep.subr.mxu0 0.0
    %3943 = vmatpush1.msra.mxu0 0.0
    %3944 = vmatprep.subr.mxu0 0.0
    %3945 = vmatpush1.msra.mxu0 0.0
    %3946 = vmatprep.subr.mxu0 0.0
    %3947 = vmatpush1.msra.mxu0 0.0
    %3948 = vmatprep.subr.mxu0 0.0
    %3949 = vmatpush1.msra.mxu0 0.0
    %3950 = vmatprep.subr.mxu0 0.0
    %3951 = vmatpush1.msra.mxu0 0.0
    %3952 = vmatprep.subr.mxu0 0.0
    %3953 = vmatpush1.msra.mxu0 0.0
    %3954 = vmatprep.subr.mxu0 0.0
    %3955 = vmatpush1.msra.mxu0 0.0
    %3956 = vmatprep.subr.mxu0 0.0
    %3957 = vmatpush1.msra.mxu0 0.0
    %3958 = vmatprep.subr.mxu0 0.0
    %3959 = vmatpush1.msra.mxu0 0.0
    %3960 = vmatprep.subr.mxu0 0.0
    %3961 = vmatpush1.msra.mxu0 0.0
    %3962 = vmatprep.subr.mxu0 0.0
    %3963 = vmatpush1.msra.mxu0 0.0
    %3964 = vmatprep.subr.mxu0 0.0
    %3965 = vmatpush1.msra.mxu0 0.0
    %3966 = vmatprep.subr.mxu0 0.0
    %3967 = vmatpush1.msra.mxu0 0.0
    %3968 = vmatprep.subr.mxu0 0.0
    %3969 = vmatpush1.msra.mxu0 0.0
    %3970 = vmatprep.subr.mxu0 0.0
    %3971 = vmatpush1.msra.mxu0 0.0
    %3972 = vmatprep.subr.mxu0 0.0
    %3973 = vmatpush1.msra.mxu0 0.0
    %3974 = vmatprep.subr.mxu0 0.0
    %3975 = vmatpush1.msra.mxu0 0.0
    %3976 = vmatprep.subr.mxu0 0.0
    %3977 = vmatpush1.msra.mxu0 0.0
    %3978 = vmatprep.subr.mxu0 0.0
    %3979 = vmatpush1.msra.mxu0 0.0
    %3980 = vmatprep.mubr.f32.mxu0 0.0
    %3981 = vmatmul.mubr.f32.gmra.mrb[0].mxu0 %v3725
    %v3982 = vpop.f32.mrb[0].mxu0
    %v3983 = vadd.f32 %v3406, %v3982
    %v3984 = vpop.f32.mrb[0].mxu0
    %3985 = vmatprep.mubr.f32.mxu0 0.0
    %3986 = vmatmul.mubr.f32.gmra.mrb[0].mxu0 %v3728
    %v3987 = vpop.f32.mrb[0].mxu0
    %v3988 = vadd.f32 %v3411, %v3987
    %v3989 = vpop.f32.mrb[0].mxu0
    %3990 = vmatprep.mubr.f32.mxu0 0.0
    %3991 = vmatmul.mubr.f32.gmra.mrb[0].mxu0 %v3731
    %v3992 = vpop.f32.mrb[0].mxu0
    %v3993 = vadd.f32 %v3416, %v3992
    %v3994 = vpop.f32.mrb[0].mxu0
    %3995 = vmatprep.mubr.f32.mxu0 0.0
    %3996 = vmatmul.mubr.f32.gmra.mrb[0].mxu0 %v3734
    %v3997 = vpop.f32.mrb[0].mxu0
    %v3998 = vadd.f32 %v3421, %v3997
    %v3999 = vpop.f32.mrb[0].mxu0
    %4000 = vmatprep.mubr.f32.mxu0 0.0
    %4001 = vmatmul.mubr.f32.gmra.mrb[0].mxu0 %v3737
    %v4002 = vpop.f32.mrb[0].mxu0
    %v4003 = vadd.f32 %v3426, %v4002
    %v4004 = vpop.f32.mrb[0].mxu0
    %4005 = vmatprep.mubr.f32.mxu0 0.0
    %4006 = vmatmul.mubr.f32.gmra.mrb[0].mxu0 %v3740
    %v4007 = vpop.f32.mrb[0].mxu0
    %v4008 = vadd.f32 %v3431, %v4007
    %v4009 = vpop.f32.mrb[0].mxu0
    %4010 = vmatprep.mubr.f32.mxu0 0.0
    %4011 = vmatmul.mubr.f32.gmra.mrb[0].mxu0 %v3743
    %v4012 = vpop.f32.mrb[0].mxu0
    %v4013 = vadd.f32 %v3436, %v4012
    %v4014 = vpop.f32.mrb[0].mxu0
    %4015 = vmatprep.mubr.f32.mxu0 0.0
    %4016 = vmatmul.mubr.f32.gmra.mrb[0].mxu0 %v3746
    %v4017 = vpop.f32.mrb[0].mxu0
    %v4018 = vadd.f32 %v3441, %v4017
    %v4019 = vpop.f32.mrb[0].mxu0
    %4020 = vmatprep.mubr.f32.mxu0 0.0
    %4021 = vmatmul.mubr.f32.gmra.mrb[0].mxu0 %v3749
    %v4022 = vpop.f32.mrb[0].mxu0
    %v4023 = vadd.f32 %v3446, %v4022
    %v4024 = vpop.f32.mrb[0].mxu0
    %4025 = vmatprep.mubr.f32.mxu0 0.0
    %4026 = vmatmul.mubr.f32.gmra.mrb[0].mxu0 %v3752
    %v4027 = vpop.f32.mrb[0].mxu0
    %v4028 = vadd.f32 %v3451, %v4027
    %v4029 = vpop.f32.mrb[0].mxu0
    %4030 = vmatprep.mubr.f32.mxu0 0.0
    %4031 = vmatmul.mubr.f32.gmra.mrb[0].mxu0 %v3755
    %v4032 = vpop.f32.mrb[0].mxu0
    %v4033 = vadd.f32 %v3456, %v4032
    %v4034 = vpop.f32.mrb[0].mxu0
    %4035 = vmatprep.mubr.f32.mxu0 0.0
    %4036 = vmatmul.mubr.f32.gmra.mrb[0].mxu0 %v3758
    %v4037 = vpop.f32.mrb[0].mxu0
    %v4038 = vadd.f32 %v3461, %v4037
    %v4039 = vpop.f32.mrb[0].mxu0
    %4040 = vmatprep.mubr.f32.mxu0 0.0
    %4041 = vmatmul.mubr.f32.gmra.mrb[0].mxu0 %v3761
    %v4042 = vpop.f32.mrb[0].mxu0
    %v4043 = vadd.f32 %v3466, %v4042
    %v4044 = vpop.f32.mrb[0].mxu0
    %4045 = vmatprep.mubr.f32.mxu0 0.0
    %4046 = vmatmul.mubr.f32.gmra.mrb[0].mxu0 %v3764
    %v4047 = vpop.f32.mrb[0].mxu0
    %v4048 = vadd.f32 %v3471, %v4047
    %v4049 = vpop.f32.mrb[0].mxu0
    %4050 = vmatprep.mubr.f32.mxu0 0.0
    %4051 = vmatmul.mubr.f32.gmra.mrb[0].mxu0 %v3767
    %v4052 = vpop.f32.mrb[0].mxu0
    %v4053 = vadd.f32 %v3476, %v4052
    %v4054 = vpop.f32.mrb[0].mxu0
    %4055 = vmatprep.mubr.f32.mxu0 0.0
    %4056 = vmatmul.mubr.f32.gmra.mrb[0].mxu0 %v3770
    %v4057 = vpop.f32.mrb[0].mxu0
    %v4058 = vadd.f32 %v3481, %v4057
    %v4059 = vpop.f32.mrb[0].mxu0
    %4060 = vmatprep.mubr.f32.mxu0 0.0
    %4061 = vmatmul.mubr.f32.gmra.mrb[0].mxu0 %v3773
    %v4062 = vpop.f32.mrb[0].mxu0
    %v4063 = vadd.f32 %v3486, %v4062
    %v4064 = vpop.f32.mrb[0].mxu0
    %4065 = vmatprep.mubr.f32.mxu0 0.0
    %4066 = vmatmul.mubr.f32.gmra.mrb[0].mxu0 %v3776
    %v4067 = vpop.f32.mrb[0].mxu0
    %v4068 = vadd.f32 %v3491, %v4067
    %v4069 = vpop.f32.mrb[0].mxu0
    %4070 = vmatprep.mubr.f32.mxu0 0.0
    %4071 = vmatmul.mubr.f32.gmra.mrb[0].mxu0 %v3779
    %v4072 = vpop.f32.mrb[0].mxu0
    %v4073 = vadd.f32 %v3496, %v4072
    %v4074 = vpop.f32.mrb[0].mxu0
    %4075 = vmatprep.mubr.f32.mxu0 0.0
    %4076 = vmatmul.mubr.f32.gmra.mrb[0].mxu0 %v3782
    %v4077 = vpop.f32.mrb[0].mxu0
    %v4078 = vadd.f32 %v3501, %v4077
    %v4079 = vpop.f32.mrb[0].mxu0
    %4080 = vmatprep.mubr.f32.mxu0 0.0
    %4081 = vmatmul.mubr.f32.gmra.mrb[0].mxu0 %v3785
    %v4082 = vpop.f32.mrb[0].mxu0
    %v4083 = vadd.f32 %v3506, %v4082
    %v4084 = vpop.f32.mrb[0].mxu0
    %4085 = vmatprep.mubr.f32.mxu0 0.0
    %4086 = vmatmul.mubr.f32.gmra.mrb[0].mxu0 %v3788
    %v4087 = vpop.f32.mrb[0].mxu0
    %v4088 = vadd.f32 %v3511, %v4087
    %v4089 = vpop.f32.mrb[0].mxu0
    %4090 = vmatprep.mubr.f32.mxu0 0.0
    %4091 = vmatmul.mubr.f32.gmra.mrb[0].mxu0 %v3791
    %v4092 = vpop.f32.mrb[0].mxu0
    %v4093 = vadd.f32 %v3516, %v4092
    %v4094 = vpop.f32.mrb[0].mxu0
    %4095 = vmatprep.mubr.f32.mxu0 0.0
    %4096 = vmatmul.mubr.f32.gmra.mrb[0].mxu0 %v3794
    %v4097 = vpop.f32.mrb[0].mxu0
    %v4098 = vadd.f32 %v3521, %v4097
    %v4099 = vpop.f32.mrb[0].mxu0
    %4100 = vmatprep.mubr.f32.mxu0 0.0
    %4101 = vmatmul.mubr.f32.gmra.mrb[0].mxu0 %v3797
    %v4102 = vpop.f32.mrb[0].mxu0
    %v4103 = vadd.f32 %v3526, %v4102
    %v4104 = vpop.f32.mrb[0].mxu0
    %4105 = vmatprep.mubr.f32.mxu0 0.0
    %4106 = vmatmul.mubr.f32.gmra.mrb[0].mxu0 %v3800
    %v4107 = vpop.f32.mrb[0].mxu0
    %v4108 = vadd.f32 %v3531, %v4107
    %v4109 = vpop.f32.mrb[0].mxu0
    %4110 = vmatprep.mubr.f32.mxu0 0.0
    %4111 = vmatmul.mubr.f32.gmra.mrb[0].mxu0 %v3803
    %v4112 = vpop.f32.mrb[0].mxu0
    %v4113 = vadd.f32 %v3536, %v4112
    %v4114 = vpop.f32.mrb[0].mxu0
    %4115 = vmatprep.mubr.f32.mxu0 0.0
    %4116 = vmatmul.mubr.f32.gmra.mrb[0].mxu0 %v3806
    %v4117 = vpop.f32.mrb[0].mxu0
    %v4118 = vadd.f32 %v3541, %v4117
    %v4119 = vpop.f32.mrb[0].mxu0
    %4120 = vmatprep.mubr.f32.mxu0 0.0
    %4121 = vmatmul.mubr.f32.gmra.mrb[0].mxu0 %v3809
    %v4122 = vpop.f32.mrb[0].mxu0
    %v4123 = vadd.f32 %v3546, %v4122
    %v4124 = vpop.f32.mrb[0].mxu0
    %4125 = vmatprep.mubr.f32.mxu0 0.0
    %4126 = vmatmul.mubr.f32.gmra.mrb[0].mxu0 %v3812
    %v4127 = vpop.f32.mrb[0].mxu0
    %v4128 = vadd.f32 %v3551, %v4127
    %v4129 = vpop.f32.mrb[0].mxu0
    %4130 = vmatprep.mubr.f32.mxu0 0.0
    %4131 = vmatmul.mubr.f32.gmra.mrb[0].mxu0 %v3815
    %v4132 = vpop.f32.mrb[0].mxu0
    %v4133 = vadd.f32 %v3556, %v4132
    %v4134 = vpop.f32.mrb[0].mxu0
    %4135 = vmatprep.mubr.f32.mxu0 0.0
    %4136 = vmatmul.mubr.f32.gmra.mrb[0].mxu0 %v3818
    %v4137 = vpop.f32.mrb[0].mxu0
    %v4138 = vadd.f32 %v3561, %v4137
    %v4139 = vpop.f32.mrb[0].mxu0
    %4140 = vmatprep.mubr.f32.mxu0 0.0
    %4141 = vmatmul.mubr.f32.gmra.mrb[0].mxu0 %v3821
    %v4142 = vpop.f32.mrb[0].mxu0
    %v4143 = vadd.f32 %v3566, %v4142
    %v4144 = vpop.f32.mrb[0].mxu0
    %4145 = vmatprep.mubr.f32.mxu0 0.0
    %4146 = vmatmul.mubr.f32.gmra.mrb[0].mxu0 %v3824
    %v4147 = vpop.f32.mrb[0].mxu0
    %v4148 = vadd.f32 %v3571, %v4147
    %v4149 = vpop.f32.mrb[0].mxu0
    %4150 = vmatprep.mubr.f32.mxu0 0.0
    %4151 = vmatmul.mubr.f32.gmra.mrb[0].mxu0 %v3827
    %v4152 = vpop.f32.mrb[0].mxu0
    %v4153 = vadd.f32 %v3576, %v4152
    %v4154 = vpop.f32.mrb[0].mxu0
    %4155 = vmatprep.mubr.f32.mxu0 0.0
    %4156 = vmatmul.mubr.f32.gmra.mrb[0].mxu0 %v3830
    %v4157 = vpop.f32.mrb[0].mxu0
    %v4158 = vadd.f32 %v3581, %v4157
    %v4159 = vpop.f32.mrb[0].mxu0
    %4160 = vmatprep.mubr.f32.mxu0 0.0
    %4161 = vmatmul.mubr.f32.gmra.mrb[0].mxu0 %v3833
    %v4162 = vpop.f32.mrb[0].mxu0
    %v4163 = vadd.f32 %v3586, %v4162
    %v4164 = vpop.f32.mrb[0].mxu0
    %4165 = vmatprep.mubr.f32.mxu0 0.0
    %4166 = vmatmul.mubr.f32.gmra.mrb[0].mxu0 %v3836
    %v4167 = vpop.f32.mrb[0].mxu0
    %v4168 = vadd.f32 %v3591, %v4167
    %v4169 = vpop.f32.mrb[0].mxu0
    %4170 = vmatprep.mubr.f32.mxu0 0.0
    %4171 = vmatmul.mubr.f32.gmra.mrb[0].mxu0 %v3839
    %v4172 = vpop.f32.mrb[0].mxu0
    %v4173 = vadd.f32 %v3596, %v4172
    %v4174 = vpop.f32.mrb[0].mxu0
    %4175 = vmatprep.mubr.f32.mxu0 0.0
    %4176 = vmatmul.mubr.f32.gmra.mrb[0].mxu0 %v3842
    %v4177 = vpop.f32.mrb[0].mxu0
    %v4178 = vadd.f32 %v3601, %v4177
    %v4179 = vpop.f32.mrb[0].mxu0
    %4180 = vmatprep.mubr.f32.mxu0 0.0
    %4181 = vmatmul.mubr.f32.gmra.mrb[0].mxu0 %v3845
    %v4182 = vpop.f32.mrb[0].mxu0
    %v4183 = vadd.f32 %v3606, %v4182
    %v4184 = vpop.f32.mrb[0].mxu0
    %4185 = vmatprep.mubr.f32.mxu0 0.0
    %4186 = vmatmul.mubr.f32.gmra.mrb[0].mxu0 %v3848
    %v4187 = vpop.f32.mrb[0].mxu0
    %v4188 = vadd.f32 %v3611, %v4187
    %v4189 = vpop.f32.mrb[0].mxu0
    %4190 = vmatprep.mubr.f32.mxu0 0.0
    %4191 = vmatmul.mubr.f32.gmra.mrb[0].mxu0 %v3851
    %v4192 = vpop.f32.mrb[0].mxu0
    %v4193 = vadd.f32 %v3616, %v4192
    %v4194 = vpop.f32.mrb[0].mxu0
    %4195 = vmatprep.mubr.f32.mxu0 0.0
    %4196 = vmatmul.mubr.f32.gmra.mrb[0].mxu0 %v3854
    %v4197 = vpop.f32.mrb[0].mxu0
    %v4198 = vadd.f32 %v3621, %v4197
    %v4199 = vpop.f32.mrb[0].mxu0
    %4200 = vmatprep.mubr.f32.mxu0 0.0
    %4201 = vmatmul.mubr.f32.gmra.mrb[0].mxu0 %v3857
    %v4202 = vpop.f32.mrb[0].mxu0
    %v4203 = vadd.f32 %v3626, %v4202
    %v4204 = vpop.f32.mrb[0].mxu0
    %4205 = vmatprep.mubr.f32.mxu0 0.0
    %4206 = vmatmul.mubr.f32.gmra.mrb[0].mxu0 %v3860
    %v4207 = vpop.f32.mrb[0].mxu0
    %v4208 = vadd.f32 %v3631, %v4207
    %v4209 = vpop.f32.mrb[0].mxu0
    %4210 = vmatprep.mubr.f32.mxu0 0.0
    %4211 = vmatmul.mubr.f32.gmra.mrb[0].mxu0 %v3863
    %v4212 = vpop.f32.mrb[0].mxu0
    %v4213 = vadd.f32 %v3636, %v4212
    %v4214 = vpop.f32.mrb[0].mxu0
    %4215 = vmatprep.mubr.f32.mxu0 0.0
    %4216 = vmatmul.mubr.f32.gmra.mrb[0].mxu0 %v3866
    %v4217 = vpop.f32.mrb[0].mxu0
    %v4218 = vadd.f32 %v3641, %v4217
    %v4219 = vpop.f32.mrb[0].mxu0
    %4220 = vmatprep.mubr.f32.mxu0 0.0
    %4221 = vmatmul.mubr.f32.gmra.mrb[0].mxu0 %v3869
    %v4222 = vpop.f32.mrb[0].mxu0
    %v4223 = vadd.f32 %v3646, %v4222
    %v4224 = vpop.f32.mrb[0].mxu0
    %4225 = vmatprep.mubr.f32.mxu0 0.0
    %4226 = vmatmul.mubr.f32.gmra.mrb[0].mxu0 %v3872
    %v4227 = vpop.f32.mrb[0].mxu0
    %v4228 = vadd.f32 %v3651, %v4227
    %v4229 = vpop.f32.mrb[0].mxu0
    %4230 = vmatprep.mubr.f32.mxu0 0.0
    %4231 = vmatmul.mubr.f32.gmra.mrb[0].mxu0 %v3875
    %v4232 = vpop.f32.mrb[0].mxu0
    %v4233 = vadd.f32 %v3656, %v4232
    %v4234 = vpop.f32.mrb[0].mxu0
    %4235 = vmatprep.mubr.f32.mxu0 0.0
    %4236 = vmatmul.mubr.f32.gmra.mrb[0].mxu0 %v3878
    %v4237 = vpop.f32.mrb[0].mxu0
    %v4238 = vadd.f32 %v3661, %v4237
    %v4239 = vpop.f32.mrb[0].mxu0
    %4240 = vmatprep.mubr.f32.mxu0 0.0
    %4241 = vmatmul.mubr.f32.gmra.mrb[0].mxu0 %v3881
    %v4242 = vpop.f32.mrb[0].mxu0
    %v4243 = vadd.f32 %v3666, %v4242
    %v4244 = vpop.f32.mrb[0].mxu0
    %4245 = vmatprep.mubr.f32.mxu0 0.0
    %4246 = vmatmul.mubr.f32.gmra.mrb[0].mxu0 %v3884
    %v4247 = vpop.f32.mrb[0].mxu0
    %v4248 = vadd.f32 %v3671, %v4247
    %v4249 = vpop.f32.mrb[0].mxu0
    %4250 = vmatprep.mubr.f32.mxu0 0.0
    %4251 = vmatmul.mubr.f32.gmra.mrb[0].mxu0 %v3887
    %v4252 = vpop.f32.mrb[0].mxu0
    %v4253 = vadd.f32 %v3676, %v4252
    %v4254 = vpop.f32.mrb[0].mxu0
    %4255 = vmatprep.mubr.f32.mxu0 0.0
    %4256 = vmatmul.mubr.f32.gmra.mrb[0].mxu0 %v3890
    %v4257 = vpop.f32.mrb[0].mxu0
    %v4258 = vadd.f32 %v3681, %v4257
    %v4259 = vpop.f32.mrb[0].mxu0
    %4260 = vmatprep.mubr.f32.mxu0 0.0
    %4261 = vmatmul.mubr.f32.gmra.mrb[0].mxu0 %v3893
    %v4262 = vpop.f32.mrb[0].mxu0
    %v4263 = vadd.f32 %v3686, %v4262
    %v4264 = vpop.f32.mrb[0].mxu0
    %4265 = vmatprep.mubr.f32.mxu0 0.0
    %4266 = vmatmul.mubr.f32.gmra.mrb[0].mxu0 %v3896
    %v4267 = vpop.f32.mrb[0].mxu0
    %v4268 = vadd.f32 %v3691, %v4267
    %v4269 = vpop.f32.mrb[0].mxu0
    %4270 = vmatprep.mubr.f32.mxu0 0.0
    %4271 = vmatmul.mubr.f32.gmra.mrb[0].mxu0 %v3899
    %v4272 = vpop.f32.mrb[0].mxu0
    %v4273 = vadd.f32 %v3696, %v4272
    %v4274 = vpop.f32.mrb[0].mxu0
    %4275 = vmatprep.mubr.f32.mxu0 0.0
    %4276 = vmatmul.mubr.f32.gmra.mrb[0].mxu0 %v3902
    %v4277 = vpop.f32.mrb[0].mxu0
    %v4278 = vadd.f32 %v3701, %v4277
    %v4279 = vpop.f32.mrb[0].mxu0
    %4280 = vmatprep.mubr.f32.mxu0 0.0
    %4281 = vmatmul.mubr.f32.gmra.mrb[0].mxu0 %v3905
    %v4282 = vpop.f32.mrb[0].mxu0
    %v4283 = vadd.f32 %v3706, %v4282
    %v4284 = vpop.f32.mrb[0].mxu0
    %4285 = vmatprep.mubr.f32.mxu0 0.0
    %4286 = vmatmul.mubr.f32.gmra.mrb[0].mxu0 %v3908
    %v4287 = vpop.f32.mrb[0].mxu0
    %v4288 = vadd.f32 %v3711, %v4287
    %v4289 = vpop.f32.mrb[0].mxu0
    %4290 = vmatprep.mubr.f32.mxu0 0.0
    %4291 = vmatmul.mubr.f32.gmra.mrb[0].mxu0 %v3911
    %v4292 = vpop.f32.mrb[0].mxu0
    %v4293 = vadd.f32 %v3716, %v4292
    %v4294 = vpop.f32.mrb[0].mxu0
    %4295 = vmatprep.mubr.f32.mxu0 0.0
    %4296 = vmatmul.mubr.f32.gmra.mrb[0].mxu0 %v3914
    %v4297 = vpop.f32.mrb[0].mxu0
    %v4298 = vadd.f32 %v3721, %v4297
    %v4299 = vpop.f32.mrb[0].mxu0
    %4300 = vdwg.mxu0
    %v4301 = vld [vmem:[#allocation2 + $0x10] sm:$0xff]
    %v4302 = vld [vmem:[#allocation2 + $0x18] sm:$0xff]
    %v4303 = vld [vmem:[#allocation2 + $0x20] sm:$0xff]
    %v4304 = vld [vmem:[#allocation2 + $0x28] sm:$0xff]
    %v4305 = vld [vmem:[#allocation2 + $0x30] sm:$0xff]
    %v4306 = vld [vmem:[#allocation2 + $0x38] sm:$0xff]
    %v4307 = vld [vmem:[#allocation2 + $0x40] sm:$0xff]
    %v4308 = vld [vmem:[#allocation2 + $0x48] sm:$0xff]
    %v4309 = vld [vmem:[#allocation2 + $0x50] sm:$0xff]
    %v4310 = vld [vmem:[#allocation2 + $0x58] sm:$0xff]
    %v4311 = vld [vmem:[#allocation2 + $0x60] sm:$0xff]
    %v4312 = vld [vmem:[#allocation2 + $0x68] sm:$0xff]
    %v4313 = vld [vmem:[#allocation2 + $0x70] sm:$0xff]
    %v4314 = vld [vmem:[#allocation2 + $0x78] sm:$0xff]
    %v4315 = vld [vmem:[#allocation2 + $0x80] sm:$0xff]
    %v4316 = vld [vmem:[#allocation2 + $0x88] sm:$0xff]
    %v4317 = vld [vmem:[#allocation2 + $0x90] sm:$0xff]
    %v4318 = vld [vmem:[#allocation2 + $0x98] sm:$0xff]
    %v4319 = vld [vmem:[#allocation2 + $0xa0] sm:$0xff]
    %v4320 = vld [vmem:[#allocation2 + $0xa8] sm:$0xff]
    %v4321 = vld [vmem:[#allocation2 + $0xb0] sm:$0xff]
    %v4322 = vld [vmem:[#allocation2 + $0xb8] sm:$0xff]
    %v4323 = vld [vmem:[#allocation2 + $0xc0] sm:$0xff]
    %v4324 = vld [vmem:[#allocation2 + $0xc8] sm:$0xff]
    %v4325 = vld [vmem:[#allocation2 + $0xd0] sm:$0xff]
    %v4326 = vld [vmem:[#allocation2 + $0xd8] sm:$0xff]
    %v4327 = vld [vmem:[#allocation2 + $0xe0] sm:$0xff]
    %v4328 = vld [vmem:[#allocation2 + $0xe8] sm:$0xff]
    %v4329 = vld [vmem:[#allocation2 + $0xf0] sm:$0xff]
    %v4330 = vld [vmem:[#allocation2 + $0xf8] sm:$0xff]
    %v4331 = vld [vmem:[#allocation2 + $0x100] sm:$0xff]
    %v4332 = vld [vmem:[#allocation2 + $0x108] sm:$0xff]
    %v4333 = vld [vmem:[#allocation2 + $0x110] sm:$0xff]
    %v4334 = vld [vmem:[#allocation2 + $0x118] sm:$0xff]
    %v4335 = vld [vmem:[#allocation2 + $0x120] sm:$0xff]
    %v4336 = vld [vmem:[#allocation2 + $0x128] sm:$0xff]
    %v4337 = vld [vmem:[#allocation2 + $0x130] sm:$0xff]
    %v4338 = vld [vmem:[#allocation2 + $0x138] sm:$0xff]
    %v4339 = vld [vmem:[#allocation2 + $0x140] sm:$0xff]
    %v4340 = vld [vmem:[#allocation2 + $0x148] sm:$0xff]
    %v4341 = vld [vmem:[#allocation2 + $0x150] sm:$0xff]
    %v4342 = vld [vmem:[#allocation2 + $0x158] sm:$0xff]
    %v4343 = vld [vmem:[#allocation2 + $0x160] sm:$0xff]
    %v4344 = vld [vmem:[#allocation2 + $0x168] sm:$0xff]
    %v4345 = vld [vmem:[#allocation2 + $0x170] sm:$0xff]
    %v4346 = vld [vmem:[#allocation2 + $0x178] sm:$0xff]
    %v4347 = vld [vmem:[#allocation2 + $0x180] sm:$0xff]
    %v4348 = vld [vmem:[#allocation2 + $0x188] sm:$0xff]
    %v4349 = vld [vmem:[#allocation2 + $0x190] sm:$0xff]
    %v4350 = vld [vmem:[#allocation2 + $0x198] sm:$0xff]
    %v4351 = vld [vmem:[#allocation2 + $0x1a0] sm:$0xff]
    %v4352 = vld [vmem:[#allocation2 + $0x1a8] sm:$0xff]
    %v4353 = vld [vmem:[#allocation2 + $0x1b0] sm:$0xff]
    %v4354 = vld [vmem:[#allocation2 + $0x1b8] sm:$0xff]
    %v4355 = vld [vmem:[#allocation2 + $0x1c0] sm:$0xff]
    %v4356 = vld [vmem:[#allocation2 + $0x1c8] sm:$0xff]
    %v4357 = vld [vmem:[#allocation2 + $0x1d0] sm:$0xff]
    %v4358 = vld [vmem:[#allocation2 + $0x1d8] sm:$0xff]
    %v4359 = vld [vmem:[#allocation2 + $0x1e0] sm:$0xff]
    %v4360 = vld [vmem:[#allocation2 + $0x1e8] sm:$0xff]
    %v4361 = vld [vmem:[#allocation2 + $0x1f0] sm:$0xff]
    %v4362 = vld [vmem:[#allocation2 + $0x1f8] sm:$0xff]
    %v4363 = vld [vmem:[#allocation2 + $0x200] sm:$0xff]
    %v4364 = vld [vmem:[#allocation2 + $0x208] sm:$0xff]
    %s4365 = scalar_lea.vmem %s3, 32
    %v4366 = vld [vmem:[%s4365] sm:$0xff]
    %v4367 = vld [vmem:[%s4365 + $0x8] sm:$0xff]
    %v4369 = vsel %vm2941, %v4301, 0
    %v4372 = vsel %vm2941, %v4302, 0
    %v4375 = vsel %vm2941, %v4303, 0
    %v4378 = vsel %vm2941, %v4304, 0
    %v4381 = vsel %vm2941, %v4305, 0
    %v4384 = vsel %vm2941, %v4306, 0
    %v4387 = vsel %vm2941, %v4307, 0
    %v4390 = vsel %vm2941, %v4308, 0
    %v4393 = vsel %vm2941, %v4309, 0
    %v4396 = vsel %vm2941, %v4310, 0
    %v4399 = vsel %vm2941, %v4311, 0
    %v4402 = vsel %vm2941, %v4312, 0
    %v4405 = vsel %vm2941, %v4313, 0
    %v4408 = vsel %vm2941, %v4314, 0
    %v4411 = vsel %vm2941, %v4315, 0
    %v4414 = vsel %vm2941, %v4316, 0
    %v4417 = vsel %vm2941, %v4317, 0
    %v4420 = vsel %vm2941, %v4318, 0
    %v4423 = vsel %vm2941, %v4319, 0
    %v4426 = vsel %vm2941, %v4320, 0
    %v4429 = vsel %vm2941, %v4321, 0
    %v4432 = vsel %vm2941, %v4322, 0
    %v4435 = vsel %vm2941, %v4323, 0
    %v4438 = vsel %vm2941, %v4324, 0
    %v4441 = vsel %vm2941, %v4325, 0
    %v4444 = vsel %vm2941, %v4326, 0
    %v4447 = vsel %vm2941, %v4327, 0
    %v4450 = vsel %vm2941, %v4328, 0
    %v4453 = vsel %vm2941, %v4329, 0
    %v4456 = vsel %vm2941, %v4330, 0
    %v4459 = vsel %vm2941, %v4331, 0
    %v4462 = vsel %vm2941, %v4332, 0
    %v4465 = vsel %vm2941, %v4333, 0
    %v4468 = vsel %vm2941, %v4334, 0
    %v4471 = vsel %vm2941, %v4335, 0
    %v4474 = vsel %vm2941, %v4336, 0
    %v4477 = vsel %vm2941, %v4337, 0
    %v4480 = vsel %vm2941, %v4338, 0
    %v4483 = vsel %vm2941, %v4339, 0
    %v4486 = vsel %vm2941, %v4340, 0
    %v4489 = vsel %vm2941, %v4341, 0
    %v4492 = vsel %vm2941, %v4342, 0
    %v4495 = vsel %vm2941, %v4343, 0
    %v4498 = vsel %vm2941, %v4344, 0
    %v4501 = vsel %vm2941, %v4345, 0
    %v4504 = vsel %vm2941, %v4346, 0
    %v4507 = vsel %vm2941, %v4347, 0
    %v4510 = vsel %vm2941, %v4348, 0
    %v4513 = vsel %vm2941, %v4349, 0
    %v4516 = vsel %vm2941, %v4350, 0
    %v4519 = vsel %vm2941, %v4351, 0
    %v4522 = vsel %vm2941, %v4352, 0
    %v4525 = vsel %vm2941, %v4353, 0
    %v4528 = vsel %vm2941, %v4354, 0
    %v4531 = vsel %vm2941, %v4355, 0
    %v4534 = vsel %vm2941, %v4356, 0
    %v4537 = vsel %vm2941, %v4357, 0
    %v4540 = vsel %vm2941, %v4358, 0
    %v4543 = vsel %vm2941, %v4359, 0
    %v4546 = vsel %vm2941, %v4360, 0
    %v4549 = vsel %vm2941, %v4361, 0
    %v4552 = vsel %vm2941, %v4362, 0
    %v4555 = vsel %vm2941, %v4363, 0
    %v4558 = vsel %vm2941, %v4364, 0
    %4560 = vmatprep.subr.mxu0 0.0
    %4561 = vmatpush1.msra.mxu0 %v4366
    %4562 = vmatprep.subr.mxu0 0.0
    %4563 = vmatpush1.msra.mxu0 %v4367
    %4564 = vmatprep.subr.mxu0 0.0
    %4565 = vmatpush1.msra.mxu0 0.0
    %4566 = vmatprep.subr.mxu0 0.0
    %4567 = vmatpush1.msra.mxu0 0.0
    %4568 = vmatprep.subr.mxu0 0.0
    %4569 = vmatpush1.msra.mxu0 0.0
    %4570 = vmatprep.subr.mxu0 0.0
    %4571 = vmatpush1.msra.mxu0 0.0
    %4572 = vmatprep.subr.mxu0 0.0
    %4573 = vmatpush1.msra.mxu0 0.0
    %4574 = vmatprep.subr.mxu0 0.0
    %4575 = vmatpush1.msra.mxu0 0.0
    %4576 = vmatprep.subr.mxu0 0.0
    %4577 = vmatpush1.msra.mxu0 0.0
    %4578 = vmatprep.subr.mxu0 0.0
    %4579 = vmatpush1.msra.mxu0 0.0
    %4580 = vmatprep.subr.mxu0 0.0
    %4581 = vmatpush1.msra.mxu0 0.0
    %4582 = vmatprep.subr.mxu0 0.0
    %4583 = vmatpush1.msra.mxu0 0.0
    %4584 = vmatprep.subr.mxu0 0.0
    %4585 = vmatpush1.msra.mxu0 0.0
    %4586 = vmatprep.subr.mxu0 0.0
    %4587 = vmatpush1.msra.mxu0 0.0
    %4588 = vmatprep.subr.mxu0 0.0
    %4589 = vmatpush1.msra.mxu0 0.0
    %4590 = vmatprep.subr.mxu0 0.0
    %4591 = vmatpush1.msra.mxu0 0.0
    %4592 = vmatprep.subr.mxu0 0.0
    %4593 = vmatpush1.msra.mxu0 0.0
    %4594 = vmatprep.subr.mxu0 0.0
    %4595 = vmatpush1.msra.mxu0 0.0
    %4596 = vmatprep.subr.mxu0 0.0
    %4597 = vmatpush1.msra.mxu0 0.0
    %4598 = vmatprep.subr.mxu0 0.0
    %4599 = vmatpush1.msra.mxu0 0.0
    %4600 = vmatprep.subr.mxu0 0.0
    %4601 = vmatpush1.msra.mxu0 0.0
    %4602 = vmatprep.subr.mxu0 0.0
    %4603 = vmatpush1.msra.mxu0 0.0
    %4604 = vmatprep.subr.mxu0 0.0
    %4605 = vmatpush1.msra.mxu0 0.0
    %4606 = vmatprep.subr.mxu0 0.0
    %4607 = vmatpush1.msra.mxu0 0.0
    %4608 = vmatprep.subr.mxu0 0.0
    %4609 = vmatpush1.msra.mxu0 0.0
    %4610 = vmatprep.subr.mxu0 0.0
    %4611 = vmatpush1.msra.mxu0 0.0
    %4612 = vmatprep.subr.mxu0 0.0
    %4613 = vmatpush1.msra.mxu0 0.0
    %4614 = vmatprep.subr.mxu0 0.0
    %4615 = vmatpush1.msra.mxu0 0.0
    %4616 = vmatprep.subr.mxu0 0.0
    %4617 = vmatpush1.msra.mxu0 0.0
    %4618 = vmatprep.subr.mxu0 0.0
    %4619 = vmatpush1.msra.mxu0 0.0
    %4620 = vmatprep.subr.mxu0 0.0
    %4621 = vmatpush1.msra.mxu0 0.0
    %4622 = vmatprep.subr.mxu0 0.0
    %4623 = vmatpush1.msra.mxu0 0.0
    %4624 = vmatprep.mubr.f32.mxu0 0.0
    %4625 = vmatmul.mubr.f32.gmra.mrb[0].mxu0 %v4369
    %v4626 = vpop.f32.mrb[0].mxu0
    %v4627 = vadd.f32 0.0, %v4626
    %v4628 = vpop.f32.mrb[0].mxu0
    %4629 = vmatprep.mubr.f32.mxu0 0.0
    %4630 = vmatmul.mubr.f32.gmra.mrb[0].mxu0 %v4372
    %v4631 = vpop.f32.mrb[0].mxu0
    %v4632 = vadd.f32 0.0, %v4631
    %v4633 = vpop.f32.mrb[0].mxu0
    %4634 = vmatprep.mubr.f32.mxu0 0.0
    %4635 = vmatmul.mubr.f32.gmra.mrb[0].mxu0 %v4375
    %v4636 = vpop.f32.mrb[0].mxu0
    %v4637 = vadd.f32 0.0, %v4636
    %v4638 = vpop.f32.mrb[0].mxu0
    %4639 = vmatprep.mubr.f32.mxu0 0.0
    %4640 = vmatmul.mubr.f32.gmra.mrb[0].mxu0 %v4378
    %v4641 = vpop.f32.mrb[0].mxu0
    %v4642 = vadd.f32 0.0, %v4641
    %v4643 = vpop.f32.mrb[0].mxu0
    %4644 = vmatprep.mubr.f32.mxu0 0.0
    %4645 = vmatmul.mubr.f32.gmra.mrb[0].mxu0 %v4381
    %v4646 = vpop.f32.mrb[0].mxu0
    %v4647 = vadd.f32 0.0, %v4646
    %v4648 = vpop.f32.mrb[0].mxu0
    %4649 = vmatprep.mubr.f32.mxu0 0.0
    %4650 = vmatmul.mubr.f32.gmra.mrb[0].mxu0 %v4384
    %v4651 = vpop.f32.mrb[0].mxu0
    %v4652 = vadd.f32 0.0, %v4651
    %v4653 = vpop.f32.mrb[0].mxu0
    %4654 = vmatprep.mubr.f32.mxu0 0.0
    %4655 = vmatmul.mubr.f32.gmra.mrb[0].mxu0 %v4387
    %v4656 = vpop.f32.mrb[0].mxu0
    %v4657 = vadd.f32 0.0, %v4656
    %v4658 = vpop.f32.mrb[0].mxu0
    %4659 = vmatprep.mubr.f32.mxu0 0.0
    %4660 = vmatmul.mubr.f32.gmra.mrb[0].mxu0 %v4390
    %v4661 = vpop.f32.mrb[0].mxu0
    %v4662 = vadd.f32 0.0, %v4661
    %v4663 = vpop.f32.mrb[0].mxu0
    %4664 = vmatprep.mubr.f32.mxu0 0.0
    %4665 = vmatmul.mubr.f32.gmra.mrb[0].mxu0 %v4393
    %v4666 = vpop.f32.mrb[0].mxu0
    %v4667 = vadd.f32 0.0, %v4666
    %v4668 = vpop.f32.mrb[0].mxu0
    %4669 = vmatprep.mubr.f32.mxu0 0.0
    %4670 = vmatmul.mubr.f32.gmra.mrb[0].mxu0 %v4396
    %v4671 = vpop.f32.mrb[0].mxu0
    %v4672 = vadd.f32 0.0, %v4671
    %v4673 = vpop.f32.mrb[0].mxu0
    %4674 = vmatprep.mubr.f32.mxu0 0.0
    %4675 = vmatmul.mubr.f32.gmra.mrb[0].mxu0 %v4399
    %v4676 = vpop.f32.mrb[0].mxu0
    %v4677 = vadd.f32 0.0, %v4676
    %v4678 = vpop.f32.mrb[0].mxu0
    %4679 = vmatprep.mubr.f32.mxu0 0.0
    %4680 = vmatmul.mubr.f32.gmra.mrb[0].mxu0 %v4402
    %v4681 = vpop.f32.mrb[0].mxu0
    %v4682 = vadd.f32 0.0, %v4681
    %v4683 = vpop.f32.mrb[0].mxu0
    %4684 = vmatprep.mubr.f32.mxu0 0.0
    %4685 = vmatmul.mubr.f32.gmra.mrb[0].mxu0 %v4405
    %v4686 = vpop.f32.mrb[0].mxu0
    %v4687 = vadd.f32 0.0, %v4686
    %v4688 = vpop.f32.mrb[0].mxu0
    %4689 = vmatprep.mubr.f32.mxu0 0.0
    %4690 = vmatmul.mubr.f32.gmra.mrb[0].mxu0 %v4408
    %v4691 = vpop.f32.mrb[0].mxu0
    %v4692 = vadd.f32 0.0, %v4691
    %v4693 = vpop.f32.mrb[0].mxu0
    %4694 = vmatprep.mubr.f32.mxu0 0.0
    %4695 = vmatmul.mubr.f32.gmra.mrb[0].mxu0 %v4411
    %v4696 = vpop.f32.mrb[0].mxu0
    %v4697 = vadd.f32 0.0, %v4696
    %v4698 = vpop.f32.mrb[0].mxu0
    %4699 = vmatprep.mubr.f32.mxu0 0.0
    %4700 = vmatmul.mubr.f32.gmra.mrb[0].mxu0 %v4414
    %v4701 = vpop.f32.mrb[0].mxu0
    %v4702 = vadd.f32 0.0, %v4701
    %v4703 = vpop.f32.mrb[0].mxu0
    %4704 = vmatprep.mubr.f32.mxu0 0.0
    %4705 = vmatmul.mubr.f32.gmra.mrb[0].mxu0 %v4417
    %v4706 = vpop.f32.mrb[0].mxu0
    %v4707 = vadd.f32 0.0, %v4706
    %v4708 = vpop.f32.mrb[0].mxu0
    %4709 = vmatprep.mubr.f32.mxu0 0.0
    %4710 = vmatmul.mubr.f32.gmra.mrb[0].mxu0 %v4420
    %v4711 = vpop.f32.mrb[0].mxu0
    %v4712 = vadd.f32 0.0, %v4711
    %v4713 = vpop.f32.mrb[0].mxu0
    %4714 = vmatprep.mubr.f32.mxu0 0.0
    %4715 = vmatmul.mubr.f32.gmra.mrb[0].mxu0 %v4423
    %v4716 = vpop.f32.mrb[0].mxu0
    %v4717 = vadd.f32 0.0, %v4716
    %v4718 = vpop.f32.mrb[0].mxu0
    %4719 = vmatprep.mubr.f32.mxu0 0.0
    %4720 = vmatmul.mubr.f32.gmra.mrb[0].mxu0 %v4426
    %v4721 = vpop.f32.mrb[0].mxu0
    %v4722 = vadd.f32 0.0, %v4721
    %v4723 = vpop.f32.mrb[0].mxu0
    %4724 = vmatprep.mubr.f32.mxu0 0.0
    %4725 = vmatmul.mubr.f32.gmra.mrb[0].mxu0 %v4429
    %v4726 = vpop.f32.mrb[0].mxu0
    %v4727 = vadd.f32 0.0, %v4726
    %v4728 = vpop.f32.mrb[0].mxu0
    %4729 = vmatprep.mubr.f32.mxu0 0.0
    %4730 = vmatmul.mubr.f32.gmra.mrb[0].mxu0 %v4432
    %v4731 = vpop.f32.mrb[0].mxu0
    %v4732 = vadd.f32 0.0, %v4731
    %v4733 = vpop.f32.mrb[0].mxu0
    %4734 = vmatprep.mubr.f32.mxu0 0.0
    %4735 = vmatmul.mubr.f32.gmra.mrb[0].mxu0 %v4435
    %v4736 = vpop.f32.mrb[0].mxu0
    %v4737 = vadd.f32 0.0, %v4736
    %v4738 = vpop.f32.mrb[0].mxu0
    %4739 = vmatprep.mubr.f32.mxu0 0.0
    %4740 = vmatmul.mubr.f32.gmra.mrb[0].mxu0 %v4438
    %v4741 = vpop.f32.mrb[0].mxu0
    %v4742 = vadd.f32 0.0, %v4741
    %v4743 = vpop.f32.mrb[0].mxu0
    %4744 = vmatprep.mubr.f32.mxu0 0.0
    %4745 = vmatmul.mubr.f32.gmra.mrb[0].mxu0 %v4441
    %v4746 = vpop.f32.mrb[0].mxu0
    %v4747 = vadd.f32 0.0, %v4746
    %v4748 = vpop.f32.mrb[0].mxu0
    %4749 = vmatprep.mubr.f32.mxu0 0.0
    %4750 = vmatmul.mubr.f32.gmra.mrb[0].mxu0 %v4444
    %v4751 = vpop.f32.mrb[0].mxu0
    %v4752 = vadd.f32 0.0, %v4751
    %v4753 = vpop.f32.mrb[0].mxu0
    %4754 = vmatprep.mubr.f32.mxu0 0.0
    %4755 = vmatmul.mubr.f32.gmra.mrb[0].mxu0 %v4447
    %v4756 = vpop.f32.mrb[0].mxu0
    %v4757 = vadd.f32 0.0, %v4756
    %v4758 = vpop.f32.mrb[0].mxu0
    %4759 = vmatprep.mubr.f32.mxu0 0.0
    %4760 = vmatmul.mubr.f32.gmra.mrb[0].mxu0 %v4450
    %v4761 = vpop.f32.mrb[0].mxu0
    %v4762 = vadd.f32 0.0, %v4761
    %v4763 = vpop.f32.mrb[0].mxu0
    %4764 = vmatprep.mubr.f32.mxu0 0.0
    %4765 = vmatmul.mubr.f32.gmra.mrb[0].mxu0 %v4453
    %v4766 = vpop.f32.mrb[0].mxu0
    %v4767 = vadd.f32 0.0, %v4766
    %v4768 = vpop.f32.mrb[0].mxu0
    %4769 = vmatprep.mubr.f32.mxu0 0.0
    %4770 = vmatmul.mubr.f32.gmra.mrb[0].mxu0 %v4456
    %v4771 = vpop.f32.mrb[0].mxu0
    %v4772 = vadd.f32 0.0, %v4771
    %v4773 = vpop.f32.mrb[0].mxu0
    %4774 = vmatprep.mubr.f32.mxu0 0.0
    %4775 = vmatmul.mubr.f32.gmra.mrb[0].mxu0 %v4459
    %v4776 = vpop.f32.mrb[0].mxu0
    %v4777 = vadd.f32 0.0, %v4776
    %v4778 = vpop.f32.mrb[0].mxu0
    %4779 = vmatprep.mubr.f32.mxu0 0.0
    %4780 = vmatmul.mubr.f32.gmra.mrb[0].mxu0 %v4462
    %v4781 = vpop.f32.mrb[0].mxu0
    %v4782 = vadd.f32 0.0, %v4781
    %v4783 = vpop.f32.mrb[0].mxu0
    %4784 = vmatprep.mubr.f32.mxu0 0.0
    %4785 = vmatmul.mubr.f32.gmra.mrb[0].mxu0 %v4465
    %v4786 = vpop.f32.mrb[0].mxu0
    %v4787 = vadd.f32 0.0, %v4786
    %v4788 = vpop.f32.mrb[0].mxu0
    %4789 = vmatprep.mubr.f32.mxu0 0.0
    %4790 = vmatmul.mubr.f32.gmra.mrb[0].mxu0 %v4468
    %v4791 = vpop.f32.mrb[0].mxu0
    %v4792 = vadd.f32 0.0, %v4791
    %v4793 = vpop.f32.mrb[0].mxu0
    %4794 = vmatprep.mubr.f32.mxu0 0.0
    %4795 = vmatmul.mubr.f32.gmra.mrb[0].mxu0 %v4471
    %v4796 = vpop.f32.mrb[0].mxu0
    %v4797 = vadd.f32 0.0, %v4796
    %v4798 = vpop.f32.mrb[0].mxu0
    %4799 = vmatprep.mubr.f32.mxu0 0.0
    %4800 = vmatmul.mubr.f32.gmra.mrb[0].mxu0 %v4474
    %v4801 = vpop.f32.mrb[0].mxu0
    %v4802 = vadd.f32 0.0, %v4801
    %v4803 = vpop.f32.mrb[0].mxu0
    %4804 = vmatprep.mubr.f32.mxu0 0.0
    %4805 = vmatmul.mubr.f32.gmra.mrb[0].mxu0 %v4477
    %v4806 = vpop.f32.mrb[0].mxu0
    %v4807 = vadd.f32 0.0, %v4806
    %v4808 = vpop.f32.mrb[0].mxu0
    %4809 = vmatprep.mubr.f32.mxu0 0.0
    %4810 = vmatmul.mubr.f32.gmra.mrb[0].mxu0 %v4480
    %v4811 = vpop.f32.mrb[0].mxu0
    %v4812 = vadd.f32 0.0, %v4811
    %v4813 = vpop.f32.mrb[0].mxu0
    %4814 = vmatprep.mubr.f32.mxu0 0.0
    %4815 = vmatmul.mubr.f32.gmra.mrb[0].mxu0 %v4483
    %v4816 = vpop.f32.mrb[0].mxu0
    %v4817 = vadd.f32 0.0, %v4816
    %v4818 = vpop.f32.mrb[0].mxu0
    %4819 = vmatprep.mubr.f32.mxu0 0.0
    %4820 = vmatmul.mubr.f32.gmra.mrb[0].mxu0 %v4486
    %v4821 = vpop.f32.mrb[0].mxu0
    %v4822 = vadd.f32 0.0, %v4821
    %v4823 = vpop.f32.mrb[0].mxu0
    %4824 = vmatprep.mubr.f32.mxu0 0.0
    %4825 = vmatmul.mubr.f32.gmra.mrb[0].mxu0 %v4489
    %v4826 = vpop.f32.mrb[0].mxu0
    %v4827 = vadd.f32 0.0, %v4826
    %v4828 = vpop.f32.mrb[0].mxu0
    %4829 = vmatprep.mubr.f32.mxu0 0.0
    %4830 = vmatmul.mubr.f32.gmra.mrb[0].mxu0 %v4492
    %v4831 = vpop.f32.mrb[0].mxu0
    %v4832 = vadd.f32 0.0, %v4831
    %v4833 = vpop.f32.mrb[0].mxu0
    %4834 = vmatprep.mubr.f32.mxu0 0.0
    %4835 = vmatmul.mubr.f32.gmra.mrb[0].mxu0 %v4495
    %v4836 = vpop.f32.mrb[0].mxu0
    %v4837 = vadd.f32 0.0, %v4836
    %v4838 = vpop.f32.mrb[0].mxu0
    %4839 = vmatprep.mubr.f32.mxu0 0.0
    %4840 = vmatmul.mubr.f32.gmra.mrb[0].mxu0 %v4498
    %v4841 = vpop.f32.mrb[0].mxu0
    %v4842 = vadd.f32 0.0, %v4841
    %v4843 = vpop.f32.mrb[0].mxu0
    %4844 = vmatprep.mubr.f32.mxu0 0.0
    %4845 = vmatmul.mubr.f32.gmra.mrb[0].mxu0 %v4501
    %v4846 = vpop.f32.mrb[0].mxu0
    %v4847 = vadd.f32 0.0, %v4846
    %v4848 = vpop.f32.mrb[0].mxu0
    %4849 = vmatprep.mubr.f32.mxu0 0.0
    %4850 = vmatmul.mubr.f32.gmra.mrb[0].mxu0 %v4504
    %v4851 = vpop.f32.mrb[0].mxu0
    %v4852 = vadd.f32 0.0, %v4851
    %v4853 = vpop.f32.mrb[0].mxu0
    %4854 = vmatprep.mubr.f32.mxu0 0.0
    %4855 = vmatmul.mubr.f32.gmra.mrb[0].mxu0 %v4507
    %v4856 = vpop.f32.mrb[0].mxu0
    %v4857 = vadd.f32 0.0, %v4856
    %v4858 = vpop.f32.mrb[0].mxu0
    %4859 = vmatprep.mubr.f32.mxu0 0.0
    %4860 = vmatmul.mubr.f32.gmra.mrb[0].mxu0 %v4510
    %v4861 = vpop.f32.mrb[0].mxu0
    %v4862 = vadd.f32 0.0, %v4861
    %v4863 = vpop.f32.mrb[0].mxu0
    %4864 = vmatprep.mubr.f32.mxu0 0.0
    %4865 = vmatmul.mubr.f32.gmra.mrb[0].mxu0 %v4513
    %v4866 = vpop.f32.mrb[0].mxu0
    %v4867 = vadd.f32 0.0, %v4866
    %v4868 = vpop.f32.mrb[0].mxu0
    %4869 = vmatprep.mubr.f32.mxu0 0.0
    %4870 = vmatmul.mubr.f32.gmra.mrb[0].mxu0 %v4516
    %v4871 = vpop.f32.mrb[0].mxu0
    %v4872 = vadd.f32 0.0, %v4871
    %v4873 = vpop.f32.mrb[0].mxu0
    %4874 = vmatprep.mubr.f32.mxu0 0.0
    %4875 = vmatmul.mubr.f32.gmra.mrb[0].mxu0 %v4519
    %v4876 = vpop.f32.mrb[0].mxu0
    %v4877 = vadd.f32 0.0, %v4876
    %v4878 = vpop.f32.mrb[0].mxu0
    %4879 = vmatprep.mubr.f32.mxu0 0.0
    %4880 = vmatmul.mubr.f32.gmra.mrb[0].mxu0 %v4522
    %v4881 = vpop.f32.mrb[0].mxu0
    %v4882 = vadd.f32 0.0, %v4881
    %v4883 = vpop.f32.mrb[0].mxu0
    %4884 = vmatprep.mubr.f32.mxu0 0.0
    %4885 = vmatmul.mubr.f32.gmra.mrb[0].mxu0 %v4525
    %v4886 = vpop.f32.mrb[0].mxu0
    %v4887 = vadd.f32 0.0, %v4886
    %v4888 = vpop.f32.mrb[0].mxu0
    %4889 = vmatprep.mubr.f32.mxu0 0.0
    %4890 = vmatmul.mubr.f32.gmra.mrb[0].mxu0 %v4528
    %v4891 = vpop.f32.mrb[0].mxu0
    %v4892 = vadd.f32 0.0, %v4891
    %v4893 = vpop.f32.mrb[0].mxu0
    %4894 = vmatprep.mubr.f32.mxu0 0.0
    %4895 = vmatmul.mubr.f32.gmra.mrb[0].mxu0 %v4531
    %v4896 = vpop.f32.mrb[0].mxu0
    %v4897 = vadd.f32 0.0, %v4896
    %v4898 = vpop.f32.mrb[0].mxu0
    %4899 = vmatprep.mubr.f32.mxu0 0.0
    %4900 = vmatmul.mubr.f32.gmra.mrb[0].mxu0 %v4534
    %v4901 = vpop.f32.mrb[0].mxu0
    %v4902 = vadd.f32 0.0, %v4901
    %v4903 = vpop.f32.mrb[0].mxu0
    %4904 = vmatprep.mubr.f32.mxu0 0.0
    %4905 = vmatmul.mubr.f32.gmra.mrb[0].mxu0 %v4537
    %v4906 = vpop.f32.mrb[0].mxu0
    %v4907 = vadd.f32 0.0, %v4906
    %v4908 = vpop.f32.mrb[0].mxu0
    %4909 = vmatprep.mubr.f32.mxu0 0.0
    %4910 = vmatmul.mubr.f32.gmra.mrb[0].mxu0 %v4540
    %v4911 = vpop.f32.mrb[0].mxu0
    %v4912 = vadd.f32 0.0, %v4911
    %v4913 = vpop.f32.mrb[0].mxu0
    %4914 = vmatprep.mubr.f32.mxu0 0.0
    %4915 = vmatmul.mubr.f32.gmra.mrb[0].mxu0 %v4543
    %v4916 = vpop.f32.mrb[0].mxu0
    %v4917 = vadd.f32 0.0, %v4916
    %v4918 = vpop.f32.mrb[0].mxu0
    %4919 = vmatprep.mubr.f32.mxu0 0.0
    %4920 = vmatmul.mubr.f32.gmra.mrb[0].mxu0 %v4546
    %v4921 = vpop.f32.mrb[0].mxu0
    %v4922 = vadd.f32 0.0, %v4921
    %v4923 = vpop.f32.mrb[0].mxu0
    %4924 = vmatprep.mubr.f32.mxu0 0.0
    %4925 = vmatmul.mubr.f32.gmra.mrb[0].mxu0 %v4549
    %v4926 = vpop.f32.mrb[0].mxu0
    %v4927 = vadd.f32 0.0, %v4926
    %v4928 = vpop.f32.mrb[0].mxu0
    %4929 = vmatprep.mubr.f32.mxu0 0.0
    %4930 = vmatmul.mubr.f32.gmra.mrb[0].mxu0 %v4552
    %v4931 = vpop.f32.mrb[0].mxu0
    %v4932 = vadd.f32 0.0, %v4931
    %v4933 = vpop.f32.mrb[0].mxu0
    %4934 = vmatprep.mubr.f32.mxu0 0.0
    %4935 = vmatmul.mubr.f32.gmra.mrb[0].mxu0 %v4555
    %v4936 = vpop.f32.mrb[0].mxu0
    %v4937 = vadd.f32 0.0, %v4936
    %v4938 = vpop.f32.mrb[0].mxu0
    %4939 = vmatprep.mubr.f32.mxu0 0.0
    %4940 = vmatmul.mubr.f32.gmra.mrb[0].mxu0 %v4558
    %v4941 = vpop.f32.mrb[0].mxu0
    %v4942 = vadd.f32 0.0, %v4941
    %v4943 = vpop.f32.mrb[0].mxu0
    %4944 = vdwg.mxu0
    %v4945 = vadd.f32 %v3983, %v4627
    %v4946 = vadd.f32 %v3988, %v4632
    %v4947 = vadd.f32 %v3993, %v4637
    %v4948 = vadd.f32 %v3998, %v4642
    %v4949 = vadd.f32 %v4003, %v4647
    %v4950 = vadd.f32 %v4008, %v4652
    %v4951 = vadd.f32 %v4013, %v4657
    %v4952 = vadd.f32 %v4018, %v4662
    %v4953 = vadd.f32 %v4023, %v4667
    %v4954 = vadd.f32 %v4028, %v4672
    %v4955 = vadd.f32 %v4033, %v4677
    %v4956 = vadd.f32 %v4038, %v4682
    %v4957 = vadd.f32 %v4043, %v4687
    %v4958 = vadd.f32 %v4048, %v4692
    %v4959 = vadd.f32 %v4053, %v4697
    %v4960 = vadd.f32 %v4058, %v4702
    %v4961 = vadd.f32 %v4063, %v4707
    %v4962 = vadd.f32 %v4068, %v4712
    %v4963 = vadd.f32 %v4073, %v4717
    %v4964 = vadd.f32 %v4078, %v4722
    %v4965 = vadd.f32 %v4083, %v4727
    %v4966 = vadd.f32 %v4088, %v4732
    %v4967 = vadd.f32 %v4093, %v4737
    %v4968 = vadd.f32 %v4098, %v4742
    %v4969 = vadd.f32 %v4103, %v4747
    %v4970 = vadd.f32 %v4108, %v4752
    %v4971 = vadd.f32 %v4113, %v4757
    %v4972 = vadd.f32 %v4118, %v4762
    %v4973 = vadd.f32 %v4123, %v4767
    %v4974 = vadd.f32 %v4128, %v4772
    %v4975 = vadd.f32 %v4133, %v4777
    %v4976 = vadd.f32 %v4138, %v4782
    %v4977 = vadd.f32 %v4143, %v4787
    %v4978 = vadd.f32 %v4148, %v4792
    %v4979 = vadd.f32 %v4153, %v4797
    %v4980 = vadd.f32 %v4158, %v4802
    %v4981 = vadd.f32 %v4163, %v4807
    %v4982 = vadd.f32 %v4168, %v4812
    %v4983 = vadd.f32 %v4173, %v4817
    %v4984 = vadd.f32 %v4178, %v4822
    %v4985 = vadd.f32 %v4183, %v4827
    %v4986 = vadd.f32 %v4188, %v4832
    %v4987 = vadd.f32 %v4193, %v4837
    %v4988 = vadd.f32 %v4198, %v4842
    %v4989 = vadd.f32 %v4203, %v4847
    %v4990 = vadd.f32 %v4208, %v4852
    %v4991 = vadd.f32 %v4213, %v4857
    %v4992 = vadd.f32 %v4218, %v4862
    %v4993 = vadd.f32 %v4223, %v4867
    %v4994 = vadd.f32 %v4228, %v4872
    %v4995 = vadd.f32 %v4233, %v4877
    %v4996 = vadd.f32 %v4238, %v4882
    %v4997 = vadd.f32 %v4243, %v4887
    %v4998 = vadd.f32 %v4248, %v4892
    %v4999 = vadd.f32 %v4253, %v4897
    %v5000 = vadd.f32 %v4258, %v4902
    %v5001 = vadd.f32 %v4263, %v4907
    %v5002 = vadd.f32 %v4268, %v4912
    %v5003 = vadd.f32 %v4273, %v4917
    %v5004 = vadd.f32 %v4278, %v4922
    %v5005 = vadd.f32 %v4283, %v4927
    %v5006 = vadd.f32 %v4288, %v4932
    %v5007 = vadd.f32 %v4293, %v4937
    %v5008 = vadd.f32 %v4298, %v4942
    %v5009 = vld [vmem:[#allocation2 + $0x11] sm:$0xff]
    %v5010 = vld [vmem:[#allocation2 + $0x19] sm:$0xff]
    %v5011 = vld [vmem:[#allocation2 + $0x21] sm:$0xff]
    %v5012 = vld [vmem:[#allocation2 + $0x29] sm:$0xff]
    %v5013 = vld [vmem:[#allocation2 + $0x31] sm:$0xff]
    %v5014 = vld [vmem:[#allocation2 + $0x39] sm:$0xff]
    %v5015 = vld [vmem:[#allocation2 + $0x41] sm:$0xff]
    %v5016 = vld [vmem:[#allocation2 + $0x49] sm:$0xff]
    %v5017 = vld [vmem:[#allocation2 + $0x51] sm:$0xff]
    %v5018 = vld [vmem:[#allocation2 + $0x59] sm:$0xff]
    %v5019 = vld [vmem:[#allocation2 + $0x61] sm:$0xff]
    %v5020 = vld [vmem:[#allocation2 + $0x69] sm:$0xff]
    %v5021 = vld [vmem:[#allocation2 + $0x71] sm:$0xff]
    %v5022 = vld [vmem:[#allocation2 + $0x79] sm:$0xff]
    %v5023 = vld [vmem:[#allocation2 + $0x81] sm:$0xff]
    %v5024 = vld [vmem:[#allocation2 + $0x89] sm:$0xff]
    %v5025 = vld [vmem:[#allocation2 + $0x91] sm:$0xff]
    %v5026 = vld [vmem:[#allocation2 + $0x99] sm:$0xff]
    %v5027 = vld [vmem:[#allocation2 + $0xa1] sm:$0xff]
    %v5028 = vld [vmem:[#allocation2 + $0xa9] sm:$0xff]
    %v5029 = vld [vmem:[#allocation2 + $0xb1] sm:$0xff]
    %v5030 = vld [vmem:[#allocation2 + $0xb9] sm:$0xff]
    %v5031 = vld [vmem:[#allocation2 + $0xc1] sm:$0xff]
    %v5032 = vld [vmem:[#allocation2 + $0xc9] sm:$0xff]
    %v5033 = vld [vmem:[#allocation2 + $0xd1] sm:$0xff]
    %v5034 = vld [vmem:[#allocation2 + $0xd9] sm:$0xff]
    %v5035 = vld [vmem:[#allocation2 + $0xe1] sm:$0xff]
    %v5036 = vld [vmem:[#allocation2 + $0xe9] sm:$0xff]
    %v5037 = vld [vmem:[#allocation2 + $0xf1] sm:$0xff]
    %v5038 = vld [vmem:[#allocation2 + $0xf9] sm:$0xff]
    %v5039 = vld [vmem:[#allocation2 + $0x101] sm:$0xff]
    %v5040 = vld [vmem:[#allocation2 + $0x109] sm:$0xff]
    %v5041 = vld [vmem:[#allocation2 + $0x111] sm:$0xff]
    %v5042 = vld [vmem:[#allocation2 + $0x119] sm:$0xff]
    %v5043 = vld [vmem:[#allocation2 + $0x121] sm:$0xff]
    %v5044 = vld [vmem:[#allocation2 + $0x129] sm:$0xff]
    %v5045 = vld [vmem:[#allocation2 + $0x131] sm:$0xff]
    %v5046 = vld [vmem:[#allocation2 + $0x139] sm:$0xff]
    %v5047 = vld [vmem:[#allocation2 + $0x141] sm:$0xff]
    %v5048 = vld [vmem:[#allocation2 + $0x149] sm:$0xff]
    %v5049 = vld [vmem:[#allocation2 + $0x151] sm:$0xff]
    %v5050 = vld [vmem:[#allocation2 + $0x159] sm:$0xff]
    %v5051 = vld [vmem:[#allocation2 + $0x161] sm:$0xff]
    %v5052 = vld [vmem:[#allocation2 + $0x169] sm:$0xff]
    %v5053 = vld [vmem:[#allocation2 + $0x171] sm:$0xff]
    %v5054 = vld [vmem:[#allocation2 + $0x179] sm:$0xff]
    %v5055 = vld [vmem:[#allocation2 + $0x181] sm:$0xff]
    %v5056 = vld [vmem:[#allocation2 + $0x189] sm:$0xff]
    %v5057 = vld [vmem:[#allocation2 + $0x191] sm:$0xff]
    %v5058 = vld [vmem:[#allocation2 + $0x199] sm:$0xff]
    %v5059 = vld [vmem:[#allocation2 + $0x1a1] sm:$0xff]
    %v5060 = vld [vmem:[#allocation2 + $0x1a9] sm:$0xff]
    %v5061 = vld [vmem:[#allocation2 + $0x1b1] sm:$0xff]
    %v5062 = vld [vmem:[#allocation2 + $0x1b9] sm:$0xff]
    %v5063 = vld [vmem:[#allocation2 + $0x1c1] sm:$0xff]
    %v5064 = vld [vmem:[#allocation2 + $0x1c9] sm:$0xff]
    %v5065 = vld [vmem:[#allocation2 + $0x1d1] sm:$0xff]
    %v5066 = vld [vmem:[#allocation2 + $0x1d9] sm:$0xff]
    %v5067 = vld [vmem:[#allocation2 + $0x1e1] sm:$0xff]
    %v5068 = vld [vmem:[#allocation2 + $0x1e9] sm:$0xff]
    %v5069 = vld [vmem:[#allocation2 + $0x1f1] sm:$0xff]
    %v5070 = vld [vmem:[#allocation2 + $0x1f9] sm:$0xff]
    %v5071 = vld [vmem:[#allocation2 + $0x201] sm:$0xff]
    %v5072 = vld [vmem:[#allocation2 + $0x209] sm:$0xff]
    %s5073 = scalar_lea.vmem %s3, 48
    %v5074 = vld [vmem:[%s5073] sm:$0xff]
    %v5075 = vld [vmem:[%s5073 + $0x8] sm:$0xff]
    %v5077 = vsel %vm2941, %v5009, 0
    %v5080 = vsel %vm2941, %v5010, 0
    %v5083 = vsel %vm2941, %v5011, 0
    %v5086 = vsel %vm2941, %v5012, 0
    %v5089 = vsel %vm2941, %v5013, 0
    %v5092 = vsel %vm2941, %v5014, 0
    %v5095 = vsel %vm2941, %v5015, 0
    %v5098 = vsel %vm2941, %v5016, 0
    %v5101 = vsel %vm2941, %v5017, 0
    %v5104 = vsel %vm2941, %v5018, 0
    %v5107 = vsel %vm2941, %v5019, 0
    %v5110 = vsel %vm2941, %v5020, 0
    %v5113 = vsel %vm2941, %v5021, 0
    %v5116 = vsel %vm2941, %v5022, 0
    %v5119 = vsel %vm2941, %v5023, 0
    %v5122 = vsel %vm2941, %v5024, 0
    %v5125 = vsel %vm2941, %v5025, 0
    %v5128 = vsel %vm2941, %v5026, 0
    %v5131 = vsel %vm2941, %v5027, 0
    %v5134 = vsel %vm2941, %v5028, 0
    %v5137 = vsel %vm2941, %v5029, 0
    %v5140 = vsel %vm2941, %v5030, 0
    %v5143 = vsel %vm2941, %v5031, 0
    %v5146 = vsel %vm2941, %v5032, 0
    %v5149 = vsel %vm2941, %v5033, 0
    %v5152 = vsel %vm2941, %v5034, 0
    %v5155 = vsel %vm2941, %v5035, 0
    %v5158 = vsel %vm2941, %v5036, 0
    %v5161 = vsel %vm2941, %v5037, 0
    %v5164 = vsel %vm2941, %v5038, 0
    %v5167 = vsel %vm2941, %v5039, 0
    %v5170 = vsel %vm2941, %v5040, 0
    %v5173 = vsel %vm2941, %v5041, 0
    %v5176 = vsel %vm2941, %v5042, 0
    %v5179 = vsel %vm2941, %v5043, 0
    %v5182 = vsel %vm2941, %v5044, 0
    %v5185 = vsel %vm2941, %v5045, 0
    %v5188 = vsel %vm2941, %v5046, 0
    %v5191 = vsel %vm2941, %v5047, 0
    %v5194 = vsel %vm2941, %v5048, 0
    %v5197 = vsel %vm2941, %v5049, 0
    %v5200 = vsel %vm2941, %v5050, 0
    %v5203 = vsel %vm2941, %v5051, 0
    %v5206 = vsel %vm2941, %v5052, 0
    %v5209 = vsel %vm2941, %v5053, 0
    %v5212 = vsel %vm2941, %v5054, 0
    %v5215 = vsel %vm2941, %v5055, 0
    %v5218 = vsel %vm2941, %v5056, 0
    %v5221 = vsel %vm2941, %v5057, 0
    %v5224 = vsel %vm2941, %v5058, 0
    %v5227 = vsel %vm2941, %v5059, 0
    %v5230 = vsel %vm2941, %v5060, 0
    %v5233 = vsel %vm2941, %v5061, 0
    %v5236 = vsel %vm2941, %v5062, 0
    %v5239 = vsel %vm2941, %v5063, 0
    %v5242 = vsel %vm2941, %v5064, 0
    %v5245 = vsel %vm2941, %v5065, 0
    %v5248 = vsel %vm2941, %v5066, 0
    %v5251 = vsel %vm2941, %v5067, 0
    %v5254 = vsel %vm2941, %v5068, 0
    %v5257 = vsel %vm2941, %v5069, 0
    %v5260 = vsel %vm2941, %v5070, 0
    %v5263 = vsel %vm2941, %v5071, 0
    %v5266 = vsel %vm2941, %v5072, 0
    %5268 = vmatprep.subr.mxu0 0.0
    %5269 = vmatpush1.msra.mxu0 %v5074
    %5270 = vmatprep.subr.mxu0 0.0
    %5271 = vmatpush1.msra.mxu0 %v5075
    %5272 = vmatprep.subr.mxu0 0.0
    %5273 = vmatpush1.msra.mxu0 0.0
    %5274 = vmatprep.subr.mxu0 0.0
    %5275 = vmatpush1.msra.mxu0 0.0
    %5276 = vmatprep.subr.mxu0 0.0
    %5277 = vmatpush1.msra.mxu0 0.0
    %5278 = vmatprep.subr.mxu0 0.0
    %5279 = vmatpush1.msra.mxu0 0.0
    %5280 = vmatprep.subr.mxu0 0.0
    %5281 = vmatpush1.msra.mxu0 0.0
    %5282 = vmatprep.subr.mxu0 0.0
    %5283 = vmatpush1.msra.mxu0 0.0
    %5284 = vmatprep.subr.mxu0 0.0
    %5285 = vmatpush1.msra.mxu0 0.0
    %5286 = vmatprep.subr.mxu0 0.0
    %5287 = vmatpush1.msra.mxu0 0.0
    %5288 = vmatprep.subr.mxu0 0.0
    %5289 = vmatpush1.msra.mxu0 0.0
    %5290 = vmatprep.subr.mxu0 0.0
    %5291 = vmatpush1.msra.mxu0 0.0
    %5292 = vmatprep.subr.mxu0 0.0
    %5293 = vmatpush1.msra.mxu0 0.0
    %5294 = vmatprep.subr.mxu0 0.0
    %5295 = vmatpush1.msra.mxu0 0.0
    %5296 = vmatprep.subr.mxu0 0.0
    %5297 = vmatpush1.msra.mxu0 0.0
    %5298 = vmatprep.subr.mxu0 0.0
    %5299 = vmatpush1.msra.mxu0 0.0
    %5300 = vmatprep.subr.mxu0 0.0
    %5301 = vmatpush1.msra.mxu0 0.0
    %5302 = vmatprep.subr.mxu0 0.0
    %5303 = vmatpush1.msra.mxu0 0.0
    %5304 = vmatprep.subr.mxu0 0.0
    %5305 = vmatpush1.msra.mxu0 0.0
    %5306 = vmatprep.subr.mxu0 0.0
    %5307 = vmatpush1.msra.mxu0 0.0
    %5308 = vmatprep.subr.mxu0 0.0
    %5309 = vmatpush1.msra.mxu0 0.0
    %5310 = vmatprep.subr.mxu0 0.0
    %5311 = vmatpush1.msra.mxu0 0.0
    %5312 = vmatprep.subr.mxu0 0.0
    %5313 = vmatpush1.msra.mxu0 0.0
    %5314 = vmatprep.subr.mxu0 0.0
    %5315 = vmatpush1.msra.mxu0 0.0
    %5316 = vmatprep.subr.mxu0 0.0
    %5317 = vmatpush1.msra.mxu0 0.0
    %5318 = vmatprep.subr.mxu0 0.0
    %5319 = vmatpush1.msra.mxu0 0.0
    %5320 = vmatprep.subr.mxu0 0.0
    %5321 = vmatpush1.msra.mxu0 0.0
    %5322 = vmatprep.subr.mxu0 0.0
    %5323 = vmatpush1.msra.mxu0 0.0
    %5324 = vmatprep.subr.mxu0 0.0
    %5325 = vmatpush1.msra.mxu0 0.0
    %5326 = vmatprep.subr.mxu0 0.0
    %5327 = vmatpush1.msra.mxu0 0.0
    %5328 = vmatprep.subr.mxu0 0.0
    %5329 = vmatpush1.msra.mxu0 0.0
    %5330 = vmatprep.subr.mxu0 0.0
    %5331 = vmatpush1.msra.mxu0 0.0
    %5332 = vmatprep.mubr.f32.mxu0 0.0
    %5333 = vmatmul.mubr.f32.gmra.mrb[0].mxu0 %v5077
    %v5334 = vpop.f32.mrb[0].mxu0
    %v5335 = vadd.f32 0.0, %v5334
    %v5336 = vpop.f32.mrb[0].mxu0
    %5337 = vmatprep.mubr.f32.mxu0 0.0
    %5338 = vmatmul.mubr.f32.gmra.mrb[0].mxu0 %v5080
    %v5339 = vpop.f32.mrb[0].mxu0
    %v5340 = vadd.f32 0.0, %v5339
    %v5341 = vpop.f32.mrb[0].mxu0
    %5342 = vmatprep.mubr.f32.mxu0 0.0
    %5343 = vmatmul.mubr.f32.gmra.mrb[0].mxu0 %v5083
    %v5344 = vpop.f32.mrb[0].mxu0
    %v5345 = vadd.f32 0.0, %v5344
    %v5346 = vpop.f32.mrb[0].mxu0
    %5347 = vmatprep.mubr.f32.mxu0 0.0
    %5348 = vmatmul.mubr.f32.gmra.mrb[0].mxu0 %v5086
    %v5349 = vpop.f32.mrb[0].mxu0
    %v5350 = vadd.f32 0.0, %v5349
    %v5351 = vpop.f32.mrb[0].mxu0
    %5352 = vmatprep.mubr.f32.mxu0 0.0
    %5353 = vmatmul.mubr.f32.gmra.mrb[0].mxu0 %v5089
    %v5354 = vpop.f32.mrb[0].mxu0
    %v5355 = vadd.f32 0.0, %v5354
    %v5356 = vpop.f32.mrb[0].mxu0
    %5357 = vmatprep.mubr.f32.mxu0 0.0
    %5358 = vmatmul.mubr.f32.gmra.mrb[0].mxu0 %v5092
    %v5359 = vpop.f32.mrb[0].mxu0
    %v5360 = vadd.f32 0.0, %v5359
    %v5361 = vpop.f32.mrb[0].mxu0
    %5362 = vmatprep.mubr.f32.mxu0 0.0
    %5363 = vmatmul.mubr.f32.gmra.mrb[0].mxu0 %v5095
    %v5364 = vpop.f32.mrb[0].mxu0
    %v5365 = vadd.f32 0.0, %v5364
    %v5366 = vpop.f32.mrb[0].mxu0
    %5367 = vmatprep.mubr.f32.mxu0 0.0
    %5368 = vmatmul.mubr.f32.gmra.mrb[0].mxu0 %v5098
    %v5369 = vpop.f32.mrb[0].mxu0
    %v5370 = vadd.f32 0.0, %v5369
    %v5371 = vpop.f32.mrb[0].mxu0
    %5372 = vmatprep.mubr.f32.mxu0 0.0
    %5373 = vmatmul.mubr.f32.gmra.mrb[0].mxu0 %v5101
    %v5374 = vpop.f32.mrb[0].mxu0
    %v5375 = vadd.f32 0.0, %v5374
    %v5376 = vpop.f32.mrb[0].mxu0
    %5377 = vmatprep.mubr.f32.mxu0 0.0
    %5378 = vmatmul.mubr.f32.gmra.mrb[0].mxu0 %v5104
    %v5379 = vpop.f32.mrb[0].mxu0
    %v5380 = vadd.f32 0.0, %v5379
    %v5381 = vpop.f32.mrb[0].mxu0
    %5382 = vmatprep.mubr.f32.mxu0 0.0
    %5383 = vmatmul.mubr.f32.gmra.mrb[0].mxu0 %v5107
    %v5384 = vpop.f32.mrb[0].mxu0
    %v5385 = vadd.f32 0.0, %v5384
    %v5386 = vpop.f32.mrb[0].mxu0
    %5387 = vmatprep.mubr.f32.mxu0 0.0
    %5388 = vmatmul.mubr.f32.gmra.mrb[0].mxu0 %v5110
    %v5389 = vpop.f32.mrb[0].mxu0
    %v5390 = vadd.f32 0.0, %v5389
    %v5391 = vpop.f32.mrb[0].mxu0
    %5392 = vmatprep.mubr.f32.mxu0 0.0
    %5393 = vmatmul.mubr.f32.gmra.mrb[0].mxu0 %v5113
    %v5394 = vpop.f32.mrb[0].mxu0
    %v5395 = vadd.f32 0.0, %v5394
    %v5396 = vpop.f32.mrb[0].mxu0
    %5397 = vmatprep.mubr.f32.mxu0 0.0
    %5398 = vmatmul.mubr.f32.gmra.mrb[0].mxu0 %v5116
    %v5399 = vpop.f32.mrb[0].mxu0
    %v5400 = vadd.f32 0.0, %v5399
    %v5401 = vpop.f32.mrb[0].mxu0
    %5402 = vmatprep.mubr.f32.mxu0 0.0
    %5403 = vmatmul.mubr.f32.gmra.mrb[0].mxu0 %v5119
    %v5404 = vpop.f32.mrb[0].mxu0
    %v5405 = vadd.f32 0.0, %v5404
    %v5406 = vpop.f32.mrb[0].mxu0
    %5407 = vmatprep.mubr.f32.mxu0 0.0
    %5408 = vmatmul.mubr.f32.gmra.mrb[0].mxu0 %v5122
    %v5409 = vpop.f32.mrb[0].mxu0
    %v5410 = vadd.f32 0.0, %v5409
    %v5411 = vpop.f32.mrb[0].mxu0
    %5412 = vmatprep.mubr.f32.mxu0 0.0
    %5413 = vmatmul.mubr.f32.gmra.mrb[0].mxu0 %v5125
    %v5414 = vpop.f32.mrb[0].mxu0
    %v5415 = vadd.f32 0.0, %v5414
    %v5416 = vpop.f32.mrb[0].mxu0
    %5417 = vmatprep.mubr.f32.mxu0 0.0
    %5418 = vmatmul.mubr.f32.gmra.mrb[0].mxu0 %v5128
    %v5419 = vpop.f32.mrb[0].mxu0
    %v5420 = vadd.f32 0.0, %v5419
    %v5421 = vpop.f32.mrb[0].mxu0
    %5422 = vmatprep.mubr.f32.mxu0 0.0
    %5423 = vmatmul.mubr.f32.gmra.mrb[0].mxu0 %v5131
    %v5424 = vpop.f32.mrb[0].mxu0
    %v5425 = vadd.f32 0.0, %v5424
    %v5426 = vpop.f32.mrb[0].mxu0
    %5427 = vmatprep.mubr.f32.mxu0 0.0
    %5428 = vmatmul.mubr.f32.gmra.mrb[0].mxu0 %v5134
    %v5429 = vpop.f32.mrb[0].mxu0
    %v5430 = vadd.f32 0.0, %v5429
    %v5431 = vpop.f32.mrb[0].mxu0
    %5432 = vmatprep.mubr.f32.mxu0 0.0
    %5433 = vmatmul.mubr.f32.gmra.mrb[0].mxu0 %v5137
    %v5434 = vpop.f32.mrb[0].mxu0
    %v5435 = vadd.f32 0.0, %v5434
    %v5436 = vpop.f32.mrb[0].mxu0
    %5437 = vmatprep.mubr.f32.mxu0 0.0
    %5438 = vmatmul.mubr.f32.gmra.mrb[0].mxu0 %v5140
    %v5439 = vpop.f32.mrb[0].mxu0
    %v5440 = vadd.f32 0.0, %v5439
    %v5441 = vpop.f32.mrb[0].mxu0
    %5442 = vmatprep.mubr.f32.mxu0 0.0
    %5443 = vmatmul.mubr.f32.gmra.mrb[0].mxu0 %v5143
    %v5444 = vpop.f32.mrb[0].mxu0
    %v5445 = vadd.f32 0.0, %v5444
    %v5446 = vpop.f32.mrb[0].mxu0
    %5447 = vmatprep.mubr.f32.mxu0 0.0
    %5448 = vmatmul.mubr.f32.gmra.mrb[0].mxu0 %v5146
    %v5449 = vpop.f32.mrb[0].mxu0
    %v5450 = vadd.f32 0.0, %v5449
    %v5451 = vpop.f32.mrb[0].mxu0
    %5452 = vmatprep.mubr.f32.mxu0 0.0
    %5453 = vmatmul.mubr.f32.gmra.mrb[0].mxu0 %v5149
    %v5454 = vpop.f32.mrb[0].mxu0
    %v5455 = vadd.f32 0.0, %v5454
    %v5456 = vpop.f32.mrb[0].mxu0
    %5457 = vmatprep.mubr.f32.mxu0 0.0
    %5458 = vmatmul.mubr.f32.gmra.mrb[0].mxu0 %v5152
    %v5459 = vpop.f32.mrb[0].mxu0
    %v5460 = vadd.f32 0.0, %v5459
    %v5461 = vpop.f32.mrb[0].mxu0
    %5462 = vmatprep.mubr.f32.mxu0 0.0
    %5463 = vmatmul.mubr.f32.gmra.mrb[0].mxu0 %v5155
    %v5464 = vpop.f32.mrb[0].mxu0
    %v5465 = vadd.f32 0.0, %v5464
    %v5466 = vpop.f32.mrb[0].mxu0
    %5467 = vmatprep.mubr.f32.mxu0 0.0
    %5468 = vmatmul.mubr.f32.gmra.mrb[0].mxu0 %v5158
    %v5469 = vpop.f32.mrb[0].mxu0
    %v5470 = vadd.f32 0.0, %v5469
    %v5471 = vpop.f32.mrb[0].mxu0
    %5472 = vmatprep.mubr.f32.mxu0 0.0
    %5473 = vmatmul.mubr.f32.gmra.mrb[0].mxu0 %v5161
    %v5474 = vpop.f32.mrb[0].mxu0
    %v5475 = vadd.f32 0.0, %v5474
    %v5476 = vpop.f32.mrb[0].mxu0
    %5477 = vmatprep.mubr.f32.mxu0 0.0
    %5478 = vmatmul.mubr.f32.gmra.mrb[0].mxu0 %v5164
    %v5479 = vpop.f32.mrb[0].mxu0
    %v5480 = vadd.f32 0.0, %v5479
    %v5481 = vpop.f32.mrb[0].mxu0
    %5482 = vmatprep.mubr.f32.mxu0 0.0
    %5483 = vmatmul.mubr.f32.gmra.mrb[0].mxu0 %v5167
    %v5484 = vpop.f32.mrb[0].mxu0
    %v5485 = vadd.f32 0.0, %v5484
    %v5486 = vpop.f32.mrb[0].mxu0
    %5487 = vmatprep.mubr.f32.mxu0 0.0
    %5488 = vmatmul.mubr.f32.gmra.mrb[0].mxu0 %v5170
    %v5489 = vpop.f32.mrb[0].mxu0
    %v5490 = vadd.f32 0.0, %v5489
    %v5491 = vpop.f32.mrb[0].mxu0
    %5492 = vmatprep.mubr.f32.mxu0 0.0
    %5493 = vmatmul.mubr.f32.gmra.mrb[0].mxu0 %v5173
    %v5494 = vpop.f32.mrb[0].mxu0
    %v5495 = vadd.f32 0.0, %v5494
    %v5496 = vpop.f32.mrb[0].mxu0
    %5497 = vmatprep.mubr.f32.mxu0 0.0
    %5498 = vmatmul.mubr.f32.gmra.mrb[0].mxu0 %v5176
    %v5499 = vpop.f32.mrb[0].mxu0
    %v5500 = vadd.f32 0.0, %v5499
    %v5501 = vpop.f32.mrb[0].mxu0
    %5502 = vmatprep.mubr.f32.mxu0 0.0
    %5503 = vmatmul.mubr.f32.gmra.mrb[0].mxu0 %v5179
    %v5504 = vpop.f32.mrb[0].mxu0
    %v5505 = vadd.f32 0.0, %v5504
    %v5506 = vpop.f32.mrb[0].mxu0
    %5507 = vmatprep.mubr.f32.mxu0 0.0
    %5508 = vmatmul.mubr.f32.gmra.mrb[0].mxu0 %v5182
    %v5509 = vpop.f32.mrb[0].mxu0
    %v5510 = vadd.f32 0.0, %v5509
    %v5511 = vpop.f32.mrb[0].mxu0
    %5512 = vmatprep.mubr.f32.mxu0 0.0
    %5513 = vmatmul.mubr.f32.gmra.mrb[0].mxu0 %v5185
    %v5514 = vpop.f32.mrb[0].mxu0
    %v5515 = vadd.f32 0.0, %v5514
    %v5516 = vpop.f32.mrb[0].mxu0
    %5517 = vmatprep.mubr.f32.mxu0 0.0
    %5518 = vmatmul.mubr.f32.gmra.mrb[0].mxu0 %v5188
    %v5519 = vpop.f32.mrb[0].mxu0
    %v5520 = vadd.f32 0.0, %v5519
    %v5521 = vpop.f32.mrb[0].mxu0
    %5522 = vmatprep.mubr.f32.mxu0 0.0
    %5523 = vmatmul.mubr.f32.gmra.mrb[0].mxu0 %v5191
    %v5524 = vpop.f32.mrb[0].mxu0
    %v5525 = vadd.f32 0.0, %v5524
    %v5526 = vpop.f32.mrb[0].mxu0
    %5527 = vmatprep.mubr.f32.mxu0 0.0
    %5528 = vmatmul.mubr.f32.gmra.mrb[0].mxu0 %v5194
    %v5529 = vpop.f32.mrb[0].mxu0
    %v5530 = vadd.f32 0.0, %v5529
    %v5531 = vpop.f32.mrb[0].mxu0
    %5532 = vmatprep.mubr.f32.mxu0 0.0
    %5533 = vmatmul.mubr.f32.gmra.mrb[0].mxu0 %v5197
    %v5534 = vpop.f32.mrb[0].mxu0
    %v5535 = vadd.f32 0.0, %v5534
    %v5536 = vpop.f32.mrb[0].mxu0
    %5537 = vmatprep.mubr.f32.mxu0 0.0
    %5538 = vmatmul.mubr.f32.gmra.mrb[0].mxu0 %v5200
    %v5539 = vpop.f32.mrb[0].mxu0
    %v5540 = vadd.f32 0.0, %v5539
    %v5541 = vpop.f32.mrb[0].mxu0
    %5542 = vmatprep.mubr.f32.mxu0 0.0
    %5543 = vmatmul.mubr.f32.gmra.mrb[0].mxu0 %v5203
    %v5544 = vpop.f32.mrb[0].mxu0
    %v5545 = vadd.f32 0.0, %v5544
    %v5546 = vpop.f32.mrb[0].mxu0
    %5547 = vmatprep.mubr.f32.mxu0 0.0
    %5548 = vmatmul.mubr.f32.gmra.mrb[0].mxu0 %v5206
    %v5549 = vpop.f32.mrb[0].mxu0
    %v5550 = vadd.f32 0.0, %v5549
    %v5551 = vpop.f32.mrb[0].mxu0
    %5552 = vmatprep.mubr.f32.mxu0 0.0
    %5553 = vmatmul.mubr.f32.gmra.mrb[0].mxu0 %v5209
    %v5554 = vpop.f32.mrb[0].mxu0
    %v5555 = vadd.f32 0.0, %v5554
    %v5556 = vpop.f32.mrb[0].mxu0
    %5557 = vmatprep.mubr.f32.mxu0 0.0
    %5558 = vmatmul.mubr.f32.gmra.mrb[0].mxu0 %v5212
    %v5559 = vpop.f32.mrb[0].mxu0
    %v5560 = vadd.f32 0.0, %v5559
    %v5561 = vpop.f32.mrb[0].mxu0
    %5562 = vmatprep.mubr.f32.mxu0 0.0
    %5563 = vmatmul.mubr.f32.gmra.mrb[0].mxu0 %v5215
    %v5564 = vpop.f32.mrb[0].mxu0
    %v5565 = vadd.f32 0.0, %v5564
    %v5566 = vpop.f32.mrb[0].mxu0
    %5567 = vmatprep.mubr.f32.mxu0 0.0
    %5568 = vmatmul.mubr.f32.gmra.mrb[0].mxu0 %v5218
    %v5569 = vpop.f32.mrb[0].mxu0
    %v5570 = vadd.f32 0.0, %v5569
    %v5571 = vpop.f32.mrb[0].mxu0
    %5572 = vmatprep.mubr.f32.mxu0 0.0
    %5573 = vmatmul.mubr.f32.gmra.mrb[0].mxu0 %v5221
    %v5574 = vpop.f32.mrb[0].mxu0
    %v5575 = vadd.f32 0.0, %v5574
    %v5576 = vpop.f32.mrb[0].mxu0
    %5577 = vmatprep.mubr.f32.mxu0 0.0
    %5578 = vmatmul.mubr.f32.gmra.mrb[0].mxu0 %v5224
    %v5579 = vpop.f32.mrb[0].mxu0
    %v5580 = vadd.f32 0.0, %v5579
    %v5581 = vpop.f32.mrb[0].mxu0
    %5582 = vmatprep.mubr.f32.mxu0 0.0
    %5583 = vmatmul.mubr.f32.gmra.mrb[0].mxu0 %v5227
    %v5584 = vpop.f32.mrb[0].mxu0
    %v5585 = vadd.f32 0.0, %v5584
    %v5586 = vpop.f32.mrb[0].mxu0
    %5587 = vmatprep.mubr.f32.mxu0 0.0
    %5588 = vmatmul.mubr.f32.gmra.mrb[0].mxu0 %v5230
    %v5589 = vpop.f32.mrb[0].mxu0
    %v5590 = vadd.f32 0.0, %v5589
    %v5591 = vpop.f32.mrb[0].mxu0
    %5592 = vmatprep.mubr.f32.mxu0 0.0
    %5593 = vmatmul.mubr.f32.gmra.mrb[0].mxu0 %v5233
    %v5594 = vpop.f32.mrb[0].mxu0
    %v5595 = vadd.f32 0.0, %v5594
    %v5596 = vpop.f32.mrb[0].mxu0
    %5597 = vmatprep.mubr.f32.mxu0 0.0
    %5598 = vmatmul.mubr.f32.gmra.mrb[0].mxu0 %v5236
    %v5599 = vpop.f32.mrb[0].mxu0
    %v5600 = vadd.f32 0.0, %v5599
    %v5601 = vpop.f32.mrb[0].mxu0
    %5602 = vmatprep.mubr.f32.mxu0 0.0
    %5603 = vmatmul.mubr.f32.gmra.mrb[0].mxu0 %v5239
    %v5604 = vpop.f32.mrb[0].mxu0
    %v5605 = vadd.f32 0.0, %v5604
    %v5606 = vpop.f32.mrb[0].mxu0
    %5607 = vmatprep.mubr.f32.mxu0 0.0
    %5608 = vmatmul.mubr.f32.gmra.mrb[0].mxu0 %v5242
    %v5609 = vpop.f32.mrb[0].mxu0
    %v5610 = vadd.f32 0.0, %v5609
    %v5611 = vpop.f32.mrb[0].mxu0
    %5612 = vmatprep.mubr.f32.mxu0 0.0
    %5613 = vmatmul.mubr.f32.gmra.mrb[0].mxu0 %v5245
    %v5614 = vpop.f32.mrb[0].mxu0
    %v5615 = vadd.f32 0.0, %v5614
    %v5616 = vpop.f32.mrb[0].mxu0
    %5617 = vmatprep.mubr.f32.mxu0 0.0
    %5618 = vmatmul.mubr.f32.gmra.mrb[0].mxu0 %v5248
    %v5619 = vpop.f32.mrb[0].mxu0
    %v5620 = vadd.f32 0.0, %v5619
    %v5621 = vpop.f32.mrb[0].mxu0
    %5622 = vmatprep.mubr.f32.mxu0 0.0
    %5623 = vmatmul.mubr.f32.gmra.mrb[0].mxu0 %v5251
    %v5624 = vpop.f32.mrb[0].mxu0
    %v5625 = vadd.f32 0.0, %v5624
    %v5626 = vpop.f32.mrb[0].mxu0
    %5627 = vmatprep.mubr.f32.mxu0 0.0
    %5628 = vmatmul.mubr.f32.gmra.mrb[0].mxu0 %v5254
    %v5629 = vpop.f32.mrb[0].mxu0
    %v5630 = vadd.f32 0.0, %v5629
    %v5631 = vpop.f32.mrb[0].mxu0
    %5632 = vmatprep.mubr.f32.mxu0 0.0
    %5633 = vmatmul.mubr.f32.gmra.mrb[0].mxu0 %v5257
    %v5634 = vpop.f32.mrb[0].mxu0
    %v5635 = vadd.f32 0.0, %v5634
    %v5636 = vpop.f32.mrb[0].mxu0
    %5637 = vmatprep.mubr.f32.mxu0 0.0
    %5638 = vmatmul.mubr.f32.gmra.mrb[0].mxu0 %v5260
    %v5639 = vpop.f32.mrb[0].mxu0
    %v5640 = vadd.f32 0.0, %v5639
    %v5641 = vpop.f32.mrb[0].mxu0
    %5642 = vmatprep.mubr.f32.mxu0 0.0
    %5643 = vmatmul.mubr.f32.gmra.mrb[0].mxu0 %v5263
    %v5644 = vpop.f32.mrb[0].mxu0
    %v5645 = vadd.f32 0.0, %v5644
    %v5646 = vpop.f32.mrb[0].mxu0
    %5647 = vmatprep.mubr.f32.mxu0 0.0
    %5648 = vmatmul.mubr.f32.gmra.mrb[0].mxu0 %v5266
    %v5649 = vpop.f32.mrb[0].mxu0
    %v5650 = vadd.f32 0.0, %v5649
    %v5651 = vpop.f32.mrb[0].mxu0
    %5652 = vdwg.mxu0
    %v5653 = vadd.f32 %v4945, %v5335
    %v5654 = vadd.f32 %v4946, %v5340
    %v5655 = vadd.f32 %v4947, %v5345
    %v5656 = vadd.f32 %v4948, %v5350
    %v5657 = vadd.f32 %v4949, %v5355
    %v5658 = vadd.f32 %v4950, %v5360
    %v5659 = vadd.f32 %v4951, %v5365
    %v5660 = vadd.f32 %v4952, %v5370
    %v5661 = vadd.f32 %v4953, %v5375
    %v5662 = vadd.f32 %v4954, %v5380
    %v5663 = vadd.f32 %v4955, %v5385
    %v5664 = vadd.f32 %v4956, %v5390
    %v5665 = vadd.f32 %v4957, %v5395
    %v5666 = vadd.f32 %v4958, %v5400
    %v5667 = vadd.f32 %v4959, %v5405
    %v5668 = vadd.f32 %v4960, %v5410
    %v5669 = vadd.f32 %v4961, %v5415
    %v5670 = vadd.f32 %v4962, %v5420
    %v5671 = vadd.f32 %v4963, %v5425
    %v5672 = vadd.f32 %v4964, %v5430
    %v5673 = vadd.f32 %v4965, %v5435
    %v5674 = vadd.f32 %v4966, %v5440
    %v5675 = vadd.f32 %v4967, %v5445
    %v5676 = vadd.f32 %v4968, %v5450
    %v5677 = vadd.f32 %v4969, %v5455
    %v5678 = vadd.f32 %v4970, %v5460
    %v5679 = vadd.f32 %v4971, %v5465
    %v5680 = vadd.f32 %v4972, %v5470
    %v5681 = vadd.f32 %v4973, %v5475
    %v5682 = vadd.f32 %v4974, %v5480
    %v5683 = vadd.f32 %v4975, %v5485
    %v5684 = vadd.f32 %v4976, %v5490
    %v5685 = vadd.f32 %v4977, %v5495
    %v5686 = vadd.f32 %v4978, %v5500
    %v5687 = vadd.f32 %v4979, %v5505
    %v5688 = vadd.f32 %v4980, %v5510
    %v5689 = vadd.f32 %v4981, %v5515
    %v5690 = vadd.f32 %v4982, %v5520
    %v5691 = vadd.f32 %v4983, %v5525
    %v5692 = vadd.f32 %v4984, %v5530
    %v5693 = vadd.f32 %v4985, %v5535
    %v5694 = vadd.f32 %v4986, %v5540
    %v5695 = vadd.f32 %v4987, %v5545
    %v5696 = vadd.f32 %v4988, %v5550
    %v5697 = vadd.f32 %v4989, %v5555
    %v5698 = vadd.f32 %v4990, %v5560
    %v5699 = vadd.f32 %v4991, %v5565
    %v5700 = vadd.f32 %v4992, %v5570
    %v5701 = vadd.f32 %v4993, %v5575
    %v5702 = vadd.f32 %v4994, %v5580
    %v5703 = vadd.f32 %v4995, %v5585
    %v5704 = vadd.f32 %v4996, %v5590
    %v5705 = vadd.f32 %v4997, %v5595
    %v5706 = vadd.f32 %v4998, %v5600
    %v5707 = vadd.f32 %v4999, %v5605
    %v5708 = vadd.f32 %v5000, %v5610
    %v5709 = vadd.f32 %v5001, %v5615
    %v5710 = vadd.f32 %v5002, %v5620
    %v5711 = vadd.f32 %v5003, %v5625
    %v5712 = vadd.f32 %v5004, %v5630
    %v5713 = vadd.f32 %v5005, %v5635
    %v5714 = vadd.f32 %v5006, %v5640
    %v5715 = vadd.f32 %v5007, %v5645
    %v5716 = vadd.f32 %v5008, %v5650
    %v5717 = vld [vmem:[%s4] sm:$0x1]
    %v5719 = vlaneseq
    %v5720 = vshrl.u32 %v5719, 7
    %v5721 = vsub.s32 0, %v5720
    %v5722 = vrot.slane %v5717, %v5721
    %v5724 = vadd.f32 %v5653, %v5722
    %v5725 = vadd.f32 %v5654, %v5722
    %v5726 = vadd.f32 %v5655, %v5722
    %v5727 = vadd.f32 %v5656, %v5722
    %v5728 = vadd.f32 %v5657, %v5722
    %v5729 = vadd.f32 %v5658, %v5722
    %v5730 = vadd.f32 %v5659, %v5722
    %v5731 = vadd.f32 %v5660, %v5722
    %v5732 = vadd.f32 %v5661, %v5722
    %v5733 = vadd.f32 %v5662, %v5722
    %v5734 = vadd.f32 %v5663, %v5722
    %v5735 = vadd.f32 %v5664, %v5722
    %v5736 = vadd.f32 %v5665, %v5722
    %v5737 = vadd.f32 %v5666, %v5722
    %v5738 = vadd.f32 %v5667, %v5722
    %v5739 = vadd.f32 %v5668, %v5722
    %v5740 = vadd.f32 %v5669, %v5722
    %v5741 = vadd.f32 %v5670, %v5722
    %v5742 = vadd.f32 %v5671, %v5722
    %v5743 = vadd.f32 %v5672, %v5722
    %v5744 = vadd.f32 %v5673, %v5722
    %v5745 = vadd.f32 %v5674, %v5722
    %v5746 = vadd.f32 %v5675, %v5722
    %v5747 = vadd.f32 %v5676, %v5722
    %v5748 = vadd.f32 %v5677, %v5722
    %v5749 = vadd.f32 %v5678, %v5722
    %v5750 = vadd.f32 %v5679, %v5722
    %v5751 = vadd.f32 %v5680, %v5722
    %v5752 = vadd.f32 %v5681, %v5722
    %v5753 = vadd.f32 %v5682, %v5722
    %v5754 = vadd.f32 %v5683, %v5722
    %v5755 = vadd.f32 %v5684, %v5722
    %v5756 = vadd.f32 %v5685, %v5722
    %v5757 = vadd.f32 %v5686, %v5722
    %v5758 = vadd.f32 %v5687, %v5722
    %v5759 = vadd.f32 %v5688, %v5722
    %v5760 = vadd.f32 %v5689, %v5722
    %v5761 = vadd.f32 %v5690, %v5722
    %v5762 = vadd.f32 %v5691, %v5722
    %v5763 = vadd.f32 %v5692, %v5722
    %v5764 = vadd.f32 %v5693, %v5722
    %v5765 = vadd.f32 %v5694, %v5722
    %v5766 = vadd.f32 %v5695, %v5722
    %v5767 = vadd.f32 %v5696, %v5722
    %v5768 = vadd.f32 %v5697, %v5722
    %v5769 = vadd.f32 %v5698, %v5722
    %v5770 = vadd.f32 %v5699, %v5722
    %v5771 = vadd.f32 %v5700, %v5722
    %v5772 = vadd.f32 %v5701, %v5722
    %v5773 = vadd.f32 %v5702, %v5722
    %v5774 = vadd.f32 %v5703, %v5722
    %v5775 = vadd.f32 %v5704, %v5722
    %v5776 = vadd.f32 %v5705, %v5722
    %v5777 = vadd.f32 %v5706, %v5722
    %v5778 = vadd.f32 %v5707, %v5722
    %v5779 = vadd.f32 %v5708, %v5722
    %v5780 = vadd.f32 %v5709, %v5722
    %v5781 = vadd.f32 %v5710, %v5722
    %v5782 = vadd.f32 %v5711, %v5722
    %v5783 = vadd.f32 %v5712, %v5722
    %v5784 = vadd.f32 %v5713, %v5722
    %v5785 = vadd.f32 %v5714, %v5722
    %v5786 = vadd.f32 %v5715, %v5722
    %v5787 = vadd.f32 %v5716, %v5722
    %v5788 = vmax.f32 %v5724, 0.0
    %v5789 = vmax.f32 %v5725, 0.0
    %v5790 = vmax.f32 %v5726, 0.0
    %v5791 = vmax.f32 %v5727, 0.0
    %v5792 = vmax.f32 %v5728, 0.0
    %v5793 = vmax.f32 %v5729, 0.0
    %v5794 = vmax.f32 %v5730, 0.0
    %v5795 = vmax.f32 %v5731, 0.0
    %v5796 = vmax.f32 %v5732, 0.0
    %v5797 = vmax.f32 %v5733, 0.0
    %v5798 = vmax.f32 %v5734, 0.0
    %v5799 = vmax.f32 %v5735, 0.0
    %v5800 = vmax.f32 %v5736, 0.0
    %v5801 = vmax.f32 %v5737, 0.0
    %v5802 = vmax.f32 %v5738, 0.0
    %v5803 = vmax.f32 %v5739, 0.0
    %v5804 = vmax.f32 %v5740, 0.0
    %v5805 = vmax.f32 %v5741, 0.0
    %v5806 = vmax.f32 %v5742, 0.0
    %v5807 = vmax.f32 %v5743, 0.0
    %v5808 = vmax.f32 %v5744, 0.0
    %v5809 = vmax.f32 %v5745, 0.0
    %v5810 = vmax.f32 %v5746, 0.0
    %v5811 = vmax.f32 %v5747, 0.0
    %v5812 = vmax.f32 %v5748, 0.0
    %v5813 = vmax.f32 %v5749, 0.0
    %v5814 = vmax.f32 %v5750, 0.0
    %v5815 = vmax.f32 %v5751, 0.0
    %v5816 = vmax.f32 %v5752, 0.0
    %v5817 = vmax.f32 %v5753, 0.0
    %v5818 = vmax.f32 %v5754, 0.0
    %v5819 = vmax.f32 %v5755, 0.0
    %v5820 = vmax.f32 %v5756, 0.0
    %v5821 = vmax.f32 %v5757, 0.0
    %v5822 = vmax.f32 %v5758, 0.0
    %v5823 = vmax.f32 %v5759, 0.0
    %v5824 = vmax.f32 %v5760, 0.0
    %v5825 = vmax.f32 %v5761, 0.0
    %v5826 = vmax.f32 %v5762, 0.0
    %v5827 = vmax.f32 %v5763, 0.0
    %v5828 = vmax.f32 %v5764, 0.0
    %v5829 = vmax.f32 %v5765, 0.0
    %v5830 = vmax.f32 %v5766, 0.0
    %v5831 = vmax.f32 %v5767, 0.0
    %v5832 = vmax.f32 %v5768, 0.0
    %v5833 = vmax.f32 %v5769, 0.0
    %v5834 = vmax.f32 %v5770, 0.0
    %v5835 = vmax.f32 %v5771, 0.0
    %v5836 = vmax.f32 %v5772, 0.0
    %v5837 = vmax.f32 %v5773, 0.0
    %v5838 = vmax.f32 %v5774, 0.0
    %v5839 = vmax.f32 %v5775, 0.0
    %v5840 = vmax.f32 %v5776, 0.0
    %v5841 = vmax.f32 %v5777, 0.0
    %v5842 = vmax.f32 %v5778, 0.0
    %v5843 = vmax.f32 %v5779, 0.0
    %v5844 = vmax.f32 %v5780, 0.0
    %v5845 = vmax.f32 %v5781, 0.0
    %v5846 = vmax.f32 %v5782, 0.0
    %v5847 = vmax.f32 %v5783, 0.0
    %v5848 = vmax.f32 %v5784, 0.0
    %v5849 = vmax.f32 %v5785, 0.0
    %v5850 = vmax.f32 %v5786, 0.0
    %v5851 = vmax.f32 %v5787, 0.0
    %5852 = vst.msk [vmem:[#allocation3] sm:$0xff] %vm3010, %v5788
    %5853 = vst.msk [vmem:[#allocation3 + $0x8] sm:$0xff] %vm3010, %v5789
    %5854 = vst.msk [vmem:[#allocation3 + $0x10] sm:$0xff] %vm3010, %v5790
    %5855 = vst.msk [vmem:[#allocation3 + $0x18] sm:$0xff] %vm3010, %v5791
    %5856 = vst.msk [vmem:[#allocation3 + $0x20] sm:$0xff] %vm3010, %v5792
    %5857 = vst.msk [vmem:[#allocation3 + $0x28] sm:$0xff] %vm3010, %v5793
    %5858 = vst.msk [vmem:[#allocation3 + $0x30] sm:$0xff] %vm3010, %v5794
    %5859 = vst.msk [vmem:[#allocation3 + $0x38] sm:$0xff] %vm3010, %v5795
    %5860 = vst.msk [vmem:[#allocation3 + $0x40] sm:$0xff] %vm3010, %v5796
    %5861 = vst.msk [vmem:[#allocation3 + $0x48] sm:$0xff] %vm3010, %v5797
    %5862 = vst.msk [vmem:[#allocation3 + $0x50] sm:$0xff] %vm3010, %v5798
    %5863 = vst.msk [vmem:[#allocation3 + $0x58] sm:$0xff] %vm3010, %v5799
    %5864 = vst.msk [vmem:[#allocation3 + $0x60] sm:$0xff] %vm3010, %v5800
    %5865 = vst.msk [vmem:[#allocation3 + $0x68] sm:$0xff] %vm3010, %v5801
    %5866 = vst.msk [vmem:[#allocation3 + $0x70] sm:$0xff] %vm3010, %v5802
    %5867 = vst.msk [vmem:[#allocation3 + $0x78] sm:$0xff] %vm3010, %v5803
    %5868 = vst.msk [vmem:[#allocation3 + $0x80] sm:$0xff] %vm3010, %v5804
    %5869 = vst.msk [vmem:[#allocation3 + $0x88] sm:$0xff] %vm3010, %v5805
    %5870 = vst.msk [vmem:[#allocation3 + $0x90] sm:$0xff] %vm3010, %v5806
    %5871 = vst.msk [vmem:[#allocation3 + $0x98] sm:$0xff] %vm3010, %v5807
    %5872 = vst.msk [vmem:[#allocation3 + $0xa0] sm:$0xff] %vm3010, %v5808
    %5873 = vst.msk [vmem:[#allocation3 + $0xa8] sm:$0xff] %vm3010, %v5809
    %5874 = vst.msk [vmem:[#allocation3 + $0xb0] sm:$0xff] %vm3010, %v5810
    %5875 = vst.msk [vmem:[#allocation3 + $0xb8] sm:$0xff] %vm3010, %v5811
    %5876 = vst.msk [vmem:[#allocation3 + $0xc0] sm:$0xff] %vm3010, %v5812
    %5877 = vst.msk [vmem:[#allocation3 + $0xc8] sm:$0xff] %vm3010, %v5813
    %5878 = vst.msk [vmem:[#allocation3 + $0xd0] sm:$0xff] %vm3010, %v5814
    %5879 = vst.msk [vmem:[#allocation3 + $0xd8] sm:$0xff] %vm3010, %v5815
    %5880 = vst.msk [vmem:[#allocation3 + $0xe0] sm:$0xff] %vm3010, %v5816
    %5881 = vst.msk [vmem:[#allocation3 + $0xe8] sm:$0xff] %vm3010, %v5817
    %5882 = vst.msk [vmem:[#allocation3 + $0xf0] sm:$0xff] %vm3010, %v5818
    %5883 = vst.msk [vmem:[#allocation3 + $0xf8] sm:$0xff] %vm3010, %v5819
    %5884 = vst.msk [vmem:[#allocation3 + $0x100] sm:$0xff] %vm3010, %v5820
    %5885 = vst.msk [vmem:[#allocation3 + $0x108] sm:$0xff] %vm3010, %v5821
    %5886 = vst.msk [vmem:[#allocation3 + $0x110] sm:$0xff] %vm3010, %v5822
    %5887 = vst.msk [vmem:[#allocation3 + $0x118] sm:$0xff] %vm3010, %v5823
    %5888 = vst.msk [vmem:[#allocation3 + $0x120] sm:$0xff] %vm3010, %v5824
    %5889 = vst.msk [vmem:[#allocation3 + $0x128] sm:$0xff] %vm3010, %v5825
    %5890 = vst.msk [vmem:[#allocation3 + $0x130] sm:$0xff] %vm3010, %v5826
    %5891 = vst.msk [vmem:[#allocation3 + $0x138] sm:$0xff] %vm3010, %v5827
    %5892 = vst.msk [vmem:[#allocation3 + $0x140] sm:$0xff] %vm3010, %v5828
    %5893 = vst.msk [vmem:[#allocation3 + $0x148] sm:$0xff] %vm3010, %v5829
    %5894 = vst.msk [vmem:[#allocation3 + $0x150] sm:$0xff] %vm3010, %v5830
    %5895 = vst.msk [vmem:[#allocation3 + $0x158] sm:$0xff] %vm3010, %v5831
    %5896 = vst.msk [vmem:[#allocation3 + $0x160] sm:$0xff] %vm3010, %v5832
    %5897 = vst.msk [vmem:[#allocation3 + $0x168] sm:$0xff] %vm3010, %v5833
    %5898 = vst.msk [vmem:[#allocation3 + $0x170] sm:$0xff] %vm3010, %v5834
    %5899 = vst.msk [vmem:[#allocation3 + $0x178] sm:$0xff] %vm3010, %v5835
    %5900 = vst.msk [vmem:[#allocation3 + $0x180] sm:$0xff] %vm3010, %v5836
    %5901 = vst.msk [vmem:[#allocation3 + $0x188] sm:$0xff] %vm3010, %v5837
    %5902 = vst.msk [vmem:[#allocation3 + $0x190] sm:$0xff] %vm3010, %v5838
    %5903 = vst.msk [vmem:[#allocation3 + $0x198] sm:$0xff] %vm3010, %v5839
    %5904 = vst.msk [vmem:[#allocation3 + $0x1a0] sm:$0xff] %vm3010, %v5840
    %5905 = vst.msk [vmem:[#allocation3 + $0x1a8] sm:$0xff] %vm3010, %v5841
    %5906 = vst.msk [vmem:[#allocation3 + $0x1b0] sm:$0xff] %vm3010, %v5842
    %5907 = vst.msk [vmem:[#allocation3 + $0x1b8] sm:$0xff] %vm3010, %v5843
    %5908 = vst.msk [vmem:[#allocation3 + $0x1c0] sm:$0xff] %vm3010, %v5844
    %5909 = vst.msk [vmem:[#allocation3 + $0x1c8] sm:$0xff] %vm3010, %v5845
    %5910 = vst.msk [vmem:[#allocation3 + $0x1d0] sm:$0xff] %vm3010, %v5846
    %5911 = vst.msk [vmem:[#allocation3 + $0x1d8] sm:$0xff] %vm3010, %v5847
    %5912 = vst.msk [vmem:[#allocation3 + $0x1e0] sm:$0xff] %vm3010, %v5848
    %5913 = vst.msk [vmem:[#allocation3 + $0x1e8] sm:$0xff] %vm3010, %v5849
    %5914 = vst.msk [vmem:[#allocation3 + $0x1f0] sm:$0xff] %vm3010, %v5850
    %5915 = vst.msk [vmem:[#allocation3 + $0x1f8] sm:$0xff] %vm3010, %v5851
    %v5916 = vld [vmem:[#allocation3] sm:$0xff]
    %v5917 = vld [vmem:[#allocation3 + $0x8] sm:$0xff]
    %v5918 = vld [vmem:[#allocation3 + $0x10] sm:$0xff]
    %v5919 = vld [vmem:[#allocation3 + $0x18] sm:$0xff]
    %v5920 = vld [vmem:[#allocation3 + $0x20] sm:$0xff]
    %v5921 = vld [vmem:[#allocation3 + $0x28] sm:$0xff]
    %v5922 = vld [vmem:[#allocation3 + $0x30] sm:$0xff]
    %v5923 = vld [vmem:[#allocation3 + $0x38] sm:$0xff]
    %v5924 = vld [vmem:[#allocation3 + $0x40] sm:$0xff]
    %v5925 = vld [vmem:[#allocation3 + $0x48] sm:$0xff]
    %v5926 = vld [vmem:[#allocation3 + $0x50] sm:$0xff]
    %v5927 = vld [vmem:[#allocation3 + $0x58] sm:$0xff]
    %v5928 = vld [vmem:[#allocation3 + $0x60] sm:$0xff]
    %v5929 = vld [vmem:[#allocation3 + $0x68] sm:$0xff]
    %v5930 = vld [vmem:[#allocation3 + $0x70] sm:$0xff]
    %v5931 = vld [vmem:[#allocation3 + $0x78] sm:$0xff]
    %v5932 = vld [vmem:[#allocation3 + $0x80] sm:$0xff]
    %v5933 = vld [vmem:[#allocation3 + $0x88] sm:$0xff]
    %v5934 = vld [vmem:[#allocation3 + $0x90] sm:$0xff]
    %v5935 = vld [vmem:[#allocation3 + $0x98] sm:$0xff]
    %v5936 = vld [vmem:[#allocation3 + $0xa0] sm:$0xff]
    %v5937 = vld [vmem:[#allocation3 + $0xa8] sm:$0xff]
    %v5938 = vld [vmem:[#allocation3 + $0xb0] sm:$0xff]
    %v5939 = vld [vmem:[#allocation3 + $0xb8] sm:$0xff]
    %v5940 = vld [vmem:[#allocation3 + $0xc0] sm:$0xff]
    %v5941 = vld [vmem:[#allocation3 + $0xc8] sm:$0xff]
    %v5942 = vld [vmem:[#allocation3 + $0xd0] sm:$0xff]
    %v5943 = vld [vmem:[#allocation3 + $0xd8] sm:$0xff]
    %v5944 = vld [vmem:[#allocation3 + $0xe0] sm:$0xff]
    %v5945 = vld [vmem:[#allocation3 + $0xe8] sm:$0xff]
    %v5946 = vld [vmem:[#allocation3 + $0xf0] sm:$0xff]
    %v5947 = vld [vmem:[#allocation3 + $0xf8] sm:$0xff]
    %v5948 = vld [vmem:[#allocation3 + $0x100] sm:$0xff]
    %v5949 = vld [vmem:[#allocation3 + $0x108] sm:$0xff]
    %v5950 = vld [vmem:[#allocation3 + $0x110] sm:$0xff]
    %v5951 = vld [vmem:[#allocation3 + $0x118] sm:$0xff]
    %v5952 = vld [vmem:[#allocation3 + $0x120] sm:$0xff]
    %v5953 = vld [vmem:[#allocation3 + $0x128] sm:$0xff]
    %v5954 = vld [vmem:[#allocation3 + $0x130] sm:$0xff]
    %v5955 = vld [vmem:[#allocation3 + $0x138] sm:$0xff]
    %v5956 = vld [vmem:[#allocation3 + $0x140] sm:$0xff]
    %v5957 = vld [vmem:[#allocation3 + $0x148] sm:$0xff]
    %v5958 = vld [vmem:[#allocation3 + $0x150] sm:$0xff]
    %v5959 = vld [vmem:[#allocation3 + $0x158] sm:$0xff]
    %v5960 = vld [vmem:[#allocation3 + $0x160] sm:$0xff]
    %v5961 = vld [vmem:[#allocation3 + $0x168] sm:$0xff]
    %v5962 = vld [vmem:[#allocation3 + $0x170] sm:$0xff]
    %v5963 = vld [vmem:[#allocation3 + $0x178] sm:$0xff]
    %v5964 = vld [vmem:[#allocation3 + $0x180] sm:$0xff]
    %v5965 = vld [vmem:[#allocation3 + $0x188] sm:$0xff]
    %v5966 = vld [vmem:[#allocation3 + $0x190] sm:$0xff]
    %v5967 = vld [vmem:[#allocation3 + $0x198] sm:$0xff]
    %v5968 = vld [vmem:[#allocation3 + $0x1a0] sm:$0xff]
    %v5969 = vld [vmem:[#allocation3 + $0x1a8] sm:$0xff]
    %v5970 = vld [vmem:[#allocation3 + $0x1b0] sm:$0xff]
    %v5971 = vld [vmem:[#allocation3 + $0x1b8] sm:$0xff]
    %v5972 = vld [vmem:[#allocation3 + $0x1c0] sm:$0xff]
    %v5973 = vld [vmem:[#allocation3 + $0x1c8] sm:$0xff]
    %v5974 = vld [vmem:[#allocation3 + $0x1d0] sm:$0xff]
    %v5975 = vld [vmem:[#allocation3 + $0x1d8] sm:$0xff]
    %v5976 = vld [vmem:[#allocation3 + $0x1e0] sm:$0xff]
    %v5977 = vld [vmem:[#allocation3 + $0x1e8] sm:$0x7f]
    %v5978 = vld [vmem:[#allocation3 + $0x1] sm:$0xff]
    %v5979 = vld [vmem:[#allocation3 + $0x9] sm:$0xff]
    %v5980 = vld [vmem:[#allocation3 + $0x11] sm:$0xff]
    %v5981 = vld [vmem:[#allocation3 + $0x19] sm:$0xff]
    %v5982 = vld [vmem:[#allocation3 + $0x21] sm:$0xff]
    %v5983 = vld [vmem:[#allocation3 + $0x29] sm:$0xff]
    %v5984 = vld [vmem:[#allocation3 + $0x31] sm:$0xff]
    %v5985 = vld [vmem:[#allocation3 + $0x39] sm:$0xff]
    %v5986 = vld [vmem:[#allocation3 + $0x41] sm:$0xff]
    %v5987 = vld [vmem:[#allocation3 + $0x49] sm:$0xff]
    %v5988 = vld [vmem:[#allocation3 + $0x51] sm:$0xff]
    %v5989 = vld [vmem:[#allocation3 + $0x59] sm:$0xff]
    %v5990 = vld [vmem:[#allocation3 + $0x61] sm:$0xff]
    %v5991 = vld [vmem:[#allocation3 + $0x69] sm:$0xff]
    %v5992 = vld [vmem:[#allocation3 + $0x71] sm:$0xff]
    %v5993 = vld [vmem:[#allocation3 + $0x79] sm:$0xff]
    %v5994 = vld [vmem:[#allocation3 + $0x81] sm:$0xff]
    %v5995 = vld [vmem:[#allocation3 + $0x89] sm:$0xff]
    %v5996 = vld [vmem:[#allocation3 + $0x91] sm:$0xff]
    %v5997 = vld [vmem:[#allocation3 + $0x99] sm:$0xff]
    %v5998 = vld [vmem:[#allocation3 + $0xa1] sm:$0xff]
    %v5999 = vld [vmem:[#allocation3 + $0xa9] sm:$0xff]
    %v6000 = vld [vmem:[#allocation3 + $0xb1] sm:$0xff]
    %v6001 = vld [vmem:[#allocation3 + $0xb9] sm:$0xff]
    %v6002 = vld [vmem:[#allocation3 + $0xc1] sm:$0xff]
    %v6003 = vld [vmem:[#allocation3 + $0xc9] sm:$0xff]
    %v6004 = vld [vmem:[#allocation3 + $0xd1] sm:$0xff]
    %v6005 = vld [vmem:[#allocation3 + $0xd9] sm:$0xff]
    %v6006 = vld [vmem:[#allocation3 + $0xe1] sm:$0xff]
    %v6007 = vld [vmem:[#allocation3 + $0xe9] sm:$0xff]
    %v6008 = vld [vmem:[#allocation3 + $0xf1] sm:$0xff]
    %v6009 = vld [vmem:[#allocation3 + $0xf9] sm:$0xff]
    %v6010 = vld [vmem:[#allocation3 + $0x101] sm:$0xff]
    %v6011 = vld [vmem:[#allocation3 + $0x109] sm:$0xff]
    %v6012 = vld [vmem:[#allocation3 + $0x111] sm:$0xff]
    %v6013 = vld [vmem:[#allocation3 + $0x119] sm:$0xff]
    %v6014 = vld [vmem:[#allocation3 + $0x121] sm:$0xff]
    %v6015 = vld [vmem:[#allocation3 + $0x129] sm:$0xff]
    %v6016 = vld [vmem:[#allocation3 + $0x131] sm:$0xff]
    %v6017 = vld [vmem:[#allocation3 + $0x139] sm:$0xff]
    %v6018 = vld [vmem:[#allocation3 + $0x141] sm:$0xff]
    %v6019 = vld [vmem:[#allocation3 + $0x149] sm:$0xff]
    %v6020 = vld [vmem:[#allocation3 + $0x151] sm:$0xff]
    %v6021 = vld [vmem:[#allocation3 + $0x159] sm:$0xff]
    %v6022 = vld [vmem:[#allocation3 + $0x161] sm:$0xff]
    %v6023 = vld [vmem:[#allocation3 + $0x169] sm:$0xff]
    %v6024 = vld [vmem:[#allocation3 + $0x171] sm:$0xff]
    %v6025 = vld [vmem:[#allocation3 + $0x179] sm:$0xff]
    %v6026 = vld [vmem:[#allocation3 + $0x181] sm:$0xff]
    %v6027 = vld [vmem:[#allocation3 + $0x189] sm:$0xff]
    %v6028 = vld [vmem:[#allocation3 + $0x191] sm:$0xff]
    %v6029 = vld [vmem:[#allocation3 + $0x199] sm:$0xff]
    %v6030 = vld [vmem:[#allocation3 + $0x1a1] sm:$0xff]
    %v6031 = vld [vmem:[#allocation3 + $0x1a9] sm:$0xff]
    %v6032 = vld [vmem:[#allocation3 + $0x1b1] sm:$0xff]
    %v6033 = vld [vmem:[#allocation3 + $0x1b9] sm:$0xff]
    %v6034 = vld [vmem:[#allocation3 + $0x1c1] sm:$0xff]
    %v6035 = vld [vmem:[#allocation3 + $0x1c9] sm:$0xff]
    %v6036 = vld [vmem:[#allocation3 + $0x1d1] sm:$0xff]
    %v6037 = vld [vmem:[#allocation3 + $0x1d9] sm:$0xff]
    %v6038 = vld [vmem:[#allocation3 + $0x1e1] sm:$0xff]
    %v6039 = vld [vmem:[#allocation3 + $0x1e9] sm:$0x7f]
    %v6040 = vmax.f32 %v5916, %v5978
    %v6041 = vmax.f32 %v5917, %v5979
    %v6042 = vmax.f32 %v5918, %v5980
    %v6043 = vmax.f32 %v5919, %v5981
    %v6044 = vmax.f32 %v5920, %v5982
    %v6045 = vmax.f32 %v5921, %v5983
    %v6046 = vmax.f32 %v5922, %v5984
    %v6047 = vmax.f32 %v5923, %v5985
    %v6048 = vmax.f32 %v5924, %v5986
    %v6049 = vmax.f32 %v5925, %v5987
    %v6050 = vmax.f32 %v5926, %v5988
    %v6051 = vmax.f32 %v5927, %v5989
    %v6052 = vmax.f32 %v5928, %v5990
    %v6053 = vmax.f32 %v5929, %v5991
    %v6054 = vmax.f32 %v5930, %v5992
    %v6055 = vmax.f32 %v5931, %v5993
    %v6056 = vmax.f32 %v5932, %v5994
    %v6057 = vmax.f32 %v5933, %v5995
    %v6058 = vmax.f32 %v5934, %v5996
    %v6059 = vmax.f32 %v5935, %v5997
    %v6060 = vmax.f32 %v5936, %v5998
    %v6061 = vmax.f32 %v5937, %v5999
    %v6062 = vmax.f32 %v5938, %v6000
    %v6063 = vmax.f32 %v5939, %v6001
    %v6064 = vmax.f32 %v5940, %v6002
    %v6065 = vmax.f32 %v5941, %v6003
    %v6066 = vmax.f32 %v5942, %v6004
    %v6067 = vmax.f32 %v5943, %v6005
    %v6068 = vmax.f32 %v5944, %v6006
    %v6069 = vmax.f32 %v5945, %v6007
    %v6070 = vmax.f32 %v5946, %v6008
    %v6071 = vmax.f32 %v5947, %v6009
    %v6072 = vmax.f32 %v5948, %v6010
    %v6073 = vmax.f32 %v5949, %v6011
    %v6074 = vmax.f32 %v5950, %v6012
    %v6075 = vmax.f32 %v5951, %v6013
    %v6076 = vmax.f32 %v5952, %v6014
    %v6077 = vmax.f32 %v5953, %v6015
    %v6078 = vmax.f32 %v5954, %v6016
    %v6079 = vmax.f32 %v5955, %v6017
    %v6080 = vmax.f32 %v5956, %v6018
    %v6081 = vmax.f32 %v5957, %v6019
    %v6082 = vmax.f32 %v5958, %v6020
    %v6083 = vmax.f32 %v5959, %v6021
    %v6084 = vmax.f32 %v5960, %v6022
    %v6085 = vmax.f32 %v5961, %v6023
    %v6086 = vmax.f32 %v5962, %v6024
    %v6087 = vmax.f32 %v5963, %v6025
    %v6088 = vmax.f32 %v5964, %v6026
    %v6089 = vmax.f32 %v5965, %v6027
    %v6090 = vmax.f32 %v5966, %v6028
    %v6091 = vmax.f32 %v5967, %v6029
    %v6092 = vmax.f32 %v5968, %v6030
    %v6093 = vmax.f32 %v5969, %v6031
    %v6094 = vmax.f32 %v5970, %v6032
    %v6095 = vmax.f32 %v5971, %v6033
    %v6096 = vmax.f32 %v5972, %v6034
    %v6097 = vmax.f32 %v5973, %v6035
    %v6098 = vmax.f32 %v5974, %v6036
    %v6099 = vmax.f32 %v5975, %v6037
    %v6100 = vmax.f32 %v5976, %v6038
    %v6101 = vmax.f32 %v5977, %v6039
    %v6102 = vld [vmem:[#allocation3 + $0x1e8] sm:$0xff]
    %v6103 = vld [vmem:[#allocation3 + $0x1f0] sm:$0xff]
    %v6104 = vld [vmem:[#allocation3 + $0x1f8] sm:$0x7f]
    %v6105 = vld [vmem:[#allocation3 + $0x1e9] sm:$0xff]
    %v6106 = vld [vmem:[#allocation3 + $0x1f1] sm:$0xff]
    %v6107 = vld [vmem:[#allocation3 + $0x1f9] sm:$0x7f]
    %v6108 = vmax.f32 %v6102, %v6105
    %v6109 = vmax.f32 %v6103, %v6106
    %v6110 = vmax.f32 %v6104, %v6107
    %v6111 = vmax.f32 %v6040, %v6042
    %v6112 = vmax.f32 %v6041, %v6043
    %v6113 = vmax.f32 %v6042, %v6044
    %v6114 = vmax.f32 %v6043, %v6045
    %v6115 = vmax.f32 %v6044, %v6046
    %v6116 = vmax.f32 %v6045, %v6047
    %v6117 = vmax.f32 %v6046, %v6048
    %v6118 = vmax.f32 %v6047, %v6049
    %v6119 = vmax.f32 %v6048, %v6050
    %v6120 = vmax.f32 %v6049, %v6051
    %v6121 = vmax.f32 %v6050, %v6052
    %v6122 = vmax.f32 %v6051, %v6053
    %v6123 = vmax.f32 %v6052, %v6054
    %v6124 = vmax.f32 %v6053, %v6055
    %v6125 = vmax.f32 %v6054, %v6056
    %v6126 = vmax.f32 %v6055, %v6057
    %v6127 = vmax.f32 %v6056, %v6058
    %v6128 = vmax.f32 %v6057, %v6059
    %v6129 = vmax.f32 %v6058, %v6060
    %v6130 = vmax.f32 %v6059, %v6061
    %v6131 = vmax.f32 %v6060, %v6062
    %v6132 = vmax.f32 %v6061, %v6063
    %v6133 = vmax.f32 %v6062, %v6064
    %v6134 = vmax.f32 %v6063, %v6065
    %v6135 = vmax.f32 %v6064, %v6066
    %v6136 = vmax.f32 %v6065, %v6067
    %v6137 = vmax.f32 %v6066, %v6068
    %v6138 = vmax.f32 %v6067, %v6069
    %v6139 = vmax.f32 %v6068, %v6070
    %v6140 = vmax.f32 %v6069, %v6071
    %v6141 = vmax.f32 %v6070, %v6072
    %v6142 = vmax.f32 %v6071, %v6073
    %v6143 = vmax.f32 %v6072, %v6074
    %v6144 = vmax.f32 %v6073, %v6075
    %v6145 = vmax.f32 %v6074, %v6076
    %v6146 = vmax.f32 %v6075, %v6077
    %v6147 = vmax.f32 %v6076, %v6078
    %v6148 = vmax.f32 %v6077, %v6079
    %v6149 = vmax.f32 %v6078, %v6080
    %v6150 = vmax.f32 %v6079, %v6081
    %v6151 = vmax.f32 %v6080, %v6082
    %v6152 = vmax.f32 %v6081, %v6083
    %v6153 = vmax.f32 %v6082, %v6084
    %v6154 = vmax.f32 %v6083, %v6085
    %v6155 = vmax.f32 %v6084, %v6086
    %v6156 = vmax.f32 %v6085, %v6087
    %v6157 = vmax.f32 %v6086, %v6088
    %v6158 = vmax.f32 %v6087, %v6089
    %v6159 = vmax.f32 %v6088, %v6090
    %v6160 = vmax.f32 %v6089, %v6091
    %v6161 = vmax.f32 %v6090, %v6092
    %v6162 = vmax.f32 %v6091, %v6093
    %v6163 = vmax.f32 %v6092, %v6094
    %v6164 = vmax.f32 %v6093, %v6095
    %v6165 = vmax.f32 %v6094, %v6096
    %v6166 = vmax.f32 %v6095, %v6097
    %v6167 = vmax.f32 %v6096, %v6098
    %v6168 = vmax.f32 %v6097, %v6099
    %v6169 = vmax.f32 %v6098, %v6100
    %v6170 = vmax.f32 %v6099, %v6108
    %v6171 = vmax.f32 %v6100, %v6109
    %v6172 = vmax.f32 %v6101, %v6110
    %6173 = vst.msk [vmem:[#allocation4] sm:$0xff] %vm3010, %v6111
    %6174 = vst.msk [vmem:[#allocation4 + $0x8] sm:$0xff] %vm3010, %v6112
    %6175 = vst.msk [vmem:[#allocation4 + $0x10] sm:$0xff] %vm3010, %v6113
    %6176 = vst.msk [vmem:[#allocation4 + $0x18] sm:$0xff] %vm3010, %v6114
    %6177 = vst.msk [vmem:[#allocation4 + $0x20] sm:$0xff] %vm3010, %v6115
    %6178 = vst.msk [vmem:[#allocation4 + $0x28] sm:$0xff] %vm3010, %v6116
    %6179 = vst.msk [vmem:[#allocation4 + $0x30] sm:$0xff] %vm3010, %v6117
    %6180 = vst.msk [vmem:[#allocation4 + $0x38] sm:$0xff] %vm3010, %v6118
    %6181 = vst.msk [vmem:[#allocation4 + $0x40] sm:$0xff] %vm3010, %v6119
    %6182 = vst.msk [vmem:[#allocation4 + $0x48] sm:$0xff] %vm3010, %v6120
    %6183 = vst.msk [vmem:[#allocation4 + $0x50] sm:$0xff] %vm3010, %v6121
    %6184 = vst.msk [vmem:[#allocation4 + $0x58] sm:$0xff] %vm3010, %v6122
    %6185 = vst.msk [vmem:[#allocation4 + $0x60] sm:$0xff] %vm3010, %v6123
    %6186 = vst.msk [vmem:[#allocation4 + $0x68] sm:$0xff] %vm3010, %v6124
    %6187 = vst.msk [vmem:[#allocation4 + $0x70] sm:$0xff] %vm3010, %v6125
    %6188 = vst.msk [vmem:[#allocation4 + $0x78] sm:$0xff] %vm3010, %v6126
    %6189 = vst.msk [vmem:[#allocation4 + $0x80] sm:$0xff] %vm3010, %v6127
    %6190 = vst.msk [vmem:[#allocation4 + $0x88] sm:$0xff] %vm3010, %v6128
    %6191 = vst.msk [vmem:[#allocation4 + $0x90] sm:$0xff] %vm3010, %v6129
    %6192 = vst.msk [vmem:[#allocation4 + $0x98] sm:$0xff] %vm3010, %v6130
    %6193 = vst.msk [vmem:[#allocation4 + $0xa0] sm:$0xff] %vm3010, %v6131
    %6194 = vst.msk [vmem:[#allocation4 + $0xa8] sm:$0xff] %vm3010, %v6132
    %6195 = vst.msk [vmem:[#allocation4 + $0xb0] sm:$0xff] %vm3010, %v6133
    %6196 = vst.msk [vmem:[#allocation4 + $0xb8] sm:$0xff] %vm3010, %v6134
    %6197 = vst.msk [vmem:[#allocation4 + $0xc0] sm:$0xff] %vm3010, %v6135
    %6198 = vst.msk [vmem:[#allocation4 + $0xc8] sm:$0xff] %vm3010, %v6136
    %6199 = vst.msk [vmem:[#allocation4 + $0xd0] sm:$0xff] %vm3010, %v6137
    %6200 = vst.msk [vmem:[#allocation4 + $0xd8] sm:$0xff] %vm3010, %v6138
    %6201 = vst.msk [vmem:[#allocation4 + $0xe0] sm:$0xff] %vm3010, %v6139
    %6202 = vst.msk [vmem:[#allocation4 + $0xe8] sm:$0xff] %vm3010, %v6140
    %6203 = vst.msk [vmem:[#allocation4 + $0xf0] sm:$0xff] %vm3010, %v6141
    %6204 = vst.msk [vmem:[#allocation4 + $0xf8] sm:$0xff] %vm3010, %v6142
    %6205 = vst.msk [vmem:[#allocation4 + $0x100] sm:$0xff] %vm3010, %v6143
    %6206 = vst.msk [vmem:[#allocation4 + $0x108] sm:$0xff] %vm3010, %v6144
    %6207 = vst.msk [vmem:[#allocation4 + $0x110] sm:$0xff] %vm3010, %v6145
    %6208 = vst.msk [vmem:[#allocation4 + $0x118] sm:$0xff] %vm3010, %v6146
    %6209 = vst.msk [vmem:[#allocation4 + $0x120] sm:$0xff] %vm3010, %v6147
    %6210 = vst.msk [vmem:[#allocation4 + $0x128] sm:$0xff] %vm3010, %v6148
    %6211 = vst.msk [vmem:[#allocation4 + $0x130] sm:$0xff] %vm3010, %v6149
    %6212 = vst.msk [vmem:[#allocation4 + $0x138] sm:$0xff] %vm3010, %v6150
    %6213 = vst.msk [vmem:[#allocation4 + $0x140] sm:$0xff] %vm3010, %v6151
    %6214 = vst.msk [vmem:[#allocation4 + $0x148] sm:$0xff] %vm3010, %v6152
    %6215 = vst.msk [vmem:[#allocation4 + $0x150] sm:$0xff] %vm3010, %v6153
    %6216 = vst.msk [vmem:[#allocation4 + $0x158] sm:$0xff] %vm3010, %v6154
    %6217 = vst.msk [vmem:[#allocation4 + $0x160] sm:$0xff] %vm3010, %v6155
    %6218 = vst.msk [vmem:[#allocation4 + $0x168] sm:$0xff] %vm3010, %v6156
    %6219 = vst.msk [vmem:[#allocation4 + $0x170] sm:$0xff] %vm3010, %v6157
    %6220 = vst.msk [vmem:[#allocation4 + $0x178] sm:$0xff] %vm3010, %v6158
    %6221 = vst.msk [vmem:[#allocation4 + $0x180] sm:$0xff] %vm3010, %v6159
    %6222 = vst.msk [vmem:[#allocation4 + $0x188] sm:$0xff] %vm3010, %v6160
    %6223 = vst.msk [vmem:[#allocation4 + $0x190] sm:$0xff] %vm3010, %v6161
    %6224 = vst.msk [vmem:[#allocation4 + $0x198] sm:$0xff] %vm3010, %v6162
    %6225 = vst.msk [vmem:[#allocation4 + $0x1a0] sm:$0xff] %vm3010, %v6163
    %6226 = vst.msk [vmem:[#allocation4 + $0x1a8] sm:$0xff] %vm3010, %v6164
    %6227 = vst.msk [vmem:[#allocation4 + $0x1b0] sm:$0xff] %vm3010, %v6165
    %6228 = vst.msk [vmem:[#allocation4 + $0x1b8] sm:$0xff] %vm3010, %v6166
    %6229 = vst.msk [vmem:[#allocation4 + $0x1c0] sm:$0xff] %vm3010, %v6167
    %6230 = vst.msk [vmem:[#allocation4 + $0x1c8] sm:$0xff] %vm3010, %v6168
    %6231 = vst.msk [vmem:[#allocation4 + $0x1d0] sm:$0xff] %vm3010, %v6169
    %6232 = vst.msk [vmem:[#allocation4 + $0x1d8] sm:$0xff] %vm3010, %v6170
    %6233 = vst.msk [vmem:[#allocation4 + $0x1e0] sm:$0xff] %vm3010, %v6171
    %vm6234 = vcmask 260096
    %6235 = vst.msk [vmem:[#allocation4 + $0x1e8] sm:$0x7f] %vm6234, %v6172
    %v6236 = vld [vmem:[#allocation4] ss:$2 sm:$0x7f]
    %6237 = vst.msk [vmem:[#allocation5] sm:$0x7f] %vm6234, %v6236
    %s6238 = scalar_lea.vmem [#allocation4], 32
    %v6239 = vld [vmem:[%s6238] ss:$2 sm:$0x7f]
    %6240 = vst.msk [vmem:[#allocation5 + $0x7] sm:$0x7f] %vm6234, %v6239
    %s6241 = scalar_lea.vmem [#allocation4], 64
    %v6242 = vld [vmem:[%s6241] ss:$2 sm:$0x7f]
    %6243 = vst.msk [vmem:[#allocation5 + $0xe] sm:$0x7f] %vm6234, %v6242
    %s6244 = scalar_lea.vmem [#allocation4], 96
    %v6245 = vld [vmem:[%s6244] ss:$2 sm:$0x7f]
    %6246 = vst.msk [vmem:[#allocation5 + $0x15] sm:$0x7f] %vm6234, %v6245
    %s6247 = scalar_lea.vmem [#allocation4], 128
    %v6248 = vld [vmem:[%s6247] ss:$2 sm:$0x7f]
    %6249 = vst.msk [vmem:[#allocation5 + $0x1c] sm:$0x7f] %vm6234, %v6248
    %s6250 = scalar_lea.vmem [#allocation4], 160
    %v6251 = vld [vmem:[%s6250] ss:$2 sm:$0x7f]
    %6252 = vst.msk [vmem:[#allocation5 + $0x23] sm:$0x7f] %vm6234, %v6251
    %s6253 = scalar_lea.vmem [#allocation4], 192
    %v6254 = vld [vmem:[%s6253] ss:$2 sm:$0x7f]
    %6255 = vst.msk [vmem:[#allocation5 + $0x2a] sm:$0x7f] %vm6234, %v6254
    %s6256 = scalar_lea.vmem [#allocation4], 256
    %v6257 = vld [vmem:[%s6256] ss:$2 sm:$0x7f]
    %6258 = vst.msk [vmem:[#allocation5 + $0x31] sm:$0x7f] %vm6234, %v6257
    %s6259 = scalar_lea.vmem [#allocation4], 288
    %v6260 = vld [vmem:[%s6259] ss:$2 sm:$0x7f]
    %6261 = vst.msk [vmem:[#allocation5 + $0x38] sm:$0x7f] %vm6234, %v6260
    %s6262 = scalar_lea.vmem [#allocation4], 320
    %v6263 = vld [vmem:[%s6262] ss:$2 sm:$0x7f]
    %6264 = vst.msk [vmem:[#allocation5 + $0x3f] sm:$0x7f] %vm6234, %v6263
    %s6265 = scalar_lea.vmem [#allocation4], 352
    %v6266 = vld [vmem:[%s6265] ss:$2 sm:$0x7f]
    %6267 = vst.msk [vmem:[#allocation5 + $0x46] sm:$0x7f] %vm6234, %v6266
    %s6268 = scalar_lea.vmem [#allocation4], 384
    %v6269 = vld [vmem:[%s6268] ss:$2 sm:$0x7f]
    %6270 = vst.msk [vmem:[#allocation5 + $0x4d] sm:$0x7f] %vm6234, %v6269
    %s6271 = scalar_lea.vmem [#allocation4], 416
    %v6272 = vld [vmem:[%s6271] ss:$2 sm:$0x7f]
    %6273 = vst.msk [vmem:[#allocation5 + $0x54] sm:$0x7f] %vm6234, %v6272
    %s6274 = scalar_lea.vmem [#allocation4], 448
    %v6275 = vld [vmem:[%s6274] ss:$2 sm:$0x7f]
    %6276 = vst.msk [vmem:[#allocation5 + $0x5b] sm:$0x7f] %vm6234, %v6275
    %v6277 = vld [vmem:[#allocation5] sm:$0xff]
    %v6278 = vld [vmem:[#allocation5 + $0x8] sm:$0xff]
    %v6279 = vld [vmem:[#allocation5 + $0x10] sm:$0xff]
    %v6280 = vld [vmem:[#allocation5 + $0x18] sm:$0xff]
    %v6281 = vld [vmem:[#allocation5 + $0x20] sm:$0xff]
    %v6282 = vld [vmem:[#allocation5 + $0x28] sm:$0xff]
    %v6283 = vld [vmem:[#allocation5 + $0x30] sm:$0xff]
    %v6284 = vld [vmem:[#allocation5 + $0x38] sm:$0xff]
    %v6285 = vld [vmem:[#allocation5 + $0x40] sm:$0xff]
    %v6286 = vld [vmem:[#allocation5 + $0x48] sm:$0xff]
    %v6287 = vld [vmem:[#allocation5 + $0x50] sm:$0xff]
    %v6288 = vld [vmem:[#allocation5 + $0x58] sm:$0xff]
    %v6289 = vld [vmem:[#allocation5 + $0x60] sm:$0x3]
    %v6290 = vld [vmem:[%s5] sm:$0xff]
    %v6291 = vld [vmem:[%s5 + $0x8] sm:$0xff]
    %v6292 = vld [vmem:[%s5 + $0x10] sm:$0xff]
    %v6293 = vld [vmem:[%s5 + $0x18] sm:$0xff]
    %v6294 = vld [vmem:[#allocation5 + $0x1] sm:$0xff]
    %v6295 = vld [vmem:[#allocation5 + $0x9] sm:$0xff]
    %v6296 = vld [vmem:[#allocation5 + $0x11] sm:$0xff]
    %v6297 = vld [vmem:[#allocation5 + $0x19] sm:$0xff]
    %v6298 = vld [vmem:[#allocation5 + $0x21] sm:$0xff]
    %v6299 = vld [vmem:[#allocation5 + $0x29] sm:$0xff]
    %v6300 = vld [vmem:[#allocation5 + $0x31] sm:$0xff]
    %v6301 = vld [vmem:[#allocation5 + $0x39] sm:$0xff]
    %v6302 = vld [vmem:[#allocation5 + $0x41] sm:$0xff]
    %v6303 = vld [vmem:[#allocation5 + $0x49] sm:$0xff]
    %v6304 = vld [vmem:[#allocation5 + $0x51] sm:$0xff]
    %v6305 = vld [vmem:[#allocation5 + $0x59] sm:$0xff]
    %v6306 = vld [vmem:[#allocation5 + $0x61] sm:$0x3]
    %s6307 = scalar_lea.vmem %s5, 32
    %v6308 = vld [vmem:[%s6307] sm:$0xff]
    %v6309 = vld [vmem:[%s6307 + $0x8] sm:$0xff]
    %v6310 = vld [vmem:[%s6307 + $0x10] sm:$0xff]
    %v6311 = vld [vmem:[%s6307 + $0x18] sm:$0xff]
    %v6313 = vsel %vm3010, %v6294, 0
    %v6316 = vsel %vm3010, %v6295, 0
    %v6319 = vsel %vm3010, %v6296, 0
    %v6322 = vsel %vm3010, %v6297, 0
    %v6325 = vsel %vm3010, %v6298, 0
    %v6328 = vsel %vm3010, %v6299, 0
    %v6331 = vsel %vm3010, %v6300, 0
    %v6334 = vsel %vm3010, %v6301, 0
    %v6337 = vsel %vm3010, %v6302, 0
    %v6340 = vsel %vm3010, %v6303, 0
    %v6343 = vsel %vm3010, %v6304, 0
    %v6346 = vsel %vm3010, %v6305, 0
    %v6349 = vsel %vm3010, %v6306, 0
    %6351 = vmatprep.subr.mxu0 0.0
    %6352 = vmatpush1.msra.mxu0 %v6308
    %6353 = vmatprep.subr.mxu0 0.0
    %6354 = vmatpush1.msra.mxu0 %v6309
    %6355 = vmatprep.subr.mxu0 0.0
    %6356 = vmatpush1.msra.mxu0 %v6310
    %6357 = vmatprep.subr.mxu0 0.0
    %6358 = vmatpush1.msra.mxu0 %v6311
    %6359 = vmatprep.subr.mxu0 0.0
    %6360 = vmatpush1.msra.mxu0 0.0
    %6361 = vmatprep.subr.mxu0 0.0
    %6362 = vmatpush1.msra.mxu0 0.0
    %6363 = vmatprep.subr.mxu0 0.0
    %6364 = vmatpush1.msra.mxu0 0.0
    %6365 = vmatprep.subr.mxu0 0.0
    %6366 = vmatpush1.msra.mxu0 0.0
    %6367 = vmatprep.subr.mxu0 0.0
    %6368 = vmatpush1.msra.mxu0 0.0
    %6369 = vmatprep.subr.mxu0 0.0
    %6370 = vmatpush1.msra.mxu0 0.0
    %6371 = vmatprep.subr.mxu0 0.0
    %6372 = vmatpush1.msra.mxu0 0.0
    %6373 = vmatprep.subr.mxu0 0.0
    %6374 = vmatpush1.msra.mxu0 0.0
    %6375 = vmatprep.subr.mxu0 0.0
    %6376 = vmatpush1.msra.mxu0 0.0
    %6377 = vmatprep.subr.mxu0 0.0
    %6378 = vmatpush1.msra.mxu0 0.0
    %6379 = vmatprep.subr.mxu0 0.0
    %6380 = vmatpush1.msra.mxu0 0.0
    %6381 = vmatprep.subr.mxu0 0.0
    %6382 = vmatpush1.msra.mxu0 0.0
    %6383 = vmatprep.subr.mxu0 0.0
    %6384 = vmatpush1.msra.mxu0 0.0
    %6385 = vmatprep.subr.mxu0 0.0
    %6386 = vmatpush1.msra.mxu0 0.0
    %6387 = vmatprep.subr.mxu0 0.0
    %6388 = vmatpush1.msra.mxu0 0.0
    %6389 = vmatprep.subr.mxu0 0.0
    %6390 = vmatpush1.msra.mxu0 0.0
    %6391 = vmatprep.subr.mxu0 0.0
    %6392 = vmatpush1.msra.mxu0 0.0
    %6393 = vmatprep.subr.mxu0 0.0
    %6394 = vmatpush1.msra.mxu0 0.0
    %6395 = vmatprep.subr.mxu0 0.0
    %6396 = vmatpush1.msra.mxu0 0.0
    %6397 = vmatprep.subr.mxu0 0.0
    %6398 = vmatpush1.msra.mxu0 0.0
    %6399 = vmatprep.subr.mxu0 0.0
    %6400 = vmatpush1.msra.mxu0 0.0
    %6401 = vmatprep.subr.mxu0 0.0
    %6402 = vmatpush1.msra.mxu0 0.0
    %6403 = vmatprep.subr.mxu0 0.0
    %6404 = vmatpush1.msra.mxu0 0.0
    %6405 = vmatprep.subr.mxu0 0.0
    %6406 = vmatpush1.msra.mxu0 0.0
    %6407 = vmatprep.subr.mxu0 0.0
    %6408 = vmatpush1.msra.mxu0 0.0
    %6409 = vmatprep.subr.mxu0 0.0
    %6410 = vmatpush1.msra.mxu0 0.0
    %6411 = vmatprep.subr.mxu0 0.0
    %6412 = vmatpush1.msra.mxu0 0.0
    %6413 = vmatprep.subr.mxu0 0.0
    %6414 = vmatpush1.msra.mxu0 0.0
    %6415 = vmatprep.mubr.f32.mxu0 0.0
    %6416 = vmatmul.mubr.f32.gmra.mrb[0].mxu0 %v6313
    %v6417 = vpop.f32.mrb[0].mxu0
    %v6418 = vadd.f32 0.0, %v6417
    %v6419 = vpop.f32.mrb[0].mxu0
    %6420 = vmatprep.mubr.f32.mxu0 0.0
    %6421 = vmatmul.mubr.f32.gmra.mrb[0].mxu0 %v6316
    %v6422 = vpop.f32.mrb[0].mxu0
    %v6423 = vadd.f32 0.0, %v6422
    %v6424 = vpop.f32.mrb[0].mxu0
    %6425 = vmatprep.mubr.f32.mxu0 0.0
    %6426 = vmatmul.mubr.f32.gmra.mrb[0].mxu0 %v6319
    %v6427 = vpop.f32.mrb[0].mxu0
    %v6428 = vadd.f32 0.0, %v6427
    %v6429 = vpop.f32.mrb[0].mxu0
    %6430 = vmatprep.mubr.f32.mxu0 0.0
    %6431 = vmatmul.mubr.f32.gmra.mrb[0].mxu0 %v6322
    %v6432 = vpop.f32.mrb[0].mxu0
    %v6433 = vadd.f32 0.0, %v6432
    %v6434 = vpop.f32.mrb[0].mxu0
    %6435 = vmatprep.mubr.f32.mxu0 0.0
    %6436 = vmatmul.mubr.f32.gmra.mrb[0].mxu0 %v6325
    %v6437 = vpop.f32.mrb[0].mxu0
    %v6438 = vadd.f32 0.0, %v6437
    %v6439 = vpop.f32.mrb[0].mxu0
    %6440 = vmatprep.mubr.f32.mxu0 0.0
    %6441 = vmatmul.mubr.f32.gmra.mrb[0].mxu0 %v6328
    %v6442 = vpop.f32.mrb[0].mxu0
    %v6443 = vadd.f32 0.0, %v6442
    %v6444 = vpop.f32.mrb[0].mxu0
    %6445 = vmatprep.mubr.f32.mxu0 0.0
    %6446 = vmatmul.mubr.f32.gmra.mrb[0].mxu0 %v6331
    %v6447 = vpop.f32.mrb[0].mxu0
    %v6448 = vadd.f32 0.0, %v6447
    %v6449 = vpop.f32.mrb[0].mxu0
    %6450 = vmatprep.mubr.f32.mxu0 0.0
    %6451 = vmatmul.mubr.f32.gmra.mrb[0].mxu0 %v6334
    %v6452 = vpop.f32.mrb[0].mxu0
    %v6453 = vadd.f32 0.0, %v6452
    %v6454 = vpop.f32.mrb[0].mxu0
    %6455 = vmatprep.mubr.f32.mxu0 0.0
    %6456 = vmatmul.mubr.f32.gmra.mrb[0].mxu0 %v6337
    %v6457 = vpop.f32.mrb[0].mxu0
    %v6458 = vadd.f32 0.0, %v6457
    %v6459 = vpop.f32.mrb[0].mxu0
    %6460 = vmatprep.mubr.f32.mxu0 0.0
    %6461 = vmatmul.mubr.f32.gmra.mrb[0].mxu0 %v6340
    %v6462 = vpop.f32.mrb[0].mxu0
    %v6463 = vadd.f32 0.0, %v6462
    %v6464 = vpop.f32.mrb[0].mxu0
    %6465 = vmatprep.mubr.f32.mxu0 0.0
    %6466 = vmatmul.mubr.f32.gmra.mrb[0].mxu0 %v6343
    %v6467 = vpop.f32.mrb[0].mxu0
    %v6468 = vadd.f32 0.0, %v6467
    %v6469 = vpop.f32.mrb[0].mxu0
    %6470 = vmatprep.mubr.f32.mxu0 0.0
    %6471 = vmatmul.mubr.f32.gmra.mrb[0].mxu0 %v6346
    %v6472 = vpop.f32.mrb[0].mxu0
    %v6473 = vadd.f32 0.0, %v6472
    %v6474 = vpop.f32.mrb[0].mxu0
    %6475 = vmatprep.mubr.f32.mxu0 0.0
    %6476 = vmatmul.mubr.f32.gmra.mrb[0].mxu0 %v6349
    %v6477 = vpop.f32.mrb[0].mxu0
    %v6478 = vadd.f32 0.0, %v6477
    %v6479 = vpop.f32.mrb[0].mxu0
    %6480 = vdwg.mxu0
    %v6482 = vsel %vm3010, %v6277, 0
    %v6485 = vsel %vm3010, %v6278, 0
    %v6488 = vsel %vm3010, %v6279, 0
    %v6491 = vsel %vm3010, %v6280, 0
    %v6494 = vsel %vm3010, %v6281, 0
    %v6497 = vsel %vm3010, %v6282, 0
    %v6500 = vsel %vm3010, %v6283, 0
    %v6503 = vsel %vm3010, %v6284, 0
    %v6506 = vsel %vm3010, %v6285, 0
    %v6509 = vsel %vm3010, %v6286, 0
    %v6512 = vsel %vm3010, %v6287, 0
    %v6515 = vsel %vm3010, %v6288, 0
    %v6518 = vsel %vm3010, %v6289, 0
    %6520 = vmatprep.subr.mxu0 0.0
    %6521 = vmatpush1.msra.mxu0 %v6290
    %6522 = vmatprep.subr.mxu0 0.0
    %6523 = vmatpush1.msra.mxu0 %v6291
    %6524 = vmatprep.subr.mxu0 0.0
    %6525 = vmatpush1.msra.mxu0 %v6292
    %6526 = vmatprep.subr.mxu0 0.0
    %6527 = vmatpush1.msra.mxu0 %v6293
    %6528 = vmatprep.subr.mxu0 0.0
    %6529 = vmatpush1.msra.mxu0 0.0
    %6530 = vmatprep.subr.mxu0 0.0
    %6531 = vmatpush1.msra.mxu0 0.0
    %6532 = vmatprep.subr.mxu0 0.0
    %6533 = vmatpush1.msra.mxu0 0.0
    %6534 = vmatprep.subr.mxu0 0.0
    %6535 = vmatpush1.msra.mxu0 0.0
    %6536 = vmatprep.subr.mxu0 0.0
    %6537 = vmatpush1.msra.mxu0 0.0
    %6538 = vmatprep.subr.mxu0 0.0
    %6539 = vmatpush1.msra.mxu0 0.0
    %6540 = vmatprep.subr.mxu0 0.0
    %6541 = vmatpush1.msra.mxu0 0.0
    %6542 = vmatprep.subr.mxu0 0.0
    %6543 = vmatpush1.msra.mxu0 0.0
    %6544 = vmatprep.subr.mxu0 0.0
    %6545 = vmatpush1.msra.mxu0 0.0
    %6546 = vmatprep.subr.mxu0 0.0
    %6547 = vmatpush1.msra.mxu0 0.0
    %6548 = vmatprep.subr.mxu0 0.0
    %6549 = vmatpush1.msra.mxu0 0.0
    %6550 = vmatprep.subr.mxu0 0.0
    %6551 = vmatpush1.msra.mxu0 0.0
    %6552 = vmatprep.subr.mxu0 0.0
    %6553 = vmatpush1.msra.mxu0 0.0
    %6554 = vmatprep.subr.mxu0 0.0
    %6555 = vmatpush1.msra.mxu0 0.0
    %6556 = vmatprep.subr.mxu0 0.0
    %6557 = vmatpush1.msra.mxu0 0.0
    %6558 = vmatprep.subr.mxu0 0.0
    %6559 = vmatpush1.msra.mxu0 0.0
    %6560 = vmatprep.subr.mxu0 0.0
    %6561 = vmatpush1.msra.mxu0 0.0
    %6562 = vmatprep.subr.mxu0 0.0
    %6563 = vmatpush1.msra.mxu0 0.0
    %6564 = vmatprep.subr.mxu0 0.0
    %6565 = vmatpush1.msra.mxu0 0.0
    %6566 = vmatprep.subr.mxu0 0.0
    %6567 = vmatpush1.msra.mxu0 0.0
    %6568 = vmatprep.subr.mxu0 0.0
    %6569 = vmatpush1.msra.mxu0 0.0
    %6570 = vmatprep.subr.mxu0 0.0
    %6571 = vmatpush1.msra.mxu0 0.0
    %6572 = vmatprep.subr.mxu0 0.0
    %6573 = vmatpush1.msra.mxu0 0.0
    %6574 = vmatprep.subr.mxu0 0.0
    %6575 = vmatpush1.msra.mxu0 0.0
    %6576 = vmatprep.subr.mxu0 0.0
    %6577 = vmatpush1.msra.mxu0 0.0
    %6578 = vmatprep.subr.mxu0 0.0
    %6579 = vmatpush1.msra.mxu0 0.0
    %6580 = vmatprep.subr.mxu0 0.0
    %6581 = vmatpush1.msra.mxu0 0.0
    %6582 = vmatprep.subr.mxu0 0.0
    %6583 = vmatpush1.msra.mxu0 0.0
    %6584 = vmatprep.mubr.f32.mxu0 0.0
    %6585 = vmatmul.mubr.f32.gmra.mrb[0].mxu0 %v6482
    %v6586 = vpop.f32.mrb[0].mxu0
    %v6587 = vadd.f32 %v6418, %v6586
    %v6588 = vpop.f32.mrb[0].mxu0
    %6589 = vmatprep.mubr.f32.mxu0 0.0
    %6590 = vmatmul.mubr.f32.gmra.mrb[0].mxu0 %v6485
    %v6591 = vpop.f32.mrb[0].mxu0
    %v6592 = vadd.f32 %v6423, %v6591
    %v6593 = vpop.f32.mrb[0].mxu0
    %6594 = vmatprep.mubr.f32.mxu0 0.0
    %6595 = vmatmul.mubr.f32.gmra.mrb[0].mxu0 %v6488
    %v6596 = vpop.f32.mrb[0].mxu0
    %v6597 = vadd.f32 %v6428, %v6596
    %v6598 = vpop.f32.mrb[0].mxu0
    %6599 = vmatprep.mubr.f32.mxu0 0.0
    %6600 = vmatmul.mubr.f32.gmra.mrb[0].mxu0 %v6491
    %v6601 = vpop.f32.mrb[0].mxu0
    %v6602 = vadd.f32 %v6433, %v6601
    %v6603 = vpop.f32.mrb[0].mxu0
    %6604 = vmatprep.mubr.f32.mxu0 0.0
    %6605 = vmatmul.mubr.f32.gmra.mrb[0].mxu0 %v6494
    %v6606 = vpop.f32.mrb[0].mxu0
    %v6607 = vadd.f32 %v6438, %v6606
    %v6608 = vpop.f32.mrb[0].mxu0
    %6609 = vmatprep.mubr.f32.mxu0 0.0
    %6610 = vmatmul.mubr.f32.gmra.mrb[0].mxu0 %v6497
    %v6611 = vpop.f32.mrb[0].mxu0
    %v6612 = vadd.f32 %v6443, %v6611
    %v6613 = vpop.f32.mrb[0].mxu0
    %6614 = vmatprep.mubr.f32.mxu0 0.0
    %6615 = vmatmul.mubr.f32.gmra.mrb[0].mxu0 %v6500
    %v6616 = vpop.f32.mrb[0].mxu0
    %v6617 = vadd.f32 %v6448, %v6616
    %v6618 = vpop.f32.mrb[0].mxu0
    %6619 = vmatprep.mubr.f32.mxu0 0.0
    %6620 = vmatmul.mubr.f32.gmra.mrb[0].mxu0 %v6503
    %v6621 = vpop.f32.mrb[0].mxu0
    %v6622 = vadd.f32 %v6453, %v6621
    %v6623 = vpop.f32.mrb[0].mxu0
    %6624 = vmatprep.mubr.f32.mxu0 0.0
    %6625 = vmatmul.mubr.f32.gmra.mrb[0].mxu0 %v6506
    %v6626 = vpop.f32.mrb[0].mxu0
    %v6627 = vadd.f32 %v6458, %v6626
    %v6628 = vpop.f32.mrb[0].mxu0
    %6629 = vmatprep.mubr.f32.mxu0 0.0
    %6630 = vmatmul.mubr.f32.gmra.mrb[0].mxu0 %v6509
    %v6631 = vpop.f32.mrb[0].mxu0
    %v6632 = vadd.f32 %v6463, %v6631
    %v6633 = vpop.f32.mrb[0].mxu0
    %6634 = vmatprep.mubr.f32.mxu0 0.0
    %6635 = vmatmul.mubr.f32.gmra.mrb[0].mxu0 %v6512
    %v6636 = vpop.f32.mrb[0].mxu0
    %v6637 = vadd.f32 %v6468, %v6636
    %v6638 = vpop.f32.mrb[0].mxu0
    %6639 = vmatprep.mubr.f32.mxu0 0.0
    %6640 = vmatmul.mubr.f32.gmra.mrb[0].mxu0 %v6515
    %v6641 = vpop.f32.mrb[0].mxu0
    %v6642 = vadd.f32 %v6473, %v6641
    %v6643 = vpop.f32.mrb[0].mxu0
    %6644 = vmatprep.mubr.f32.mxu0 0.0
    %6645 = vmatmul.mubr.f32.gmra.mrb[0].mxu0 %v6518
    %v6646 = vpop.f32.mrb[0].mxu0
    %v6647 = vadd.f32 %v6478, %v6646
    %v6648 = vpop.f32.mrb[0].mxu0
    %6649 = vdwg.mxu0
    %v6650 = vld [vmem:[#allocation5 + $0x7] sm:$0xff]
    %v6651 = vld [vmem:[#allocation5 + $0xf] sm:$0xff]
    %v6652 = vld [vmem:[#allocation5 + $0x17] sm:$0xff]
    %v6653 = vld [vmem:[#allocation5 + $0x1f] sm:$0xff]
    %v6654 = vld [vmem:[#allocation5 + $0x27] sm:$0xff]
    %v6655 = vld [vmem:[#allocation5 + $0x2f] sm:$0xff]
    %v6656 = vld [vmem:[#allocation5 + $0x37] sm:$0xff]
    %v6657 = vld [vmem:[#allocation5 + $0x3f] sm:$0xff]
    %v6658 = vld [vmem:[#allocation5 + $0x47] sm:$0xff]
    %v6659 = vld [vmem:[#allocation5 + $0x4f] sm:$0xff]
    %v6660 = vld [vmem:[#allocation5 + $0x57] sm:$0xff]
    %v6661 = vld [vmem:[#allocation5 + $0x5f] sm:$0xff]
    %v6662 = vld [vmem:[#allocation5 + $0x67] sm:$0x3]
    %s6663 = scalar_lea.vmem %s5, 64
    %v6664 = vld [vmem:[%s6663] sm:$0xff]
    %v6665 = vld [vmem:[%s6663 + $0x8] sm:$0xff]
    %v6666 = vld [vmem:[%s6663 + $0x10] sm:$0xff]
    %v6667 = vld [vmem:[%s6663 + $0x18] sm:$0xff]
    %v6669 = vsel %vm3010, %v6650, 0
    %v6672 = vsel %vm3010, %v6651, 0
    %v6675 = vsel %vm3010, %v6652, 0
    %v6678 = vsel %vm3010, %v6653, 0
    %v6681 = vsel %vm3010, %v6654, 0
    %v6684 = vsel %vm3010, %v6655, 0
    %v6687 = vsel %vm3010, %v6656, 0
    %v6690 = vsel %vm3010, %v6657, 0
    %v6693 = vsel %vm3010, %v6658, 0
    %v6696 = vsel %vm3010, %v6659, 0
    %v6699 = vsel %vm3010, %v6660, 0
    %v6702 = vsel %vm3010, %v6661, 0
    %v6705 = vsel %vm3010, %v6662, 0
    %6707 = vmatprep.subr.mxu0 0.0
    %6708 = vmatpush1.msra.mxu0 %v6664
    %6709 = vmatprep.subr.mxu0 0.0
    %6710 = vmatpush1.msra.mxu0 %v6665
    %6711 = vmatprep.subr.mxu0 0.0
    %6712 = vmatpush1.msra.mxu0 %v6666
    %6713 = vmatprep.subr.mxu0 0.0
    %6714 = vmatpush1.msra.mxu0 %v6667
    %6715 = vmatprep.subr.mxu0 0.0
    %6716 = vmatpush1.msra.mxu0 0.0
    %6717 = vmatprep.subr.mxu0 0.0
    %6718 = vmatpush1.msra.mxu0 0.0
    %6719 = vmatprep.subr.mxu0 0.0
    %6720 = vmatpush1.msra.mxu0 0.0
    %6721 = vmatprep.subr.mxu0 0.0
    %6722 = vmatpush1.msra.mxu0 0.0
    %6723 = vmatprep.subr.mxu0 0.0
    %6724 = vmatpush1.msra.mxu0 0.0
    %6725 = vmatprep.subr.mxu0 0.0
    %6726 = vmatpush1.msra.mxu0 0.0
    %6727 = vmatprep.subr.mxu0 0.0
    %6728 = vmatpush1.msra.mxu0 0.0
    %6729 = vmatprep.subr.mxu0 0.0
    %6730 = vmatpush1.msra.mxu0 0.0
    %6731 = vmatprep.subr.mxu0 0.0
    %6732 = vmatpush1.msra.mxu0 0.0
    %6733 = vmatprep.subr.mxu0 0.0
    %6734 = vmatpush1.msra.mxu0 0.0
    %6735 = vmatprep.subr.mxu0 0.0
    %6736 = vmatpush1.msra.mxu0 0.0
    %6737 = vmatprep.subr.mxu0 0.0
    %6738 = vmatpush1.msra.mxu0 0.0
    %6739 = vmatprep.subr.mxu0 0.0
    %6740 = vmatpush1.msra.mxu0 0.0
    %6741 = vmatprep.subr.mxu0 0.0
    %6742 = vmatpush1.msra.mxu0 0.0
    %6743 = vmatprep.subr.mxu0 0.0
    %6744 = vmatpush1.msra.mxu0 0.0
    %6745 = vmatprep.subr.mxu0 0.0
    %6746 = vmatpush1.msra.mxu0 0.0
    %6747 = vmatprep.subr.mxu0 0.0
    %6748 = vmatpush1.msra.mxu0 0.0
    %6749 = vmatprep.subr.mxu0 0.0
    %6750 = vmatpush1.msra.mxu0 0.0
    %6751 = vmatprep.subr.mxu0 0.0
    %6752 = vmatpush1.msra.mxu0 0.0
    %6753 = vmatprep.subr.mxu0 0.0
    %6754 = vmatpush1.msra.mxu0 0.0
    %6755 = vmatprep.subr.mxu0 0.0
    %6756 = vmatpush1.msra.mxu0 0.0
    %6757 = vmatprep.subr.mxu0 0.0
    %6758 = vmatpush1.msra.mxu0 0.0
    %6759 = vmatprep.subr.mxu0 0.0
    %6760 = vmatpush1.msra.mxu0 0.0
    %6761 = vmatprep.subr.mxu0 0.0
    %6762 = vmatpush1.msra.mxu0 0.0
    %6763 = vmatprep.subr.mxu0 0.0
    %6764 = vmatpush1.msra.mxu0 0.0
    %6765 = vmatprep.subr.mxu0 0.0
    %6766 = vmatpush1.msra.mxu0 0.0
    %6767 = vmatprep.subr.mxu0 0.0
    %6768 = vmatpush1.msra.mxu0 0.0
    %6769 = vmatprep.subr.mxu0 0.0
    %6770 = vmatpush1.msra.mxu0 0.0
    %6771 = vmatprep.mubr.f32.mxu0 0.0
    %6772 = vmatmul.mubr.f32.gmra.mrb[0].mxu0 %v6669
    %v6773 = vpop.f32.mrb[0].mxu0
    %v6774 = vadd.f32 0.0, %v6773
    %v6775 = vpop.f32.mrb[0].mxu0
    %6776 = vmatprep.mubr.f32.mxu0 0.0
    %6777 = vmatmul.mubr.f32.gmra.mrb[0].mxu0 %v6672
    %v6778 = vpop.f32.mrb[0].mxu0
    %v6779 = vadd.f32 0.0, %v6778
    %v6780 = vpop.f32.mrb[0].mxu0
    %6781 = vmatprep.mubr.f32.mxu0 0.0
    %6782 = vmatmul.mubr.f32.gmra.mrb[0].mxu0 %v6675
    %v6783 = vpop.f32.mrb[0].mxu0
    %v6784 = vadd.f32 0.0, %v6783
    %v6785 = vpop.f32.mrb[0].mxu0
    %6786 = vmatprep.mubr.f32.mxu0 0.0
    %6787 = vmatmul.mubr.f32.gmra.mrb[0].mxu0 %v6678
    %v6788 = vpop.f32.mrb[0].mxu0
    %v6789 = vadd.f32 0.0, %v6788
    %v6790 = vpop.f32.mrb[0].mxu0
    %6791 = vmatprep.mubr.f32.mxu0 0.0
    %6792 = vmatmul.mubr.f32.gmra.mrb[0].mxu0 %v6681
    %v6793 = vpop.f32.mrb[0].mxu0
    %v6794 = vadd.f32 0.0, %v6793
    %v6795 = vpop.f32.mrb[0].mxu0
    %6796 = vmatprep.mubr.f32.mxu0 0.0
    %6797 = vmatmul.mubr.f32.gmra.mrb[0].mxu0 %v6684
    %v6798 = vpop.f32.mrb[0].mxu0
    %v6799 = vadd.f32 0.0, %v6798
    %v6800 = vpop.f32.mrb[0].mxu0
    %6801 = vmatprep.mubr.f32.mxu0 0.0
    %6802 = vmatmul.mubr.f32.gmra.mrb[0].mxu0 %v6687
    %v6803 = vpop.f32.mrb[0].mxu0
    %v6804 = vadd.f32 0.0, %v6803
    %v6805 = vpop.f32.mrb[0].mxu0
    %6806 = vmatprep.mubr.f32.mxu0 0.0
    %6807 = vmatmul.mubr.f32.gmra.mrb[0].mxu0 %v6690
    %v6808 = vpop.f32.mrb[0].mxu0
    %v6809 = vadd.f32 0.0, %v6808
    %v6810 = vpop.f32.mrb[0].mxu0
    %6811 = vmatprep.mubr.f32.mxu0 0.0
    %6812 = vmatmul.mubr.f32.gmra.mrb[0].mxu0 %v6693
    %v6813 = vpop.f32.mrb[0].mxu0
    %v6814 = vadd.f32 0.0, %v6813
    %v6815 = vpop.f32.mrb[0].mxu0
    %6816 = vmatprep.mubr.f32.mxu0 0.0
    %6817 = vmatmul.mubr.f32.gmra.mrb[0].mxu0 %v6696
    %v6818 = vpop.f32.mrb[0].mxu0
    %v6819 = vadd.f32 0.0, %v6818
    %v6820 = vpop.f32.mrb[0].mxu0
    %6821 = vmatprep.mubr.f32.mxu0 0.0
    %6822 = vmatmul.mubr.f32.gmra.mrb[0].mxu0 %v6699
    %v6823 = vpop.f32.mrb[0].mxu0
    %v6824 = vadd.f32 0.0, %v6823
    %v6825 = vpop.f32.mrb[0].mxu0
    %6826 = vmatprep.mubr.f32.mxu0 0.0
    %6827 = vmatmul.mubr.f32.gmra.mrb[0].mxu0 %v6702
    %v6828 = vpop.f32.mrb[0].mxu0
    %v6829 = vadd.f32 0.0, %v6828
    %v6830 = vpop.f32.mrb[0].mxu0
    %6831 = vmatprep.mubr.f32.mxu0 0.0
    %6832 = vmatmul.mubr.f32.gmra.mrb[0].mxu0 %v6705
    %v6833 = vpop.f32.mrb[0].mxu0
    %v6834 = vadd.f32 0.0, %v6833
    %v6835 = vpop.f32.mrb[0].mxu0
    %6836 = vdwg.mxu0
    %v6837 = vadd.f32 %v6587, %v6774
    %v6838 = vadd.f32 %v6592, %v6779
    %v6839 = vadd.f32 %v6597, %v6784
    %v6840 = vadd.f32 %v6602, %v6789
    %v6841 = vadd.f32 %v6607, %v6794
    %v6842 = vadd.f32 %v6612, %v6799
    %v6843 = vadd.f32 %v6617, %v6804
    %v6844 = vadd.f32 %v6622, %v6809
    %v6845 = vadd.f32 %v6627, %v6814
    %v6846 = vadd.f32 %v6632, %v6819
    %v6847 = vadd.f32 %v6637, %v6824
    %v6848 = vadd.f32 %v6642, %v6829
    %v6849 = vadd.f32 %v6647, %v6834
    %v6850 = vld [vmem:[#allocation5 + $0x8] sm:$0xff]
    %v6851 = vld [vmem:[#allocation5 + $0x10] sm:$0xff]
    %v6852 = vld [vmem:[#allocation5 + $0x18] sm:$0xff]
    %v6853 = vld [vmem:[#allocation5 + $0x20] sm:$0xff]
    %v6854 = vld [vmem:[#allocation5 + $0x28] sm:$0xff]
    %v6855 = vld [vmem:[#allocation5 + $0x30] sm:$0xff]
    %v6856 = vld [vmem:[#allocation5 + $0x38] sm:$0xff]
    %v6857 = vld [vmem:[#allocation5 + $0x40] sm:$0xff]
    %v6858 = vld [vmem:[#allocation5 + $0x48] sm:$0xff]
    %v6859 = vld [vmem:[#allocation5 + $0x50] sm:$0xff]
    %v6860 = vld [vmem:[#allocation5 + $0x58] sm:$0xff]
    %v6861 = vld [vmem:[#allocation5 + $0x60] sm:$0xff]
    %v6862 = vld [vmem:[#allocation5 + $0x68] sm:$0x3]
    %s6863 = scalar_lea.vmem %s5, 96
    %v6864 = vld [vmem:[%s6863] sm:$0xff]
    %v6865 = vld [vmem:[%s6863 + $0x8] sm:$0xff]
    %v6866 = vld [vmem:[%s6863 + $0x10] sm:$0xff]
    %v6867 = vld [vmem:[%s6863 + $0x18] sm:$0xff]
    %v6869 = vsel %vm3010, %v6850, 0
    %v6872 = vsel %vm3010, %v6851, 0
    %v6875 = vsel %vm3010, %v6852, 0
    %v6878 = vsel %vm3010, %v6853, 0
    %v6881 = vsel %vm3010, %v6854, 0
    %v6884 = vsel %vm3010, %v6855, 0
    %v6887 = vsel %vm3010, %v6856, 0
    %v6890 = vsel %vm3010, %v6857, 0
    %v6893 = vsel %vm3010, %v6858, 0
    %v6896 = vsel %vm3010, %v6859, 0
    %v6899 = vsel %vm3010, %v6860, 0
    %v6902 = vsel %vm3010, %v6861, 0
    %v6905 = vsel %vm3010, %v6862, 0
    %6907 = vmatprep.subr.mxu0 0.0
    %6908 = vmatpush1.msra.mxu0 %v6864
    %6909 = vmatprep.subr.mxu0 0.0
    %6910 = vmatpush1.msra.mxu0 %v6865
    %6911 = vmatprep.subr.mxu0 0.0
    %6912 = vmatpush1.msra.mxu0 %v6866
    %6913 = vmatprep.subr.mxu0 0.0
    %6914 = vmatpush1.msra.mxu0 %v6867
    %6915 = vmatprep.subr.mxu0 0.0
    %6916 = vmatpush1.msra.mxu0 0.0
    %6917 = vmatprep.subr.mxu0 0.0
    %6918 = vmatpush1.msra.mxu0 0.0
    %6919 = vmatprep.subr.mxu0 0.0
    %6920 = vmatpush1.msra.mxu0 0.0
    %6921 = vmatprep.subr.mxu0 0.0
    %6922 = vmatpush1.msra.mxu0 0.0
    %6923 = vmatprep.subr.mxu0 0.0
    %6924 = vmatpush1.msra.mxu0 0.0
    %6925 = vmatprep.subr.mxu0 0.0
    %6926 = vmatpush1.msra.mxu0 0.0
    %6927 = vmatprep.subr.mxu0 0.0
    %6928 = vmatpush1.msra.mxu0 0.0
    %6929 = vmatprep.subr.mxu0 0.0
    %6930 = vmatpush1.msra.mxu0 0.0
    %6931 = vmatprep.subr.mxu0 0.0
    %6932 = vmatpush1.msra.mxu0 0.0
    %6933 = vmatprep.subr.mxu0 0.0
    %6934 = vmatpush1.msra.mxu0 0.0
    %6935 = vmatprep.subr.mxu0 0.0
    %6936 = vmatpush1.msra.mxu0 0.0
    %6937 = vmatprep.subr.mxu0 0.0
    %6938 = vmatpush1.msra.mxu0 0.0
    %6939 = vmatprep.subr.mxu0 0.0
    %6940 = vmatpush1.msra.mxu0 0.0
    %6941 = vmatprep.subr.mxu0 0.0
    %6942 = vmatpush1.msra.mxu0 0.0
    %6943 = vmatprep.subr.mxu0 0.0
    %6944 = vmatpush1.msra.mxu0 0.0
    %6945 = vmatprep.subr.mxu0 0.0
    %6946 = vmatpush1.msra.mxu0 0.0
    %6947 = vmatprep.subr.mxu0 0.0
    %6948 = vmatpush1.msra.mxu0 0.0
    %6949 = vmatprep.subr.mxu0 0.0
    %6950 = vmatpush1.msra.mxu0 0.0
    %6951 = vmatprep.subr.mxu0 0.0
    %6952 = vmatpush1.msra.mxu0 0.0
    %6953 = vmatprep.subr.mxu0 0.0
    %6954 = vmatpush1.msra.mxu0 0.0
    %6955 = vmatprep.subr.mxu0 0.0
    %6956 = vmatpush1.msra.mxu0 0.0
    %6957 = vmatprep.subr.mxu0 0.0
    %6958 = vmatpush1.msra.mxu0 0.0
    %6959 = vmatprep.subr.mxu0 0.0
    %6960 = vmatpush1.msra.mxu0 0.0
    %6961 = vmatprep.subr.mxu0 0.0
    %6962 = vmatpush1.msra.mxu0 0.0
    %6963 = vmatprep.subr.mxu0 0.0
    %6964 = vmatpush1.msra.mxu0 0.0
    %6965 = vmatprep.subr.mxu0 0.0
    %6966 = vmatpush1.msra.mxu0 0.0
    %6967 = vmatprep.subr.mxu0 0.0
    %6968 = vmatpush1.msra.mxu0 0.0
    %6969 = vmatprep.subr.mxu0 0.0
    %6970 = vmatpush1.msra.mxu0 0.0
    %6971 = vmatprep.mubr.f32.mxu0 0.0
    %6972 = vmatmul.mubr.f32.gmra.mrb[0].mxu0 %v6869
    %v6973 = vpop.f32.mrb[0].mxu0
    %v6974 = vadd.f32 0.0, %v6973
    %v6975 = vpop.f32.mrb[0].mxu0
    %6976 = vmatprep.mubr.f32.mxu0 0.0
    %6977 = vmatmul.mubr.f32.gmra.mrb[0].mxu0 %v6872
    %v6978 = vpop.f32.mrb[0].mxu0
    %v6979 = vadd.f32 0.0, %v6978
    %v6980 = vpop.f32.mrb[0].mxu0
    %6981 = vmatprep.mubr.f32.mxu0 0.0
    %6982 = vmatmul.mubr.f32.gmra.mrb[0].mxu0 %v6875
    %v6983 = vpop.f32.mrb[0].mxu0
    %v6984 = vadd.f32 0.0, %v6983
    %v6985 = vpop.f32.mrb[0].mxu0
    %6986 = vmatprep.mubr.f32.mxu0 0.0
    %6987 = vmatmul.mubr.f32.gmra.mrb[0].mxu0 %v6878
    %v6988 = vpop.f32.mrb[0].mxu0
    %v6989 = vadd.f32 0.0, %v6988
    %v6990 = vpop.f32.mrb[0].mxu0
    %6991 = vmatprep.mubr.f32.mxu0 0.0
    %6992 = vmatmul.mubr.f32.gmra.mrb[0].mxu0 %v6881
    %v6993 = vpop.f32.mrb[0].mxu0
    %v6994 = vadd.f32 0.0, %v6993
    %v6995 = vpop.f32.mrb[0].mxu0
    %6996 = vmatprep.mubr.f32.mxu0 0.0
    %6997 = vmatmul.mubr.f32.gmra.mrb[0].mxu0 %v6884
    %v6998 = vpop.f32.mrb[0].mxu0
    %v6999 = vadd.f32 0.0, %v6998
    %v7000 = vpop.f32.mrb[0].mxu0
    %7001 = vmatprep.mubr.f32.mxu0 0.0
    %7002 = vmatmul.mubr.f32.gmra.mrb[0].mxu0 %v6887
    %v7003 = vpop.f32.mrb[0].mxu0
    %v7004 = vadd.f32 0.0, %v7003
    %v7005 = vpop.f32.mrb[0].mxu0
    %7006 = vmatprep.mubr.f32.mxu0 0.0
    %7007 = vmatmul.mubr.f32.gmra.mrb[0].mxu0 %v6890
    %v7008 = vpop.f32.mrb[0].mxu0
    %v7009 = vadd.f32 0.0, %v7008
    %v7010 = vpop.f32.mrb[0].mxu0
    %7011 = vmatprep.mubr.f32.mxu0 0.0
    %7012 = vmatmul.mubr.f32.gmra.mrb[0].mxu0 %v6893
    %v7013 = vpop.f32.mrb[0].mxu0
    %v7014 = vadd.f32 0.0, %v7013
    %v7015 = vpop.f32.mrb[0].mxu0
    %7016 = vmatprep.mubr.f32.mxu0 0.0
    %7017 = vmatmul.mubr.f32.gmra.mrb[0].mxu0 %v6896
    %v7018 = vpop.f32.mrb[0].mxu0
    %v7019 = vadd.f32 0.0, %v7018
    %v7020 = vpop.f32.mrb[0].mxu0
    %7021 = vmatprep.mubr.f32.mxu0 0.0
    %7022 = vmatmul.mubr.f32.gmra.mrb[0].mxu0 %v6899
    %v7023 = vpop.f32.mrb[0].mxu0
    %v7024 = vadd.f32 0.0, %v7023
    %v7025 = vpop.f32.mrb[0].mxu0
    %7026 = vmatprep.mubr.f32.mxu0 0.0
    %7027 = vmatmul.mubr.f32.gmra.mrb[0].mxu0 %v6902
    %v7028 = vpop.f32.mrb[0].mxu0
    %v7029 = vadd.f32 0.0, %v7028
    %v7030 = vpop.f32.mrb[0].mxu0
    %7031 = vmatprep.mubr.f32.mxu0 0.0
    %7032 = vmatmul.mubr.f32.gmra.mrb[0].mxu0 %v6905
    %v7033 = vpop.f32.mrb[0].mxu0
    %v7034 = vadd.f32 0.0, %v7033
    %v7035 = vpop.f32.mrb[0].mxu0
    %7036 = vdwg.mxu0
    %v7037 = vadd.f32 %v6837, %v6974
    %v7038 = vadd.f32 %v6838, %v6979
    %v7039 = vadd.f32 %v6839, %v6984
    %v7040 = vadd.f32 %v6840, %v6989
    %v7041 = vadd.f32 %v6841, %v6994
    %v7042 = vadd.f32 %v6842, %v6999
    %v7043 = vadd.f32 %v6843, %v7004
    %v7044 = vadd.f32 %v6844, %v7009
    %v7045 = vadd.f32 %v6845, %v7014
    %v7046 = vadd.f32 %v6846, %v7019
    %v7047 = vadd.f32 %v6847, %v7024
    %v7048 = vadd.f32 %v6848, %v7029
    %v7049 = vadd.f32 %v6849, %v7034
    %v7050 = vld [vmem:[%s6] sm:$0x1]
    %v7052 = vlaneseq
    %v7053 = vshrl.u32 %v7052, 7
    %v7054 = vsub.s32 0, %v7053
    %v7055 = vrot.slane %v7050, %v7054
    %v7057 = vadd.f32 %v7037, %v7055
    %v7058 = vadd.f32 %v7038, %v7055
    %v7059 = vadd.f32 %v7039, %v7055
    %v7060 = vadd.f32 %v7040, %v7055
    %v7061 = vadd.f32 %v7041, %v7055
    %v7062 = vadd.f32 %v7042, %v7055
    %v7063 = vadd.f32 %v7043, %v7055
    %v7064 = vadd.f32 %v7044, %v7055
    %v7065 = vadd.f32 %v7045, %v7055
    %v7066 = vadd.f32 %v7046, %v7055
    %v7067 = vadd.f32 %v7047, %v7055
    %v7068 = vadd.f32 %v7048, %v7055
    %v7069 = vadd.f32 %v7049, %v7055
    %v7070 = vmax.f32 %v7057, 0.0
    %v7071 = vmax.f32 %v7058, 0.0
    %v7072 = vmax.f32 %v7059, 0.0
    %v7073 = vmax.f32 %v7060, 0.0
    %v7074 = vmax.f32 %v7061, 0.0
    %v7075 = vmax.f32 %v7062, 0.0
    %v7076 = vmax.f32 %v7063, 0.0
    %v7077 = vmax.f32 %v7064, 0.0
    %v7078 = vmax.f32 %v7065, 0.0
    %v7079 = vmax.f32 %v7066, 0.0
    %v7080 = vmax.f32 %v7067, 0.0
    %v7081 = vmax.f32 %v7068, 0.0
    %v7082 = vmax.f32 %v7069, 0.0
    %vm7083 = vcmask 523264
    %7084 = vst.msk [vmem:[#allocation6] sm:$0xff] %vm7083, %v7070
    %7085 = vst.msk [vmem:[#allocation6 + $0x8] sm:$0xff] %vm7083, %v7071
    %7086 = vst.msk [vmem:[#allocation6 + $0x10] sm:$0xff] %vm7083, %v7072
    %7087 = vst.msk [vmem:[#allocation6 + $0x18] sm:$0xff] %vm7083, %v7073
    %7088 = vst.msk [vmem:[#allocation6 + $0x20] sm:$0xff] %vm7083, %v7074
    %7089 = vst.msk [vmem:[#allocation6 + $0x28] sm:$0xff] %vm7083, %v7075
    %7090 = vst.msk [vmem:[#allocation6 + $0x30] sm:$0xff] %vm7083, %v7076
    %7091 = vst.msk [vmem:[#allocation6 + $0x38] sm:$0xff] %vm7083, %v7077
    %7092 = vst.msk [vmem:[#allocation6 + $0x40] sm:$0xff] %vm7083, %v7078
    %7093 = vst.msk [vmem:[#allocation6 + $0x48] sm:$0xff] %vm7083, %v7079
    %7094 = vst.msk [vmem:[#allocation6 + $0x50] sm:$0xff] %vm7083, %v7080
    %7095 = vst.msk [vmem:[#allocation6 + $0x58] sm:$0xff] %vm7083, %v7081
    %vm7096 = vcmask 517120
    %7097 = vst.msk [vmem:[#allocation6 + $0x60] sm:$0x3] %vm7096, %v7082
    %v7098 = vld [vmem:[#allocation6] sm:$0xff]
    %v7099 = vld [vmem:[#allocation6 + $0x8] sm:$0xff]
    %v7100 = vld [vmem:[#allocation6 + $0x10] sm:$0xff]
    %v7101 = vld [vmem:[#allocation6 + $0x18] sm:$0xff]
    %v7102 = vld [vmem:[#allocation6 + $0x20] sm:$0xff]
    %v7103 = vld [vmem:[#allocation6 + $0x28] sm:$0xff]
    %v7104 = vld [vmem:[#allocation6 + $0x30] sm:$0xff]
    %v7105 = vld [vmem:[#allocation6 + $0x38] sm:$0xff]
    %v7106 = vld [vmem:[#allocation6 + $0x40] sm:$0xff]
    %v7107 = vld [vmem:[#allocation6 + $0x48] sm:$0xff]
    %v7108 = vld [vmem:[#allocation6 + $0x50] sm:$0xff]
    %v7109 = vld [vmem:[#allocation6 + $0x58] sm:$0x3]
    %v7110 = vld [vmem:[#allocation6 + $0x1] sm:$0xff]
    %v7111 = vld [vmem:[#allocation6 + $0x9] sm:$0xff]
    %v7112 = vld [vmem:[#allocation6 + $0x11] sm:$0xff]
    %v7113 = vld [vmem:[#allocation6 + $0x19] sm:$0xff]
    %v7114 = vld [vmem:[#allocation6 + $0x21] sm:$0xff]
    %v7115 = vld [vmem:[#allocation6 + $0x29] sm:$0xff]
    %v7116 = vld [vmem:[#allocation6 + $0x31] sm:$0xff]
    %v7117 = vld [vmem:[#allocation6 + $0x39] sm:$0xff]
    %v7118 = vld [vmem:[#allocation6 + $0x41] sm:$0xff]
    %v7119 = vld [vmem:[#allocation6 + $0x49] sm:$0xff]
    %v7120 = vld [vmem:[#allocation6 + $0x51] sm:$0xff]
    %v7121 = vld [vmem:[#allocation6 + $0x59] sm:$0x3]
    %v7122 = vmax.f32 %v7098, %v7110
    %v7123 = vmax.f32 %v7099, %v7111
    %v7124 = vmax.f32 %v7100, %v7112
    %v7125 = vmax.f32 %v7101, %v7113
    %v7126 = vmax.f32 %v7102, %v7114
    %v7127 = vmax.f32 %v7103, %v7115
    %v7128 = vmax.f32 %v7104, %v7116
    %v7129 = vmax.f32 %v7105, %v7117
    %v7130 = vmax.f32 %v7106, %v7118
    %v7131 = vmax.f32 %v7107, %v7119
    %v7132 = vmax.f32 %v7108, %v7120
    %v7133 = vmax.f32 %v7109, %v7121
    %v7134 = vld [vmem:[#allocation6 + $0x7] sm:$0xff]
    %v7135 = vld [vmem:[#allocation6 + $0xf] sm:$0xff]
    %v7136 = vld [vmem:[#allocation6 + $0x17] sm:$0xff]
    %v7137 = vld [vmem:[#allocation6 + $0x1f] sm:$0xff]
    %v7138 = vld [vmem:[#allocation6 + $0x27] sm:$0xff]
    %v7139 = vld [vmem:[#allocation6 + $0x2f] sm:$0xff]
    %v7140 = vld [vmem:[#allocation6 + $0x37] sm:$0xff]
    %v7141 = vld [vmem:[#allocation6 + $0x3f] sm:$0xff]
    %v7142 = vld [vmem:[#allocation6 + $0x47] sm:$0xff]
    %v7143 = vld [vmem:[#allocation6 + $0x4f] sm:$0xff]
    %v7144 = vld [vmem:[#allocation6 + $0x57] sm:$0xff]
    %v7145 = vld [vmem:[#allocation6 + $0x5f] sm:$0x3]
    %v7146 = vld [vmem:[#allocation6 + $0x58] sm:$0xff]
    %v7147 = vld [vmem:[#allocation6 + $0x60] sm:$0x3]
    %v7148 = vmax.f32 %v7134, %v7099
    %v7149 = vmax.f32 %v7135, %v7100
    %v7150 = vmax.f32 %v7136, %v7101
    %v7151 = vmax.f32 %v7137, %v7102
    %v7152 = vmax.f32 %v7138, %v7103
    %v7153 = vmax.f32 %v7139, %v7104
    %v7154 = vmax.f32 %v7140, %v7105
    %v7155 = vmax.f32 %v7141, %v7106
    %v7156 = vmax.f32 %v7142, %v7107
    %v7157 = vmax.f32 %v7143, %v7108
    %v7158 = vmax.f32 %v7144, %v7146
    %v7159 = vmax.f32 %v7145, %v7147
    %v7160 = vmax.f32 %v7122, %v7148
    %v7161 = vmax.f32 %v7123, %v7149
    %v7162 = vmax.f32 %v7124, %v7150
    %v7163 = vmax.f32 %v7125, %v7151
    %v7164 = vmax.f32 %v7126, %v7152
    %v7165 = vmax.f32 %v7127, %v7153
    %v7166 = vmax.f32 %v7128, %v7154
    %v7167 = vmax.f32 %v7129, %v7155
    %v7168 = vmax.f32 %v7130, %v7156
    %v7169 = vmax.f32 %v7131, %v7157
    %v7170 = vmax.f32 %v7132, %v7158
    %v7171 = vmax.f32 %v7133, %v7159
    %7172 = vst.msk [vmem:[#allocation7] sm:$0xff] %vm7083, %v7160
    %7173 = vst.msk [vmem:[#allocation7 + $0x8] sm:$0xff] %vm7083, %v7161
    %7174 = vst.msk [vmem:[#allocation7 + $0x10] sm:$0xff] %vm7083, %v7162
    %7175 = vst.msk [vmem:[#allocation7 + $0x18] sm:$0xff] %vm7083, %v7163
    %7176 = vst.msk [vmem:[#allocation7 + $0x20] sm:$0xff] %vm7083, %v7164
    %7177 = vst.msk [vmem:[#allocation7 + $0x28] sm:$0xff] %vm7083, %v7165
    %7178 = vst.msk [vmem:[#allocation7 + $0x30] sm:$0xff] %vm7083, %v7166
    %7179 = vst.msk [vmem:[#allocation7 + $0x38] sm:$0xff] %vm7083, %v7167
    %7180 = vst.msk [vmem:[#allocation7 + $0x40] sm:$0xff] %vm7083, %v7168
    %7181 = vst.msk [vmem:[#allocation7 + $0x48] sm:$0xff] %vm7083, %v7169
    %7182 = vst.msk [vmem:[#allocation7 + $0x50] sm:$0xff] %vm7083, %v7170
    %7183 = vst.msk [vmem:[#allocation7 + $0x58] sm:$0x3] %vm7096, %v7171
    %v7184 = vld [vmem:[#allocation7] ss:$2 sm:$0x7]
    %vm7185 = vcmask 518144
    %7186 = vst.msk [vmem:[#allocation8] sm:$0x7] %vm7185, %v7184
    %s7187 = scalar_lea.vmem [#allocation7], 14
    %v7188 = vld [vmem:[%s7187] ss:$2 sm:$0x7]
    %7189 = vst.msk [vmem:[#allocation8 + $0x3] sm:$0x7] %vm7185, %v7188
    %s7190 = scalar_lea.vmem [#allocation7], 28
    %v7191 = vld [vmem:[%s7190] ss:$2 sm:$0x7]
    %7192 = vst.msk [vmem:[#allocation8 + $0x6] sm:$0x7] %vm7185, %v7191
    %s7193 = scalar_lea.vmem [#allocation7], 49
    %v7194 = vld [vmem:[%s7193] ss:$2 sm:$0x7]
    %7195 = vst.msk [vmem:[#allocation8 + $0x9] sm:$0x7] %vm7185, %v7194
    %s7196 = scalar_lea.vmem [#allocation7], 63
    %v7197 = vld [vmem:[%s7196] ss:$2 sm:$0x7]
    %7198 = vst.msk [vmem:[#allocation8 + $0xc] sm:$0x7] %vm7185, %v7197
    %s7199 = scalar_lea.vmem [#allocation7], 77
    %v7200 = vld [vmem:[%s7199] ss:$2 sm:$0x7]
    %7201 = vst.msk [vmem:[#allocation8 + $0xf] sm:$0x7] %vm7185, %v7200
    %v7202 = vld [vmem:[#allocation8] sm:$0xff]
    %v7203 = vld [vmem:[#allocation8 + $0x8] sm:$0xff]
    %v7204 = vld [vmem:[#allocation8 + $0x10] sm:$0x3]
    %v7205 = vld [vmem:[%s7] sm:$0xff]
    %v7206 = vld [vmem:[%s7 + $0x8] sm:$0xff]
    %v7207 = vld [vmem:[%s7 + $0x10] sm:$0xff]
    %v7208 = vld [vmem:[%s7 + $0x18] sm:$0xff]
    %v7209 = vld [vmem:[%s7 + $0x20] sm:$0xff]
    %v7210 = vld [vmem:[%s7 + $0x28] sm:$0xff]
    %v7211 = vld [vmem:[%s7 + $0x30] sm:$0xff]
    %v7212 = vld [vmem:[%s7 + $0x38] sm:$0xff]
    %v7213 = vld [vmem:[#allocation8 + $0x1] sm:$0xff]
    %v7214 = vld [vmem:[#allocation8 + $0x9] sm:$0xff]
    %v7215 = vld [vmem:[#allocation8 + $0x11] sm:$0x3]
    %s7216 = scalar_lea.vmem %s7, 64
    %v7217 = vld [vmem:[%s7216] sm:$0xff]
    %v7218 = vld [vmem:[%s7216 + $0x8] sm:$0xff]
    %v7219 = vld [vmem:[%s7216 + $0x10] sm:$0xff]
    %v7220 = vld [vmem:[%s7216 + $0x18] sm:$0xff]
    %v7221 = vld [vmem:[%s7216 + $0x20] sm:$0xff]
    %v7222 = vld [vmem:[%s7216 + $0x28] sm:$0xff]
    %v7223 = vld [vmem:[%s7216 + $0x30] sm:$0xff]
    %v7224 = vld [vmem:[%s7216 + $0x38] sm:$0xff]
    %v7226 = vsel %vm7083, %v7213, 0
    %v7229 = vsel %vm7083, %v7214, 0
    %v7232 = vsel %vm7083, %v7215, 0
    %7234 = vmatprep.subr.mxu0 0.0
    %7235 = vmatpush1.msra.mxu0 %v7217
    %7236 = vmatprep.subr.mxu0 0.0
    %7237 = vmatpush1.msra.mxu0 %v7218
    %7238 = vmatprep.subr.mxu0 0.0
    %7239 = vmatpush1.msra.mxu0 %v7219
    %7240 = vmatprep.subr.mxu0 0.0
    %7241 = vmatpush1.msra.mxu0 %v7220
    %7242 = vmatprep.subr.mxu0 0.0
    %7243 = vmatpush1.msra.mxu0 %v7221
    %7244 = vmatprep.subr.mxu0 0.0
    %7245 = vmatpush1.msra.mxu0 %v7222
    %7246 = vmatprep.subr.mxu0 0.0
    %7247 = vmatpush1.msra.mxu0 %v7223
    %7248 = vmatprep.subr.mxu0 0.0
    %7249 = vmatpush1.msra.mxu0 %v7224
    %7250 = vmatprep.subr.mxu0 0.0
    %7251 = vmatpush1.msra.mxu0 0.0
    %7252 = vmatprep.subr.mxu0 0.0
    %7253 = vmatpush1.msra.mxu0 0.0
    %7254 = vmatprep.subr.mxu0 0.0
    %7255 = vmatpush1.msra.mxu0 0.0
    %7256 = vmatprep.subr.mxu0 0.0
    %7257 = vmatpush1.msra.mxu0 0.0
    %7258 = vmatprep.subr.mxu0 0.0
    %7259 = vmatpush1.msra.mxu0 0.0
    %7260 = vmatprep.subr.mxu0 0.0
    %7261 = vmatpush1.msra.mxu0 0.0
    %7262 = vmatprep.subr.mxu0 0.0
    %7263 = vmatpush1.msra.mxu0 0.0
    %7264 = vmatprep.subr.mxu0 0.0
    %7265 = vmatpush1.msra.mxu0 0.0
    %7266 = vmatprep.subr.mxu0 0.0
    %7267 = vmatpush1.msra.mxu0 0.0
    %7268 = vmatprep.subr.mxu0 0.0
    %7269 = vmatpush1.msra.mxu0 0.0
    %7270 = vmatprep.subr.mxu0 0.0
    %7271 = vmatpush1.msra.mxu0 0.0
    %7272 = vmatprep.subr.mxu0 0.0
    %7273 = vmatpush1.msra.mxu0 0.0
    %7274 = vmatprep.subr.mxu0 0.0
    %7275 = vmatpush1.msra.mxu0 0.0
    %7276 = vmatprep.subr.mxu0 0.0
    %7277 = vmatpush1.msra.mxu0 0.0
    %7278 = vmatprep.subr.mxu0 0.0
    %7279 = vmatpush1.msra.mxu0 0.0
    %7280 = vmatprep.subr.mxu0 0.0
    %7281 = vmatpush1.msra.mxu0 0.0
    %7282 = vmatprep.subr.mxu0 0.0
    %7283 = vmatpush1.msra.mxu0 0.0
    %7284 = vmatprep.subr.mxu0 0.0
    %7285 = vmatpush1.msra.mxu0 0.0
    %7286 = vmatprep.subr.mxu0 0.0
    %7287 = vmatpush1.msra.mxu0 0.0
    %7288 = vmatprep.subr.mxu0 0.0
    %7289 = vmatpush1.msra.mxu0 0.0
    %7290 = vmatprep.subr.mxu0 0.0
    %7291 = vmatpush1.msra.mxu0 0.0
    %7292 = vmatprep.subr.mxu0 0.0
    %7293 = vmatpush1.msra.mxu0 0.0
    %7294 = vmatprep.subr.mxu0 0.0
    %7295 = vmatpush1.msra.mxu0 0.0
    %7296 = vmatprep.subr.mxu0 0.0
    %7297 = vmatpush1.msra.mxu0 0.0
    %7298 = vmatprep.mubr.f32.mxu0 0.0
    %7299 = vmatmul.mubr.f32.gmra.mrb[0].mxu0 %v7226
    %v7300 = vpop.f32.mrb[0].mxu0
    %v7301 = vadd.f32 0.0, %v7300
    %v7302 = vpop.f32.mrb[0].mxu0
    %7303 = vmatprep.mubr.f32.mxu0 0.0
    %7304 = vmatmul.mubr.f32.gmra.mrb[0].mxu0 %v7229
    %v7305 = vpop.f32.mrb[0].mxu0
    %v7306 = vadd.f32 0.0, %v7305
    %v7307 = vpop.f32.mrb[0].mxu0
    %7308 = vmatprep.mubr.f32.mxu0 0.0
    %7309 = vmatmul.mubr.f32.gmra.mrb[0].mxu0 %v7232
    %v7310 = vpop.f32.mrb[0].mxu0
    %v7311 = vadd.f32 0.0, %v7310
    %v7312 = vpop.f32.mrb[0].mxu0
    %7313 = vdwg.mxu0
    %v7315 = vsel %vm7083, %v7202, 0
    %v7318 = vsel %vm7083, %v7203, 0
    %v7321 = vsel %vm7083, %v7204, 0
    %7323 = vmatprep.subr.mxu0 0.0
    %7324 = vmatpush1.msra.mxu0 %v7205
    %7325 = vmatprep.subr.mxu0 0.0
    %7326 = vmatpush1.msra.mxu0 %v7206
    %7327 = vmatprep.subr.mxu0 0.0
    %7328 = vmatpush1.msra.mxu0 %v7207
    %7329 = vmatprep.subr.mxu0 0.0
    %7330 = vmatpush1.msra.mxu0 %v7208
    %7331 = vmatprep.subr.mxu0 0.0
    %7332 = vmatpush1.msra.mxu0 %v7209
    %7333 = vmatprep.subr.mxu0 0.0
    %7334 = vmatpush1.msra.mxu0 %v7210
    %7335 = vmatprep.subr.mxu0 0.0
    %7336 = vmatpush1.msra.mxu0 %v7211
    %7337 = vmatprep.subr.mxu0 0.0
    %7338 = vmatpush1.msra.mxu0 %v7212
    %7339 = vmatprep.subr.mxu0 0.0
    %7340 = vmatpush1.msra.mxu0 0.0
    %7341 = vmatprep.subr.mxu0 0.0
    %7342 = vmatpush1.msra.mxu0 0.0
    %7343 = vmatprep.subr.mxu0 0.0
    %7344 = vmatpush1.msra.mxu0 0.0
    %7345 = vmatprep.subr.mxu0 0.0
    %7346 = vmatpush1.msra.mxu0 0.0
    %7347 = vmatprep.subr.mxu0 0.0
    %7348 = vmatpush1.msra.mxu0 0.0
    %7349 = vmatprep.subr.mxu0 0.0
    %7350 = vmatpush1.msra.mxu0 0.0
    %7351 = vmatprep.subr.mxu0 0.0
    %7352 = vmatpush1.msra.mxu0 0.0
    %7353 = vmatprep.subr.mxu0 0.0
    %7354 = vmatpush1.msra.mxu0 0.0
    %7355 = vmatprep.subr.mxu0 0.0
    %7356 = vmatpush1.msra.mxu0 0.0
    %7357 = vmatprep.subr.mxu0 0.0
    %7358 = vmatpush1.msra.mxu0 0.0
    %7359 = vmatprep.subr.mxu0 0.0
    %7360 = vmatpush1.msra.mxu0 0.0
    %7361 = vmatprep.subr.mxu0 0.0
    %7362 = vmatpush1.msra.mxu0 0.0
    %7363 = vmatprep.subr.mxu0 0.0
    %7364 = vmatpush1.msra.mxu0 0.0
    %7365 = vmatprep.subr.mxu0 0.0
    %7366 = vmatpush1.msra.mxu0 0.0
    %7367 = vmatprep.subr.mxu0 0.0
    %7368 = vmatpush1.msra.mxu0 0.0
    %7369 = vmatprep.subr.mxu0 0.0
    %7370 = vmatpush1.msra.mxu0 0.0
    %7371 = vmatprep.subr.mxu0 0.0
    %7372 = vmatpush1.msra.mxu0 0.0
    %7373 = vmatprep.subr.mxu0 0.0
    %7374 = vmatpush1.msra.mxu0 0.0
    %7375 = vmatprep.subr.mxu0 0.0
    %7376 = vmatpush1.msra.mxu0 0.0
    %7377 = vmatprep.subr.mxu0 0.0
    %7378 = vmatpush1.msra.mxu0 0.0
    %7379 = vmatprep.subr.mxu0 0.0
    %7380 = vmatpush1.msra.mxu0 0.0
    %7381 = vmatprep.subr.mxu0 0.0
    %7382 = vmatpush1.msra.mxu0 0.0
    %7383 = vmatprep.subr.mxu0 0.0
    %7384 = vmatpush1.msra.mxu0 0.0
    %7385 = vmatprep.subr.mxu0 0.0
    %7386 = vmatpush1.msra.mxu0 0.0
    %7387 = vmatprep.mubr.f32.mxu0 0.0
    %7388 = vmatmul.mubr.f32.gmra.mrb[0].mxu0 %v7315
    %v7389 = vpop.f32.mrb[0].mxu0
    %v7390 = vadd.f32 %v7301, %v7389
    %v7391 = vpop.f32.mrb[0].mxu0
    %7392 = vmatprep.mubr.f32.mxu0 0.0
    %7393 = vmatmul.mubr.f32.gmra.mrb[0].mxu0 %v7318
    %v7394 = vpop.f32.mrb[0].mxu0
    %v7395 = vadd.f32 %v7306, %v7394
    %v7396 = vpop.f32.mrb[0].mxu0
    %7397 = vmatprep.mubr.f32.mxu0 0.0
    %7398 = vmatmul.mubr.f32.gmra.mrb[0].mxu0 %v7321
    %v7399 = vpop.f32.mrb[0].mxu0
    %v7400 = vadd.f32 %v7311, %v7399
    %v7401 = vpop.f32.mrb[0].mxu0
    %7402 = vdwg.mxu0
    %v7403 = vld [vmem:[#allocation8 + $0x3] sm:$0xff]
    %v7404 = vld [vmem:[#allocation8 + $0xb] sm:$0xff]
    %v7405 = vld [vmem:[#allocation8 + $0x13] sm:$0x3]
    %s7406 = scalar_lea.vmem %s7, 128
    %v7407 = vld [vmem:[%s7406] sm:$0xff]
    %v7408 = vld [vmem:[%s7406 + $0x8] sm:$0xff]
    %v7409 = vld [vmem:[%s7406 + $0x10] sm:$0xff]
    %v7410 = vld [vmem:[%s7406 + $0x18] sm:$0xff]
    %v7411 = vld [vmem:[%s7406 + $0x20] sm:$0xff]
    %v7412 = vld [vmem:[%s7406 + $0x28] sm:$0xff]
    %v7413 = vld [vmem:[%s7406 + $0x30] sm:$0xff]
    %v7414 = vld [vmem:[%s7406 + $0x38] sm:$0xff]
    %v7416 = vsel %vm7083, %v7403, 0
    %v7419 = vsel %vm7083, %v7404, 0
    %v7422 = vsel %vm7083, %v7405, 0
    %7424 = vmatprep.subr.mxu0 0.0
    %7425 = vmatpush1.msra.mxu0 %v7407
    %7426 = vmatprep.subr.mxu0 0.0
    %7427 = vmatpush1.msra.mxu0 %v7408
    %7428 = vmatprep.subr.mxu0 0.0
    %7429 = vmatpush1.msra.mxu0 %v7409
    %7430 = vmatprep.subr.mxu0 0.0
    %7431 = vmatpush1.msra.mxu0 %v7410
    %7432 = vmatprep.subr.mxu0 0.0
    %7433 = vmatpush1.msra.mxu0 %v7411
    %7434 = vmatprep.subr.mxu0 0.0
    %7435 = vmatpush1.msra.mxu0 %v7412
    %7436 = vmatprep.subr.mxu0 0.0
    %7437 = vmatpush1.msra.mxu0 %v7413
    %7438 = vmatprep.subr.mxu0 0.0
    %7439 = vmatpush1.msra.mxu0 %v7414
    %7440 = vmatprep.subr.mxu0 0.0
    %7441 = vmatpush1.msra.mxu0 0.0
    %7442 = vmatprep.subr.mxu0 0.0
    %7443 = vmatpush1.msra.mxu0 0.0
    %7444 = vmatprep.subr.mxu0 0.0
    %7445 = vmatpush1.msra.mxu0 0.0
    %7446 = vmatprep.subr.mxu0 0.0
    %7447 = vmatpush1.msra.mxu0 0.0
    %7448 = vmatprep.subr.mxu0 0.0
    %7449 = vmatpush1.msra.mxu0 0.0
    %7450 = vmatprep.subr.mxu0 0.0
    %7451 = vmatpush1.msra.mxu0 0.0
    %7452 = vmatprep.subr.mxu0 0.0
    %7453 = vmatpush1.msra.mxu0 0.0
    %7454 = vmatprep.subr.mxu0 0.0
    %7455 = vmatpush1.msra.mxu0 0.0
    %7456 = vmatprep.subr.mxu0 0.0
    %7457 = vmatpush1.msra.mxu0 0.0
    %7458 = vmatprep.subr.mxu0 0.0
    %7459 = vmatpush1.msra.mxu0 0.0
    %7460 = vmatprep.subr.mxu0 0.0
    %7461 = vmatpush1.msra.mxu0 0.0
    %7462 = vmatprep.subr.mxu0 0.0
    %7463 = vmatpush1.msra.mxu0 0.0
    %7464 = vmatprep.subr.mxu0 0.0
    %7465 = vmatpush1.msra.mxu0 0.0
    %7466 = vmatprep.subr.mxu0 0.0
    %7467 = vmatpush1.msra.mxu0 0.0
    %7468 = vmatprep.subr.mxu0 0.0
    %7469 = vmatpush1.msra.mxu0 0.0
    %7470 = vmatprep.subr.mxu0 0.0
    %7471 = vmatpush1.msra.mxu0 0.0
    %7472 = vmatprep.subr.mxu0 0.0
    %7473 = vmatpush1.msra.mxu0 0.0
    %7474 = vmatprep.subr.mxu0 0.0
    %7475 = vmatpush1.msra.mxu0 0.0
    %7476 = vmatprep.subr.mxu0 0.0
    %7477 = vmatpush1.msra.mxu0 0.0
    %7478 = vmatprep.subr.mxu0 0.0
    %7479 = vmatpush1.msra.mxu0 0.0
    %7480 = vmatprep.subr.mxu0 0.0
    %7481 = vmatpush1.msra.mxu0 0.0
    %7482 = vmatprep.subr.mxu0 0.0
    %7483 = vmatpush1.msra.mxu0 0.0
    %7484 = vmatprep.subr.mxu0 0.0
    %7485 = vmatpush1.msra.mxu0 0.0
    %7486 = vmatprep.subr.mxu0 0.0
    %7487 = vmatpush1.msra.mxu0 0.0
    %7488 = vmatprep.mubr.f32.mxu0 0.0
    %7489 = vmatmul.mubr.f32.gmra.mrb[0].mxu0 %v7416
    %v7490 = vpop.f32.mrb[0].mxu0
    %v7491 = vadd.f32 0.0, %v7490
    %v7492 = vpop.f32.mrb[0].mxu0
    %7493 = vmatprep.mubr.f32.mxu0 0.0
    %7494 = vmatmul.mubr.f32.gmra.mrb[0].mxu0 %v7419
    %v7495 = vpop.f32.mrb[0].mxu0
    %v7496 = vadd.f32 0.0, %v7495
    %v7497 = vpop.f32.mrb[0].mxu0
    %7498 = vmatprep.mubr.f32.mxu0 0.0
    %7499 = vmatmul.mubr.f32.gmra.mrb[0].mxu0 %v7422
    %v7500 = vpop.f32.mrb[0].mxu0
    %v7501 = vadd.f32 0.0, %v7500
    %v7502 = vpop.f32.mrb[0].mxu0
    %7503 = vdwg.mxu0
    %v7504 = vadd.f32 %v7390, %v7491
    %v7505 = vadd.f32 %v7395, %v7496
    %v7506 = vadd.f32 %v7400, %v7501
    %v7507 = vld [vmem:[#allocation8 + $0x4] sm:$0xff]
    %v7508 = vld [vmem:[#allocation8 + $0xc] sm:$0xff]
    %v7509 = vld [vmem:[#allocation8 + $0x14] sm:$0x3]
    %s7510 = scalar_lea.vmem %s7, 192
    %v7511 = vld [vmem:[%s7510] sm:$0xff]
    %v7512 = vld [vmem:[%s7510 + $0x8] sm:$0xff]
    %v7513 = vld [vmem:[%s7510 + $0x10] sm:$0xff]
    %v7514 = vld [vmem:[%s7510 + $0x18] sm:$0xff]
    %v7515 = vld [vmem:[%s7510 + $0x20] sm:$0xff]
    %v7516 = vld [vmem:[%s7510 + $0x28] sm:$0xff]
    %v7517 = vld [vmem:[%s7510 + $0x30] sm:$0xff]
    %v7518 = vld [vmem:[%s7510 + $0x38] sm:$0xff]
    %v7520 = vsel %vm7083, %v7507, 0
    %v7523 = vsel %vm7083, %v7508, 0
    %v7526 = vsel %vm7083, %v7509, 0
    %7528 = vmatprep.subr.mxu0 0.0
    %7529 = vmatpush1.msra.mxu0 %v7511
    %7530 = vmatprep.subr.mxu0 0.0
    %7531 = vmatpush1.msra.mxu0 %v7512
    %7532 = vmatprep.subr.mxu0 0.0
    %7533 = vmatpush1.msra.mxu0 %v7513
    %7534 = vmatprep.subr.mxu0 0.0
    %7535 = vmatpush1.msra.mxu0 %v7514
    %7536 = vmatprep.subr.mxu0 0.0
    %7537 = vmatpush1.msra.mxu0 %v7515
    %7538 = vmatprep.subr.mxu0 0.0
    %7539 = vmatpush1.msra.mxu0 %v7516
    %7540 = vmatprep.subr.mxu0 0.0
    %7541 = vmatpush1.msra.mxu0 %v7517
    %7542 = vmatprep.subr.mxu0 0.0
    %7543 = vmatpush1.msra.mxu0 %v7518
    %7544 = vmatprep.subr.mxu0 0.0
    %7545 = vmatpush1.msra.mxu0 0.0
    %7546 = vmatprep.subr.mxu0 0.0
    %7547 = vmatpush1.msra.mxu0 0.0
    %7548 = vmatprep.subr.mxu0 0.0
    %7549 = vmatpush1.msra.mxu0 0.0
    %7550 = vmatprep.subr.mxu0 0.0
    %7551 = vmatpush1.msra.mxu0 0.0
    %7552 = vmatprep.subr.mxu0 0.0
    %7553 = vmatpush1.msra.mxu0 0.0
    %7554 = vmatprep.subr.mxu0 0.0
    %7555 = vmatpush1.msra.mxu0 0.0
    %7556 = vmatprep.subr.mxu0 0.0
    %7557 = vmatpush1.msra.mxu0 0.0
    %7558 = vmatprep.subr.mxu0 0.0
    %7559 = vmatpush1.msra.mxu0 0.0
    %7560 = vmatprep.subr.mxu0 0.0
    %7561 = vmatpush1.msra.mxu0 0.0
    %7562 = vmatprep.subr.mxu0 0.0
    %7563 = vmatpush1.msra.mxu0 0.0
    %7564 = vmatprep.subr.mxu0 0.0
    %7565 = vmatpush1.msra.mxu0 0.0
    %7566 = vmatprep.subr.mxu0 0.0
    %7567 = vmatpush1.msra.mxu0 0.0
    %7568 = vmatprep.subr.mxu0 0.0
    %7569 = vmatpush1.msra.mxu0 0.0
    %7570 = vmatprep.subr.mxu0 0.0
    %7571 = vmatpush1.msra.mxu0 0.0
    %7572 = vmatprep.subr.mxu0 0.0
    %7573 = vmatpush1.msra.mxu0 0.0
    %7574 = vmatprep.subr.mxu0 0.0
    %7575 = vmatpush1.msra.mxu0 0.0
    %7576 = vmatprep.subr.mxu0 0.0
    %7577 = vmatpush1.msra.mxu0 0.0
    %7578 = vmatprep.subr.mxu0 0.0
    %7579 = vmatpush1.msra.mxu0 0.0
    %7580 = vmatprep.subr.mxu0 0.0
    %7581 = vmatpush1.msra.mxu0 0.0
    %7582 = vmatprep.subr.mxu0 0.0
    %7583 = vmatpush1.msra.mxu0 0.0
    %7584 = vmatprep.subr.mxu0 0.0
    %7585 = vmatpush1.msra.mxu0 0.0
    %7586 = vmatprep.subr.mxu0 0.0
    %7587 = vmatpush1.msra.mxu0 0.0
    %7588 = vmatprep.subr.mxu0 0.0
    %7589 = vmatpush1.msra.mxu0 0.0
    %7590 = vmatprep.subr.mxu0 0.0
    %7591 = vmatpush1.msra.mxu0 0.0
    %7592 = vmatprep.mubr.f32.mxu0 0.0
    %7593 = vmatmul.mubr.f32.gmra.mrb[0].mxu0 %v7520
    %v7594 = vpop.f32.mrb[0].mxu0
    %v7595 = vadd.f32 0.0, %v7594
    %v7596 = vpop.f32.mrb[0].mxu0
    %7597 = vmatprep.mubr.f32.mxu0 0.0
    %7598 = vmatmul.mubr.f32.gmra.mrb[0].mxu0 %v7523
    %v7599 = vpop.f32.mrb[0].mxu0
    %v7600 = vadd.f32 0.0, %v7599
    %v7601 = vpop.f32.mrb[0].mxu0
    %7602 = vmatprep.mubr.f32.mxu0 0.0
    %7603 = vmatmul.mubr.f32.gmra.mrb[0].mxu0 %v7526
    %v7604 = vpop.f32.mrb[0].mxu0
    %v7605 = vadd.f32 0.0, %v7604
    %v7606 = vpop.f32.mrb[0].mxu0
    %7607 = vdwg.mxu0
    %v7608 = vadd.f32 %v7504, %v7595
    %v7609 = vadd.f32 %v7505, %v7600
    %v7610 = vadd.f32 %v7506, %v7605
    %v7611 = vld [vmem:[%s8] sm:$0x1]
    %v7613 = vlaneseq
    %v7614 = vshrl.u32 %v7613, 7
    %v7615 = vsub.s32 0, %v7614
    %v7616 = vrot.slane %v7611, %v7615
    %v7618 = vadd.f32 %v7608, %v7616
    %v7619 = vadd.f32 %v7609, %v7616
    %v7620 = vadd.f32 %v7610, %v7616
    %v7621 = vmax.f32 %v7618, 0.0
    %v7622 = vmax.f32 %v7619, 0.0
    %v7623 = vmax.f32 %v7620, 0.0
    %7624 = vst [vmem:[#allocation9] sm:$0xff] %v7621
    %7625 = vst [vmem:[#allocation9 + $0x8] sm:$0xff] %v7622
    %7626 = vst [vmem:[#allocation9 + $0x10] sm:$0x3] %v7623
    %v7627 = vld [vmem:[#allocation9] sm:$0xff]
    %v7628 = vld [vmem:[#allocation9 + $0x8] sm:$0x3f]
    %v7629 = vld [vmem:[#allocation9 + $0x1] sm:$0xff]
    %v7630 = vld [vmem:[#allocation9 + $0x9] sm:$0x3f]
    %v7631 = vmax.f32 %v7627, %v7629
    %v7632 = vmax.f32 %v7628, %v7630
    %v7633 = vld [vmem:[#allocation9 + $0x3] sm:$0xff]
    %v7634 = vld [vmem:[#allocation9 + $0xb] sm:$0x3f]
    %v7635 = vld [vmem:[#allocation9 + $0x4] sm:$0xff]
    %v7636 = vld [vmem:[#allocation9 + $0xc] sm:$0x3f]
    %v7637 = vmax.f32 %v7633, %v7635
    %v7638 = vmax.f32 %v7634, %v7636
    %v7639 = vmax.f32 %v7631, %v7637
    %v7640 = vmax.f32 %v7632, %v7638
    %7641 = vst [vmem:[#allocation10] sm:$0xff] %v7639
    %7642 = vst [vmem:[#allocation10 + $0x8] sm:$0x3f] %v7640
    %v7643 = vld [vmem:[#allocation10] sm:$0x1]
    %7644 = vst [vmem:[#allocation11] sm:$0x1] %v7643
    %v7645 = vld [vmem:[#allocation10 + $0x9] sm:$0x1]
    %7646 = vst [vmem:[#allocation11 + $0x1] sm:$0x1] %v7645
    %v7647 = vld [vmem:[#allocation11] sm:$0x3]
    %v7648 = vld [vmem:[%s9] sm:$0xff]
    %v7649 = vld [vmem:[%s9 + $0x8] sm:$0xff]
    %v7650 = vld [vmem:[%s9 + $0x10] sm:$0xff]
    %v7651 = vld [vmem:[%s9 + $0x18] sm:$0xff]
    %v7652 = vld [vmem:[%s9 + $0x20] sm:$0xff]
    %v7653 = vld [vmem:[%s9 + $0x28] sm:$0xff]
    %v7654 = vld [vmem:[%s9 + $0x30] sm:$0xff]
    %v7655 = vld [vmem:[%s9 + $0x38] sm:$0xff]
    %v7656 = vld [vmem:[%s9 + $0x40] sm:$0xff]
    %v7657 = vld [vmem:[%s9 + $0x48] sm:$0xff]
    %v7658 = vld [vmem:[%s9 + $0x50] sm:$0xff]
    %v7659 = vld [vmem:[%s9 + $0x58] sm:$0xff]
    %v7660 = vld [vmem:[%s9 + $0x60] sm:$0xff]
    %v7661 = vld [vmem:[%s9 + $0x68] sm:$0xff]
    %v7662 = vld [vmem:[%s9 + $0x70] sm:$0xff]
    %v7663 = vld [vmem:[%s9 + $0x78] sm:$0xff]
    %v7664 = vld [vmem:[%s10] sm:$0x1]
    %v7666 = vlaneseq
    %v7667 = vshrl.u32 %v7666, 7
    %v7668 = vsub.s32 0, %v7667
    %v7669 = vrot.slane %v7664, %v7668
    %7671 = vmatprep.subr.mxu0 0.0
    %7672 = vmatpush1.msra.mxu0 %v7648
    %7673 = vmatprep.subr.mxu0 0.0
    %7674 = vmatpush1.msra.mxu0 %v7649
    %7675 = vmatprep.subr.mxu0 0.0
    %7676 = vmatpush1.msra.mxu0 %v7650
    %7677 = vmatprep.subr.mxu0 0.0
    %7678 = vmatpush1.msra.mxu0 %v7651
    %7679 = vmatprep.subr.mxu0 0.0
    %7680 = vmatpush1.msra.mxu0 %v7652
    %7681 = vmatprep.subr.mxu0 0.0
    %7682 = vmatpush1.msra.mxu0 %v7653
    %7683 = vmatprep.subr.mxu0 0.0
    %7684 = vmatpush1.msra.mxu0 %v7654
    %7685 = vmatprep.subr.mxu0 0.0
    %7686 = vmatpush1.msra.mxu0 %v7655
    %7687 = vmatprep.subr.mxu0 0.0
    %7688 = vmatpush1.msra.mxu0 %v7656
    %7689 = vmatprep.subr.mxu0 0.0
    %7690 = vmatpush1.msra.mxu0 %v7657
    %7691 = vmatprep.subr.mxu0 0.0
    %7692 = vmatpush1.msra.mxu0 %v7658
    %7693 = vmatprep.subr.mxu0 0.0
    %7694 = vmatpush1.msra.mxu0 %v7659
    %7695 = vmatprep.subr.mxu0 0.0
    %7696 = vmatpush1.msra.mxu0 %v7660
    %7697 = vmatprep.subr.mxu0 0.0
    %7698 = vmatpush1.msra.mxu0 %v7661
    %7699 = vmatprep.subr.mxu0 0.0
    %7700 = vmatpush1.msra.mxu0 %v7662
    %7701 = vmatprep.subr.mxu0 0.0
    %7702 = vmatpush1.msra.mxu0 %v7663
    %7703 = vmatprep.subr.mxu0 0.0
    %7704 = vmatpush1.msra.mxu0 0.0
    %7705 = vmatprep.subr.mxu0 0.0
    %7706 = vmatpush1.msra.mxu0 0.0
    %7707 = vmatprep.subr.mxu0 0.0
    %7708 = vmatpush1.msra.mxu0 0.0
    %7709 = vmatprep.subr.mxu0 0.0
    %7710 = vmatpush1.msra.mxu0 0.0
    %7711 = vmatprep.subr.mxu0 0.0
    %7712 = vmatpush1.msra.mxu0 0.0
    %7713 = vmatprep.subr.mxu0 0.0
    %7714 = vmatpush1.msra.mxu0 0.0
    %7715 = vmatprep.subr.mxu0 0.0
    %7716 = vmatpush1.msra.mxu0 0.0
    %7717 = vmatprep.subr.mxu0 0.0
    %7718 = vmatpush1.msra.mxu0 0.0
    %7719 = vmatprep.subr.mxu0 0.0
    %7720 = vmatpush1.msra.mxu0 0.0
    %7721 = vmatprep.subr.mxu0 0.0
    %7722 = vmatpush1.msra.mxu0 0.0
    %7723 = vmatprep.subr.mxu0 0.0
    %7724 = vmatpush1.msra.mxu0 0.0
    %7725 = vmatprep.subr.mxu0 0.0
    %7726 = vmatpush1.msra.mxu0 0.0
    %7727 = vmatprep.subr.mxu0 0.0
    %7728 = vmatpush1.msra.mxu0 0.0
    %7729 = vmatprep.subr.mxu0 0.0
    %7730 = vmatpush1.msra.mxu0 0.0
    %7731 = vmatprep.subr.mxu0 0.0
    %7732 = vmatpush1.msra.mxu0 0.0
    %7733 = vmatprep.subr.mxu0 0.0
    %7734 = vmatpush1.msra.mxu0 0.0
    %7735 = vmatprep.mubr.f32.mxu0 0.0
    %7736 = vmatmul.mubr.f32.gmra.mrb[0].mxu0 %v7647
    %v7737 = vpop.f32.mrb[0].mxu0
    %v7738 = vadd.f32 %v7669, %v7737
    %v7739 = vpop.f32.mrb[0].mxu0
    %7740 = vdwg.mxu0
    %v7741 = vld [vmem:[%s11] sm:$0xff]
    %v7742 = vld [vmem:[%s11 + $0x8] sm:$0xff]
    %v7743 = vld [vmem:[%s11 + $0x10] sm:$0xff]
    %v7744 = vld [vmem:[%s11 + $0x18] sm:$0xff]
    %v7745 = vld [vmem:[%s11 + $0x20] sm:$0xff]
    %v7746 = vld [vmem:[%s11 + $0x28] sm:$0xff]
    %v7747 = vld [vmem:[%s11 + $0x30] sm:$0xff]
    %v7748 = vld [vmem:[%s11 + $0x38] sm:$0xff]
    %v7749 = vld [vmem:[%s12] sm:$0x1]
    %v7751 = vlaneseq
    %v7752 = vshrl.u32 %v7751, 7
    %v7753 = vsub.s32 0, %v7752
    %v7754 = vrot.slane %v7749, %v7753
    %v7757 = vsel %vm7083, %v7738, 0
    %7759 = vmatprep.subr.mxu0 0.0
    %7760 = vmatpush1.msra.mxu0 %v7741
    %7761 = vmatprep.subr.mxu0 0.0
    %7762 = vmatpush1.msra.mxu0 %v7742
    %7763 = vmatprep.subr.mxu0 0.0
    %7764 = vmatpush1.msra.mxu0 %v7743
    %7765 = vmatprep.subr.mxu0 0.0
    %7766 = vmatpush1.msra.mxu0 %v7744
    %7767 = vmatprep.subr.mxu0 0.0
    %7768 = vmatpush1.msra.mxu0 %v7745
    %7769 = vmatprep.subr.mxu0 0.0
    %7770 = vmatpush1.msra.mxu0 %v7746
    %7771 = vmatprep.subr.mxu0 0.0
    %7772 = vmatpush1.msra.mxu0 %v7747
    %7773 = vmatprep.subr.mxu0 0.0
    %7774 = vmatpush1.msra.mxu0 %v7748
    %7775 = vmatprep.subr.mxu0 0.0
    %7776 = vmatpush1.msra.mxu0 0.0
    %7777 = vmatprep.subr.mxu0 0.0
    %7778 = vmatpush1.msra.mxu0 0.0
    %7779 = vmatprep.subr.mxu0 0.0
    %7780 = vmatpush1.msra.mxu0 0.0
    %7781 = vmatprep.subr.mxu0 0.0
    %7782 = vmatpush1.msra.mxu0 0.0
    %7783 = vmatprep.subr.mxu0 0.0
    %7784 = vmatpush1.msra.mxu0 0.0
    %7785 = vmatprep.subr.mxu0 0.0
    %7786 = vmatpush1.msra.mxu0 0.0
    %7787 = vmatprep.subr.mxu0 0.0
    %7788 = vmatpush1.msra.mxu0 0.0
    %7789 = vmatprep.subr.mxu0 0.0
    %7790 = vmatpush1.msra.mxu0 0.0
    %7791 = vmatprep.subr.mxu0 0.0
    %7792 = vmatpush1.msra.mxu0 0.0
    %7793 = vmatprep.subr.mxu0 0.0
    %7794 = vmatpush1.msra.mxu0 0.0
    %7795 = vmatprep.subr.mxu0 0.0
    %7796 = vmatpush1.msra.mxu0 0.0
    %7797 = vmatprep.subr.mxu0 0.0
    %7798 = vmatpush1.msra.mxu0 0.0
    %7799 = vmatprep.subr.mxu0 0.0
    %7800 = vmatpush1.msra.mxu0 0.0
    %7801 = vmatprep.subr.mxu0 0.0
    %7802 = vmatpush1.msra.mxu0 0.0
    %7803 = vmatprep.subr.mxu0 0.0
    %7804 = vmatpush1.msra.mxu0 0.0
    %7805 = vmatprep.subr.mxu0 0.0
    %7806 = vmatpush1.msra.mxu0 0.0
    %7807 = vmatprep.subr.mxu0 0.0
    %7808 = vmatpush1.msra.mxu0 0.0
    %7809 = vmatprep.subr.mxu0 0.0
    %7810 = vmatpush1.msra.mxu0 0.0
    %7811 = vmatprep.subr.mxu0 0.0
    %7812 = vmatpush1.msra.mxu0 0.0
    %7813 = vmatprep.subr.mxu0 0.0
    %7814 = vmatpush1.msra.mxu0 0.0
    %7815 = vmatprep.subr.mxu0 0.0
    %7816 = vmatpush1.msra.mxu0 0.0
    %7817 = vmatprep.subr.mxu0 0.0
    %7818 = vmatpush1.msra.mxu0 0.0
    %7819 = vmatprep.subr.mxu0 0.0
    %7820 = vmatpush1.msra.mxu0 0.0
    %7821 = vmatprep.subr.mxu0 0.0
    %7822 = vmatpush1.msra.mxu0 0.0
    %7823 = vmatprep.mubr.f32.mxu0 0.0
    %7824 = vmatmul.mubr.f32.gmra.mrb[0].mxu0 %v7757
    %v7825 = vpop.f32.mrb[0].mxu0
    %v7826 = vadd.f32 %v7754, %v7825
    %v7827 = vpop.f32.mrb[0].mxu0
    %7828 = vdwg.mxu0
    %vm7829 = vcmask 41984
    %7830 = vst.msk [vmem:[#allocation12] sm:$0x3] %vm7829, %v7826
    // Predicated region
    $region54: #{spt_cnn_forward.1} parent=1 // pred_check
      _
    $region55: #{spt_cnn_forward.1} parent=1 // pred_check_branch
      %7832 = sbr.rel (0) target = $region57
    $region56: #{spt_cnn_forward.1} parent=1 // pred_region
      %s7834 = ssub.s32 32, 32
      %7835 = vsyncadd [#allocation13], %s7834
      %s7837 = sshll.u32 [#allocation12], 4
      %s7838 = int_to_ptr.vmem [resolvable:$true] %s7837
      %7840 = dma.vmem_to_hbm [thread:$0]  %s7838, 32, %s13, [#allocation13]
    $region57: #{spt_cnn_forward.1} parent=1 // pred_fallthru
      _
    // Predicated region
    $region58: #{spt_cnn_forward.1} parent=1 // pred_check
      _
    $region59: #{spt_cnn_forward.1} parent=1 // pred_check_branch
      %7842 = sbr.rel (0) target = $region61
    $region60: #{spt_cnn_forward.1} parent=1 // pred_region
      %7843 = dma.done [#allocation13], 32
    $region61: #{spt_cnn_forward.1} parent=1 // pred_fallthru
      _
    %7844 = vsyncpa [#allocation13], 1

</llo_original>
